<compile_context>
chip_gen: v6e
topology: v6e:2x2x1
jax: 0.10.0
libtpu: 0.0.40
codegen_flags: <defaults>
</compile_context>

<pallas_src>
import functools
import math

import jax
import jax.numpy as jnp
from jax.experimental import pallas as pl
from jax.experimental.pallas import tpu as pltpu

HEAD_OUT_CHANNELS = (1, 2, 2, 17, 2, 34)   # hm, wh, reg, pose_hm, pose_offset, pose_kps
HIDDEN = 256                               # ConvBlock hidden width per head
N_HEADS = len(HEAD_OUT_CHANNELS)
CH_TOTAL = N_HEADS * HIDDEN                # 1536 fused hidden channels
COUT_TOTAL = sum(HEAD_OUT_CHANNELS)        # 58 real output channels
COUT_PAD = 128                             # lane-dense fused output width

_MAX_TILE_ROWS = 2048   # pixels per grid step; big tiles amortize ~0.35us/step
_MIN_TILE_ROWS = 512    # don't shrink tiles below this just to add grid steps


def _vmem_limits():
    """Generation-aware VMEM sizing: v5e/v6e have 128 MiB physical, v7x only 64."""
    try:
        phys = int(pltpu.get_tpu_info().vmem_capacity_bytes)
    except Exception:
        phys = 64 * 1024 * 1024            # assume the smallest (v7x) if query fails
    limit = min(phys * 3 // 4, 96 * 1024 * 1024)   # scoped VMEM we request
    budget = limit * 3 // 4                        # what the row tile is sized against
    return budget, limit


_VMEM_TILE_BUDGET, _VMEM_LIMIT_BYTES = _vmem_limits()


def _round_up(a, b):
    return -(-a // b) * b


def _padded_bytes(shape, dtype):
    """Approximate VMEM footprint (minor two dims padded to the vreg tile)."""
    itemsize = jnp.dtype(dtype).itemsize
    sublane = 32 // itemsize               # 8 for f32, 16 for bf16
    if len(shape) == 1:
        shape = (1,) + tuple(shape)
    *lead, s, l = shape
    n = 1
    for d in lead:
        n *= d
    return n * _round_up(max(s, 1), sublane) * _round_up(max(l, 1), 128) * itemsize


def _tile_vmem_bytes(th, h_pad, w, cin, x_dt, out_dt):
    """Per-grid-step VMEM estimate for the fused kernel (budgets the band height)."""
    rows = th * w
    b = 0
    b += 2 * _padded_bytes((h_pad + 2, w + 2, cin), x_dt)     # padded image (2 buffers)
    b += 2 * _padded_bytes((9 * cin, CH_TOTAL), x_dt)         # w1 (counted x2: see TODO below)
    b += 2 * _padded_bytes((CH_TOTAL, COUT_PAD), x_dt)        # w2
    b += 2 * _padded_bytes((1, CH_TOTAL), jnp.float32)        # b1
    b += 2 * _padded_bytes((1, COUT_PAD), jnp.float32)        # b2
    b += 2 * _padded_bytes((rows, 9 * cin), x_dt)             # in-kernel im2col slab + temp
    b += _padded_bytes((rows, CH_TOTAL), jnp.float32)         # conv1 f32 accumulator
    b += 2 * _padded_bytes((rows, COUT_PAD), out_dt)          # output block (2 buffers)
    return b


def _pick_row_tile(H, W, Cin, x_dt, out_dt, n_batch):
    """Image rows per grid step, sized against an explicit VMEM budget."""
    unit = 8 // math.gcd(W, 8)              # keeps th*W sublane (8) aligned
    cap = max(unit, (_MAX_TILE_ROWS // W) // unit * unit) if W <= _MAX_TILE_ROWS else unit
    th = max(unit, min(_round_up(H, unit), cap))
    while th > unit and _tile_vmem_bytes(th, _round_up(H, th), W, Cin,
                                         x_dt, out_dt) > _VMEM_TILE_BUDGET:
        th -= unit
    # Megacore: keep >= ceil(4 / N) row tiles so both v7x TensorCores stay busy,
    # as long as a tile does not drop below _MIN_TILE_ROWS pixels.
    want_steps = -(-4 // max(n_batch, 1))
    while th > unit and -(-H // th) < want_steps and (th - unit) * W >= _MIN_TILE_ROWS:
        th -= unit
    return th


def _fuse_params(params, mxu_dtype):
    """Fuse all heads: one (9*Cin, 1536) conv1 weight, block-diagonal conv2 weight."""
    cin = params[0][0].shape[2]
    # Row order (ky, kx, cin) matches the in-kernel tap order.
    w1_cat = jnp.concatenate(
        [w1.reshape(9 * cin, HIDDEN) for (w1, _, _, _) in params], axis=-1)
    b1_cat = jnp.concatenate([b1 for (_, b1, _, _) in params], axis=0)

    w2_bd = jnp.zeros((CH_TOTAL, COUT_PAD), jnp.float32)
    b2_cat = jnp.zeros((COUT_PAD,), jnp.float32)
    off = 0
    for h, (_, _, w2, b2) in enumerate(params):
        cout = w2.shape[-1]
        w2_bd = w2_bd.at[h * HIDDEN:(h + 1) * HIDDEN, off:off + cout].set(w2)
        b2_cat = b2_cat.at[off:off + cout].set(b2)
        off += cout
    return (w1_cat.astype(mxu_dtype), b1_cat.reshape(1, -1).astype(jnp.float32),
            w2_bd.astype(mxu_dtype), b2_cat.reshape(1, -1).astype(jnp.float32))


def _two_matmuls(cols, w1_ref, b1_ref, w2_ref, b2_ref, o_ref):
    # conv1 (3x3, all 6 heads): one MXU matmul with f32 accumulation.
    # NOTE: f32 operands run at the MXU's default precision (multi-pass bf16);
    # pass precision=jax.lax.Precision.HIGHEST here if bit-exact f32 is required.
    hidden = jnp.dot(cols, w1_ref[...], preferred_element_type=jnp.float32)
    hidden = jnp.maximum(hidden + b1_ref[...], 0.0)          # bias + ReLU in f32
    # conv2 (1x1, all 6 heads): one matmul against the block-diagonal weight;
    # 128-lane output slab -> unmasked full-width stores.
    out = jnp.dot(hidden.astype(w2_ref.dtype), w2_ref[...],
                  preferred_element_type=jnp.float32) + b2_ref[...]
    o_ref[0] = out.astype(o_ref.dtype)


def _fused_im2col_kernel(x_ref, w1_ref, b1_ref, w2_ref, b2_ref, o_ref, *, th, w):
    """In-kernel im2col: x_ref holds the whole zero-padded NHWC image of one batch
    element (fetched once per batch, VMEM resident); each grid step builds the
    (th*w, 9*Cin) im2col slab for its row band straight from VMEM."""
    r = pl.program_id(1)
    row0 = r * th                                            # top padded row of the band
    taps = [x_ref[0, pl.ds(row0 + dy, th), pl.ds(dx, w), :]  # 9 x (th, w, Cin)
            for dy in range(3) for dx in range(3)]
    cols = jnp.concatenate(taps, axis=-1)                    # (th, w, 9*Cin)
    cols = cols.reshape(th * w, cols.shape[-1])              # (th*w, 9*Cin)
    _two_matmuls(cols, w1_ref, b1_ref, w2_ref, b2_ref, o_ref)


def _precols_kernel(x_ref, w1_ref, b1_ref, w2_ref, b2_ref, o_ref):
    """Fallback kernel: im2col rows pre-materialized by XLA (9x input HBM traffic)."""
    _two_matmuls(x_ref[0], w1_ref, b1_ref, w2_ref, b2_ref, o_ref)


@functools.partial(jax.jit, static_argnames=("use_bf16", "in_kernel_im2col"))
def _center_head_impl(x_nchw, params, use_bf16, in_kernel_im2col):
    N, Cin, H, W = x_nchw.shape
    x_dt = jnp.bfloat16 if use_bf16 else jnp.float32
    out_dt = jnp.bfloat16 if use_bf16 else jnp.float32

    th = _pick_row_tile(H, W, Cin, x_dt, out_dt, N)
    h_pad = _round_up(H, th)
    rows = th * W
    grid = (N, h_pad // th)

    # NCHW -> NHWC in the compute dtype; 1-pixel zero halo + bottom rows to h_pad.
    x = jnp.transpose(x_nchw, (0, 2, 3, 1)).astype(x_dt)
    x = jnp.pad(x, ((0, 0), (1, h_pad - H + 1), (1, 1), (0, 0)))  # (N, h_pad+2, W+2, Cin)

    w1, b1, w2, b2 = _fuse_params(params, x_dt)

    if in_kernel_im2col:
        kernel = functools.partial(_fused_im2col_kernel, th=th, w=W)
        x_in = x
        # Constant over the row axis -> the image is DMA'd once per batch element.
        # TODO(synk): for feature maps too large to keep whole in VMEM, switch to a
        # manual halo-band DMA (memory_space=pl.ANY + make_async_copy).
        x_spec = pl.BlockSpec((1, h_pad + 2, W + 2, Cin), lambda n, r: (n, 0, 0, 0))
    else:
        # TODO(synk): only taken when the Mosaic lowering rejects the in-kernel
        # im2col (concat/reshape); costs ~9x input HBM traffic.
        kernel = _precols_kernel
        taps = [x[:, dy:dy + h_pad, dx:dx + W, :]
                for dy in range(3) for dx in range(3)]
        x_in = jnp.concatenate(taps, axis=-1).reshape(N, h_pad * W, 9 * Cin)
        x_spec = pl.BlockSpec((1, rows, 9 * Cin), lambda n, r: (n, r, 0))

    # Constant-index weight/bias blocks: fetched once, stay VMEM resident.
    # TODO(synk): single-buffer them (pl.Buffered(1) / whole-array VMEM residency)
    # once universally supported; the VMEM budget conservatively counts them x2.
    w_specs = [
        pl.BlockSpec((9 * Cin, CH_TOTAL), lambda n, r: (0, 0)),
        pl.BlockSpec((1, CH_TOTAL), lambda n, r: (0, 0)),
        pl.BlockSpec((CH_TOTAL, COUT_PAD), lambda n, r: (0, 0)),
        pl.BlockSpec((1, COUT_PAD), lambda n, r: (0, 0)),
    ]

    flops = 2 * N * h_pad * W * (9 * Cin * CH_TOTAL + CH_TOTAL * COUT_PAD)
    bytes_accessed = int(
        x_in.size * x_in.dtype.itemsize
        + w1.size * w1.dtype.itemsize + w2.size * w2.dtype.itemsize
        + b1.size * 4 + b2.size * 4
        + N * h_pad * W * COUT_PAD * jnp.dtype(out_dt).itemsize)

    fused = pl.pallas_call(
        kernel,
        out_shape=jax.ShapeDtypeStruct((N, h_pad * W, COUT_PAD), out_dt),
        grid=grid,
        in_specs=[x_spec] + w_specs,
        out_specs=pl.BlockSpec((1, rows, COUT_PAD), lambda n, r: (n, r, 0)),
        compiler_params=pltpu.CompilerParams(
            dimension_semantics=("parallel", "parallel"),
            vmem_limit_bytes=_VMEM_LIMIT_BYTES),
        cost_estimate=pl.CostEstimate(
            flops=flops, transcendentals=0, bytes_accessed=bytes_accessed),
    )(x_in, w1, b1, w2, b2)

    # One lane-friendly split for all six heads: drop row/channel padding, do a
    # single NHWC->NCHW transpose of the 58 real channels, then slice per head.
    fused = fused.reshape(N, h_pad, W, COUT_PAD)[:, :H, :, :COUT_TOTAL]
    fused = jnp.transpose(fused, (0, 3, 1, 2))               # (N, 58, H, W)
    outs, off = [], 0
    for cout in HEAD_OUT_CHANNELS:
        outs.append(fused[:, off:off + cout])
        off += cout
    return outs


_IN_KERNEL_IM2COL = True  # flipped off if this Mosaic build rejects the in-kernel path


def center_head_forward(x_nchw, params, use_bf16=True):
    """Mirrors CenterHead.forward: returns the 6 per-head NCHW tensors."""
    global _IN_KERNEL_IM2COL
    if _IN_KERNEL_IM2COL:
        try:
            return _center_head_impl(x_nchw, params, use_bf16=use_bf16,
                                     in_kernel_im2col=True)
        except Exception:
            _IN_KERNEL_IM2COL = False
    return _center_head_impl(x_nchw, params, use_bf16=use_bf16,
                             in_kernel_im2col=False)


def init_center_head_params(key, intermediate_channel, hidden=HIDDEN):
    """Deterministic synthetic parameters (no checkpoint loading)."""
    params = []
    for cout in HEAD_OUT_CHANNELS:
        key, k1, k2, k3, k4 = jax.random.split(key, 5)
        w1 = jax.random.normal(k1, (3, 3, intermediate_channel, hidden),
                               jnp.float32) * 0.05
        b1 = jax.random.normal(k2, (hidden,), jnp.float32) * 0.05
        w2 = jax.random.normal(k3, (hidden, cout), jnp.float32) * 0.05
        b2 = jax.random.normal(k4, (cout,), jnp.float32) * 0.05
        params.append((w1, b1, w2, b2))
    return params


def _reference_head(x_nhwc, w1, b1, w2, b2):
    """Pure-JAX reference for correctness checking."""
    y = jax.lax.conv_general_dilated(
        x_nhwc, w1, window_strides=(1, 1), padding="SAME",
        dimension_numbers=("NHWC", "HWIO", "NHWC"))
    y = jnp.maximum(y + b1, 0.0)
    return jnp.einsum("nhwc,cd->nhwd", y, w2) + b2


if __name__ == "__main__":
    key = jax.random.PRNGKey(0)
    key, kx = jax.random.split(key)

    # Small shapes consistent with the module: batch=2, intermediate=4, 16x16.
    N, Cin, H, W = 2, 4, 16, 16
    x_nchw = jax.random.normal(kx, (N, Cin, H, W), jnp.float32)
    params = init_center_head_params(key, Cin)

    # f32 operand path: tight check against the plain-JAX reference.
    outs_f32 = jax.block_until_ready(
        center_head_forward(x_nchw, params, use_bf16=False))

    x_nhwc = jnp.transpose(x_nchw, (0, 2, 3, 1))
    refs = []
    for out, cout, (w1, b1, w2, b2) in zip(outs_f32, HEAD_OUT_CHANNELS, params):
        assert out.shape == (N, cout, H, W), out.shape
        ref = jnp.transpose(_reference_head(x_nhwc, w1, b1, w2, b2), (0, 3, 1, 2))
        refs.append(ref)
        err = float(jnp.max(jnp.abs(out.astype(jnp.float32) - ref)))
        assert jnp.allclose(out.astype(jnp.float32), ref, rtol=1e-4, atol=1e-4), err

    # Default path: bf16 operands + bf16 output slab, f32 MXU accumulation.
    outs_bf16 = jax.block_until_ready(center_head_forward(x_nchw, params))
    for out, ref in zip(outs_bf16, refs):
        err = float(jnp.max(jnp.abs(out.astype(jnp.float32) - ref)))
        assert jnp.allclose(out.astype(jnp.float32), ref, rtol=5e-2, atol=5e-2), err

    print("KERNEL_OK")
</pallas_src>

<mosaic_0001>
module attributes {stable_mosaic.version = 11 : i64} {
  func.func @_fused_im2col_kernel(%arg0: i32, %arg1: i32, %arg2: memref<1x18x18x4xf32, #tpu.memory_space<vmem>>, %arg3: memref<36x1536xf32, #tpu.memory_space<vmem>>, %arg4: memref<1x1536xf32, #tpu.memory_space<vmem>>, %arg5: memref<1536x128xf32, #tpu.memory_space<vmem>>, %arg6: memref<1x128xf32, #tpu.memory_space<vmem>>, %arg7: memref<1x256x128xf32, #tpu.memory_space<vmem>>) attributes {dimension_semantics = [#tpu.dimension_semantics<parallel>, #tpu.dimension_semantics<parallel>], iteration_bounds = array<i64: 2, 1>, scalar_prefetch = 0 : i64, scratch_operands = 0 : i64, tpu.core_type = #tpu.core_type<tc>, window_params = [{transform_indices = @transform_0, window_bounds = array<i64: 1, 18, 18, 4>}, {pipeline_mode = #tpu.pipeline_mode<synchronous>, transform_indices = @transform_1, window_bounds = array<i64: 36, 1536>}, {pipeline_mode = #tpu.pipeline_mode<synchronous>, transform_indices = @transform_2, window_bounds = array<i64: 1, 1536>}, {pipeline_mode = #tpu.pipeline_mode<synchronous>, transform_indices = @transform_3, window_bounds = array<i64: 1536, 128>}, {pipeline_mode = #tpu.pipeline_mode<synchronous>, transform_indices = @transform_4, window_bounds = array<i64: 1, 128>}, {transform_indices = @transform_5, window_bounds = array<i64: 1, 256, 128>}]} {
    %c16_i32 = arith.constant 16 : i32
    %0 = arith.muli %arg1, %c16_i32 : i32
    %c0_i32 = arith.constant 0 : i32
    %1 = arith.addi %0, %c0_i32 : i32
    %c0 = arith.constant 0 : index
    %2 = arith.index_cast %1 : i32 to index
    %c0_0 = arith.constant 0 : index
    %c0_1 = arith.constant 0 : index
    %3 = vector.load %arg2[%c0, %2, %c0_0, %c0_1] : memref<1x18x18x4xf32, #tpu.memory_space<vmem>>, vector<1x16x16x4xf32>
    %4 = vector.shape_cast %3 : vector<1x16x16x4xf32> to vector<16x16x4xf32>
    %c0_i32_2 = arith.constant 0 : i32
    %5 = arith.addi %0, %c0_i32_2 : i32
    %c0_3 = arith.constant 0 : index
    %6 = arith.index_cast %5 : i32 to index
    %c1 = arith.constant 1 : index
    %c0_4 = arith.constant 0 : index
    %7 = vector.load %arg2[%c0_3, %6, %c1, %c0_4] : memref<1x18x18x4xf32, #tpu.memory_space<vmem>>, vector<1x16x16x4xf32>
    %8 = vector.shape_cast %7 : vector<1x16x16x4xf32> to vector<16x16x4xf32>
    %c0_i32_5 = arith.constant 0 : i32
    %9 = arith.addi %0, %c0_i32_5 : i32
    %c0_6 = arith.constant 0 : index
    %10 = arith.index_cast %9 : i32 to index
    %c2 = arith.constant 2 : index
    %c0_7 = arith.constant 0 : index
    %11 = vector.load %arg2[%c0_6, %10, %c2, %c0_7] : memref<1x18x18x4xf32, #tpu.memory_space<vmem>>, vector<1x16x16x4xf32>
    %12 = vector.shape_cast %11 : vector<1x16x16x4xf32> to vector<16x16x4xf32>
    %c1_i32 = arith.constant 1 : i32
    %13 = arith.addi %0, %c1_i32 : i32
    %c0_8 = arith.constant 0 : index
    %14 = arith.index_cast %13 : i32 to index
    %c0_9 = arith.constant 0 : index
    %c0_10 = arith.constant 0 : index
    %15 = vector.load %arg2[%c0_8, %14, %c0_9, %c0_10] : memref<1x18x18x4xf32, #tpu.memory_space<vmem>>, vector<1x16x16x4xf32>
    %16 = vector.shape_cast %15 : vector<1x16x16x4xf32> to vector<16x16x4xf32>
    %c1_i32_11 = arith.constant 1 : i32
    %17 = arith.addi %0, %c1_i32_11 : i32
    %c0_12 = arith.constant 0 : index
    %18 = arith.index_cast %17 : i32 to index
    %c1_13 = arith.constant 1 : index
    %c0_14 = arith.constant 0 : index
    %19 = vector.load %arg2[%c0_12, %18, %c1_13, %c0_14] : memref<1x18x18x4xf32, #tpu.memory_space<vmem>>, vector<1x16x16x4xf32>
    %20 = vector.shape_cast %19 : vector<1x16x16x4xf32> to vector<16x16x4xf32>
    %c1_i32_15 = arith.constant 1 : i32
    %21 = arith.addi %0, %c1_i32_15 : i32
    %c0_16 = arith.constant 0 : index
    %22 = arith.index_cast %21 : i32 to index
    %c2_17 = arith.constant 2 : index
    %c0_18 = arith.constant 0 : index
    %23 = vector.load %arg2[%c0_16, %22, %c2_17, %c0_18] : memref<1x18x18x4xf32, #tpu.memory_space<vmem>>, vector<1x16x16x4xf32>
    %24 = vector.shape_cast %23 : vector<1x16x16x4xf32> to vector<16x16x4xf32>
    %c2_i32 = arith.constant 2 : i32
    %25 = arith.addi %0, %c2_i32 : i32
    %c0_19 = arith.constant 0 : index
    %26 = arith.index_cast %25 : i32 to index
    %c0_20 = arith.constant 0 : index
    %c0_21 = arith.constant 0 : index
    %27 = vector.load %arg2[%c0_19, %26, %c0_20, %c0_21] : memref<1x18x18x4xf32, #tpu.memory_space<vmem>>, vector<1x16x16x4xf32>
    %28 = vector.shape_cast %27 : vector<1x16x16x4xf32> to vector<16x16x4xf32>
    %c2_i32_22 = arith.constant 2 : i32
    %29 = arith.addi %0, %c2_i32_22 : i32
    %c0_23 = arith.constant 0 : index
    %30 = arith.index_cast %29 : i32 to index
    %c1_24 = arith.constant 1 : index
    %c0_25 = arith.constant 0 : index
    %31 = vector.load %arg2[%c0_23, %30, %c1_24, %c0_25] : memref<1x18x18x4xf32, #tpu.memory_space<vmem>>, vector<1x16x16x4xf32>
    %32 = vector.shape_cast %31 : vector<1x16x16x4xf32> to vector<16x16x4xf32>
    %c2_i32_26 = arith.constant 2 : i32
    %33 = arith.addi %0, %c2_i32_26 : i32
    %c0_27 = arith.constant 0 : index
    %34 = arith.index_cast %33 : i32 to index
    %c2_28 = arith.constant 2 : index
    %c0_29 = arith.constant 0 : index
    %35 = vector.load %arg2[%c0_27, %34, %c2_28, %c0_29] : memref<1x18x18x4xf32, #tpu.memory_space<vmem>>, vector<1x16x16x4xf32>
    %36 = vector.shape_cast %35 : vector<1x16x16x4xf32> to vector<16x16x4xf32>
    %37 = tpu.concatenate %4, %8, %12, %16, %20, %24, %28, %32, %36 in 2 : vector<16x16x4xf32>, vector<16x16x4xf32>, vector<16x16x4xf32>, vector<16x16x4xf32>, vector<16x16x4xf32>, vector<16x16x4xf32>, vector<16x16x4xf32>, vector<16x16x4xf32>, vector<16x16x4xf32> -> vector<16x16x36xf32>
    %38 = vector.shape_cast %37 : vector<16x16x36xf32> to vector<256x36xf32>
    %c0_30 = arith.constant 0 : index
    %c0_31 = arith.constant 0 : index
    %39 = vector.load %arg3[%c0_30, %c0_31] : memref<36x1536xf32, #tpu.memory_space<vmem>>, vector<36x1536xf32>
    %cst = arith.constant dense<0.000000e+00> : vector<256x1536xf32>
    %40 = tpu.matmul %38, %39, %cst {dimension_numbers = #tpu.dot_dimension_numbers<[1], [0], [0], [1], [0, 0, 1, 1], [], []>} : vector<256x36xf32>, vector<36x1536xf32>, vector<256x1536xf32> -> vector<256x1536xf32>
    %c0_32 = arith.constant 0 : index
    %c0_33 = arith.constant 0 : index
    %41 = vector.load %arg4[%c0_32, %c0_33] : memref<1x1536xf32, #tpu.memory_space<vmem>>, vector<1x1536xf32>
    %42 = vector.broadcast %41 : vector<1x1536xf32> to vector<256x1536xf32>
    %43 = arith.addf %40, %42 : vector<256x1536xf32>
    %cst_34 = arith.constant 0.000000e+00 : f32
    %44 = vector.broadcast %cst_34 : f32 to vector<256x1536xf32>
    %45 = arith.maximumf %43, %44 : vector<256x1536xf32>
    %c0_35 = arith.constant 0 : index
    %c0_36 = arith.constant 0 : index
    %46 = vector.load %arg5[%c0_35, %c0_36] : memref<1536x128xf32, #tpu.memory_space<vmem>>, vector<1536x128xf32>
    %cst_37 = arith.constant dense<0.000000e+00> : vector<256x128xf32>
    %47 = tpu.matmul %45, %46, %cst_37 {dimension_numbers = #tpu.dot_dimension_numbers<[1], [0], [0], [1], [0, 0, 1, 1], [], []>} : vector<256x1536xf32>, vector<1536x128xf32>, vector<256x128xf32> -> vector<256x128xf32>
    %c0_38 = arith.constant 0 : index
    %c0_39 = arith.constant 0 : index
    %48 = vector.load %arg6[%c0_38, %c0_39] : memref<1x128xf32, #tpu.memory_space<vmem>>, vector<1x128xf32>
    %49 = vector.broadcast %48 : vector<1x128xf32> to vector<256x128xf32>
    %50 = arith.addf %47, %49 : vector<256x128xf32>
    %c0_40 = arith.constant 0 : index
    %c0_41 = arith.constant 0 : index
    %c0_42 = arith.constant 0 : index
    %51 = vector.load %arg7[%c0_40, %c0_41, %c0_42] : memref<1x256x128xf32, #tpu.memory_space<vmem>>, vector<1x256x128xf32>
    %52 = vector.shape_cast %51 : vector<1x256x128xf32> to vector<256x128xf32>
    %53 = vector.shape_cast %50 : vector<256x128xf32> to vector<1x256x128xf32>
    tpu.vector_store %arg7[%c0_40, %c0_41, %c0_42], %53 {strides = array<i32>} : memref<1x256x128xf32, #tpu.memory_space<vmem>>, vector<1x256x128xf32>,
    return
  }
  func.func @transform_0(%arg0: i32, %arg1: i32) -> (i32, i32, i32, i32) {
    %c0_i32 = arith.constant 0 : i32
    %c0_i32_0 = arith.constant 0 : i32
    %c0_i32_1 = arith.constant 0 : i32
    %c0_i32_2 = arith.constant 0 : i32
    return %arg0, %c0_i32, %c0_i32_0, %c0_i32_1 : i32, i32, i32, i32
  }
  func.func @transform_1(%arg0: i32, %arg1: i32) -> (i32, i32) {
    %c0_i32 = arith.constant 0 : i32
    %c0_i32_0 = arith.constant 0 : i32
    %c0_i32_1 = arith.constant 0 : i32
    return %c0_i32, %c0_i32_0 : i32, i32
  }
  func.func @transform_2(%arg0: i32, %arg1: i32) -> (i32, i32) {
    %c0_i32 = arith.constant 0 : i32
    %c0_i32_0 = arith.constant 0 : i32
    %c0_i32_1 = arith.constant 0 : i32
    return %c0_i32, %c0_i32_0 : i32, i32
  }
  func.func @transform_3(%arg0: i32, %arg1: i32) -> (i32, i32) {
    %c0_i32 = arith.constant 0 : i32
    %c0_i32_0 = arith.constant 0 : i32
    %c0_i32_1 = arith.constant 0 : i32
    return %c0_i32, %c0_i32_0 : i32, i32
  }
  func.func @transform_4(%arg0: i32, %arg1: i32) -> (i32, i32) {
    %c0_i32 = arith.constant 0 : i32
    %c0_i32_0 = arith.constant 0 : i32
    %c0_i32_1 = arith.constant 0 : i32
    return %c0_i32, %c0_i32_0 : i32, i32
  }
  func.func @transform_5(%arg0: i32, %arg1: i32) -> (i32, i32, i32) {
    %c0_i32 = arith.constant 0 : i32
    %c0_i32_0 = arith.constant 0 : i32
    return %arg0, %arg1, %c0_i32 : i32, i32, i32
  }
}

module attributes {stable_mosaic.version = 11 : i64} {
  func.func @_precols_kernel(%arg0: i32, %arg1: i32, %arg2: memref<1x256x36xf32, #tpu.memory_space<vmem>>, %arg3: memref<36x1536xf32, #tpu.memory_space<vmem>>, %arg4: memref<1x1536xf32, #tpu.memory_space<vmem>>, %arg5: memref<1536x128xf32, #tpu.memory_space<vmem>>, %arg6: memref<1x128xf32, #tpu.memory_space<vmem>>, %arg7: memref<1x256x128xf32, #tpu.memory_space<vmem>>) attributes {dimension_semantics = [#tpu.dimension_semantics<parallel>, #tpu.dimension_semantics<parallel>], iteration_bounds = array<i64: 2, 1>, scalar_prefetch = 0 : i64, scratch_operands = 0 : i64, tpu.core_type = #tpu.core_type<tc>, window_params = [{transform_indices = @transform_0, window_bounds = array<i64: 1, 256, 36>}, {pipeline_mode = #tpu.pipeline_mode<synchronous>, transform_indices = @transform_1, window_bounds = array<i64: 36, 1536>}, {pipeline_mode = #tpu.pipeline_mode<synchronous>, transform_indices = @transform_2, window_bounds = array<i64: 1, 1536>}, {pipeline_mode = #tpu.pipeline_mode<synchronous>, transform_indices = @transform_3, window_bounds = array<i64: 1536, 128>}, {pipeline_mode = #tpu.pipeline_mode<synchronous>, transform_indices = @transform_4, window_bounds = array<i64: 1, 128>}, {transform_indices = @transform_5, window_bounds = array<i64: 1, 256, 128>}]} {
    %c0 = arith.constant 0 : index
    %c0_0 = arith.constant 0 : index
    %c0_1 = arith.constant 0 : index
    %0 = vector.load %arg2[%c0, %c0_0, %c0_1] : memref<1x256x36xf32, #tpu.memory_space<vmem>>, vector<1x256x36xf32>
    %1 = vector.shape_cast %0 : vector<1x256x36xf32> to vector<256x36xf32>
    %c0_2 = arith.constant 0 : index
    %c0_3 = arith.constant 0 : index
    %2 = vector.load %arg3[%c0_2, %c0_3] : memref<36x1536xf32, #tpu.memory_space<vmem>>, vector<36x1536xf32>
    %cst = arith.constant dense<0.000000e+00> : vector<256x1536xf32>
    %3 = tpu.matmul %1, %2, %cst {dimension_numbers = #tpu.dot_dimension_numbers<[1], [0], [0], [1], [0, 0, 1, 1], [], []>} : vector<256x36xf32>, vector<36x1536xf32>, vector<256x1536xf32> -> vector<256x1536xf32>
    %c0_4 = arith.constant 0 : index
    %c0_5 = arith.constant 0 : index
    %4 = vector.load %arg4[%c0_4, %c0_5] : memref<1x1536xf32, #tpu.memory_space<vmem>>, vector<1x1536xf32>
    %5 = vector.broadcast %4 : vector<1x1536xf32> to vector<256x1536xf32>
    %6 = arith.addf %3, %5 : vector<256x1536xf32>
    %cst_6 = arith.constant 0.000000e+00 : f32
    %7 = vector.broadcast %cst_6 : f32 to vector<256x1536xf32>
    %8 = arith.maximumf %6, %7 : vector<256x1536xf32>
    %c0_7 = arith.constant 0 : index
    %c0_8 = arith.constant 0 : index
    %9 = vector.load %arg5[%c0_7, %c0_8] : memref<1536x128xf32, #tpu.memory_space<vmem>>, vector<1536x128xf32>
    %cst_9 = arith.constant dense<0.000000e+00> : vector<256x128xf32>
    %10 = tpu.matmul %8, %9, %cst_9 {dimension_numbers = #tpu.dot_dimension_numbers<[1], [0], [0], [1], [0, 0, 1, 1], [], []>} : vector<256x1536xf32>, vector<1536x128xf32>, vector<256x128xf32> -> vector<256x128xf32>
    %c0_10 = arith.constant 0 : index
    %c0_11 = arith.constant 0 : index
    %11 = vector.load %arg6[%c0_10, %c0_11] : memref<1x128xf32, #tpu.memory_space<vmem>>, vector<1x128xf32>
    %12 = vector.broadcast %11 : vector<1x128xf32> to vector<256x128xf32>
    %13 = arith.addf %10, %12 : vector<256x128xf32>
    %c0_12 = arith.constant 0 : index
    %c0_13 = arith.constant 0 : index
    %c0_14 = arith.constant 0 : index
    %14 = vector.load %arg7[%c0_12, %c0_13, %c0_14] : memref<1x256x128xf32, #tpu.memory_space<vmem>>, vector<1x256x128xf32>
    %15 = vector.shape_cast %14 : vector<1x256x128xf32> to vector<256x128xf32>
    %16 = vector.shape_cast %13 : vector<256x128xf32> to vector<1x256x128xf32>
    tpu.vector_store %arg7[%c0_12, %c0_13, %c0_14], %16 {strides = array<i32>} : memref<1x256x128xf32, #tpu.memory_space<vmem>>, vector<1x256x128xf32>,
    return
  }
  func.func @transform_0(%arg0: i32, %arg1: i32) -> (i32, i32, i32) {
    %c0_i32 = arith.constant 0 : i32
    %c0_i32_0 = arith.constant 0 : i32
    return %arg0, %arg1, %c0_i32 : i32, i32, i32
  }
  func.func @transform_1(%arg0: i32, %arg1: i32) -> (i32, i32) {
    %c0_i32 = arith.constant 0 : i32
    %c0_i32_0 = arith.constant 0 : i32
    %c0_i32_1 = arith.constant 0 : i32
    return %c0_i32, %c0_i32_0 : i32, i32
  }
  func.func @transform_2(%arg0: i32, %arg1: i32) -> (i32, i32) {
    %c0_i32 = arith.constant 0 : i32
    %c0_i32_0 = arith.constant 0 : i32
    %c0_i32_1 = arith.constant 0 : i32
    return %c0_i32, %c0_i32_0 : i32, i32
  }
  func.func @transform_3(%arg0: i32, %arg1: i32) -> (i32, i32) {
    %c0_i32 = arith.constant 0 : i32
    %c0_i32_0 = arith.constant 0 : i32
    %c0_i32_1 = arith.constant 0 : i32
    return %c0_i32, %c0_i32_0 : i32, i32
  }
  func.func @transform_4(%arg0: i32, %arg1: i32) -> (i32, i32) {
    %c0_i32 = arith.constant 0 : i32
    %c0_i32_0 = arith.constant 0 : i32
    %c0_i32_1 = arith.constant 0 : i32
    return %c0_i32, %c0_i32_0 : i32, i32
  }
  func.func @transform_5(%arg0: i32, %arg1: i32) -> (i32, i32, i32) {
    %c0_i32 = arith.constant 0 : i32
    %c0_i32_0 = arith.constant 0 : i32
    return %arg0, %arg1, %c0_i32 : i32, i32, i32
  }
}

</mosaic_0001>

<llo_original>
// kernel: custom-call
$region0: #{custom-call}
  %s0 = inlined_call_operand.vmem [shape: f32[1536], index: 0, kind: output, shape index: {}]

// kernel: _center_head_impl.1
$region0: #{_center_head_impl.1}
  #allocation0 [shape = 'u32[]', space=smem, size = 0x4, offset = 0x4, fixed_abs, tag = 'smem constant byte address 0x4 - core index']
  #allocation1 [shape = 'u32[144,128]{1,0:T(1,128)}', space=vmem, size = 0x12000, scoped, tag = 'internal scratch']
  %s0 = inlined_call_operand.vmem [shape: f32[2,18,18,4], index: 0, kind: input, shape index: {}]
  %s1 = inlined_call_operand.vmem [shape: f32[36,1536], index: 1, kind: input, shape index: {}]
  %s2 = inlined_call_operand.vmem [shape: f32[1,1536], index: 2, kind: input, shape index: {}]
  %s3 = inlined_call_operand.vmem [shape: f32[1536,128], index: 3, kind: input, shape index: {}]
  %s4 = inlined_call_operand.vmem [shape: f32[1,128], index: 4, kind: input, shape index: {}]
  %s5 = inlined_call_operand.vmem [shape: f32[2,256,128], index: 5, kind: output, shape index: {}]
  %s6 = sld [smem:[#allocation0]]
  $region53: #{_center_head_impl.1} parent=0
    _
  %s8 = ssub.s32 1, %s6
  %s9 = scalar_select 0, %s8, %s6
  loop: start=0, step=1, limit=4
  $region2: #{_center_head_impl.1} parent=0 // loop_pre_header
    _
  $region3: #{_center_head_impl.1} parent=0 // loop_header
    %s11 = sphi 0, %s15
    %p12 = scmp.ge.s32.totalorder %s11, 4
    %s18 = sphi 0, %s30
    %s19 = sphi 0, %s26
    %s20 = sphi 0, %s18
    %s21 = sphi 0, %s19
    %s22 = sphi 0, %s20
    %s23 = sphi 0, %s21
    %s33 = sphi 0, %s35
    %s36 = sphi 0, %s33
    %s37 = sphi 0, %s36
    %s53 = sphi 0, %s37
    %s57 = sphi 0, %s57
    %s59 = sphi 0, %s57
    %s60 = sphi 0, %s59
    %s74 = sphi 0, %s60
    %s78 = sphi 0, %s78
    %s80 = sphi 0, %s78
    %s81 = sphi 0, %s80
    %s95 = sphi 0, %s81
    %s99 = sphi 0, %s99
    %s101 = sphi 0, %s99
    %s102 = sphi 0, %s101
    %s116 = sphi 0, %s102
    %s120 = sphi 0, %s120
    %s122 = sphi 0, %s120
    %s123 = sphi 0, %s122
    %s137 = sphi 0, %s123
    %s145 = sphi 0, %s147
    %s148 = sphi 0, %s145
    %s149 = sphi 0, %s148
    %s165 = sphi 0, %s149
  $region4: #{_center_head_impl.1} parent=0 // loop_header_branch
    %14 = sbr.rel (%p12) target = $region8
  $region5: #{_center_head_impl.1} parent=0 // loop_body
    %s16 = ssub.s32 %s11, 1
    %s17 = ssub.s32 %s11, 2
    %s24 = sadd.s32 1, %s19
    %p25 = scmp.ge.s32.totalorder %s24, 1
    %s26 = scalar_select %p25, 0, %s24
    %s27 = sadd.s32 1, %s18
    %s28 = scalar_select %p25, %s27, %s18
    %p29 = scmp.ge.s32.totalorder %s28, 2
    %s30 = scalar_select %p29, 0, %s28
    %s31 = ssub.s32 %s18, %s30
    %p32 = scmp.eq.s32.totalorder %s31, 0
    %s34 = sadd.s32 %s33, 1
    %s35 = scalar_select %p32, %s33, %s34
    %p38 = pneg %p32
    %p39 = scmp.eq.s32.totalorder %s11, 1
    %p40 = por %p38, %p39
    %p41 = scmp.ne.s32.totalorder %s33, %s36
    %p42 = scmp.eq.s32.totalorder %s11, 0
    %p43 = por %p41, %p42
    %p44 = scmp.ne.s32.totalorder %s33, %s36
    %p45 = scmp.eq.s32.totalorder %s16, 1
    %p46 = por %p44, %p45
    %p47 = scmp.ne.s32.totalorder %s36, %s37
    %p48 = scmp.eq.s32.totalorder %s16, 0
    %p49 = por %p47, %p48
    %p50 = scmp.ne.s32.totalorder %s36, %s37
    %p51 = scmp.eq.s32.totalorder %s17, 1
    %p52 = por %p50, %p51
    %p54 = scmp.ne.s32.totalorder %s37, %s53
    %p55 = scmp.eq.s32.totalorder %s17, 0
    %p56 = por %p54, %p55
    %s58 = sadd.s32 %s57, 1
    %p61 = scmp.eq.s32.totalorder %s11, 1
    %p62 = scmp.ne.s32.totalorder %s57, %s59
    %p63 = scmp.eq.s32.totalorder %s11, 0
    %p64 = por %p62, %p63
    %p65 = scmp.ne.s32.totalorder %s57, %s59
    %p66 = scmp.eq.s32.totalorder %s16, 1
    %p67 = por %p65, %p66
    %p68 = scmp.ne.s32.totalorder %s59, %s60
    %p69 = scmp.eq.s32.totalorder %s16, 0
    %p70 = por %p68, %p69
    %p71 = scmp.ne.s32.totalorder %s59, %s60
    %p72 = scmp.eq.s32.totalorder %s17, 1
    %p73 = por %p71, %p72
    %p75 = scmp.ne.s32.totalorder %s60, %s74
    %p76 = scmp.eq.s32.totalorder %s17, 0
    %p77 = por %p75, %p76
    %s79 = sadd.s32 %s78, 1
    %p82 = scmp.eq.s32.totalorder %s11, 1
    %p83 = scmp.ne.s32.totalorder %s78, %s80
    %p84 = scmp.eq.s32.totalorder %s11, 0
    %p85 = por %p83, %p84
    %p86 = scmp.ne.s32.totalorder %s78, %s80
    %p87 = scmp.eq.s32.totalorder %s16, 1
    %p88 = por %p86, %p87
    %p89 = scmp.ne.s32.totalorder %s80, %s81
    %p90 = scmp.eq.s32.totalorder %s16, 0
    %p91 = por %p89, %p90
    %p92 = scmp.ne.s32.totalorder %s80, %s81
    %p93 = scmp.eq.s32.totalorder %s17, 1
    %p94 = por %p92, %p93
    %p96 = scmp.ne.s32.totalorder %s81, %s95
    %p97 = scmp.eq.s32.totalorder %s17, 0
    %p98 = por %p96, %p97
    %s100 = sadd.s32 %s99, 1
    %p103 = scmp.eq.s32.totalorder %s11, 1
    %p104 = scmp.ne.s32.totalorder %s99, %s101
    %p105 = scmp.eq.s32.totalorder %s11, 0
    %p106 = por %p104, %p105
    %p107 = scmp.ne.s32.totalorder %s99, %s101
    %p108 = scmp.eq.s32.totalorder %s16, 1
    %p109 = por %p107, %p108
    %p110 = scmp.ne.s32.totalorder %s101, %s102
    %p111 = scmp.eq.s32.totalorder %s16, 0
    %p112 = por %p110, %p111
    %p113 = scmp.ne.s32.totalorder %s101, %s102
    %p114 = scmp.eq.s32.totalorder %s17, 1
    %p115 = por %p113, %p114
    %p117 = scmp.ne.s32.totalorder %s102, %s116
    %p118 = scmp.eq.s32.totalorder %s17, 0
    %p119 = por %p117, %p118
    %s121 = sadd.s32 %s120, 1
    %p124 = scmp.eq.s32.totalorder %s11, 1
    %p125 = scmp.ne.s32.totalorder %s120, %s122
    %p126 = scmp.eq.s32.totalorder %s11, 0
    %p127 = por %p125, %p126
    %p128 = scmp.ne.s32.totalorder %s120, %s122
    %p129 = scmp.eq.s32.totalorder %s16, 1
    %p130 = por %p128, %p129
    %p131 = scmp.ne.s32.totalorder %s122, %s123
    %p132 = scmp.eq.s32.totalorder %s16, 0
    %p133 = por %p131, %p132
    %p134 = scmp.ne.s32.totalorder %s122, %s123
    %p135 = scmp.eq.s32.totalorder %s17, 1
    %p136 = por %p134, %p135
    %p138 = scmp.ne.s32.totalorder %s123, %s137
    %p139 = scmp.eq.s32.totalorder %s17, 0
    %p140 = por %p138, %p139
    %s141 = ssub.s32 %s18, %s30
    %s142 = ssub.s32 %s19, %s26
    %s143 = sor.u32 %s141, %s142
    %p144 = scmp.eq.s32.totalorder %s143, 0
    %s146 = sadd.s32 %s145, 1
    %s147 = scalar_select %p144, %s145, %s146
    %p150 = pneg %p144
    %p151 = scmp.eq.s32.totalorder %s11, 1
    %p152 = por %p150, %p151
    %p153 = scmp.ne.s32.totalorder %s145, %s148
    %p154 = scmp.eq.s32.totalorder %s11, 0
    %p155 = por %p153, %p154
    %p156 = scmp.ne.s32.totalorder %s145, %s148
    %p157 = scmp.eq.s32.totalorder %s16, 1
    %p158 = por %p156, %p157
    %p159 = scmp.ne.s32.totalorder %s148, %s149
    %p160 = scmp.eq.s32.totalorder %s16, 0
    %p161 = por %p159, %p160
    %p162 = scmp.ne.s32.totalorder %s148, %s149
    %p163 = scmp.eq.s32.totalorder %s17, 1
    %p164 = por %p162, %p163
    %p166 = scmp.ne.s32.totalorder %s149, %s165
    %p167 = scmp.eq.s32.totalorder %s17, 0
    %p168 = por %p166, %p167
    %p169 = scmp.le.s32.totalorder 1, %s11
    %p170 = scmp.lt.s32.totalorder %s11, 3
    %p171 = pnand %p169, %p170
    %p172 = pneg %p171
    // Predicated region
    $region9: #{_center_head_impl.1} parent=5 // pred_check
      _
    $region10: #{_center_head_impl.1} parent=5 // pred_check_branch
      %174 = sbr.rel (%p171) target = $region12
    $region11: #{_center_head_impl.1} parent=5 // pred_region
      %s175 = ssub.s32 %s11, 1
      // Predicated region
      $region13: #{_center_head_impl.1} parent=11 // pred_check
        %p176 = pneg %p70
      $region14: #{_center_head_impl.1} parent=11 // pred_check_branch
        %178 = sbr.rel (%p176) target = $region16
      $region15: #{_center_head_impl.1} parent=11 // pred_region
        _
      $region16: #{_center_head_impl.1} parent=11 // pred_fallthru
        _
      // Predicated region
      $region17: #{_center_head_impl.1} parent=11 // pred_check
        %p179 = pneg %p91
      $region18: #{_center_head_impl.1} parent=11 // pred_check_branch
        %181 = sbr.rel (%p179) target = $region20
      $region19: #{_center_head_impl.1} parent=11 // pred_region
        _
      $region20: #{_center_head_impl.1} parent=11 // pred_fallthru
        _
      // Predicated region
      $region21: #{_center_head_impl.1} parent=11 // pred_check
        %p182 = pneg %p112
      $region22: #{_center_head_impl.1} parent=11 // pred_check_branch
        %184 = sbr.rel (%p182) target = $region24
      $region23: #{_center_head_impl.1} parent=11 // pred_region
        _
      $region24: #{_center_head_impl.1} parent=11 // pred_fallthru
        _
      // Predicated region
      $region25: #{_center_head_impl.1} parent=11 // pred_check
        %p185 = pneg %p133
      $region26: #{_center_head_impl.1} parent=11 // pred_check_branch
        %187 = sbr.rel (%p185) target = $region28
      $region27: #{_center_head_impl.1} parent=11 // pred_region
        _
      $region28: #{_center_head_impl.1} parent=11 // pred_fallthru
        _
    $region12: #{_center_head_impl.1} parent=5 // pred_fallthru
      _
    %p188 = scmp.lt.s32.totalorder %s11, 2
    // Predicated region
    $region29: #{_center_head_impl.1} parent=5 // pred_check
      %p189 = pneg %p188
    $region30: #{_center_head_impl.1} parent=5 // pred_check_branch
      %191 = sbr.rel (%p189) target = $region32
    $region31: #{_center_head_impl.1} parent=5 // pred_region
      // Predicated region
      $region33: #{_center_head_impl.1} parent=31 // pred_check
        %p192 = pneg %p43
      $region34: #{_center_head_impl.1} parent=31 // pred_check_branch
        %194 = sbr.rel (%p192) target = $region36
      $region35: #{_center_head_impl.1} parent=31 // pred_region
        %p195 = scmp.lt.s32.totalorder %s18, 1
        %s196 = scalar_select %p195, %s18, 1
        %s197 = smul.addr %s196, 54
        %s198 = smul.addr %s197, 8
        %s199 = scalar_lea.vmem %s0, %s198
      $region36: #{_center_head_impl.1} parent=31 // pred_fallthru
        _
    $region32: #{_center_head_impl.1} parent=5 // pred_fallthru
      _
    %p200 = scmp.le.s32.totalorder 1, %s11
    %p201 = scmp.lt.s32.totalorder %s11, 3
    %p202 = pnand %p200, %p201
    %p203 = pneg %p202
    // Predicated region
    $region37: #{_center_head_impl.1} parent=5 // pred_check
      _
    $region38: #{_center_head_impl.1} parent=5 // pred_check_branch
      %205 = sbr.rel (%p202) target = $region40
    $region39: #{_center_head_impl.1} parent=5 // pred_region
      %s206 = ssub.s32 %s11, 1
      %p207 = scmp.lt.s32.totalorder %s20, 1
      %s208 = scalar_select %p207, %s20, 1
      %s209 = smul.addr %s208, 54
      %s210 = smul.addr %s209, 8
      %s211 = scalar_lea.vmem %s0, %s210
      %p212 = pneg %p49
      %p213 = pneg %p46
      %p214 = pneg %p70
      %p215 = pneg %p67
      %p216 = pneg %p91
      %p217 = pneg %p88
      %p218 = pneg %p112
      %p219 = pneg %p109
      %p220 = pneg %p133
      %p221 = pneg %p130
      %p222 = pneg %p161
      %p223 = pneg %p158
      %s224 = smul.u32 32, %s21
      %p225 = scmp.lt.s32.totalorder %s20, 1
      %s226 = scalar_select %p225, %s20, 1
      %p227 = scmp.lt.s32.totalorder %s224, 31
      %s228 = scalar_select %p227, %s224, 31
      %s229 = smul.addr %s226, 32
      %s230 = sadd.s32 %s228, %s229
      %s231 = smul.addr %s230, 8
      %s232 = scalar_lea.vmem %s5, %s231
      %p233 = scmp.lt.s32.totalorder %s20, 1
      %s234 = scalar_select %p233, %s20, 1
      %s235 = smul.addr %s234, 54
      %s236 = smul.addr %s235, 8
      %s237 = scalar_lea.vmem %s0, %s236
      %s238 = smul.u32 32, %s21
      %p239 = scmp.lt.s32.totalorder %s20, 1
      %s240 = scalar_select %p239, %s20, 1
      %p241 = scmp.lt.s32.totalorder %s238, 31
      %s242 = scalar_select %p241, %s238, 31
      %s243 = smul.addr %s240, 32
      %s244 = sadd.s32 %s242, %s243
      %s245 = smul.addr %s244, 8
      %s246 = scalar_lea.vmem %s5, %s245
      %s247 = smul.u32 32, %s21
      %s248 = smul.u32 %s21, 16
      %s249 = smul.u32 %s248, 24
      %s250 = scalar_lea.vmem %s237, %s249
      %v251 = vld [vmem:[%s250] sm:$0xff]
      %v252 = vld [vmem:[%s250 + $0x8] sm:$0xff]
      %v253 = vld [vmem:[%s250 + $0x18] sm:$0xff]
      %v254 = vld [vmem:[%s250 + $0x20] sm:$0xff]
      %v255 = vld [vmem:[%s250 + $0x30] sm:$0xff]
      %v256 = vld [vmem:[%s250 + $0x38] sm:$0xff]
      %v257 = vld [vmem:[%s250 + $0x48] sm:$0xff]
      %v258 = vld [vmem:[%s250 + $0x50] sm:$0xff]
      %v259 = vld [vmem:[%s250 + $0x60] sm:$0xff]
      %v260 = vld [vmem:[%s250 + $0x68] sm:$0xff]
      %v261 = vld [vmem:[%s250 + $0x78] sm:$0xff]
      %v262 = vld [vmem:[%s250 + $0x80] sm:$0xff]
      %v263 = vld [vmem:[%s250 + $0x90] sm:$0xff]
      %v264 = vld [vmem:[%s250 + $0x98] sm:$0xff]
      %v265 = vld [vmem:[%s250 + $0xa8] sm:$0xff]
      %v266 = vld [vmem:[%s250 + $0xb0] sm:$0xff]
      %v267 = vld [vmem:[%s250 + $0xc0] sm:$0xff]
      %v268 = vld [vmem:[%s250 + $0xc8] sm:$0xff]
      %v269 = vld [vmem:[%s250 + $0xd8] sm:$0xff]
      %v270 = vld [vmem:[%s250 + $0xe0] sm:$0xff]
      %v271 = vld [vmem:[%s250 + $0xf0] sm:$0xff]
      %v272 = vld [vmem:[%s250 + $0xf8] sm:$0xff]
      %v273 = vld [vmem:[%s250 + $0x108] sm:$0xff]
      %v274 = vld [vmem:[%s250 + $0x110] sm:$0xff]
      %v275 = vld [vmem:[%s250 + $0x120] sm:$0xff]
      %v276 = vld [vmem:[%s250 + $0x128] sm:$0xff]
      %v277 = vld [vmem:[%s250 + $0x138] sm:$0xff]
      %v278 = vld [vmem:[%s250 + $0x140] sm:$0xff]
      %v279 = vld [vmem:[%s250 + $0x150] sm:$0xff]
      %v280 = vld [vmem:[%s250 + $0x158] sm:$0xff]
      %v281 = vld [vmem:[%s250 + $0x168] sm:$0xff]
      %v282 = vld [vmem:[%s250 + $0x170] sm:$0xff]
      %v283 = vld [vmem:[%s250 + $0x1] sm:$0xff]
      %v284 = vld [vmem:[%s250 + $0x9] sm:$0xff]
      %v285 = vld [vmem:[%s250 + $0x19] sm:$0xff]
      %v286 = vld [vmem:[%s250 + $0x21] sm:$0xff]
      %v287 = vld [vmem:[%s250 + $0x31] sm:$0xff]
      %v288 = vld [vmem:[%s250 + $0x39] sm:$0xff]
      %v289 = vld [vmem:[%s250 + $0x49] sm:$0xff]
      %v290 = vld [vmem:[%s250 + $0x51] sm:$0xff]
      %v291 = vld [vmem:[%s250 + $0x61] sm:$0xff]
      %v292 = vld [vmem:[%s250 + $0x69] sm:$0xff]
      %v293 = vld [vmem:[%s250 + $0x79] sm:$0xff]
      %v294 = vld [vmem:[%s250 + $0x81] sm:$0xff]
      %v295 = vld [vmem:[%s250 + $0x91] sm:$0xff]
      %v296 = vld [vmem:[%s250 + $0x99] sm:$0xff]
      %v297 = vld [vmem:[%s250 + $0xa9] sm:$0xff]
      %v298 = vld [vmem:[%s250 + $0xb1] sm:$0xff]
      %v299 = vld [vmem:[%s250 + $0xc1] sm:$0xff]
      %v300 = vld [vmem:[%s250 + $0xc9] sm:$0xff]
      %v301 = vld [vmem:[%s250 + $0xd9] sm:$0xff]
      %v302 = vld [vmem:[%s250 + $0xe1] sm:$0xff]
      %v303 = vld [vmem:[%s250 + $0xf1] sm:$0xff]
      %v304 = vld [vmem:[%s250 + $0xf9] sm:$0xff]
      %v305 = vld [vmem:[%s250 + $0x109] sm:$0xff]
      %v306 = vld [vmem:[%s250 + $0x111] sm:$0xff]
      %v307 = vld [vmem:[%s250 + $0x121] sm:$0xff]
      %v308 = vld [vmem:[%s250 + $0x129] sm:$0xff]
      %v309 = vld [vmem:[%s250 + $0x139] sm:$0xff]
      %v310 = vld [vmem:[%s250 + $0x141] sm:$0xff]
      %v311 = vld [vmem:[%s250 + $0x151] sm:$0xff]
      %v312 = vld [vmem:[%s250 + $0x159] sm:$0xff]
      %v313 = vld [vmem:[%s250 + $0x169] sm:$0xff]
      %v314 = vld [vmem:[%s250 + $0x171] sm:$0xff]
      %v315 = vld [vmem:[%s250 + $0x2] sm:$0xff]
      %v316 = vld [vmem:[%s250 + $0xa] sm:$0xff]
      %v317 = vld [vmem:[%s250 + $0x1a] sm:$0xff]
      %v318 = vld [vmem:[%s250 + $0x22] sm:$0xff]
      %v319 = vld [vmem:[%s250 + $0x32] sm:$0xff]
      %v320 = vld [vmem:[%s250 + $0x3a] sm:$0xff]
      %v321 = vld [vmem:[%s250 + $0x4a] sm:$0xff]
      %v322 = vld [vmem:[%s250 + $0x52] sm:$0xff]
      %v323 = vld [vmem:[%s250 + $0x62] sm:$0xff]
      %v324 = vld [vmem:[%s250 + $0x6a] sm:$0xff]
      %v325 = vld [vmem:[%s250 + $0x7a] sm:$0xff]
      %v326 = vld [vmem:[%s250 + $0x82] sm:$0xff]
      %v327 = vld [vmem:[%s250 + $0x92] sm:$0xff]
      %v328 = vld [vmem:[%s250 + $0x9a] sm:$0xff]
      %v329 = vld [vmem:[%s250 + $0xaa] sm:$0xff]
      %v330 = vld [vmem:[%s250 + $0xb2] sm:$0xff]
      %v331 = vld [vmem:[%s250 + $0xc2] sm:$0xff]
      %v332 = vld [vmem:[%s250 + $0xca] sm:$0xff]
      %v333 = vld [vmem:[%s250 + $0xda] sm:$0xff]
      %v334 = vld [vmem:[%s250 + $0xe2] sm:$0xff]
      %v335 = vld [vmem:[%s250 + $0xf2] sm:$0xff]
      %v336 = vld [vmem:[%s250 + $0xfa] sm:$0xff]
      %v337 = vld [vmem:[%s250 + $0x10a] sm:$0xff]
      %v338 = vld [vmem:[%s250 + $0x112] sm:$0xff]
      %v339 = vld [vmem:[%s250 + $0x122] sm:$0xff]
      %v340 = vld [vmem:[%s250 + $0x12a] sm:$0xff]
      %v341 = vld [vmem:[%s250 + $0x13a] sm:$0xff]
      %v342 = vld [vmem:[%s250 + $0x142] sm:$0xff]
      %v343 = vld [vmem:[%s250 + $0x152] sm:$0xff]
      %v344 = vld [vmem:[%s250 + $0x15a] sm:$0xff]
      %v345 = vld [vmem:[%s250 + $0x16a] sm:$0xff]
      %v346 = vld [vmem:[%s250 + $0x172] sm:$0xff]
      %s347 = sadd.s32 %s248, 1
      %s348 = smul.u32 %s347, 24
      %s349 = scalar_lea.vmem %s237, %s348
      %v350 = vld [vmem:[%s349] sm:$0xff]
      %v351 = vld [vmem:[%s349 + $0x8] sm:$0xff]
      %v352 = vld [vmem:[%s349 + $0x18] sm:$0xff]
      %v353 = vld [vmem:[%s349 + $0x20] sm:$0xff]
      %v354 = vld [vmem:[%s349 + $0x30] sm:$0xff]
      %v355 = vld [vmem:[%s349 + $0x38] sm:$0xff]
      %v356 = vld [vmem:[%s349 + $0x48] sm:$0xff]
      %v357 = vld [vmem:[%s349 + $0x50] sm:$0xff]
      %v358 = vld [vmem:[%s349 + $0x60] sm:$0xff]
      %v359 = vld [vmem:[%s349 + $0x68] sm:$0xff]
      %v360 = vld [vmem:[%s349 + $0x78] sm:$0xff]
      %v361 = vld [vmem:[%s349 + $0x80] sm:$0xff]
      %v362 = vld [vmem:[%s349 + $0x90] sm:$0xff]
      %v363 = vld [vmem:[%s349 + $0x98] sm:$0xff]
      %v364 = vld [vmem:[%s349 + $0xa8] sm:$0xff]
      %v365 = vld [vmem:[%s349 + $0xb0] sm:$0xff]
      %v366 = vld [vmem:[%s349 + $0xc0] sm:$0xff]
      %v367 = vld [vmem:[%s349 + $0xc8] sm:$0xff]
      %v368 = vld [vmem:[%s349 + $0xd8] sm:$0xff]
      %v369 = vld [vmem:[%s349 + $0xe0] sm:$0xff]
      %v370 = vld [vmem:[%s349 + $0xf0] sm:$0xff]
      %v371 = vld [vmem:[%s349 + $0xf8] sm:$0xff]
      %v372 = vld [vmem:[%s349 + $0x108] sm:$0xff]
      %v373 = vld [vmem:[%s349 + $0x110] sm:$0xff]
      %v374 = vld [vmem:[%s349 + $0x120] sm:$0xff]
      %v375 = vld [vmem:[%s349 + $0x128] sm:$0xff]
      %v376 = vld [vmem:[%s349 + $0x138] sm:$0xff]
      %v377 = vld [vmem:[%s349 + $0x140] sm:$0xff]
      %v378 = vld [vmem:[%s349 + $0x150] sm:$0xff]
      %v379 = vld [vmem:[%s349 + $0x158] sm:$0xff]
      %v380 = vld [vmem:[%s349 + $0x168] sm:$0xff]
      %v381 = vld [vmem:[%s349 + $0x170] sm:$0xff]
      %v382 = vld [vmem:[%s349 + $0x1] sm:$0xff]
      %v383 = vld [vmem:[%s349 + $0x9] sm:$0xff]
      %v384 = vld [vmem:[%s349 + $0x19] sm:$0xff]
      %v385 = vld [vmem:[%s349 + $0x21] sm:$0xff]
      %v386 = vld [vmem:[%s349 + $0x31] sm:$0xff]
      %v387 = vld [vmem:[%s349 + $0x39] sm:$0xff]
      %v388 = vld [vmem:[%s349 + $0x49] sm:$0xff]
      %v389 = vld [vmem:[%s349 + $0x51] sm:$0xff]
      %v390 = vld [vmem:[%s349 + $0x61] sm:$0xff]
      %v391 = vld [vmem:[%s349 + $0x69] sm:$0xff]
      %v392 = vld [vmem:[%s349 + $0x79] sm:$0xff]
      %v393 = vld [vmem:[%s349 + $0x81] sm:$0xff]
      %v394 = vld [vmem:[%s349 + $0x91] sm:$0xff]
      %v395 = vld [vmem:[%s349 + $0x99] sm:$0xff]
      %v396 = vld [vmem:[%s349 + $0xa9] sm:$0xff]
      %v397 = vld [vmem:[%s349 + $0xb1] sm:$0xff]
      %v398 = vld [vmem:[%s349 + $0xc1] sm:$0xff]
      %v399 = vld [vmem:[%s349 + $0xc9] sm:$0xff]
      %v400 = vld [vmem:[%s349 + $0xd9] sm:$0xff]
      %v401 = vld [vmem:[%s349 + $0xe1] sm:$0xff]
      %v402 = vld [vmem:[%s349 + $0xf1] sm:$0xff]
      %v403 = vld [vmem:[%s349 + $0xf9] sm:$0xff]
      %v404 = vld [vmem:[%s349 + $0x109] sm:$0xff]
      %v405 = vld [vmem:[%s349 + $0x111] sm:$0xff]
      %v406 = vld [vmem:[%s349 + $0x121] sm:$0xff]
      %v407 = vld [vmem:[%s349 + $0x129] sm:$0xff]
      %v408 = vld [vmem:[%s349 + $0x139] sm:$0xff]
      %v409 = vld [vmem:[%s349 + $0x141] sm:$0xff]
      %v410 = vld [vmem:[%s349 + $0x151] sm:$0xff]
      %v411 = vld [vmem:[%s349 + $0x159] sm:$0xff]
      %v412 = vld [vmem:[%s349 + $0x169] sm:$0xff]
      %v413 = vld [vmem:[%s349 + $0x171] sm:$0xff]
      %v414 = vld [vmem:[%s349 + $0x2] sm:$0xff]
      %v415 = vld [vmem:[%s349 + $0xa] sm:$0xff]
      %v416 = vld [vmem:[%s349 + $0x1a] sm:$0xff]
      %v417 = vld [vmem:[%s349 + $0x22] sm:$0xff]
      %v418 = vld [vmem:[%s349 + $0x32] sm:$0xff]
      %v419 = vld [vmem:[%s349 + $0x3a] sm:$0xff]
      %v420 = vld [vmem:[%s349 + $0x4a] sm:$0xff]
      %v421 = vld [vmem:[%s349 + $0x52] sm:$0xff]
      %v422 = vld [vmem:[%s349 + $0x62] sm:$0xff]
      %v423 = vld [vmem:[%s349 + $0x6a] sm:$0xff]
      %v424 = vld [vmem:[%s349 + $0x7a] sm:$0xff]
      %v425 = vld [vmem:[%s349 + $0x82] sm:$0xff]
      %v426 = vld [vmem:[%s349 + $0x92] sm:$0xff]
      %v427 = vld [vmem:[%s349 + $0x9a] sm:$0xff]
      %v428 = vld [vmem:[%s349 + $0xaa] sm:$0xff]
      %v429 = vld [vmem:[%s349 + $0xb2] sm:$0xff]
      %v430 = vld [vmem:[%s349 + $0xc2] sm:$0xff]
      %v431 = vld [vmem:[%s349 + $0xca] sm:$0xff]
      %v432 = vld [vmem:[%s349 + $0xda] sm:$0xff]
      %v433 = vld [vmem:[%s349 + $0xe2] sm:$0xff]
      %v434 = vld [vmem:[%s349 + $0xf2] sm:$0xff]
      %v435 = vld [vmem:[%s349 + $0xfa] sm:$0xff]
      %v436 = vld [vmem:[%s349 + $0x10a] sm:$0xff]
      %v437 = vld [vmem:[%s349 + $0x112] sm:$0xff]
      %v438 = vld [vmem:[%s349 + $0x122] sm:$0xff]
      %v439 = vld [vmem:[%s349 + $0x12a] sm:$0xff]
      %v440 = vld [vmem:[%s349 + $0x13a] sm:$0xff]
      %v441 = vld [vmem:[%s349 + $0x142] sm:$0xff]
      %v442 = vld [vmem:[%s349 + $0x152] sm:$0xff]
      %v443 = vld [vmem:[%s349 + $0x15a] sm:$0xff]
      %v444 = vld [vmem:[%s349 + $0x16a] sm:$0xff]
      %v445 = vld [vmem:[%s349 + $0x172] sm:$0xff]
      %s446 = sadd.s32 %s248, 2
      %s447 = smul.u32 %s446, 24
      %s448 = scalar_lea.vmem %s237, %s447
      %v449 = vld [vmem:[%s448] sm:$0xff]
      %v450 = vld [vmem:[%s448 + $0x8] sm:$0xff]
      %v451 = vld [vmem:[%s448 + $0x18] sm:$0xff]
      %v452 = vld [vmem:[%s448 + $0x20] sm:$0xff]
      %v453 = vld [vmem:[%s448 + $0x30] sm:$0xff]
      %v454 = vld [vmem:[%s448 + $0x38] sm:$0xff]
      %v455 = vld [vmem:[%s448 + $0x48] sm:$0xff]
      %v456 = vld [vmem:[%s448 + $0x50] sm:$0xff]
      %v457 = vld [vmem:[%s448 + $0x60] sm:$0xff]
      %v458 = vld [vmem:[%s448 + $0x68] sm:$0xff]
      %v459 = vld [vmem:[%s448 + $0x78] sm:$0xff]
      %v460 = vld [vmem:[%s448 + $0x80] sm:$0xff]
      %v461 = vld [vmem:[%s448 + $0x90] sm:$0xff]
      %v462 = vld [vmem:[%s448 + $0x98] sm:$0xff]
      %v463 = vld [vmem:[%s448 + $0xa8] sm:$0xff]
      %v464 = vld [vmem:[%s448 + $0xb0] sm:$0xff]
      %v465 = vld [vmem:[%s448 + $0xc0] sm:$0xff]
      %v466 = vld [vmem:[%s448 + $0xc8] sm:$0xff]
      %v467 = vld [vmem:[%s448 + $0xd8] sm:$0xff]
      %v468 = vld [vmem:[%s448 + $0xe0] sm:$0xff]
      %v469 = vld [vmem:[%s448 + $0xf0] sm:$0xff]
      %v470 = vld [vmem:[%s448 + $0xf8] sm:$0xff]
      %v471 = vld [vmem:[%s448 + $0x108] sm:$0xff]
      %v472 = vld [vmem:[%s448 + $0x110] sm:$0xff]
      %v473 = vld [vmem:[%s448 + $0x120] sm:$0xff]
      %v474 = vld [vmem:[%s448 + $0x128] sm:$0xff]
      %v475 = vld [vmem:[%s448 + $0x138] sm:$0xff]
      %v476 = vld [vmem:[%s448 + $0x140] sm:$0xff]
      %v477 = vld [vmem:[%s448 + $0x150] sm:$0xff]
      %v478 = vld [vmem:[%s448 + $0x158] sm:$0xff]
      %v479 = vld [vmem:[%s448 + $0x168] sm:$0xff]
      %v480 = vld [vmem:[%s448 + $0x170] sm:$0xff]
      %v481 = vld [vmem:[%s448 + $0x1] sm:$0xff]
      %v482 = vld [vmem:[%s448 + $0x9] sm:$0xff]
      %v483 = vld [vmem:[%s448 + $0x19] sm:$0xff]
      %v484 = vld [vmem:[%s448 + $0x21] sm:$0xff]
      %v485 = vld [vmem:[%s448 + $0x31] sm:$0xff]
      %v486 = vld [vmem:[%s448 + $0x39] sm:$0xff]
      %v487 = vld [vmem:[%s448 + $0x49] sm:$0xff]
      %v488 = vld [vmem:[%s448 + $0x51] sm:$0xff]
      %v489 = vld [vmem:[%s448 + $0x61] sm:$0xff]
      %v490 = vld [vmem:[%s448 + $0x69] sm:$0xff]
      %v491 = vld [vmem:[%s448 + $0x79] sm:$0xff]
      %v492 = vld [vmem:[%s448 + $0x81] sm:$0xff]
      %v493 = vld [vmem:[%s448 + $0x91] sm:$0xff]
      %v494 = vld [vmem:[%s448 + $0x99] sm:$0xff]
      %v495 = vld [vmem:[%s448 + $0xa9] sm:$0xff]
      %v496 = vld [vmem:[%s448 + $0xb1] sm:$0xff]
      %v497 = vld [vmem:[%s448 + $0xc1] sm:$0xff]
      %v498 = vld [vmem:[%s448 + $0xc9] sm:$0xff]
      %v499 = vld [vmem:[%s448 + $0xd9] sm:$0xff]
      %v500 = vld [vmem:[%s448 + $0xe1] sm:$0xff]
      %v501 = vld [vmem:[%s448 + $0xf1] sm:$0xff]
      %v502 = vld [vmem:[%s448 + $0xf9] sm:$0xff]
      %v503 = vld [vmem:[%s448 + $0x109] sm:$0xff]
      %v504 = vld [vmem:[%s448 + $0x111] sm:$0xff]
      %v505 = vld [vmem:[%s448 + $0x121] sm:$0xff]
      %v506 = vld [vmem:[%s448 + $0x129] sm:$0xff]
      %v507 = vld [vmem:[%s448 + $0x139] sm:$0xff]
      %v508 = vld [vmem:[%s448 + $0x141] sm:$0xff]
      %v509 = vld [vmem:[%s448 + $0x151] sm:$0xff]
      %v510 = vld [vmem:[%s448 + $0x159] sm:$0xff]
      %v511 = vld [vmem:[%s448 + $0x169] sm:$0xff]
      %v512 = vld [vmem:[%s448 + $0x171] sm:$0xff]
      %v513 = vld [vmem:[%s448 + $0x2] sm:$0xff]
      %v514 = vld [vmem:[%s448 + $0xa] sm:$0xff]
      %v515 = vld [vmem:[%s448 + $0x1a] sm:$0xff]
      %v516 = vld [vmem:[%s448 + $0x22] sm:$0xff]
      %v517 = vld [vmem:[%s448 + $0x32] sm:$0xff]
      %v518 = vld [vmem:[%s448 + $0x3a] sm:$0xff]
      %v519 = vld [vmem:[%s448 + $0x4a] sm:$0xff]
      %v520 = vld [vmem:[%s448 + $0x52] sm:$0xff]
      %v521 = vld [vmem:[%s448 + $0x62] sm:$0xff]
      %v522 = vld [vmem:[%s448 + $0x6a] sm:$0xff]
      %v523 = vld [vmem:[%s448 + $0x7a] sm:$0xff]
      %v524 = vld [vmem:[%s448 + $0x82] sm:$0xff]
      %v525 = vld [vmem:[%s448 + $0x92] sm:$0xff]
      %v526 = vld [vmem:[%s448 + $0x9a] sm:$0xff]
      %v527 = vld [vmem:[%s448 + $0xaa] sm:$0xff]
      %v528 = vld [vmem:[%s448 + $0xb2] sm:$0xff]
      %v529 = vld [vmem:[%s448 + $0xc2] sm:$0xff]
      %v530 = vld [vmem:[%s448 + $0xca] sm:$0xff]
      %v531 = vld [vmem:[%s448 + $0xda] sm:$0xff]
      %v532 = vld [vmem:[%s448 + $0xe2] sm:$0xff]
      %v533 = vld [vmem:[%s448 + $0xf2] sm:$0xff]
      %v534 = vld [vmem:[%s448 + $0xfa] sm:$0xff]
      %v535 = vld [vmem:[%s448 + $0x10a] sm:$0xff]
      %v536 = vld [vmem:[%s448 + $0x112] sm:$0xff]
      %v537 = vld [vmem:[%s448 + $0x122] sm:$0xff]
      %v538 = vld [vmem:[%s448 + $0x12a] sm:$0xff]
      %v539 = vld [vmem:[%s448 + $0x13a] sm:$0xff]
      %v540 = vld [vmem:[%s448 + $0x142] sm:$0xff]
      %v541 = vld [vmem:[%s448 + $0x152] sm:$0xff]
      %v542 = vld [vmem:[%s448 + $0x15a] sm:$0xff]
      %v543 = vld [vmem:[%s448 + $0x16a] sm:$0xff]
      %v544 = vld [vmem:[%s448 + $0x172] sm:$0xff]
      %577 = vrot.lane.b32.xlu0 %v283, 4
      %v578 = vpop.permute.xlu0 %577
      %579 = vrot.lane.b32.xlu0 %v284, 4
      %v580 = vpop.permute.xlu0 %579
      %581 = vrot.lane.b32.xlu0 %v285, 4
      %v582 = vpop.permute.xlu0 %581
      %583 = vrot.lane.b32.xlu0 %v286, 4
      %v584 = vpop.permute.xlu0 %583
      %585 = vrot.lane.b32.xlu0 %v287, 4
      %v586 = vpop.permute.xlu0 %585
      %587 = vrot.lane.b32.xlu0 %v288, 4
      %v588 = vpop.permute.xlu0 %587
      %589 = vrot.lane.b32.xlu0 %v289, 4
      %v590 = vpop.permute.xlu0 %589
      %591 = vrot.lane.b32.xlu0 %v290, 4
      %v592 = vpop.permute.xlu0 %591
      %593 = vrot.lane.b32.xlu0 %v291, 4
      %v594 = vpop.permute.xlu0 %593
      %595 = vrot.lane.b32.xlu0 %v292, 4
      %v596 = vpop.permute.xlu0 %595
      %597 = vrot.lane.b32.xlu0 %v293, 4
      %v598 = vpop.permute.xlu0 %597
      %599 = vrot.lane.b32.xlu0 %v294, 4
      %v600 = vpop.permute.xlu0 %599
      %601 = vrot.lane.b32.xlu0 %v295, 4
      %v602 = vpop.permute.xlu0 %601
      %603 = vrot.lane.b32.xlu0 %v296, 4
      %v604 = vpop.permute.xlu0 %603
      %605 = vrot.lane.b32.xlu0 %v297, 4
      %v606 = vpop.permute.xlu0 %605
      %607 = vrot.lane.b32.xlu0 %v298, 4
      %v608 = vpop.permute.xlu0 %607
      %609 = vrot.lane.b32.xlu0 %v299, 4
      %v610 = vpop.permute.xlu0 %609
      %611 = vrot.lane.b32.xlu0 %v300, 4
      %v612 = vpop.permute.xlu0 %611
      %613 = vrot.lane.b32.xlu0 %v301, 4
      %v614 = vpop.permute.xlu0 %613
      %615 = vrot.lane.b32.xlu0 %v302, 4
      %v616 = vpop.permute.xlu0 %615
      %617 = vrot.lane.b32.xlu0 %v303, 4
      %v618 = vpop.permute.xlu0 %617
      %619 = vrot.lane.b32.xlu0 %v304, 4
      %v620 = vpop.permute.xlu0 %619
      %621 = vrot.lane.b32.xlu0 %v305, 4
      %v622 = vpop.permute.xlu0 %621
      %623 = vrot.lane.b32.xlu0 %v306, 4
      %v624 = vpop.permute.xlu0 %623
      %625 = vrot.lane.b32.xlu0 %v307, 4
      %v626 = vpop.permute.xlu0 %625
      %627 = vrot.lane.b32.xlu0 %v308, 4
      %v628 = vpop.permute.xlu0 %627
      %629 = vrot.lane.b32.xlu0 %v309, 4
      %v630 = vpop.permute.xlu0 %629
      %631 = vrot.lane.b32.xlu0 %v310, 4
      %v632 = vpop.permute.xlu0 %631
      %633 = vrot.lane.b32.xlu0 %v311, 4
      %v634 = vpop.permute.xlu0 %633
      %635 = vrot.lane.b32.xlu0 %v312, 4
      %v636 = vpop.permute.xlu0 %635
      %637 = vrot.lane.b32.xlu0 %v313, 4
      %v638 = vpop.permute.xlu0 %637
      %639 = vrot.lane.b32.xlu0 %v314, 4
      %v640 = vpop.permute.xlu0 %639
      %705 = vrot.lane.b32.xlu0 %v315, 8
      %v706 = vpop.permute.xlu0 %705
      %707 = vrot.lane.b32.xlu0 %v316, 8
      %v708 = vpop.permute.xlu0 %707
      %709 = vrot.lane.b32.xlu0 %v317, 8
      %v710 = vpop.permute.xlu0 %709
      %711 = vrot.lane.b32.xlu0 %v318, 8
      %v712 = vpop.permute.xlu0 %711
      %713 = vrot.lane.b32.xlu0 %v319, 8
      %v714 = vpop.permute.xlu0 %713
      %715 = vrot.lane.b32.xlu0 %v320, 8
      %v716 = vpop.permute.xlu0 %715
      %717 = vrot.lane.b32.xlu0 %v321, 8
      %v718 = vpop.permute.xlu0 %717
      %719 = vrot.lane.b32.xlu0 %v322, 8
      %v720 = vpop.permute.xlu0 %719
      %721 = vrot.lane.b32.xlu0 %v323, 8
      %v722 = vpop.permute.xlu0 %721
      %723 = vrot.lane.b32.xlu0 %v324, 8
      %v724 = vpop.permute.xlu0 %723
      %725 = vrot.lane.b32.xlu0 %v325, 8
      %v726 = vpop.permute.xlu0 %725
      %727 = vrot.lane.b32.xlu0 %v326, 8
      %v728 = vpop.permute.xlu0 %727
      %729 = vrot.lane.b32.xlu0 %v327, 8
      %v730 = vpop.permute.xlu0 %729
      %731 = vrot.lane.b32.xlu0 %v328, 8
      %v732 = vpop.permute.xlu0 %731
      %733 = vrot.lane.b32.xlu0 %v329, 8
      %v734 = vpop.permute.xlu0 %733
      %735 = vrot.lane.b32.xlu0 %v330, 8
      %v736 = vpop.permute.xlu0 %735
      %737 = vrot.lane.b32.xlu0 %v331, 8
      %v738 = vpop.permute.xlu0 %737
      %739 = vrot.lane.b32.xlu0 %v332, 8
      %v740 = vpop.permute.xlu0 %739
      %741 = vrot.lane.b32.xlu0 %v333, 8
      %v742 = vpop.permute.xlu0 %741
      %743 = vrot.lane.b32.xlu0 %v334, 8
      %v744 = vpop.permute.xlu0 %743
      %745 = vrot.lane.b32.xlu0 %v335, 8
      %v746 = vpop.permute.xlu0 %745
      %747 = vrot.lane.b32.xlu0 %v336, 8
      %v748 = vpop.permute.xlu0 %747
      %749 = vrot.lane.b32.xlu0 %v337, 8
      %v750 = vpop.permute.xlu0 %749
      %751 = vrot.lane.b32.xlu0 %v338, 8
      %v752 = vpop.permute.xlu0 %751
      %753 = vrot.lane.b32.xlu0 %v339, 8
      %v754 = vpop.permute.xlu0 %753
      %755 = vrot.lane.b32.xlu0 %v340, 8
      %v756 = vpop.permute.xlu0 %755
      %757 = vrot.lane.b32.xlu0 %v341, 8
      %v758 = vpop.permute.xlu0 %757
      %759 = vrot.lane.b32.xlu0 %v342, 8
      %v760 = vpop.permute.xlu0 %759
      %761 = vrot.lane.b32.xlu0 %v343, 8
      %v762 = vpop.permute.xlu0 %761
      %763 = vrot.lane.b32.xlu0 %v344, 8
      %v764 = vpop.permute.xlu0 %763
      %765 = vrot.lane.b32.xlu0 %v345, 8
      %v766 = vpop.permute.xlu0 %765
      %767 = vrot.lane.b32.xlu0 %v346, 8
      %v768 = vpop.permute.xlu0 %767
      %833 = vrot.lane.b32.xlu0 %v350, 12
      %v834 = vpop.permute.xlu0 %833
      %835 = vrot.lane.b32.xlu0 %v351, 12
      %v836 = vpop.permute.xlu0 %835
      %837 = vrot.lane.b32.xlu0 %v352, 12
      %v838 = vpop.permute.xlu0 %837
      %839 = vrot.lane.b32.xlu0 %v353, 12
      %v840 = vpop.permute.xlu0 %839
      %841 = vrot.lane.b32.xlu0 %v354, 12
      %v842 = vpop.permute.xlu0 %841
      %843 = vrot.lane.b32.xlu0 %v355, 12
      %v844 = vpop.permute.xlu0 %843
      %845 = vrot.lane.b32.xlu0 %v356, 12
      %v846 = vpop.permute.xlu0 %845
      %847 = vrot.lane.b32.xlu0 %v357, 12
      %v848 = vpop.permute.xlu0 %847
      %849 = vrot.lane.b32.xlu0 %v358, 12
      %v850 = vpop.permute.xlu0 %849
      %851 = vrot.lane.b32.xlu0 %v359, 12
      %v852 = vpop.permute.xlu0 %851
      %853 = vrot.lane.b32.xlu0 %v360, 12
      %v854 = vpop.permute.xlu0 %853
      %855 = vrot.lane.b32.xlu0 %v361, 12
      %v856 = vpop.permute.xlu0 %855
      %857 = vrot.lane.b32.xlu0 %v362, 12
      %v858 = vpop.permute.xlu0 %857
      %859 = vrot.lane.b32.xlu0 %v363, 12
      %v860 = vpop.permute.xlu0 %859
      %861 = vrot.lane.b32.xlu0 %v364, 12
      %v862 = vpop.permute.xlu0 %861
      %863 = vrot.lane.b32.xlu0 %v365, 12
      %v864 = vpop.permute.xlu0 %863
      %865 = vrot.lane.b32.xlu0 %v366, 12
      %v866 = vpop.permute.xlu0 %865
      %867 = vrot.lane.b32.xlu0 %v367, 12
      %v868 = vpop.permute.xlu0 %867
      %869 = vrot.lane.b32.xlu0 %v368, 12
      %v870 = vpop.permute.xlu0 %869
      %871 = vrot.lane.b32.xlu0 %v369, 12
      %v872 = vpop.permute.xlu0 %871
      %873 = vrot.lane.b32.xlu0 %v370, 12
      %v874 = vpop.permute.xlu0 %873
      %875 = vrot.lane.b32.xlu0 %v371, 12
      %v876 = vpop.permute.xlu0 %875
      %877 = vrot.lane.b32.xlu0 %v372, 12
      %v878 = vpop.permute.xlu0 %877
      %879 = vrot.lane.b32.xlu0 %v373, 12
      %v880 = vpop.permute.xlu0 %879
      %881 = vrot.lane.b32.xlu0 %v374, 12
      %v882 = vpop.permute.xlu0 %881
      %883 = vrot.lane.b32.xlu0 %v375, 12
      %v884 = vpop.permute.xlu0 %883
      %885 = vrot.lane.b32.xlu0 %v376, 12
      %v886 = vpop.permute.xlu0 %885
      %887 = vrot.lane.b32.xlu0 %v377, 12
      %v888 = vpop.permute.xlu0 %887
      %889 = vrot.lane.b32.xlu0 %v378, 12
      %v890 = vpop.permute.xlu0 %889
      %891 = vrot.lane.b32.xlu0 %v379, 12
      %v892 = vpop.permute.xlu0 %891
      %893 = vrot.lane.b32.xlu0 %v380, 12
      %v894 = vpop.permute.xlu0 %893
      %895 = vrot.lane.b32.xlu0 %v381, 12
      %v896 = vpop.permute.xlu0 %895
      %961 = vrot.lane.b32.xlu0 %v382, 16
      %v962 = vpop.permute.xlu0 %961
      %963 = vrot.lane.b32.xlu0 %v383, 16
      %v964 = vpop.permute.xlu0 %963
      %965 = vrot.lane.b32.xlu0 %v384, 16
      %v966 = vpop.permute.xlu0 %965
      %967 = vrot.lane.b32.xlu0 %v385, 16
      %v968 = vpop.permute.xlu0 %967
      %969 = vrot.lane.b32.xlu0 %v386, 16
      %v970 = vpop.permute.xlu0 %969
      %971 = vrot.lane.b32.xlu0 %v387, 16
      %v972 = vpop.permute.xlu0 %971
      %973 = vrot.lane.b32.xlu0 %v388, 16
      %v974 = vpop.permute.xlu0 %973
      %975 = vrot.lane.b32.xlu0 %v389, 16
      %v976 = vpop.permute.xlu0 %975
      %977 = vrot.lane.b32.xlu0 %v390, 16
      %v978 = vpop.permute.xlu0 %977
      %979 = vrot.lane.b32.xlu0 %v391, 16
      %v980 = vpop.permute.xlu0 %979
      %981 = vrot.lane.b32.xlu0 %v392, 16
      %v982 = vpop.permute.xlu0 %981
      %983 = vrot.lane.b32.xlu0 %v393, 16
      %v984 = vpop.permute.xlu0 %983
      %985 = vrot.lane.b32.xlu0 %v394, 16
      %v986 = vpop.permute.xlu0 %985
      %987 = vrot.lane.b32.xlu0 %v395, 16
      %v988 = vpop.permute.xlu0 %987
      %989 = vrot.lane.b32.xlu0 %v396, 16
      %v990 = vpop.permute.xlu0 %989
      %991 = vrot.lane.b32.xlu0 %v397, 16
      %v992 = vpop.permute.xlu0 %991
      %993 = vrot.lane.b32.xlu0 %v398, 16
      %v994 = vpop.permute.xlu0 %993
      %995 = vrot.lane.b32.xlu0 %v399, 16
      %v996 = vpop.permute.xlu0 %995
      %997 = vrot.lane.b32.xlu0 %v400, 16
      %v998 = vpop.permute.xlu0 %997
      %999 = vrot.lane.b32.xlu0 %v401, 16
      %v1000 = vpop.permute.xlu0 %999
      %1001 = vrot.lane.b32.xlu0 %v402, 16
      %v1002 = vpop.permute.xlu0 %1001
      %1003 = vrot.lane.b32.xlu0 %v403, 16
      %v1004 = vpop.permute.xlu0 %1003
      %1005 = vrot.lane.b32.xlu0 %v404, 16
      %v1006 = vpop.permute.xlu0 %1005
      %1007 = vrot.lane.b32.xlu0 %v405, 16
      %v1008 = vpop.permute.xlu0 %1007
      %1009 = vrot.lane.b32.xlu0 %v406, 16
      %v1010 = vpop.permute.xlu0 %1009
      %1011 = vrot.lane.b32.xlu0 %v407, 16
      %v1012 = vpop.permute.xlu0 %1011
      %1013 = vrot.lane.b32.xlu0 %v408, 16
      %v1014 = vpop.permute.xlu0 %1013
      %1015 = vrot.lane.b32.xlu0 %v409, 16
      %v1016 = vpop.permute.xlu0 %1015
      %1017 = vrot.lane.b32.xlu0 %v410, 16
      %v1018 = vpop.permute.xlu0 %1017
      %1019 = vrot.lane.b32.xlu0 %v411, 16
      %v1020 = vpop.permute.xlu0 %1019
      %1021 = vrot.lane.b32.xlu0 %v412, 16
      %v1022 = vpop.permute.xlu0 %1021
      %1023 = vrot.lane.b32.xlu0 %v413, 16
      %v1024 = vpop.permute.xlu0 %1023
      %1089 = vrot.lane.b32.xlu0 %v414, 20
      %v1090 = vpop.permute.xlu0 %1089
      %1091 = vrot.lane.b32.xlu0 %v415, 20
      %v1092 = vpop.permute.xlu0 %1091
      %1093 = vrot.lane.b32.xlu0 %v416, 20
      %v1094 = vpop.permute.xlu0 %1093
      %1095 = vrot.lane.b32.xlu0 %v417, 20
      %v1096 = vpop.permute.xlu0 %1095
      %1097 = vrot.lane.b32.xlu0 %v418, 20
      %v1098 = vpop.permute.xlu0 %1097
      %1099 = vrot.lane.b32.xlu0 %v419, 20
      %v1100 = vpop.permute.xlu0 %1099
      %1101 = vrot.lane.b32.xlu0 %v420, 20
      %v1102 = vpop.permute.xlu0 %1101
      %1103 = vrot.lane.b32.xlu0 %v421, 20
      %v1104 = vpop.permute.xlu0 %1103
      %1105 = vrot.lane.b32.xlu0 %v422, 20
      %v1106 = vpop.permute.xlu0 %1105
      %1107 = vrot.lane.b32.xlu0 %v423, 20
      %v1108 = vpop.permute.xlu0 %1107
      %1109 = vrot.lane.b32.xlu0 %v424, 20
      %v1110 = vpop.permute.xlu0 %1109
      %1111 = vrot.lane.b32.xlu0 %v425, 20
      %v1112 = vpop.permute.xlu0 %1111
      %1113 = vrot.lane.b32.xlu0 %v426, 20
      %v1114 = vpop.permute.xlu0 %1113
      %1115 = vrot.lane.b32.xlu0 %v427, 20
      %v1116 = vpop.permute.xlu0 %1115
      %1117 = vrot.lane.b32.xlu0 %v428, 20
      %v1118 = vpop.permute.xlu0 %1117
      %1119 = vrot.lane.b32.xlu0 %v429, 20
      %v1120 = vpop.permute.xlu0 %1119
      %1121 = vrot.lane.b32.xlu0 %v430, 20
      %v1122 = vpop.permute.xlu0 %1121
      %1123 = vrot.lane.b32.xlu0 %v431, 20
      %v1124 = vpop.permute.xlu0 %1123
      %1125 = vrot.lane.b32.xlu0 %v432, 20
      %v1126 = vpop.permute.xlu0 %1125
      %1127 = vrot.lane.b32.xlu0 %v433, 20
      %v1128 = vpop.permute.xlu0 %1127
      %1129 = vrot.lane.b32.xlu0 %v434, 20
      %v1130 = vpop.permute.xlu0 %1129
      %1131 = vrot.lane.b32.xlu0 %v435, 20
      %v1132 = vpop.permute.xlu0 %1131
      %1133 = vrot.lane.b32.xlu0 %v436, 20
      %v1134 = vpop.permute.xlu0 %1133
      %1135 = vrot.lane.b32.xlu0 %v437, 20
      %v1136 = vpop.permute.xlu0 %1135
      %1137 = vrot.lane.b32.xlu0 %v438, 20
      %v1138 = vpop.permute.xlu0 %1137
      %1139 = vrot.lane.b32.xlu0 %v439, 20
      %v1140 = vpop.permute.xlu0 %1139
      %1141 = vrot.lane.b32.xlu0 %v440, 20
      %v1142 = vpop.permute.xlu0 %1141
      %1143 = vrot.lane.b32.xlu0 %v441, 20
      %v1144 = vpop.permute.xlu0 %1143
      %1145 = vrot.lane.b32.xlu0 %v442, 20
      %v1146 = vpop.permute.xlu0 %1145
      %1147 = vrot.lane.b32.xlu0 %v443, 20
      %v1148 = vpop.permute.xlu0 %1147
      %1149 = vrot.lane.b32.xlu0 %v444, 20
      %v1150 = vpop.permute.xlu0 %1149
      %1151 = vrot.lane.b32.xlu0 %v445, 20
      %v1152 = vpop.permute.xlu0 %1151
      %1217 = vrot.lane.b32.xlu0 %v449, 24
      %v1218 = vpop.permute.xlu0 %1217
      %1219 = vrot.lane.b32.xlu0 %v450, 24
      %v1220 = vpop.permute.xlu0 %1219
      %1221 = vrot.lane.b32.xlu0 %v451, 24
      %v1222 = vpop.permute.xlu0 %1221
      %1223 = vrot.lane.b32.xlu0 %v452, 24
      %v1224 = vpop.permute.xlu0 %1223
      %1225 = vrot.lane.b32.xlu0 %v453, 24
      %v1226 = vpop.permute.xlu0 %1225
      %1227 = vrot.lane.b32.xlu0 %v454, 24
      %v1228 = vpop.permute.xlu0 %1227
      %1229 = vrot.lane.b32.xlu0 %v455, 24
      %v1230 = vpop.permute.xlu0 %1229
      %1231 = vrot.lane.b32.xlu0 %v456, 24
      %v1232 = vpop.permute.xlu0 %1231
      %1233 = vrot.lane.b32.xlu0 %v457, 24
      %v1234 = vpop.permute.xlu0 %1233
      %1235 = vrot.lane.b32.xlu0 %v458, 24
      %v1236 = vpop.permute.xlu0 %1235
      %1237 = vrot.lane.b32.xlu0 %v459, 24
      %v1238 = vpop.permute.xlu0 %1237
      %1239 = vrot.lane.b32.xlu0 %v460, 24
      %v1240 = vpop.permute.xlu0 %1239
      %1241 = vrot.lane.b32.xlu0 %v461, 24
      %v1242 = vpop.permute.xlu0 %1241
      %1243 = vrot.lane.b32.xlu0 %v462, 24
      %v1244 = vpop.permute.xlu0 %1243
      %1245 = vrot.lane.b32.xlu0 %v463, 24
      %v1246 = vpop.permute.xlu0 %1245
      %1247 = vrot.lane.b32.xlu0 %v464, 24
      %v1248 = vpop.permute.xlu0 %1247
      %1249 = vrot.lane.b32.xlu0 %v465, 24
      %v1250 = vpop.permute.xlu0 %1249
      %1251 = vrot.lane.b32.xlu0 %v466, 24
      %v1252 = vpop.permute.xlu0 %1251
      %1253 = vrot.lane.b32.xlu0 %v467, 24
      %v1254 = vpop.permute.xlu0 %1253
      %1255 = vrot.lane.b32.xlu0 %v468, 24
      %v1256 = vpop.permute.xlu0 %1255
      %1257 = vrot.lane.b32.xlu0 %v469, 24
      %v1258 = vpop.permute.xlu0 %1257
      %1259 = vrot.lane.b32.xlu0 %v470, 24
      %v1260 = vpop.permute.xlu0 %1259
      %1261 = vrot.lane.b32.xlu0 %v471, 24
      %v1262 = vpop.permute.xlu0 %1261
      %1263 = vrot.lane.b32.xlu0 %v472, 24
      %v1264 = vpop.permute.xlu0 %1263
      %1265 = vrot.lane.b32.xlu0 %v473, 24
      %v1266 = vpop.permute.xlu0 %1265
      %1267 = vrot.lane.b32.xlu0 %v474, 24
      %v1268 = vpop.permute.xlu0 %1267
      %1269 = vrot.lane.b32.xlu0 %v475, 24
      %v1270 = vpop.permute.xlu0 %1269
      %1271 = vrot.lane.b32.xlu0 %v476, 24
      %v1272 = vpop.permute.xlu0 %1271
      %1273 = vrot.lane.b32.xlu0 %v477, 24
      %v1274 = vpop.permute.xlu0 %1273
      %1275 = vrot.lane.b32.xlu0 %v478, 24
      %v1276 = vpop.permute.xlu0 %1275
      %1277 = vrot.lane.b32.xlu0 %v479, 24
      %v1278 = vpop.permute.xlu0 %1277
      %1279 = vrot.lane.b32.xlu0 %v480, 24
      %v1280 = vpop.permute.xlu0 %1279
      %1345 = vrot.lane.b32.xlu0 %v481, 28
      %v1346 = vpop.permute.xlu0 %1345
      %1347 = vrot.lane.b32.xlu0 %v482, 28
      %v1348 = vpop.permute.xlu0 %1347
      %1349 = vrot.lane.b32.xlu0 %v483, 28
      %v1350 = vpop.permute.xlu0 %1349
      %1351 = vrot.lane.b32.xlu0 %v484, 28
      %v1352 = vpop.permute.xlu0 %1351
      %1353 = vrot.lane.b32.xlu0 %v485, 28
      %v1354 = vpop.permute.xlu0 %1353
      %1355 = vrot.lane.b32.xlu0 %v486, 28
      %v1356 = vpop.permute.xlu0 %1355
      %1357 = vrot.lane.b32.xlu0 %v487, 28
      %v1358 = vpop.permute.xlu0 %1357
      %1359 = vrot.lane.b32.xlu0 %v488, 28
      %v1360 = vpop.permute.xlu0 %1359
      %1361 = vrot.lane.b32.xlu0 %v489, 28
      %v1362 = vpop.permute.xlu0 %1361
      %1363 = vrot.lane.b32.xlu0 %v490, 28
      %v1364 = vpop.permute.xlu0 %1363
      %1365 = vrot.lane.b32.xlu0 %v491, 28
      %v1366 = vpop.permute.xlu0 %1365
      %1367 = vrot.lane.b32.xlu0 %v492, 28
      %v1368 = vpop.permute.xlu0 %1367
      %1369 = vrot.lane.b32.xlu0 %v493, 28
      %v1370 = vpop.permute.xlu0 %1369
      %1371 = vrot.lane.b32.xlu0 %v494, 28
      %v1372 = vpop.permute.xlu0 %1371
      %1373 = vrot.lane.b32.xlu0 %v495, 28
      %v1374 = vpop.permute.xlu0 %1373
      %1375 = vrot.lane.b32.xlu0 %v496, 28
      %v1376 = vpop.permute.xlu0 %1375
      %1377 = vrot.lane.b32.xlu0 %v497, 28
      %v1378 = vpop.permute.xlu0 %1377
      %1379 = vrot.lane.b32.xlu0 %v498, 28
      %v1380 = vpop.permute.xlu0 %1379
      %1381 = vrot.lane.b32.xlu0 %v499, 28
      %v1382 = vpop.permute.xlu0 %1381
      %1383 = vrot.lane.b32.xlu0 %v500, 28
      %v1384 = vpop.permute.xlu0 %1383
      %1385 = vrot.lane.b32.xlu0 %v501, 28
      %v1386 = vpop.permute.xlu0 %1385
      %1387 = vrot.lane.b32.xlu0 %v502, 28
      %v1388 = vpop.permute.xlu0 %1387
      %1389 = vrot.lane.b32.xlu0 %v503, 28
      %v1390 = vpop.permute.xlu0 %1389
      %1391 = vrot.lane.b32.xlu0 %v504, 28
      %v1392 = vpop.permute.xlu0 %1391
      %1393 = vrot.lane.b32.xlu0 %v505, 28
      %v1394 = vpop.permute.xlu0 %1393
      %1395 = vrot.lane.b32.xlu0 %v506, 28
      %v1396 = vpop.permute.xlu0 %1395
      %1397 = vrot.lane.b32.xlu0 %v507, 28
      %v1398 = vpop.permute.xlu0 %1397
      %1399 = vrot.lane.b32.xlu0 %v508, 28
      %v1400 = vpop.permute.xlu0 %1399
      %1401 = vrot.lane.b32.xlu0 %v509, 28
      %v1402 = vpop.permute.xlu0 %1401
      %1403 = vrot.lane.b32.xlu0 %v510, 28
      %v1404 = vpop.permute.xlu0 %1403
      %1405 = vrot.lane.b32.xlu0 %v511, 28
      %v1406 = vpop.permute.xlu0 %1405
      %1407 = vrot.lane.b32.xlu0 %v512, 28
      %v1408 = vpop.permute.xlu0 %1407
      %1473 = vrot.lane.b32.xlu0 %v513, 32
      %v1474 = vpop.permute.xlu0 %1473
      %1475 = vrot.lane.b32.xlu0 %v514, 32
      %v1476 = vpop.permute.xlu0 %1475
      %1477 = vrot.lane.b32.xlu0 %v515, 32
      %v1478 = vpop.permute.xlu0 %1477
      %1479 = vrot.lane.b32.xlu0 %v516, 32
      %v1480 = vpop.permute.xlu0 %1479
      %1481 = vrot.lane.b32.xlu0 %v517, 32
      %v1482 = vpop.permute.xlu0 %1481
      %1483 = vrot.lane.b32.xlu0 %v518, 32
      %v1484 = vpop.permute.xlu0 %1483
      %1485 = vrot.lane.b32.xlu0 %v519, 32
      %v1486 = vpop.permute.xlu0 %1485
      %1487 = vrot.lane.b32.xlu0 %v520, 32
      %v1488 = vpop.permute.xlu0 %1487
      %1489 = vrot.lane.b32.xlu0 %v521, 32
      %v1490 = vpop.permute.xlu0 %1489
      %1491 = vrot.lane.b32.xlu0 %v522, 32
      %v1492 = vpop.permute.xlu0 %1491
      %1493 = vrot.lane.b32.xlu0 %v523, 32
      %v1494 = vpop.permute.xlu0 %1493
      %1495 = vrot.lane.b32.xlu0 %v524, 32
      %v1496 = vpop.permute.xlu0 %1495
      %1497 = vrot.lane.b32.xlu0 %v525, 32
      %v1498 = vpop.permute.xlu0 %1497
      %1499 = vrot.lane.b32.xlu0 %v526, 32
      %v1500 = vpop.permute.xlu0 %1499
      %1501 = vrot.lane.b32.xlu0 %v527, 32
      %v1502 = vpop.permute.xlu0 %1501
      %1503 = vrot.lane.b32.xlu0 %v528, 32
      %v1504 = vpop.permute.xlu0 %1503
      %1505 = vrot.lane.b32.xlu0 %v529, 32
      %v1506 = vpop.permute.xlu0 %1505
      %1507 = vrot.lane.b32.xlu0 %v530, 32
      %v1508 = vpop.permute.xlu0 %1507
      %1509 = vrot.lane.b32.xlu0 %v531, 32
      %v1510 = vpop.permute.xlu0 %1509
      %1511 = vrot.lane.b32.xlu0 %v532, 32
      %v1512 = vpop.permute.xlu0 %1511
      %1513 = vrot.lane.b32.xlu0 %v533, 32
      %v1514 = vpop.permute.xlu0 %1513
      %1515 = vrot.lane.b32.xlu0 %v534, 32
      %v1516 = vpop.permute.xlu0 %1515
      %1517 = vrot.lane.b32.xlu0 %v535, 32
      %v1518 = vpop.permute.xlu0 %1517
      %1519 = vrot.lane.b32.xlu0 %v536, 32
      %v1520 = vpop.permute.xlu0 %1519
      %1521 = vrot.lane.b32.xlu0 %v537, 32
      %v1522 = vpop.permute.xlu0 %1521
      %1523 = vrot.lane.b32.xlu0 %v538, 32
      %v1524 = vpop.permute.xlu0 %1523
      %1525 = vrot.lane.b32.xlu0 %v539, 32
      %v1526 = vpop.permute.xlu0 %1525
      %1527 = vrot.lane.b32.xlu0 %v540, 32
      %v1528 = vpop.permute.xlu0 %1527
      %1529 = vrot.lane.b32.xlu0 %v541, 32
      %v1530 = vpop.permute.xlu0 %1529
      %1531 = vrot.lane.b32.xlu0 %v542, 32
      %v1532 = vpop.permute.xlu0 %1531
      %1533 = vrot.lane.b32.xlu0 %v543, 32
      %v1534 = vpop.permute.xlu0 %1533
      %1535 = vrot.lane.b32.xlu0 %v544, 32
      %v1536 = vpop.permute.xlu0 %1535
      %vm1569 = vcmask 31744
      %v1570 = vsel %vm1569, %v251, %v578
      %v1571 = vsel %vm1569, %v252, %v580
      %v1572 = vsel %vm1569, %v253, %v582
      %v1573 = vsel %vm1569, %v254, %v584
      %v1574 = vsel %vm1569, %v255, %v586
      %v1575 = vsel %vm1569, %v256, %v588
      %v1576 = vsel %vm1569, %v257, %v590
      %v1577 = vsel %vm1569, %v258, %v592
      %v1578 = vsel %vm1569, %v259, %v594
      %v1579 = vsel %vm1569, %v260, %v596
      %v1580 = vsel %vm1569, %v261, %v598
      %v1581 = vsel %vm1569, %v262, %v600
      %v1582 = vsel %vm1569, %v263, %v602
      %v1583 = vsel %vm1569, %v264, %v604
      %v1584 = vsel %vm1569, %v265, %v606
      %v1585 = vsel %vm1569, %v266, %v608
      %v1586 = vsel %vm1569, %v267, %v610
      %v1587 = vsel %vm1569, %v268, %v612
      %v1588 = vsel %vm1569, %v269, %v614
      %v1589 = vsel %vm1569, %v270, %v616
      %v1590 = vsel %vm1569, %v271, %v618
      %v1591 = vsel %vm1569, %v272, %v620
      %v1592 = vsel %vm1569, %v273, %v622
      %v1593 = vsel %vm1569, %v274, %v624
      %v1594 = vsel %vm1569, %v275, %v626
      %v1595 = vsel %vm1569, %v276, %v628
      %v1596 = vsel %vm1569, %v277, %v630
      %v1597 = vsel %vm1569, %v278, %v632
      %v1598 = vsel %vm1569, %v279, %v634
      %v1599 = vsel %vm1569, %v280, %v636
      %v1600 = vsel %vm1569, %v281, %v638
      %v1601 = vsel %vm1569, %v282, %v640
      %vm1602 = vcmask 64512
      %v1603 = vsel %vm1602, %v1570, %v706
      %v1604 = vsel %vm1602, %v1571, %v708
      %v1605 = vsel %vm1602, %v1572, %v710
      %v1606 = vsel %vm1602, %v1573, %v712
      %v1607 = vsel %vm1602, %v1574, %v714
      %v1608 = vsel %vm1602, %v1575, %v716
      %v1609 = vsel %vm1602, %v1576, %v718
      %v1610 = vsel %vm1602, %v1577, %v720
      %v1611 = vsel %vm1602, %v1578, %v722
      %v1612 = vsel %vm1602, %v1579, %v724
      %v1613 = vsel %vm1602, %v1580, %v726
      %v1614 = vsel %vm1602, %v1581, %v728
      %v1615 = vsel %vm1602, %v1582, %v730
      %v1616 = vsel %vm1602, %v1583, %v732
      %v1617 = vsel %vm1602, %v1584, %v734
      %v1618 = vsel %vm1602, %v1585, %v736
      %v1619 = vsel %vm1602, %v1586, %v738
      %v1620 = vsel %vm1602, %v1587, %v740
      %v1621 = vsel %vm1602, %v1588, %v742
      %v1622 = vsel %vm1602, %v1589, %v744
      %v1623 = vsel %vm1602, %v1590, %v746
      %v1624 = vsel %vm1602, %v1591, %v748
      %v1625 = vsel %vm1602, %v1592, %v750
      %v1626 = vsel %vm1602, %v1593, %v752
      %v1627 = vsel %vm1602, %v1594, %v754
      %v1628 = vsel %vm1602, %v1595, %v756
      %v1629 = vsel %vm1602, %v1596, %v758
      %v1630 = vsel %vm1602, %v1597, %v760
      %v1631 = vsel %vm1602, %v1598, %v762
      %v1632 = vsel %vm1602, %v1599, %v764
      %v1633 = vsel %vm1602, %v1600, %v766
      %v1634 = vsel %vm1602, %v1601, %v768
      %vm1635 = vcmask 97280
      %v1636 = vsel %vm1635, %v1603, %v834
      %v1637 = vsel %vm1635, %v1604, %v836
      %v1638 = vsel %vm1635, %v1605, %v838
      %v1639 = vsel %vm1635, %v1606, %v840
      %v1640 = vsel %vm1635, %v1607, %v842
      %v1641 = vsel %vm1635, %v1608, %v844
      %v1642 = vsel %vm1635, %v1609, %v846
      %v1643 = vsel %vm1635, %v1610, %v848
      %v1644 = vsel %vm1635, %v1611, %v850
      %v1645 = vsel %vm1635, %v1612, %v852
      %v1646 = vsel %vm1635, %v1613, %v854
      %v1647 = vsel %vm1635, %v1614, %v856
      %v1648 = vsel %vm1635, %v1615, %v858
      %v1649 = vsel %vm1635, %v1616, %v860
      %v1650 = vsel %vm1635, %v1617, %v862
      %v1651 = vsel %vm1635, %v1618, %v864
      %v1652 = vsel %vm1635, %v1619, %v866
      %v1653 = vsel %vm1635, %v1620, %v868
      %v1654 = vsel %vm1635, %v1621, %v870
      %v1655 = vsel %vm1635, %v1622, %v872
      %v1656 = vsel %vm1635, %v1623, %v874
      %v1657 = vsel %vm1635, %v1624, %v876
      %v1658 = vsel %vm1635, %v1625, %v878
      %v1659 = vsel %vm1635, %v1626, %v880
      %v1660 = vsel %vm1635, %v1627, %v882
      %v1661 = vsel %vm1635, %v1628, %v884
      %v1662 = vsel %vm1635, %v1629, %v886
      %v1663 = vsel %vm1635, %v1630, %v888
      %v1664 = vsel %vm1635, %v1631, %v890
      %v1665 = vsel %vm1635, %v1632, %v892
      %v1666 = vsel %vm1635, %v1633, %v894
      %v1667 = vsel %vm1635, %v1634, %v896
      %vm1668 = vcmask 130048
      %v1669 = vsel %vm1668, %v1636, %v962
      %v1670 = vsel %vm1668, %v1637, %v964
      %v1671 = vsel %vm1668, %v1638, %v966
      %v1672 = vsel %vm1668, %v1639, %v968
      %v1673 = vsel %vm1668, %v1640, %v970
      %v1674 = vsel %vm1668, %v1641, %v972
      %v1675 = vsel %vm1668, %v1642, %v974
      %v1676 = vsel %vm1668, %v1643, %v976
      %v1677 = vsel %vm1668, %v1644, %v978
      %v1678 = vsel %vm1668, %v1645, %v980
      %v1679 = vsel %vm1668, %v1646, %v982
      %v1680 = vsel %vm1668, %v1647, %v984
      %v1681 = vsel %vm1668, %v1648, %v986
      %v1682 = vsel %vm1668, %v1649, %v988
      %v1683 = vsel %vm1668, %v1650, %v990
      %v1684 = vsel %vm1668, %v1651, %v992
      %v1685 = vsel %vm1668, %v1652, %v994
      %v1686 = vsel %vm1668, %v1653, %v996
      %v1687 = vsel %vm1668, %v1654, %v998
      %v1688 = vsel %vm1668, %v1655, %v1000
      %v1689 = vsel %vm1668, %v1656, %v1002
      %v1690 = vsel %vm1668, %v1657, %v1004
      %v1691 = vsel %vm1668, %v1658, %v1006
      %v1692 = vsel %vm1668, %v1659, %v1008
      %v1693 = vsel %vm1668, %v1660, %v1010
      %v1694 = vsel %vm1668, %v1661, %v1012
      %v1695 = vsel %vm1668, %v1662, %v1014
      %v1696 = vsel %vm1668, %v1663, %v1016
      %v1697 = vsel %vm1668, %v1664, %v1018
      %v1698 = vsel %vm1668, %v1665, %v1020
      %v1699 = vsel %vm1668, %v1666, %v1022
      %v1700 = vsel %vm1668, %v1667, %v1024
      %vm1701 = vcmask 162816
      %v1702 = vsel %vm1701, %v1669, %v1090
      %v1703 = vsel %vm1701, %v1670, %v1092
      %v1704 = vsel %vm1701, %v1671, %v1094
      %v1705 = vsel %vm1701, %v1672, %v1096
      %v1706 = vsel %vm1701, %v1673, %v1098
      %v1707 = vsel %vm1701, %v1674, %v1100
      %v1708 = vsel %vm1701, %v1675, %v1102
      %v1709 = vsel %vm1701, %v1676, %v1104
      %v1710 = vsel %vm1701, %v1677, %v1106
      %v1711 = vsel %vm1701, %v1678, %v1108
      %v1712 = vsel %vm1701, %v1679, %v1110
      %v1713 = vsel %vm1701, %v1680, %v1112
      %v1714 = vsel %vm1701, %v1681, %v1114
      %v1715 = vsel %vm1701, %v1682, %v1116
      %v1716 = vsel %vm1701, %v1683, %v1118
      %v1717 = vsel %vm1701, %v1684, %v1120
      %v1718 = vsel %vm1701, %v1685, %v1122
      %v1719 = vsel %vm1701, %v1686, %v1124
      %v1720 = vsel %vm1701, %v1687, %v1126
      %v1721 = vsel %vm1701, %v1688, %v1128
      %v1722 = vsel %vm1701, %v1689, %v1130
      %v1723 = vsel %vm1701, %v1690, %v1132
      %v1724 = vsel %vm1701, %v1691, %v1134
      %v1725 = vsel %vm1701, %v1692, %v1136
      %v1726 = vsel %vm1701, %v1693, %v1138
      %v1727 = vsel %vm1701, %v1694, %v1140
      %v1728 = vsel %vm1701, %v1695, %v1142
      %v1729 = vsel %vm1701, %v1696, %v1144
      %v1730 = vsel %vm1701, %v1697, %v1146
      %v1731 = vsel %vm1701, %v1698, %v1148
      %v1732 = vsel %vm1701, %v1699, %v1150
      %v1733 = vsel %vm1701, %v1700, %v1152
      %vm1734 = vcmask 195584
      %v1735 = vsel %vm1734, %v1702, %v1218
      %v1736 = vsel %vm1734, %v1703, %v1220
      %v1737 = vsel %vm1734, %v1704, %v1222
      %v1738 = vsel %vm1734, %v1705, %v1224
      %v1739 = vsel %vm1734, %v1706, %v1226
      %v1740 = vsel %vm1734, %v1707, %v1228
      %v1741 = vsel %vm1734, %v1708, %v1230
      %v1742 = vsel %vm1734, %v1709, %v1232
      %v1743 = vsel %vm1734, %v1710, %v1234
      %v1744 = vsel %vm1734, %v1711, %v1236
      %v1745 = vsel %vm1734, %v1712, %v1238
      %v1746 = vsel %vm1734, %v1713, %v1240
      %v1747 = vsel %vm1734, %v1714, %v1242
      %v1748 = vsel %vm1734, %v1715, %v1244
      %v1749 = vsel %vm1734, %v1716, %v1246
      %v1750 = vsel %vm1734, %v1717, %v1248
      %v1751 = vsel %vm1734, %v1718, %v1250
      %v1752 = vsel %vm1734, %v1719, %v1252
      %v1753 = vsel %vm1734, %v1720, %v1254
      %v1754 = vsel %vm1734, %v1721, %v1256
      %v1755 = vsel %vm1734, %v1722, %v1258
      %v1756 = vsel %vm1734, %v1723, %v1260
      %v1757 = vsel %vm1734, %v1724, %v1262
      %v1758 = vsel %vm1734, %v1725, %v1264
      %v1759 = vsel %vm1734, %v1726, %v1266
      %v1760 = vsel %vm1734, %v1727, %v1268
      %v1761 = vsel %vm1734, %v1728, %v1270
      %v1762 = vsel %vm1734, %v1729, %v1272
      %v1763 = vsel %vm1734, %v1730, %v1274
      %v1764 = vsel %vm1734, %v1731, %v1276
      %v1765 = vsel %vm1734, %v1732, %v1278
      %v1766 = vsel %vm1734, %v1733, %v1280
      %vm1767 = vcmask 228352
      %v1768 = vsel %vm1767, %v1735, %v1346
      %v1769 = vsel %vm1767, %v1736, %v1348
      %v1770 = vsel %vm1767, %v1737, %v1350
      %v1771 = vsel %vm1767, %v1738, %v1352
      %v1772 = vsel %vm1767, %v1739, %v1354
      %v1773 = vsel %vm1767, %v1740, %v1356
      %v1774 = vsel %vm1767, %v1741, %v1358
      %v1775 = vsel %vm1767, %v1742, %v1360
      %v1776 = vsel %vm1767, %v1743, %v1362
      %v1777 = vsel %vm1767, %v1744, %v1364
      %v1778 = vsel %vm1767, %v1745, %v1366
      %v1779 = vsel %vm1767, %v1746, %v1368
      %v1780 = vsel %vm1767, %v1747, %v1370
      %v1781 = vsel %vm1767, %v1748, %v1372
      %v1782 = vsel %vm1767, %v1749, %v1374
      %v1783 = vsel %vm1767, %v1750, %v1376
      %v1784 = vsel %vm1767, %v1751, %v1378
      %v1785 = vsel %vm1767, %v1752, %v1380
      %v1786 = vsel %vm1767, %v1753, %v1382
      %v1787 = vsel %vm1767, %v1754, %v1384
      %v1788 = vsel %vm1767, %v1755, %v1386
      %v1789 = vsel %vm1767, %v1756, %v1388
      %v1790 = vsel %vm1767, %v1757, %v1390
      %v1791 = vsel %vm1767, %v1758, %v1392
      %v1792 = vsel %vm1767, %v1759, %v1394
      %v1793 = vsel %vm1767, %v1760, %v1396
      %v1794 = vsel %vm1767, %v1761, %v1398
      %v1795 = vsel %vm1767, %v1762, %v1400
      %v1796 = vsel %vm1767, %v1763, %v1402
      %v1797 = vsel %vm1767, %v1764, %v1404
      %v1798 = vsel %vm1767, %v1765, %v1406
      %v1799 = vsel %vm1767, %v1766, %v1408
      %vm1800 = vcmask 261120
      %v1801 = vsel %vm1800, %v1768, %v1474
      %v1802 = vsel %vm1800, %v1769, %v1476
      %v1803 = vsel %vm1800, %v1770, %v1478
      %v1804 = vsel %vm1800, %v1771, %v1480
      %v1805 = vsel %vm1800, %v1772, %v1482
      %v1806 = vsel %vm1800, %v1773, %v1484
      %v1807 = vsel %vm1800, %v1774, %v1486
      %v1808 = vsel %vm1800, %v1775, %v1488
      %v1809 = vsel %vm1800, %v1776, %v1490
      %v1810 = vsel %vm1800, %v1777, %v1492
      %v1811 = vsel %vm1800, %v1778, %v1494
      %v1812 = vsel %vm1800, %v1779, %v1496
      %v1813 = vsel %vm1800, %v1780, %v1498
      %v1814 = vsel %vm1800, %v1781, %v1500
      %v1815 = vsel %vm1800, %v1782, %v1502
      %v1816 = vsel %vm1800, %v1783, %v1504
      %v1817 = vsel %vm1800, %v1784, %v1506
      %v1818 = vsel %vm1800, %v1785, %v1508
      %v1819 = vsel %vm1800, %v1786, %v1510
      %v1820 = vsel %vm1800, %v1787, %v1512
      %v1821 = vsel %vm1800, %v1788, %v1514
      %v1822 = vsel %vm1800, %v1789, %v1516
      %v1823 = vsel %vm1800, %v1790, %v1518
      %v1824 = vsel %vm1800, %v1791, %v1520
      %v1825 = vsel %vm1800, %v1792, %v1522
      %v1826 = vsel %vm1800, %v1793, %v1524
      %v1827 = vsel %vm1800, %v1794, %v1526
      %v1828 = vsel %vm1800, %v1795, %v1528
      %v1829 = vsel %vm1800, %v1796, %v1530
      %v1830 = vsel %vm1800, %v1797, %v1532
      %v1831 = vsel %vm1800, %v1798, %v1534
      %v1832 = vsel %vm1800, %v1799, %v1536
      %v1833 = vld [vmem:[%s1] sm:$0xff]
      %v1834 = vld [vmem:[%s1 + $0x8] sm:$0xff]
      %v1835 = vld [vmem:[%s1 + $0x10] sm:$0xff]
      %v1836 = vld [vmem:[%s1 + $0x18] sm:$0xff]
      %v1837 = vld [vmem:[%s1 + $0x20] sm:$0xff]
      %v1838 = vld [vmem:[%s1 + $0x28] sm:$0xff]
      %v1839 = vld [vmem:[%s1 + $0x30] sm:$0xff]
      %v1840 = vld [vmem:[%s1 + $0x38] sm:$0xff]
      %v1841 = vld [vmem:[%s1 + $0x40] sm:$0xff]
      %v1842 = vld [vmem:[%s1 + $0x48] sm:$0xff]
      %v1843 = vld [vmem:[%s1 + $0x50] sm:$0xff]
      %v1844 = vld [vmem:[%s1 + $0x58] sm:$0xff]
      %v1845 = vld [vmem:[%s1 + $0x60] sm:$0xff]
      %v1846 = vld [vmem:[%s1 + $0x68] sm:$0xff]
      %v1847 = vld [vmem:[%s1 + $0x70] sm:$0xff]
      %v1848 = vld [vmem:[%s1 + $0x78] sm:$0xff]
      %v1849 = vld [vmem:[%s1 + $0x80] sm:$0xff]
      %v1850 = vld [vmem:[%s1 + $0x88] sm:$0xff]
      %v1851 = vld [vmem:[%s1 + $0x90] sm:$0xff]
      %v1852 = vld [vmem:[%s1 + $0x98] sm:$0xff]
      %v1853 = vld [vmem:[%s1 + $0xa0] sm:$0xff]
      %v1854 = vld [vmem:[%s1 + $0xa8] sm:$0xff]
      %v1855 = vld [vmem:[%s1 + $0xb0] sm:$0xff]
      %v1856 = vld [vmem:[%s1 + $0xb8] sm:$0xff]
      %v1857 = vld [vmem:[%s1 + $0xc0] sm:$0xff]
      %v1858 = vld [vmem:[%s1 + $0xc8] sm:$0xff]
      %v1859 = vld [vmem:[%s1 + $0xd0] sm:$0xff]
      %v1860 = vld [vmem:[%s1 + $0xd8] sm:$0xff]
      %v1861 = vld [vmem:[%s1 + $0xe0] sm:$0xff]
      %v1862 = vld [vmem:[%s1 + $0xe8] sm:$0xff]
      %v1863 = vld [vmem:[%s1 + $0xf0] sm:$0xff]
      %v1864 = vld [vmem:[%s1 + $0xf8] sm:$0xff]
      %v1865 = vld [vmem:[%s1 + $0x100] sm:$0xff]
      %v1866 = vld [vmem:[%s1 + $0x108] sm:$0xff]
      %v1867 = vld [vmem:[%s1 + $0x110] sm:$0xff]
      %v1868 = vld [vmem:[%s1 + $0x118] sm:$0xff]
      %v1869 = vld [vmem:[%s1 + $0x120] sm:$0xff]
      %v1870 = vld [vmem:[%s1 + $0x128] sm:$0xff]
      %v1871 = vld [vmem:[%s1 + $0x130] sm:$0xff]
      %v1872 = vld [vmem:[%s1 + $0x138] sm:$0xff]
      %v1873 = vld [vmem:[%s1 + $0x140] sm:$0xff]
      %v1874 = vld [vmem:[%s1 + $0x148] sm:$0xff]
      %v1875 = vld [vmem:[%s1 + $0x150] sm:$0xff]
      %v1876 = vld [vmem:[%s1 + $0x158] sm:$0xff]
      %v1877 = vld [vmem:[%s1 + $0x160] sm:$0xff]
      %v1878 = vld [vmem:[%s1 + $0x168] sm:$0xff]
      %v1879 = vld [vmem:[%s1 + $0x170] sm:$0xff]
      %v1880 = vld [vmem:[%s1 + $0x178] sm:$0xff]
      %v1881 = vld [vmem:[%s1 + $0x180] sm:$0xf]
      %v1882 = vld [vmem:[%s1 + $0x188] sm:$0xf]
      %v1883 = vld [vmem:[%s1 + $0x190] sm:$0xf]
      %v1884 = vld [vmem:[%s1 + $0x198] sm:$0xf]
      %v1885 = vld [vmem:[%s1 + $0x1a0] sm:$0xf]
      %v1886 = vld [vmem:[%s1 + $0x1a8] sm:$0xf]
      %v1887 = vld [vmem:[%s1 + $0x1b0] sm:$0xf]
      %v1888 = vld [vmem:[%s1 + $0x1b8] sm:$0xf]
      %v1889 = vld [vmem:[%s1 + $0x1c0] sm:$0xf]
      %v1890 = vld [vmem:[%s1 + $0x1c8] sm:$0xf]
      %v1891 = vld [vmem:[%s1 + $0x1d0] sm:$0xf]
      %v1892 = vld [vmem:[%s1 + $0x1d8] sm:$0xf]
      %v1893 = vld [vmem:[%s2] sm:$0xff]
      %v1894 = vld [vmem:[%s2 + $0x8] sm:$0xf]
      %v1897 = vlaneseq
      %v1898 = vshrl.u32 %v1897, 7
      %v1899 = vsub.s32 0, %v1898
      %v1900 = vrot.slane %v1893, %v1899
      %v1901 = vlaneseq
      %v1902 = vshrl.u32 %v1901, 7
      %v1903 = vsub.s32 1, %v1902
      %v1904 = vrot.slane %v1893, %v1903
      %v1905 = vlaneseq
      %v1906 = vshrl.u32 %v1905, 7
      %v1907 = vsub.s32 2, %v1906
      %v1908 = vrot.slane %v1893, %v1907
      %v1909 = vlaneseq
      %v1910 = vshrl.u32 %v1909, 7
      %v1911 = vsub.s32 3, %v1910
      %v1912 = vrot.slane %v1893, %v1911
      %v1913 = vlaneseq
      %v1914 = vshrl.u32 %v1913, 7
      %v1915 = vsub.s32 4, %v1914
      %v1916 = vrot.slane %v1893, %v1915
      %v1917 = vlaneseq
      %v1918 = vshrl.u32 %v1917, 7
      %v1919 = vsub.s32 5, %v1918
      %v1920 = vrot.slane %v1893, %v1919
      %v1921 = vlaneseq
      %v1922 = vshrl.u32 %v1921, 7
      %v1923 = vsub.s32 6, %v1922
      %v1924 = vrot.slane %v1893, %v1923
      %v1925 = vlaneseq
      %v1926 = vshrl.u32 %v1925, 7
      %v1927 = vsub.s32 7, %v1926
      %v1928 = vrot.slane %v1893, %v1927
      %v1929 = vlaneseq
      %v1930 = vshrl.u32 %v1929, 7
      %v1931 = vsub.s32 0, %v1930
      %v1932 = vrot.slane %v1894, %v1931
      %v1933 = vlaneseq
      %v1934 = vshrl.u32 %v1933, 7
      %v1935 = vsub.s32 1, %v1934
      %v1936 = vrot.slane %v1894, %v1935
      %v1937 = vlaneseq
      %v1938 = vshrl.u32 %v1937, 7
      %v1939 = vsub.s32 2, %v1938
      %v1940 = vrot.slane %v1894, %v1939
      %v1941 = vlaneseq
      %v1942 = vshrl.u32 %v1941, 7
      %v1943 = vsub.s32 3, %v1942
      %v1944 = vrot.slane %v1894, %v1943
      %vm1957 = vcmask 293888
      %v1959 = vsel %vm1957, %v1801, 0
      %v1962 = vsel %vm1957, %v1802, 0
      %v1965 = vsel %vm1957, %v1803, 0
      %v1968 = vsel %vm1957, %v1804, 0
      %v1971 = vsel %vm1957, %v1805, 0
      %v1974 = vsel %vm1957, %v1806, 0
      %v1977 = vsel %vm1957, %v1807, 0
      %v1980 = vsel %vm1957, %v1808, 0
      %v1983 = vsel %vm1957, %v1809, 0
      %v1986 = vsel %vm1957, %v1810, 0
      %v1989 = vsel %vm1957, %v1811, 0
      %v1992 = vsel %vm1957, %v1812, 0
      %v1995 = vsel %vm1957, %v1813, 0
      %v1998 = vsel %vm1957, %v1814, 0
      %v2001 = vsel %vm1957, %v1815, 0
      %v2004 = vsel %vm1957, %v1816, 0
      %v2007 = vsel %vm1957, %v1817, 0
      %v2010 = vsel %vm1957, %v1818, 0
      %v2013 = vsel %vm1957, %v1819, 0
      %v2016 = vsel %vm1957, %v1820, 0
      %v2019 = vsel %vm1957, %v1821, 0
      %v2022 = vsel %vm1957, %v1822, 0
      %v2025 = vsel %vm1957, %v1823, 0
      %v2028 = vsel %vm1957, %v1824, 0
      %v2031 = vsel %vm1957, %v1825, 0
      %v2034 = vsel %vm1957, %v1826, 0
      %v2037 = vsel %vm1957, %v1827, 0
      %v2040 = vsel %vm1957, %v1828, 0
      %v2043 = vsel %vm1957, %v1829, 0
      %v2046 = vsel %vm1957, %v1830, 0
      %v2049 = vsel %vm1957, %v1831, 0
      %v2052 = vsel %vm1957, %v1832, 0
      %vm2054 = vcmask 1043456
      %v2056 = vsel %vm2054, %v1881, 0
      %v2059 = vsel %vm2054, %v1882, 0
      %v2062 = vsel %vm2054, %v1883, 0
      %v2065 = vsel %vm2054, %v1884, 0
      %v2068 = vsel %vm2054, %v1885, 0
      %v2071 = vsel %vm2054, %v1886, 0
      %v2074 = vsel %vm2054, %v1887, 0
      %v2077 = vsel %vm2054, %v1888, 0
      %v2080 = vsel %vm2054, %v1889, 0
      %v2083 = vsel %vm2054, %v1890, 0
      %v2086 = vsel %vm2054, %v1891, 0
      %v2089 = vsel %vm2054, %v1892, 0
      %2091 = vmatprep.subr.mxu0 0.0
      %2092 = vmatpush1.msra.mxu0 0.0
      %2093 = vmatprep.subr.mxu0 0.0
      %2094 = vmatpush1.msra.mxu0 0.0
      %2095 = vmatprep.subr.mxu0 0.0
      %2096 = vmatpush1.msra.mxu0 0.0
      %2097 = vmatprep.subr.mxu0 0.0
      %2098 = vmatpush1.msra.mxu0 0.0
      %2099 = vmatprep.subr.mxu0 0.0
      %2100 = vmatpush1.msra.mxu0 0.0
      %2101 = vmatprep.subr.mxu0 0.0
      %2102 = vmatpush1.msra.mxu0 0.0
      %2103 = vmatprep.subr.mxu0 0.0
      %2104 = vmatpush1.msra.mxu0 0.0
      %2105 = vmatprep.subr.mxu0 0.0
      %2106 = vmatpush1.msra.mxu0 0.0
      %2107 = vmatprep.subr.mxu0 0.0
      %2108 = vmatpush1.msra.mxu0 0.0
      %2109 = vmatprep.subr.mxu0 0.0
      %2110 = vmatpush1.msra.mxu0 0.0
      %2111 = vmatprep.subr.mxu0 0.0
      %2112 = vmatpush1.msra.mxu0 0.0
      %2113 = vmatprep.subr.mxu0 %v2059
      %2114 = vmatpush1.msra.mxu0 %v2056
      %2115 = vmatprep.subr.mxu0 %v1870
      %2116 = vmatpush1.msra.mxu0 %v1869
      %2117 = vmatprep.subr.mxu0 %v1858
      %2118 = vmatpush1.msra.mxu0 %v1857
      %2119 = vmatprep.subr.mxu0 %v1846
      %2120 = vmatpush1.msra.mxu0 %v1845
      %2121 = vmatprep.subr.mxu0 %v1834
      %2122 = vmatpush1.msra.mxu0 %v1833
      %2123 = vmatprep.subr.mxu0 0.0
      %2124 = vmatpush2.msra.mxu0 0.0
      %2125 = vmatprep.subr.mxu0 0.0
      %2126 = vmatpush2.msra.mxu0 0.0
      %2127 = vmatprep.subr.mxu0 0.0
      %2128 = vmatpush2.msra.mxu0 0.0
      %2129 = vmatprep.subr.mxu0 0.0
      %2130 = vmatpush2.msra.mxu0 0.0
      %2131 = vmatprep.subr.mxu0 0.0
      %2132 = vmatpush2.msra.mxu0 0.0
      %2133 = vmatprep.subr.mxu0 0.0
      %2134 = vmatpush2.msra.mxu0 0.0
      %2135 = vmatprep.subr.mxu0 0.0
      %2136 = vmatpush2.msra.mxu0 0.0
      %2137 = vmatprep.subr.mxu0 0.0
      %2138 = vmatpush2.msra.mxu0 0.0
      %2139 = vmatprep.subr.mxu0 0.0
      %2140 = vmatpush2.msra.mxu0 0.0
      %2141 = vmatprep.subr.mxu0 0.0
      %2142 = vmatpush2.msra.mxu0 0.0
      %2143 = vmatprep.subr.mxu0 0.0
      %2144 = vmatpush2.msra.mxu0 0.0
      %2145 = vmatprep.subr.mxu0 0.0
      %2146 = vmatpush2.msra.mxu0 0.0
      %2147 = vmatprep.subr.mxu0 0.0
      %2148 = vmatpush2.msra.mxu0 0.0
      %2149 = vmatprep.subr.mxu0 0.0
      %2150 = vmatpush2.msra.mxu0 0.0
      %2151 = vmatprep.subr.mxu0 0.0
      %2152 = vmatpush2.msra.mxu0 0.0
      %2153 = vmatprep.subr.mxu0 0.0
      %2154 = vmatpush2.msra.mxu0 0.0
      %2155 = vmatprep.mubr.f32.mxu0 0.0
      %2156 = vmatmul.mubr.f32.gmra.mxu0 %v1959
      %v2157 = vpop.f32.mrf.mxu0
      %v2158 = vadd.f32 %v1900, %v2157
      %v2159 = vpop.f32.mrf.mxu0
      %v2160 = vadd.f32 %v1904, %v2159
      %2161 = vmatprep.mubr.f32.mxu0 0.0
      %2162 = vmatmul.mubr.f32.gmra.mxu0 %v1962
      %v2163 = vpop.f32.mrf.mxu0
      %v2164 = vadd.f32 %v1900, %v2163
      %v2165 = vpop.f32.mrf.mxu0
      %v2166 = vadd.f32 %v1904, %v2165
      %2167 = vmatprep.mubr.f32.mxu0 0.0
      %2168 = vmatmul.mubr.f32.gmra.mxu0 %v1965
      %v2169 = vpop.f32.mrf.mxu0
      %v2170 = vadd.f32 %v1900, %v2169
      %v2171 = vpop.f32.mrf.mxu0
      %v2172 = vadd.f32 %v1904, %v2171
      %2173 = vmatprep.mubr.f32.mxu0 0.0
      %2174 = vmatmul.mubr.f32.gmra.mxu0 %v1968
      %v2175 = vpop.f32.mrf.mxu0
      %v2176 = vadd.f32 %v1900, %v2175
      %v2177 = vpop.f32.mrf.mxu0
      %v2178 = vadd.f32 %v1904, %v2177
      %2179 = vmatprep.mubr.f32.mxu0 0.0
      %2180 = vmatmul.mubr.f32.gmra.mxu0 %v1971
      %v2181 = vpop.f32.mrf.mxu0
      %v2182 = vadd.f32 %v1900, %v2181
      %v2183 = vpop.f32.mrf.mxu0
      %v2184 = vadd.f32 %v1904, %v2183
      %2185 = vmatprep.mubr.f32.mxu0 0.0
      %2186 = vmatmul.mubr.f32.gmra.mxu0 %v1974
      %v2187 = vpop.f32.mrf.mxu0
      %v2188 = vadd.f32 %v1900, %v2187
      %v2189 = vpop.f32.mrf.mxu0
      %v2190 = vadd.f32 %v1904, %v2189
      %2191 = vmatprep.mubr.f32.mxu0 0.0
      %2192 = vmatmul.mubr.f32.gmra.mxu0 %v1977
      %v2193 = vpop.f32.mrf.mxu0
      %v2194 = vadd.f32 %v1900, %v2193
      %v2195 = vpop.f32.mrf.mxu0
      %v2196 = vadd.f32 %v1904, %v2195
      %2197 = vmatprep.mubr.f32.mxu0 0.0
      %2198 = vmatmul.mubr.f32.gmra.mxu0 %v1980
      %v2199 = vpop.f32.mrf.mxu0
      %v2200 = vadd.f32 %v1900, %v2199
      %v2201 = vpop.f32.mrf.mxu0
      %v2202 = vadd.f32 %v1904, %v2201
      %2203 = vmatprep.mubr.f32.mxu0 0.0
      %2204 = vmatmul.mubr.f32.gmra.mxu0 %v1983
      %v2205 = vpop.f32.mrf.mxu0
      %v2206 = vadd.f32 %v1900, %v2205
      %v2207 = vpop.f32.mrf.mxu0
      %v2208 = vadd.f32 %v1904, %v2207
      %2209 = vmatprep.mubr.f32.mxu0 0.0
      %2210 = vmatmul.mubr.f32.gmra.mxu0 %v1986
      %v2211 = vpop.f32.mrf.mxu0
      %v2212 = vadd.f32 %v1900, %v2211
      %v2213 = vpop.f32.mrf.mxu0
      %v2214 = vadd.f32 %v1904, %v2213
      %2215 = vmatprep.mubr.f32.mxu0 0.0
      %2216 = vmatmul.mubr.f32.gmra.mxu0 %v1989
      %v2217 = vpop.f32.mrf.mxu0
      %v2218 = vadd.f32 %v1900, %v2217
      %v2219 = vpop.f32.mrf.mxu0
      %v2220 = vadd.f32 %v1904, %v2219
      %2221 = vmatprep.mubr.f32.mxu0 0.0
      %2222 = vmatmul.mubr.f32.gmra.mxu0 %v1992
      %v2223 = vpop.f32.mrf.mxu0
      %v2224 = vadd.f32 %v1900, %v2223
      %v2225 = vpop.f32.mrf.mxu0
      %v2226 = vadd.f32 %v1904, %v2225
      %2227 = vmatprep.mubr.f32.mxu0 0.0
      %2228 = vmatmul.mubr.f32.gmra.mxu0 %v1995
      %v2229 = vpop.f32.mrf.mxu0
      %v2230 = vadd.f32 %v1900, %v2229
      %v2231 = vpop.f32.mrf.mxu0
      %v2232 = vadd.f32 %v1904, %v2231
      %2233 = vmatprep.mubr.f32.mxu0 0.0
      %2234 = vmatmul.mubr.f32.gmra.mxu0 %v1998
      %v2235 = vpop.f32.mrf.mxu0
      %v2236 = vadd.f32 %v1900, %v2235
      %v2237 = vpop.f32.mrf.mxu0
      %v2238 = vadd.f32 %v1904, %v2237
      %2239 = vmatprep.mubr.f32.mxu0 0.0
      %2240 = vmatmul.mubr.f32.gmra.mxu0 %v2001
      %v2241 = vpop.f32.mrf.mxu0
      %v2242 = vadd.f32 %v1900, %v2241
      %v2243 = vpop.f32.mrf.mxu0
      %v2244 = vadd.f32 %v1904, %v2243
      %2245 = vmatprep.mubr.f32.mxu0 0.0
      %2246 = vmatmul.mubr.f32.gmra.mxu0 %v2004
      %v2247 = vpop.f32.mrf.mxu0
      %v2248 = vadd.f32 %v1900, %v2247
      %v2249 = vpop.f32.mrf.mxu0
      %v2250 = vadd.f32 %v1904, %v2249
      %2251 = vmatprep.mubr.f32.mxu0 0.0
      %2252 = vmatmul.mubr.f32.gmra.mxu0 %v2007
      %v2253 = vpop.f32.mrf.mxu0
      %v2254 = vadd.f32 %v1900, %v2253
      %v2255 = vpop.f32.mrf.mxu0
      %v2256 = vadd.f32 %v1904, %v2255
      %2257 = vmatprep.mubr.f32.mxu0 0.0
      %2258 = vmatmul.mubr.f32.gmra.mxu0 %v2010
      %v2259 = vpop.f32.mrf.mxu0
      %v2260 = vadd.f32 %v1900, %v2259
      %v2261 = vpop.f32.mrf.mxu0
      %v2262 = vadd.f32 %v1904, %v2261
      %2263 = vmatprep.mubr.f32.mxu0 0.0
      %2264 = vmatmul.mubr.f32.gmra.mxu0 %v2013
      %v2265 = vpop.f32.mrf.mxu0
      %v2266 = vadd.f32 %v1900, %v2265
      %v2267 = vpop.f32.mrf.mxu0
      %v2268 = vadd.f32 %v1904, %v2267
      %2269 = vmatprep.mubr.f32.mxu0 0.0
      %2270 = vmatmul.mubr.f32.gmra.mxu0 %v2016
      %v2271 = vpop.f32.mrf.mxu0
      %v2272 = vadd.f32 %v1900, %v2271
      %v2273 = vpop.f32.mrf.mxu0
      %v2274 = vadd.f32 %v1904, %v2273
      %2275 = vmatprep.mubr.f32.mxu0 0.0
      %2276 = vmatmul.mubr.f32.gmra.mxu0 %v2019
      %v2277 = vpop.f32.mrf.mxu0
      %v2278 = vadd.f32 %v1900, %v2277
      %v2279 = vpop.f32.mrf.mxu0
      %v2280 = vadd.f32 %v1904, %v2279
      %2281 = vmatprep.mubr.f32.mxu0 0.0
      %2282 = vmatmul.mubr.f32.gmra.mxu0 %v2022
      %v2283 = vpop.f32.mrf.mxu0
      %v2284 = vadd.f32 %v1900, %v2283
      %v2285 = vpop.f32.mrf.mxu0
      %v2286 = vadd.f32 %v1904, %v2285
      %2287 = vmatprep.mubr.f32.mxu0 0.0
      %2288 = vmatmul.mubr.f32.gmra.mxu0 %v2025
      %v2289 = vpop.f32.mrf.mxu0
      %v2290 = vadd.f32 %v1900, %v2289
      %v2291 = vpop.f32.mrf.mxu0
      %v2292 = vadd.f32 %v1904, %v2291
      %2293 = vmatprep.mubr.f32.mxu0 0.0
      %2294 = vmatmul.mubr.f32.gmra.mxu0 %v2028
      %v2295 = vpop.f32.mrf.mxu0
      %v2296 = vadd.f32 %v1900, %v2295
      %v2297 = vpop.f32.mrf.mxu0
      %v2298 = vadd.f32 %v1904, %v2297
      %2299 = vmatprep.mubr.f32.mxu0 0.0
      %2300 = vmatmul.mubr.f32.gmra.mxu0 %v2031
      %v2301 = vpop.f32.mrf.mxu0
      %v2302 = vadd.f32 %v1900, %v2301
      %v2303 = vpop.f32.mrf.mxu0
      %v2304 = vadd.f32 %v1904, %v2303
      %2305 = vmatprep.mubr.f32.mxu0 0.0
      %2306 = vmatmul.mubr.f32.gmra.mxu0 %v2034
      %v2307 = vpop.f32.mrf.mxu0
      %v2308 = vadd.f32 %v1900, %v2307
      %v2309 = vpop.f32.mrf.mxu0
      %v2310 = vadd.f32 %v1904, %v2309
      %2311 = vmatprep.mubr.f32.mxu0 0.0
      %2312 = vmatmul.mubr.f32.gmra.mxu0 %v2037
      %v2313 = vpop.f32.mrf.mxu0
      %v2314 = vadd.f32 %v1900, %v2313
      %v2315 = vpop.f32.mrf.mxu0
      %v2316 = vadd.f32 %v1904, %v2315
      %2317 = vmatprep.mubr.f32.mxu0 0.0
      %2318 = vmatmul.mubr.f32.gmra.mxu0 %v2040
      %v2319 = vpop.f32.mrf.mxu0
      %v2320 = vadd.f32 %v1900, %v2319
      %v2321 = vpop.f32.mrf.mxu0
      %v2322 = vadd.f32 %v1904, %v2321
      %2323 = vmatprep.mubr.f32.mxu0 0.0
      %2324 = vmatmul.mubr.f32.gmra.mxu0 %v2043
      %v2325 = vpop.f32.mrf.mxu0
      %v2326 = vadd.f32 %v1900, %v2325
      %v2327 = vpop.f32.mrf.mxu0
      %v2328 = vadd.f32 %v1904, %v2327
      %2329 = vmatprep.mubr.f32.mxu0 0.0
      %2330 = vmatmul.mubr.f32.gmra.mxu0 %v2046
      %v2331 = vpop.f32.mrf.mxu0
      %v2332 = vadd.f32 %v1900, %v2331
      %v2333 = vpop.f32.mrf.mxu0
      %v2334 = vadd.f32 %v1904, %v2333
      %2335 = vmatprep.mubr.f32.mxu0 0.0
      %2336 = vmatmul.mubr.f32.gmra.mxu0 %v2049
      %v2337 = vpop.f32.mrf.mxu0
      %v2338 = vadd.f32 %v1900, %v2337
      %v2339 = vpop.f32.mrf.mxu0
      %v2340 = vadd.f32 %v1904, %v2339
      %2341 = vmatprep.mubr.f32.mxu0 0.0
      %2342 = vmatmul.mubr.f32.gmra.mxu0 %v2052
      %v2343 = vpop.f32.mrf.mxu0
      %v2344 = vadd.f32 %v1900, %v2343
      %v2345 = vpop.f32.mrf.mxu0
      %v2346 = vadd.f32 %v1904, %v2345
      %2347 = vdwg.mxu0
      %2348 = vmatprep.subr.mxu0 0.0
      %2349 = vmatpush1.msra.mxu0 0.0
      %2350 = vmatprep.subr.mxu0 0.0
      %2351 = vmatpush1.msra.mxu0 0.0
      %2352 = vmatprep.subr.mxu0 0.0
      %2353 = vmatpush1.msra.mxu0 0.0
      %2354 = vmatprep.subr.mxu0 0.0
      %2355 = vmatpush1.msra.mxu0 0.0
      %2356 = vmatprep.subr.mxu0 0.0
      %2357 = vmatpush1.msra.mxu0 0.0
      %2358 = vmatprep.subr.mxu0 0.0
      %2359 = vmatpush1.msra.mxu0 0.0
      %2360 = vmatprep.subr.mxu0 0.0
      %2361 = vmatpush1.msra.mxu0 0.0
      %2362 = vmatprep.subr.mxu0 0.0
      %2363 = vmatpush1.msra.mxu0 0.0
      %2364 = vmatprep.subr.mxu0 0.0
      %2365 = vmatpush1.msra.mxu0 0.0
      %2366 = vmatprep.subr.mxu0 0.0
      %2367 = vmatpush1.msra.mxu0 0.0
      %2368 = vmatprep.subr.mxu0 0.0
      %2369 = vmatpush1.msra.mxu0 0.0
      %2370 = vmatprep.subr.mxu0 %v2065
      %2371 = vmatpush1.msra.mxu0 %v2062
      %2372 = vmatprep.subr.mxu0 %v1872
      %2373 = vmatpush1.msra.mxu0 %v1871
      %2374 = vmatprep.subr.mxu0 %v1860
      %2375 = vmatpush1.msra.mxu0 %v1859
      %2376 = vmatprep.subr.mxu0 %v1848
      %2377 = vmatpush1.msra.mxu0 %v1847
      %2378 = vmatprep.subr.mxu0 %v1836
      %2379 = vmatpush1.msra.mxu0 %v1835
      %2380 = vmatprep.subr.mxu0 0.0
      %2381 = vmatpush2.msra.mxu0 0.0
      %2382 = vmatprep.subr.mxu0 0.0
      %2383 = vmatpush2.msra.mxu0 0.0
      %2384 = vmatprep.subr.mxu0 0.0
      %2385 = vmatpush2.msra.mxu0 0.0
      %2386 = vmatprep.subr.mxu0 0.0
      %2387 = vmatpush2.msra.mxu0 0.0
      %2388 = vmatprep.subr.mxu0 0.0
      %2389 = vmatpush2.msra.mxu0 0.0
      %2390 = vmatprep.subr.mxu0 0.0
      %2391 = vmatpush2.msra.mxu0 0.0
      %2392 = vmatprep.subr.mxu0 0.0
      %2393 = vmatpush2.msra.mxu0 0.0
      %2394 = vmatprep.subr.mxu0 0.0
      %2395 = vmatpush2.msra.mxu0 0.0
      %2396 = vmatprep.subr.mxu0 0.0
      %2397 = vmatpush2.msra.mxu0 0.0
      %2398 = vmatprep.subr.mxu0 0.0
      %2399 = vmatpush2.msra.mxu0 0.0
      %2400 = vmatprep.subr.mxu0 0.0
      %2401 = vmatpush2.msra.mxu0 0.0
      %2402 = vmatprep.subr.mxu0 0.0
      %2403 = vmatpush2.msra.mxu0 0.0
      %2404 = vmatprep.subr.mxu0 0.0
      %2405 = vmatpush2.msra.mxu0 0.0
      %2406 = vmatprep.subr.mxu0 0.0
      %2407 = vmatpush2.msra.mxu0 0.0
      %2408 = vmatprep.subr.mxu0 0.0
      %2409 = vmatpush2.msra.mxu0 0.0
      %2410 = vmatprep.subr.mxu0 0.0
      %2411 = vmatpush2.msra.mxu0 0.0
      %2412 = vmatprep.mubr.f32.mxu0 0.0
      %2413 = vmatmul.mubr.f32.gmra.mxu0 %v1959
      %v2414 = vpop.f32.mrf.mxu0
      %v2415 = vadd.f32 %v1908, %v2414
      %v2416 = vpop.f32.mrf.mxu0
      %v2417 = vadd.f32 %v1912, %v2416
      %2418 = vmatprep.mubr.f32.mxu0 0.0
      %2419 = vmatmul.mubr.f32.gmra.mxu0 %v1962
      %v2420 = vpop.f32.mrf.mxu0
      %v2421 = vadd.f32 %v1908, %v2420
      %v2422 = vpop.f32.mrf.mxu0
      %v2423 = vadd.f32 %v1912, %v2422
      %2424 = vmatprep.mubr.f32.mxu0 0.0
      %2425 = vmatmul.mubr.f32.gmra.mxu0 %v1965
      %v2426 = vpop.f32.mrf.mxu0
      %v2427 = vadd.f32 %v1908, %v2426
      %v2428 = vpop.f32.mrf.mxu0
      %v2429 = vadd.f32 %v1912, %v2428
      %2430 = vmatprep.mubr.f32.mxu0 0.0
      %2431 = vmatmul.mubr.f32.gmra.mxu0 %v1968
      %v2432 = vpop.f32.mrf.mxu0
      %v2433 = vadd.f32 %v1908, %v2432
      %v2434 = vpop.f32.mrf.mxu0
      %v2435 = vadd.f32 %v1912, %v2434
      %2436 = vmatprep.mubr.f32.mxu0 0.0
      %2437 = vmatmul.mubr.f32.gmra.mxu0 %v1971
      %v2438 = vpop.f32.mrf.mxu0
      %v2439 = vadd.f32 %v1908, %v2438
      %v2440 = vpop.f32.mrf.mxu0
      %v2441 = vadd.f32 %v1912, %v2440
      %2442 = vmatprep.mubr.f32.mxu0 0.0
      %2443 = vmatmul.mubr.f32.gmra.mxu0 %v1974
      %v2444 = vpop.f32.mrf.mxu0
      %v2445 = vadd.f32 %v1908, %v2444
      %v2446 = vpop.f32.mrf.mxu0
      %v2447 = vadd.f32 %v1912, %v2446
      %2448 = vmatprep.mubr.f32.mxu0 0.0
      %2449 = vmatmul.mubr.f32.gmra.mxu0 %v1977
      %v2450 = vpop.f32.mrf.mxu0
      %v2451 = vadd.f32 %v1908, %v2450
      %v2452 = vpop.f32.mrf.mxu0
      %v2453 = vadd.f32 %v1912, %v2452
      %2454 = vmatprep.mubr.f32.mxu0 0.0
      %2455 = vmatmul.mubr.f32.gmra.mxu0 %v1980
      %v2456 = vpop.f32.mrf.mxu0
      %v2457 = vadd.f32 %v1908, %v2456
      %v2458 = vpop.f32.mrf.mxu0
      %v2459 = vadd.f32 %v1912, %v2458
      %2460 = vmatprep.mubr.f32.mxu0 0.0
      %2461 = vmatmul.mubr.f32.gmra.mxu0 %v1983
      %v2462 = vpop.f32.mrf.mxu0
      %v2463 = vadd.f32 %v1908, %v2462
      %v2464 = vpop.f32.mrf.mxu0
      %v2465 = vadd.f32 %v1912, %v2464
      %2466 = vmatprep.mubr.f32.mxu0 0.0
      %2467 = vmatmul.mubr.f32.gmra.mxu0 %v1986
      %v2468 = vpop.f32.mrf.mxu0
      %v2469 = vadd.f32 %v1908, %v2468
      %v2470 = vpop.f32.mrf.mxu0
      %v2471 = vadd.f32 %v1912, %v2470
      %2472 = vmatprep.mubr.f32.mxu0 0.0
      %2473 = vmatmul.mubr.f32.gmra.mxu0 %v1989
      %v2474 = vpop.f32.mrf.mxu0
      %v2475 = vadd.f32 %v1908, %v2474
      %v2476 = vpop.f32.mrf.mxu0
      %v2477 = vadd.f32 %v1912, %v2476
      %2478 = vmatprep.mubr.f32.mxu0 0.0
      %2479 = vmatmul.mubr.f32.gmra.mxu0 %v1992
      %v2480 = vpop.f32.mrf.mxu0
      %v2481 = vadd.f32 %v1908, %v2480
      %v2482 = vpop.f32.mrf.mxu0
      %v2483 = vadd.f32 %v1912, %v2482
      %2484 = vmatprep.mubr.f32.mxu0 0.0
      %2485 = vmatmul.mubr.f32.gmra.mxu0 %v1995
      %v2486 = vpop.f32.mrf.mxu0
      %v2487 = vadd.f32 %v1908, %v2486
      %v2488 = vpop.f32.mrf.mxu0
      %v2489 = vadd.f32 %v1912, %v2488
      %2490 = vmatprep.mubr.f32.mxu0 0.0
      %2491 = vmatmul.mubr.f32.gmra.mxu0 %v1998
      %v2492 = vpop.f32.mrf.mxu0
      %v2493 = vadd.f32 %v1908, %v2492
      %v2494 = vpop.f32.mrf.mxu0
      %v2495 = vadd.f32 %v1912, %v2494
      %2496 = vmatprep.mubr.f32.mxu0 0.0
      %2497 = vmatmul.mubr.f32.gmra.mxu0 %v2001
      %v2498 = vpop.f32.mrf.mxu0
      %v2499 = vadd.f32 %v1908, %v2498
      %v2500 = vpop.f32.mrf.mxu0
      %v2501 = vadd.f32 %v1912, %v2500
      %2502 = vmatprep.mubr.f32.mxu0 0.0
      %2503 = vmatmul.mubr.f32.gmra.mxu0 %v2004
      %v2504 = vpop.f32.mrf.mxu0
      %v2505 = vadd.f32 %v1908, %v2504
      %v2506 = vpop.f32.mrf.mxu0
      %v2507 = vadd.f32 %v1912, %v2506
      %2508 = vmatprep.mubr.f32.mxu0 0.0
      %2509 = vmatmul.mubr.f32.gmra.mxu0 %v2007
      %v2510 = vpop.f32.mrf.mxu0
      %v2511 = vadd.f32 %v1908, %v2510
      %v2512 = vpop.f32.mrf.mxu0
      %v2513 = vadd.f32 %v1912, %v2512
      %2514 = vmatprep.mubr.f32.mxu0 0.0
      %2515 = vmatmul.mubr.f32.gmra.mxu0 %v2010
      %v2516 = vpop.f32.mrf.mxu0
      %v2517 = vadd.f32 %v1908, %v2516
      %v2518 = vpop.f32.mrf.mxu0
      %v2519 = vadd.f32 %v1912, %v2518
      %2520 = vmatprep.mubr.f32.mxu0 0.0
      %2521 = vmatmul.mubr.f32.gmra.mxu0 %v2013
      %v2522 = vpop.f32.mrf.mxu0
      %v2523 = vadd.f32 %v1908, %v2522
      %v2524 = vpop.f32.mrf.mxu0
      %v2525 = vadd.f32 %v1912, %v2524
      %2526 = vmatprep.mubr.f32.mxu0 0.0
      %2527 = vmatmul.mubr.f32.gmra.mxu0 %v2016
      %v2528 = vpop.f32.mrf.mxu0
      %v2529 = vadd.f32 %v1908, %v2528
      %v2530 = vpop.f32.mrf.mxu0
      %v2531 = vadd.f32 %v1912, %v2530
      %2532 = vmatprep.mubr.f32.mxu0 0.0
      %2533 = vmatmul.mubr.f32.gmra.mxu0 %v2019
      %v2534 = vpop.f32.mrf.mxu0
      %v2535 = vadd.f32 %v1908, %v2534
      %v2536 = vpop.f32.mrf.mxu0
      %v2537 = vadd.f32 %v1912, %v2536
      %2538 = vmatprep.mubr.f32.mxu0 0.0
      %2539 = vmatmul.mubr.f32.gmra.mxu0 %v2022
      %v2540 = vpop.f32.mrf.mxu0
      %v2541 = vadd.f32 %v1908, %v2540
      %v2542 = vpop.f32.mrf.mxu0
      %v2543 = vadd.f32 %v1912, %v2542
      %2544 = vmatprep.mubr.f32.mxu0 0.0
      %2545 = vmatmul.mubr.f32.gmra.mxu0 %v2025
      %v2546 = vpop.f32.mrf.mxu0
      %v2547 = vadd.f32 %v1908, %v2546
      %v2548 = vpop.f32.mrf.mxu0
      %v2549 = vadd.f32 %v1912, %v2548
      %2550 = vmatprep.mubr.f32.mxu0 0.0
      %2551 = vmatmul.mubr.f32.gmra.mxu0 %v2028
      %v2552 = vpop.f32.mrf.mxu0
      %v2553 = vadd.f32 %v1908, %v2552
      %v2554 = vpop.f32.mrf.mxu0
      %v2555 = vadd.f32 %v1912, %v2554
      %2556 = vmatprep.mubr.f32.mxu0 0.0
      %2557 = vmatmul.mubr.f32.gmra.mxu0 %v2031
      %v2558 = vpop.f32.mrf.mxu0
      %v2559 = vadd.f32 %v1908, %v2558
      %v2560 = vpop.f32.mrf.mxu0
      %v2561 = vadd.f32 %v1912, %v2560
      %2562 = vmatprep.mubr.f32.mxu0 0.0
      %2563 = vmatmul.mubr.f32.gmra.mxu0 %v2034
      %v2564 = vpop.f32.mrf.mxu0
      %v2565 = vadd.f32 %v1908, %v2564
      %v2566 = vpop.f32.mrf.mxu0
      %v2567 = vadd.f32 %v1912, %v2566
      %2568 = vmatprep.mubr.f32.mxu0 0.0
      %2569 = vmatmul.mubr.f32.gmra.mxu0 %v2037
      %v2570 = vpop.f32.mrf.mxu0
      %v2571 = vadd.f32 %v1908, %v2570
      %v2572 = vpop.f32.mrf.mxu0
      %v2573 = vadd.f32 %v1912, %v2572
      %2574 = vmatprep.mubr.f32.mxu0 0.0
      %2575 = vmatmul.mubr.f32.gmra.mxu0 %v2040
      %v2576 = vpop.f32.mrf.mxu0
      %v2577 = vadd.f32 %v1908, %v2576
      %v2578 = vpop.f32.mrf.mxu0
      %v2579 = vadd.f32 %v1912, %v2578
      %2580 = vmatprep.mubr.f32.mxu0 0.0
      %2581 = vmatmul.mubr.f32.gmra.mxu0 %v2043
      %v2582 = vpop.f32.mrf.mxu0
      %v2583 = vadd.f32 %v1908, %v2582
      %v2584 = vpop.f32.mrf.mxu0
      %v2585 = vadd.f32 %v1912, %v2584
      %2586 = vmatprep.mubr.f32.mxu0 0.0
      %2587 = vmatmul.mubr.f32.gmra.mxu0 %v2046
      %v2588 = vpop.f32.mrf.mxu0
      %v2589 = vadd.f32 %v1908, %v2588
      %v2590 = vpop.f32.mrf.mxu0
      %v2591 = vadd.f32 %v1912, %v2590
      %2592 = vmatprep.mubr.f32.mxu0 0.0
      %2593 = vmatmul.mubr.f32.gmra.mxu0 %v2049
      %v2594 = vpop.f32.mrf.mxu0
      %v2595 = vadd.f32 %v1908, %v2594
      %v2596 = vpop.f32.mrf.mxu0
      %v2597 = vadd.f32 %v1912, %v2596
      %2598 = vmatprep.mubr.f32.mxu0 0.0
      %2599 = vmatmul.mubr.f32.gmra.mxu0 %v2052
      %v2600 = vpop.f32.mrf.mxu0
      %v2601 = vadd.f32 %v1908, %v2600
      %v2602 = vpop.f32.mrf.mxu0
      %v2603 = vadd.f32 %v1912, %v2602
      %2604 = vdwg.mxu0
      %2605 = vmatprep.subr.mxu0 0.0
      %2606 = vmatpush1.msra.mxu0 0.0
      %2607 = vmatprep.subr.mxu0 0.0
      %2608 = vmatpush1.msra.mxu0 0.0
      %2609 = vmatprep.subr.mxu0 0.0
      %2610 = vmatpush1.msra.mxu0 0.0
      %2611 = vmatprep.subr.mxu0 0.0
      %2612 = vmatpush1.msra.mxu0 0.0
      %2613 = vmatprep.subr.mxu0 0.0
      %2614 = vmatpush1.msra.mxu0 0.0
      %2615 = vmatprep.subr.mxu0 0.0
      %2616 = vmatpush1.msra.mxu0 0.0
      %2617 = vmatprep.subr.mxu0 0.0
      %2618 = vmatpush1.msra.mxu0 0.0
      %2619 = vmatprep.subr.mxu0 0.0
      %2620 = vmatpush1.msra.mxu0 0.0
      %2621 = vmatprep.subr.mxu0 0.0
      %2622 = vmatpush1.msra.mxu0 0.0
      %2623 = vmatprep.subr.mxu0 0.0
      %2624 = vmatpush1.msra.mxu0 0.0
      %2625 = vmatprep.subr.mxu0 0.0
      %2626 = vmatpush1.msra.mxu0 0.0
      %2627 = vmatprep.subr.mxu0 %v2071
      %2628 = vmatpush1.msra.mxu0 %v2068
      %2629 = vmatprep.subr.mxu0 %v1874
      %2630 = vmatpush1.msra.mxu0 %v1873
      %2631 = vmatprep.subr.mxu0 %v1862
      %2632 = vmatpush1.msra.mxu0 %v1861
      %2633 = vmatprep.subr.mxu0 %v1850
      %2634 = vmatpush1.msra.mxu0 %v1849
      %2635 = vmatprep.subr.mxu0 %v1838
      %2636 = vmatpush1.msra.mxu0 %v1837
      %2637 = vmatprep.subr.mxu0 0.0
      %2638 = vmatpush2.msra.mxu0 0.0
      %2639 = vmatprep.subr.mxu0 0.0
      %2640 = vmatpush2.msra.mxu0 0.0
      %2641 = vmatprep.subr.mxu0 0.0
      %2642 = vmatpush2.msra.mxu0 0.0
      %2643 = vmatprep.subr.mxu0 0.0
      %2644 = vmatpush2.msra.mxu0 0.0
      %2645 = vmatprep.subr.mxu0 0.0
      %2646 = vmatpush2.msra.mxu0 0.0
      %2647 = vmatprep.subr.mxu0 0.0
      %2648 = vmatpush2.msra.mxu0 0.0
      %2649 = vmatprep.subr.mxu0 0.0
      %2650 = vmatpush2.msra.mxu0 0.0
      %2651 = vmatprep.subr.mxu0 0.0
      %2652 = vmatpush2.msra.mxu0 0.0
      %2653 = vmatprep.subr.mxu0 0.0
      %2654 = vmatpush2.msra.mxu0 0.0
      %2655 = vmatprep.subr.mxu0 0.0
      %2656 = vmatpush2.msra.mxu0 0.0
      %2657 = vmatprep.subr.mxu0 0.0
      %2658 = vmatpush2.msra.mxu0 0.0
      %2659 = vmatprep.subr.mxu0 0.0
      %2660 = vmatpush2.msra.mxu0 0.0
      %2661 = vmatprep.subr.mxu0 0.0
      %2662 = vmatpush2.msra.mxu0 0.0
      %2663 = vmatprep.subr.mxu0 0.0
      %2664 = vmatpush2.msra.mxu0 0.0
      %2665 = vmatprep.subr.mxu0 0.0
      %2666 = vmatpush2.msra.mxu0 0.0
      %2667 = vmatprep.subr.mxu0 0.0
      %2668 = vmatpush2.msra.mxu0 0.0
      %2669 = vmatprep.mubr.f32.mxu0 0.0
      %2670 = vmatmul.mubr.f32.gmra.mxu0 %v1959
      %v2671 = vpop.f32.mrf.mxu0
      %v2672 = vadd.f32 %v1916, %v2671
      %v2673 = vpop.f32.mrf.mxu0
      %v2674 = vadd.f32 %v1920, %v2673
      %2675 = vmatprep.mubr.f32.mxu0 0.0
      %2676 = vmatmul.mubr.f32.gmra.mxu0 %v1962
      %v2677 = vpop.f32.mrf.mxu0
      %v2678 = vadd.f32 %v1916, %v2677
      %v2679 = vpop.f32.mrf.mxu0
      %v2680 = vadd.f32 %v1920, %v2679
      %2681 = vmatprep.mubr.f32.mxu0 0.0
      %2682 = vmatmul.mubr.f32.gmra.mxu0 %v1965
      %v2683 = vpop.f32.mrf.mxu0
      %v2684 = vadd.f32 %v1916, %v2683
      %v2685 = vpop.f32.mrf.mxu0
      %v2686 = vadd.f32 %v1920, %v2685
      %2687 = vmatprep.mubr.f32.mxu0 0.0
      %2688 = vmatmul.mubr.f32.gmra.mxu0 %v1968
      %v2689 = vpop.f32.mrf.mxu0
      %v2690 = vadd.f32 %v1916, %v2689
      %v2691 = vpop.f32.mrf.mxu0
      %v2692 = vadd.f32 %v1920, %v2691
      %2693 = vmatprep.mubr.f32.mxu0 0.0
      %2694 = vmatmul.mubr.f32.gmra.mxu0 %v1971
      %v2695 = vpop.f32.mrf.mxu0
      %v2696 = vadd.f32 %v1916, %v2695
      %v2697 = vpop.f32.mrf.mxu0
      %v2698 = vadd.f32 %v1920, %v2697
      %2699 = vmatprep.mubr.f32.mxu0 0.0
      %2700 = vmatmul.mubr.f32.gmra.mxu0 %v1974
      %v2701 = vpop.f32.mrf.mxu0
      %v2702 = vadd.f32 %v1916, %v2701
      %v2703 = vpop.f32.mrf.mxu0
      %v2704 = vadd.f32 %v1920, %v2703
      %2705 = vmatprep.mubr.f32.mxu0 0.0
      %2706 = vmatmul.mubr.f32.gmra.mxu0 %v1977
      %v2707 = vpop.f32.mrf.mxu0
      %v2708 = vadd.f32 %v1916, %v2707
      %v2709 = vpop.f32.mrf.mxu0
      %v2710 = vadd.f32 %v1920, %v2709
      %2711 = vmatprep.mubr.f32.mxu0 0.0
      %2712 = vmatmul.mubr.f32.gmra.mxu0 %v1980
      %v2713 = vpop.f32.mrf.mxu0
      %v2714 = vadd.f32 %v1916, %v2713
      %v2715 = vpop.f32.mrf.mxu0
      %v2716 = vadd.f32 %v1920, %v2715
      %2717 = vmatprep.mubr.f32.mxu0 0.0
      %2718 = vmatmul.mubr.f32.gmra.mxu0 %v1983
      %v2719 = vpop.f32.mrf.mxu0
      %v2720 = vadd.f32 %v1916, %v2719
      %v2721 = vpop.f32.mrf.mxu0
      %v2722 = vadd.f32 %v1920, %v2721
      %2723 = vmatprep.mubr.f32.mxu0 0.0
      %2724 = vmatmul.mubr.f32.gmra.mxu0 %v1986
      %v2725 = vpop.f32.mrf.mxu0
      %v2726 = vadd.f32 %v1916, %v2725
      %v2727 = vpop.f32.mrf.mxu0
      %v2728 = vadd.f32 %v1920, %v2727
      %2729 = vmatprep.mubr.f32.mxu0 0.0
      %2730 = vmatmul.mubr.f32.gmra.mxu0 %v1989
      %v2731 = vpop.f32.mrf.mxu0
      %v2732 = vadd.f32 %v1916, %v2731
      %v2733 = vpop.f32.mrf.mxu0
      %v2734 = vadd.f32 %v1920, %v2733
      %2735 = vmatprep.mubr.f32.mxu0 0.0
      %2736 = vmatmul.mubr.f32.gmra.mxu0 %v1992
      %v2737 = vpop.f32.mrf.mxu0
      %v2738 = vadd.f32 %v1916, %v2737
      %v2739 = vpop.f32.mrf.mxu0
      %v2740 = vadd.f32 %v1920, %v2739
      %2741 = vmatprep.mubr.f32.mxu0 0.0
      %2742 = vmatmul.mubr.f32.gmra.mxu0 %v1995
      %v2743 = vpop.f32.mrf.mxu0
      %v2744 = vadd.f32 %v1916, %v2743
      %v2745 = vpop.f32.mrf.mxu0
      %v2746 = vadd.f32 %v1920, %v2745
      %2747 = vmatprep.mubr.f32.mxu0 0.0
      %2748 = vmatmul.mubr.f32.gmra.mxu0 %v1998
      %v2749 = vpop.f32.mrf.mxu0
      %v2750 = vadd.f32 %v1916, %v2749
      %v2751 = vpop.f32.mrf.mxu0
      %v2752 = vadd.f32 %v1920, %v2751
      %2753 = vmatprep.mubr.f32.mxu0 0.0
      %2754 = vmatmul.mubr.f32.gmra.mxu0 %v2001
      %v2755 = vpop.f32.mrf.mxu0
      %v2756 = vadd.f32 %v1916, %v2755
      %v2757 = vpop.f32.mrf.mxu0
      %v2758 = vadd.f32 %v1920, %v2757
      %2759 = vmatprep.mubr.f32.mxu0 0.0
      %2760 = vmatmul.mubr.f32.gmra.mxu0 %v2004
      %v2761 = vpop.f32.mrf.mxu0
      %v2762 = vadd.f32 %v1916, %v2761
      %v2763 = vpop.f32.mrf.mxu0
      %v2764 = vadd.f32 %v1920, %v2763
      %2765 = vmatprep.mubr.f32.mxu0 0.0
      %2766 = vmatmul.mubr.f32.gmra.mxu0 %v2007
      %v2767 = vpop.f32.mrf.mxu0
      %v2768 = vadd.f32 %v1916, %v2767
      %v2769 = vpop.f32.mrf.mxu0
      %v2770 = vadd.f32 %v1920, %v2769
      %2771 = vmatprep.mubr.f32.mxu0 0.0
      %2772 = vmatmul.mubr.f32.gmra.mxu0 %v2010
      %v2773 = vpop.f32.mrf.mxu0
      %v2774 = vadd.f32 %v1916, %v2773
      %v2775 = vpop.f32.mrf.mxu0
      %v2776 = vadd.f32 %v1920, %v2775
      %2777 = vmatprep.mubr.f32.mxu0 0.0
      %2778 = vmatmul.mubr.f32.gmra.mxu0 %v2013
      %v2779 = vpop.f32.mrf.mxu0
      %v2780 = vadd.f32 %v1916, %v2779
      %v2781 = vpop.f32.mrf.mxu0
      %v2782 = vadd.f32 %v1920, %v2781
      %2783 = vmatprep.mubr.f32.mxu0 0.0
      %2784 = vmatmul.mubr.f32.gmra.mxu0 %v2016
      %v2785 = vpop.f32.mrf.mxu0
      %v2786 = vadd.f32 %v1916, %v2785
      %v2787 = vpop.f32.mrf.mxu0
      %v2788 = vadd.f32 %v1920, %v2787
      %2789 = vmatprep.mubr.f32.mxu0 0.0
      %2790 = vmatmul.mubr.f32.gmra.mxu0 %v2019
      %v2791 = vpop.f32.mrf.mxu0
      %v2792 = vadd.f32 %v1916, %v2791
      %v2793 = vpop.f32.mrf.mxu0
      %v2794 = vadd.f32 %v1920, %v2793
      %2795 = vmatprep.mubr.f32.mxu0 0.0
      %2796 = vmatmul.mubr.f32.gmra.mxu0 %v2022
      %v2797 = vpop.f32.mrf.mxu0
      %v2798 = vadd.f32 %v1916, %v2797
      %v2799 = vpop.f32.mrf.mxu0
      %v2800 = vadd.f32 %v1920, %v2799
      %2801 = vmatprep.mubr.f32.mxu0 0.0
      %2802 = vmatmul.mubr.f32.gmra.mxu0 %v2025
      %v2803 = vpop.f32.mrf.mxu0
      %v2804 = vadd.f32 %v1916, %v2803
      %v2805 = vpop.f32.mrf.mxu0
      %v2806 = vadd.f32 %v1920, %v2805
      %2807 = vmatprep.mubr.f32.mxu0 0.0
      %2808 = vmatmul.mubr.f32.gmra.mxu0 %v2028
      %v2809 = vpop.f32.mrf.mxu0
      %v2810 = vadd.f32 %v1916, %v2809
      %v2811 = vpop.f32.mrf.mxu0
      %v2812 = vadd.f32 %v1920, %v2811
      %2813 = vmatprep.mubr.f32.mxu0 0.0
      %2814 = vmatmul.mubr.f32.gmra.mxu0 %v2031
      %v2815 = vpop.f32.mrf.mxu0
      %v2816 = vadd.f32 %v1916, %v2815
      %v2817 = vpop.f32.mrf.mxu0
      %v2818 = vadd.f32 %v1920, %v2817
      %2819 = vmatprep.mubr.f32.mxu0 0.0
      %2820 = vmatmul.mubr.f32.gmra.mxu0 %v2034
      %v2821 = vpop.f32.mrf.mxu0
      %v2822 = vadd.f32 %v1916, %v2821
      %v2823 = vpop.f32.mrf.mxu0
      %v2824 = vadd.f32 %v1920, %v2823
      %2825 = vmatprep.mubr.f32.mxu0 0.0
      %2826 = vmatmul.mubr.f32.gmra.mxu0 %v2037
      %v2827 = vpop.f32.mrf.mxu0
      %v2828 = vadd.f32 %v1916, %v2827
      %v2829 = vpop.f32.mrf.mxu0
      %v2830 = vadd.f32 %v1920, %v2829
      %2831 = vmatprep.mubr.f32.mxu0 0.0
      %2832 = vmatmul.mubr.f32.gmra.mxu0 %v2040
      %v2833 = vpop.f32.mrf.mxu0
      %v2834 = vadd.f32 %v1916, %v2833
      %v2835 = vpop.f32.mrf.mxu0
      %v2836 = vadd.f32 %v1920, %v2835
      %2837 = vmatprep.mubr.f32.mxu0 0.0
      %2838 = vmatmul.mubr.f32.gmra.mxu0 %v2043
      %v2839 = vpop.f32.mrf.mxu0
      %v2840 = vadd.f32 %v1916, %v2839
      %v2841 = vpop.f32.mrf.mxu0
      %v2842 = vadd.f32 %v1920, %v2841
      %2843 = vmatprep.mubr.f32.mxu0 0.0
      %2844 = vmatmul.mubr.f32.gmra.mxu0 %v2046
      %v2845 = vpop.f32.mrf.mxu0
      %v2846 = vadd.f32 %v1916, %v2845
      %v2847 = vpop.f32.mrf.mxu0
      %v2848 = vadd.f32 %v1920, %v2847
      %2849 = vmatprep.mubr.f32.mxu0 0.0
      %2850 = vmatmul.mubr.f32.gmra.mxu0 %v2049
      %v2851 = vpop.f32.mrf.mxu0
      %v2852 = vadd.f32 %v1916, %v2851
      %v2853 = vpop.f32.mrf.mxu0
      %v2854 = vadd.f32 %v1920, %v2853
      %2855 = vmatprep.mubr.f32.mxu0 0.0
      %2856 = vmatmul.mubr.f32.gmra.mxu0 %v2052
      %v2857 = vpop.f32.mrf.mxu0
      %v2858 = vadd.f32 %v1916, %v2857
      %v2859 = vpop.f32.mrf.mxu0
      %v2860 = vadd.f32 %v1920, %v2859
      %2861 = vdwg.mxu0
      %2862 = vmatprep.subr.mxu0 0.0
      %2863 = vmatpush1.msra.mxu0 0.0
      %2864 = vmatprep.subr.mxu0 0.0
      %2865 = vmatpush1.msra.mxu0 0.0
      %2866 = vmatprep.subr.mxu0 0.0
      %2867 = vmatpush1.msra.mxu0 0.0
      %2868 = vmatprep.subr.mxu0 0.0
      %2869 = vmatpush1.msra.mxu0 0.0
      %2870 = vmatprep.subr.mxu0 0.0
      %2871 = vmatpush1.msra.mxu0 0.0
      %2872 = vmatprep.subr.mxu0 0.0
      %2873 = vmatpush1.msra.mxu0 0.0
      %2874 = vmatprep.subr.mxu0 0.0
      %2875 = vmatpush1.msra.mxu0 0.0
      %2876 = vmatprep.subr.mxu0 0.0
      %2877 = vmatpush1.msra.mxu0 0.0
      %2878 = vmatprep.subr.mxu0 0.0
      %2879 = vmatpush1.msra.mxu0 0.0
      %2880 = vmatprep.subr.mxu0 0.0
      %2881 = vmatpush1.msra.mxu0 0.0
      %2882 = vmatprep.subr.mxu0 0.0
      %2883 = vmatpush1.msra.mxu0 0.0
      %2884 = vmatprep.subr.mxu0 %v2077
      %2885 = vmatpush1.msra.mxu0 %v2074
      %2886 = vmatprep.subr.mxu0 %v1876
      %2887 = vmatpush1.msra.mxu0 %v1875
      %2888 = vmatprep.subr.mxu0 %v1864
      %2889 = vmatpush1.msra.mxu0 %v1863
      %2890 = vmatprep.subr.mxu0 %v1852
      %2891 = vmatpush1.msra.mxu0 %v1851
      %2892 = vmatprep.subr.mxu0 %v1840
      %2893 = vmatpush1.msra.mxu0 %v1839
      %2894 = vmatprep.subr.mxu0 0.0
      %2895 = vmatpush2.msra.mxu0 0.0
      %2896 = vmatprep.subr.mxu0 0.0
      %2897 = vmatpush2.msra.mxu0 0.0
      %2898 = vmatprep.subr.mxu0 0.0
      %2899 = vmatpush2.msra.mxu0 0.0
      %2900 = vmatprep.subr.mxu0 0.0
      %2901 = vmatpush2.msra.mxu0 0.0
      %2902 = vmatprep.subr.mxu0 0.0
      %2903 = vmatpush2.msra.mxu0 0.0
      %2904 = vmatprep.subr.mxu0 0.0
      %2905 = vmatpush2.msra.mxu0 0.0
      %2906 = vmatprep.subr.mxu0 0.0
      %2907 = vmatpush2.msra.mxu0 0.0
      %2908 = vmatprep.subr.mxu0 0.0
      %2909 = vmatpush2.msra.mxu0 0.0
      %2910 = vmatprep.subr.mxu0 0.0
      %2911 = vmatpush2.msra.mxu0 0.0
      %2912 = vmatprep.subr.mxu0 0.0
      %2913 = vmatpush2.msra.mxu0 0.0
      %2914 = vmatprep.subr.mxu0 0.0
      %2915 = vmatpush2.msra.mxu0 0.0
      %2916 = vmatprep.subr.mxu0 0.0
      %2917 = vmatpush2.msra.mxu0 0.0
      %2918 = vmatprep.subr.mxu0 0.0
      %2919 = vmatpush2.msra.mxu0 0.0
      %2920 = vmatprep.subr.mxu0 0.0
      %2921 = vmatpush2.msra.mxu0 0.0
      %2922 = vmatprep.subr.mxu0 0.0
      %2923 = vmatpush2.msra.mxu0 0.0
      %2924 = vmatprep.subr.mxu0 0.0
      %2925 = vmatpush2.msra.mxu0 0.0
      %2926 = vmatprep.mubr.f32.mxu0 0.0
      %2927 = vmatmul.mubr.f32.gmra.mxu0 %v1959
      %v2928 = vpop.f32.mrf.mxu0
      %v2929 = vadd.f32 %v1924, %v2928
      %v2930 = vpop.f32.mrf.mxu0
      %v2931 = vadd.f32 %v1928, %v2930
      %2932 = vmatprep.mubr.f32.mxu0 0.0
      %2933 = vmatmul.mubr.f32.gmra.mxu0 %v1962
      %v2934 = vpop.f32.mrf.mxu0
      %v2935 = vadd.f32 %v1924, %v2934
      %v2936 = vpop.f32.mrf.mxu0
      %v2937 = vadd.f32 %v1928, %v2936
      %2938 = vmatprep.mubr.f32.mxu0 0.0
      %2939 = vmatmul.mubr.f32.gmra.mxu0 %v1965
      %v2940 = vpop.f32.mrf.mxu0
      %v2941 = vadd.f32 %v1924, %v2940
      %v2942 = vpop.f32.mrf.mxu0
      %v2943 = vadd.f32 %v1928, %v2942
      %2944 = vmatprep.mubr.f32.mxu0 0.0
      %2945 = vmatmul.mubr.f32.gmra.mxu0 %v1968
      %v2946 = vpop.f32.mrf.mxu0
      %v2947 = vadd.f32 %v1924, %v2946
      %v2948 = vpop.f32.mrf.mxu0
      %v2949 = vadd.f32 %v1928, %v2948
      %2950 = vmatprep.mubr.f32.mxu0 0.0
      %2951 = vmatmul.mubr.f32.gmra.mxu0 %v1971
      %v2952 = vpop.f32.mrf.mxu0
      %v2953 = vadd.f32 %v1924, %v2952
      %v2954 = vpop.f32.mrf.mxu0
      %v2955 = vadd.f32 %v1928, %v2954
      %2956 = vmatprep.mubr.f32.mxu0 0.0
      %2957 = vmatmul.mubr.f32.gmra.mxu0 %v1974
      %v2958 = vpop.f32.mrf.mxu0
      %v2959 = vadd.f32 %v1924, %v2958
      %v2960 = vpop.f32.mrf.mxu0
      %v2961 = vadd.f32 %v1928, %v2960
      %2962 = vmatprep.mubr.f32.mxu0 0.0
      %2963 = vmatmul.mubr.f32.gmra.mxu0 %v1977
      %v2964 = vpop.f32.mrf.mxu0
      %v2965 = vadd.f32 %v1924, %v2964
      %v2966 = vpop.f32.mrf.mxu0
      %v2967 = vadd.f32 %v1928, %v2966
      %2968 = vmatprep.mubr.f32.mxu0 0.0
      %2969 = vmatmul.mubr.f32.gmra.mxu0 %v1980
      %v2970 = vpop.f32.mrf.mxu0
      %v2971 = vadd.f32 %v1924, %v2970
      %v2972 = vpop.f32.mrf.mxu0
      %v2973 = vadd.f32 %v1928, %v2972
      %2974 = vmatprep.mubr.f32.mxu0 0.0
      %2975 = vmatmul.mubr.f32.gmra.mxu0 %v1983
      %v2976 = vpop.f32.mrf.mxu0
      %v2977 = vadd.f32 %v1924, %v2976
      %v2978 = vpop.f32.mrf.mxu0
      %v2979 = vadd.f32 %v1928, %v2978
      %2980 = vmatprep.mubr.f32.mxu0 0.0
      %2981 = vmatmul.mubr.f32.gmra.mxu0 %v1986
      %v2982 = vpop.f32.mrf.mxu0
      %v2983 = vadd.f32 %v1924, %v2982
      %v2984 = vpop.f32.mrf.mxu0
      %v2985 = vadd.f32 %v1928, %v2984
      %2986 = vmatprep.mubr.f32.mxu0 0.0
      %2987 = vmatmul.mubr.f32.gmra.mxu0 %v1989
      %v2988 = vpop.f32.mrf.mxu0
      %v2989 = vadd.f32 %v1924, %v2988
      %v2990 = vpop.f32.mrf.mxu0
      %v2991 = vadd.f32 %v1928, %v2990
      %2992 = vmatprep.mubr.f32.mxu0 0.0
      %2993 = vmatmul.mubr.f32.gmra.mxu0 %v1992
      %v2994 = vpop.f32.mrf.mxu0
      %v2995 = vadd.f32 %v1924, %v2994
      %v2996 = vpop.f32.mrf.mxu0
      %v2997 = vadd.f32 %v1928, %v2996
      %2998 = vmatprep.mubr.f32.mxu0 0.0
      %2999 = vmatmul.mubr.f32.gmra.mxu0 %v1995
      %v3000 = vpop.f32.mrf.mxu0
      %v3001 = vadd.f32 %v1924, %v3000
      %v3002 = vpop.f32.mrf.mxu0
      %v3003 = vadd.f32 %v1928, %v3002
      %3004 = vmatprep.mubr.f32.mxu0 0.0
      %3005 = vmatmul.mubr.f32.gmra.mxu0 %v1998
      %v3006 = vpop.f32.mrf.mxu0
      %v3007 = vadd.f32 %v1924, %v3006
      %v3008 = vpop.f32.mrf.mxu0
      %v3009 = vadd.f32 %v1928, %v3008
      %3010 = vmatprep.mubr.f32.mxu0 0.0
      %3011 = vmatmul.mubr.f32.gmra.mxu0 %v2001
      %v3012 = vpop.f32.mrf.mxu0
      %v3013 = vadd.f32 %v1924, %v3012
      %v3014 = vpop.f32.mrf.mxu0
      %v3015 = vadd.f32 %v1928, %v3014
      %3016 = vmatprep.mubr.f32.mxu0 0.0
      %3017 = vmatmul.mubr.f32.gmra.mxu0 %v2004
      %v3018 = vpop.f32.mrf.mxu0
      %v3019 = vadd.f32 %v1924, %v3018
      %v3020 = vpop.f32.mrf.mxu0
      %v3021 = vadd.f32 %v1928, %v3020
      %3022 = vmatprep.mubr.f32.mxu0 0.0
      %3023 = vmatmul.mubr.f32.gmra.mxu0 %v2007
      %v3024 = vpop.f32.mrf.mxu0
      %v3025 = vadd.f32 %v1924, %v3024
      %v3026 = vpop.f32.mrf.mxu0
      %v3027 = vadd.f32 %v1928, %v3026
      %3028 = vmatprep.mubr.f32.mxu0 0.0
      %3029 = vmatmul.mubr.f32.gmra.mxu0 %v2010
      %v3030 = vpop.f32.mrf.mxu0
      %v3031 = vadd.f32 %v1924, %v3030
      %v3032 = vpop.f32.mrf.mxu0
      %v3033 = vadd.f32 %v1928, %v3032
      %3034 = vmatprep.mubr.f32.mxu0 0.0
      %3035 = vmatmul.mubr.f32.gmra.mxu0 %v2013
      %v3036 = vpop.f32.mrf.mxu0
      %v3037 = vadd.f32 %v1924, %v3036
      %v3038 = vpop.f32.mrf.mxu0
      %v3039 = vadd.f32 %v1928, %v3038
      %3040 = vmatprep.mubr.f32.mxu0 0.0
      %3041 = vmatmul.mubr.f32.gmra.mxu0 %v2016
      %v3042 = vpop.f32.mrf.mxu0
      %v3043 = vadd.f32 %v1924, %v3042
      %v3044 = vpop.f32.mrf.mxu0
      %v3045 = vadd.f32 %v1928, %v3044
      %3046 = vmatprep.mubr.f32.mxu0 0.0
      %3047 = vmatmul.mubr.f32.gmra.mxu0 %v2019
      %v3048 = vpop.f32.mrf.mxu0
      %v3049 = vadd.f32 %v1924, %v3048
      %v3050 = vpop.f32.mrf.mxu0
      %v3051 = vadd.f32 %v1928, %v3050
      %3052 = vmatprep.mubr.f32.mxu0 0.0
      %3053 = vmatmul.mubr.f32.gmra.mxu0 %v2022
      %v3054 = vpop.f32.mrf.mxu0
      %v3055 = vadd.f32 %v1924, %v3054
      %v3056 = vpop.f32.mrf.mxu0
      %v3057 = vadd.f32 %v1928, %v3056
      %3058 = vmatprep.mubr.f32.mxu0 0.0
      %3059 = vmatmul.mubr.f32.gmra.mxu0 %v2025
      %v3060 = vpop.f32.mrf.mxu0
      %v3061 = vadd.f32 %v1924, %v3060
      %v3062 = vpop.f32.mrf.mxu0
      %v3063 = vadd.f32 %v1928, %v3062
      %3064 = vmatprep.mubr.f32.mxu0 0.0
      %3065 = vmatmul.mubr.f32.gmra.mxu0 %v2028
      %v3066 = vpop.f32.mrf.mxu0
      %v3067 = vadd.f32 %v1924, %v3066
      %v3068 = vpop.f32.mrf.mxu0
      %v3069 = vadd.f32 %v1928, %v3068
      %3070 = vmatprep.mubr.f32.mxu0 0.0
      %3071 = vmatmul.mubr.f32.gmra.mxu0 %v2031
      %v3072 = vpop.f32.mrf.mxu0
      %v3073 = vadd.f32 %v1924, %v3072
      %v3074 = vpop.f32.mrf.mxu0
      %v3075 = vadd.f32 %v1928, %v3074
      %3076 = vmatprep.mubr.f32.mxu0 0.0
      %3077 = vmatmul.mubr.f32.gmra.mxu0 %v2034
      %v3078 = vpop.f32.mrf.mxu0
      %v3079 = vadd.f32 %v1924, %v3078
      %v3080 = vpop.f32.mrf.mxu0
      %v3081 = vadd.f32 %v1928, %v3080
      %3082 = vmatprep.mubr.f32.mxu0 0.0
      %3083 = vmatmul.mubr.f32.gmra.mxu0 %v2037
      %v3084 = vpop.f32.mrf.mxu0
      %v3085 = vadd.f32 %v1924, %v3084
      %v3086 = vpop.f32.mrf.mxu0
      %v3087 = vadd.f32 %v1928, %v3086
      %3088 = vmatprep.mubr.f32.mxu0 0.0
      %3089 = vmatmul.mubr.f32.gmra.mxu0 %v2040
      %v3090 = vpop.f32.mrf.mxu0
      %v3091 = vadd.f32 %v1924, %v3090
      %v3092 = vpop.f32.mrf.mxu0
      %v3093 = vadd.f32 %v1928, %v3092
      %3094 = vmatprep.mubr.f32.mxu0 0.0
      %3095 = vmatmul.mubr.f32.gmra.mxu0 %v2043
      %v3096 = vpop.f32.mrf.mxu0
      %v3097 = vadd.f32 %v1924, %v3096
      %v3098 = vpop.f32.mrf.mxu0
      %v3099 = vadd.f32 %v1928, %v3098
      %3100 = vmatprep.mubr.f32.mxu0 0.0
      %3101 = vmatmul.mubr.f32.gmra.mxu0 %v2046
      %v3102 = vpop.f32.mrf.mxu0
      %v3103 = vadd.f32 %v1924, %v3102
      %v3104 = vpop.f32.mrf.mxu0
      %v3105 = vadd.f32 %v1928, %v3104
      %3106 = vmatprep.mubr.f32.mxu0 0.0
      %3107 = vmatmul.mubr.f32.gmra.mxu0 %v2049
      %v3108 = vpop.f32.mrf.mxu0
      %v3109 = vadd.f32 %v1924, %v3108
      %v3110 = vpop.f32.mrf.mxu0
      %v3111 = vadd.f32 %v1928, %v3110
      %3112 = vmatprep.mubr.f32.mxu0 0.0
      %3113 = vmatmul.mubr.f32.gmra.mxu0 %v2052
      %v3114 = vpop.f32.mrf.mxu0
      %v3115 = vadd.f32 %v1924, %v3114
      %v3116 = vpop.f32.mrf.mxu0
      %v3117 = vadd.f32 %v1928, %v3116
      %3118 = vdwg.mxu0
      %3119 = vmatprep.subr.mxu0 0.0
      %3120 = vmatpush1.msra.mxu0 0.0
      %3121 = vmatprep.subr.mxu0 0.0
      %3122 = vmatpush1.msra.mxu0 0.0
      %3123 = vmatprep.subr.mxu0 0.0
      %3124 = vmatpush1.msra.mxu0 0.0
      %3125 = vmatprep.subr.mxu0 0.0
      %3126 = vmatpush1.msra.mxu0 0.0
      %3127 = vmatprep.subr.mxu0 0.0
      %3128 = vmatpush1.msra.mxu0 0.0
      %3129 = vmatprep.subr.mxu0 0.0
      %3130 = vmatpush1.msra.mxu0 0.0
      %3131 = vmatprep.subr.mxu0 0.0
      %3132 = vmatpush1.msra.mxu0 0.0
      %3133 = vmatprep.subr.mxu0 0.0
      %3134 = vmatpush1.msra.mxu0 0.0
      %3135 = vmatprep.subr.mxu0 0.0
      %3136 = vmatpush1.msra.mxu0 0.0
      %3137 = vmatprep.subr.mxu0 0.0
      %3138 = vmatpush1.msra.mxu0 0.0
      %3139 = vmatprep.subr.mxu0 0.0
      %3140 = vmatpush1.msra.mxu0 0.0
      %3141 = vmatprep.subr.mxu0 %v2083
      %3142 = vmatpush1.msra.mxu0 %v2080
      %3143 = vmatprep.subr.mxu0 %v1878
      %3144 = vmatpush1.msra.mxu0 %v1877
      %3145 = vmatprep.subr.mxu0 %v1866
      %3146 = vmatpush1.msra.mxu0 %v1865
      %3147 = vmatprep.subr.mxu0 %v1854
      %3148 = vmatpush1.msra.mxu0 %v1853
      %3149 = vmatprep.subr.mxu0 %v1842
      %3150 = vmatpush1.msra.mxu0 %v1841
      %3151 = vmatprep.subr.mxu0 0.0
      %3152 = vmatpush2.msra.mxu0 0.0
      %3153 = vmatprep.subr.mxu0 0.0
      %3154 = vmatpush2.msra.mxu0 0.0
      %3155 = vmatprep.subr.mxu0 0.0
      %3156 = vmatpush2.msra.mxu0 0.0
      %3157 = vmatprep.subr.mxu0 0.0
      %3158 = vmatpush2.msra.mxu0 0.0
      %3159 = vmatprep.subr.mxu0 0.0
      %3160 = vmatpush2.msra.mxu0 0.0
      %3161 = vmatprep.subr.mxu0 0.0
      %3162 = vmatpush2.msra.mxu0 0.0
      %3163 = vmatprep.subr.mxu0 0.0
      %3164 = vmatpush2.msra.mxu0 0.0
      %3165 = vmatprep.subr.mxu0 0.0
      %3166 = vmatpush2.msra.mxu0 0.0
      %3167 = vmatprep.subr.mxu0 0.0
      %3168 = vmatpush2.msra.mxu0 0.0
      %3169 = vmatprep.subr.mxu0 0.0
      %3170 = vmatpush2.msra.mxu0 0.0
      %3171 = vmatprep.subr.mxu0 0.0
      %3172 = vmatpush2.msra.mxu0 0.0
      %3173 = vmatprep.subr.mxu0 0.0
      %3174 = vmatpush2.msra.mxu0 0.0
      %3175 = vmatprep.subr.mxu0 0.0
      %3176 = vmatpush2.msra.mxu0 0.0
      %3177 = vmatprep.subr.mxu0 0.0
      %3178 = vmatpush2.msra.mxu0 0.0
      %3179 = vmatprep.subr.mxu0 0.0
      %3180 = vmatpush2.msra.mxu0 0.0
      %3181 = vmatprep.subr.mxu0 0.0
      %3182 = vmatpush2.msra.mxu0 0.0
      %3183 = vmatprep.mubr.f32.mxu0 0.0
      %3184 = vmatmul.mubr.f32.gmra.mxu0 %v1959
      %v3185 = vpop.f32.mrf.mxu0
      %v3186 = vadd.f32 %v1932, %v3185
      %v3187 = vpop.f32.mrf.mxu0
      %v3188 = vadd.f32 %v1936, %v3187
      %3189 = vmatprep.mubr.f32.mxu0 0.0
      %3190 = vmatmul.mubr.f32.gmra.mxu0 %v1962
      %v3191 = vpop.f32.mrf.mxu0
      %v3192 = vadd.f32 %v1932, %v3191
      %v3193 = vpop.f32.mrf.mxu0
      %v3194 = vadd.f32 %v1936, %v3193
      %3195 = vmatprep.mubr.f32.mxu0 0.0
      %3196 = vmatmul.mubr.f32.gmra.mxu0 %v1965
      %v3197 = vpop.f32.mrf.mxu0
      %v3198 = vadd.f32 %v1932, %v3197
      %v3199 = vpop.f32.mrf.mxu0
      %v3200 = vadd.f32 %v1936, %v3199
      %3201 = vmatprep.mubr.f32.mxu0 0.0
      %3202 = vmatmul.mubr.f32.gmra.mxu0 %v1968
      %v3203 = vpop.f32.mrf.mxu0
      %v3204 = vadd.f32 %v1932, %v3203
      %v3205 = vpop.f32.mrf.mxu0
      %v3206 = vadd.f32 %v1936, %v3205
      %3207 = vmatprep.mubr.f32.mxu0 0.0
      %3208 = vmatmul.mubr.f32.gmra.mxu0 %v1971
      %v3209 = vpop.f32.mrf.mxu0
      %v3210 = vadd.f32 %v1932, %v3209
      %v3211 = vpop.f32.mrf.mxu0
      %v3212 = vadd.f32 %v1936, %v3211
      %3213 = vmatprep.mubr.f32.mxu0 0.0
      %3214 = vmatmul.mubr.f32.gmra.mxu0 %v1974
      %v3215 = vpop.f32.mrf.mxu0
      %v3216 = vadd.f32 %v1932, %v3215
      %v3217 = vpop.f32.mrf.mxu0
      %v3218 = vadd.f32 %v1936, %v3217
      %3219 = vmatprep.mubr.f32.mxu0 0.0
      %3220 = vmatmul.mubr.f32.gmra.mxu0 %v1977
      %v3221 = vpop.f32.mrf.mxu0
      %v3222 = vadd.f32 %v1932, %v3221
      %v3223 = vpop.f32.mrf.mxu0
      %v3224 = vadd.f32 %v1936, %v3223
      %3225 = vmatprep.mubr.f32.mxu0 0.0
      %3226 = vmatmul.mubr.f32.gmra.mxu0 %v1980
      %v3227 = vpop.f32.mrf.mxu0
      %v3228 = vadd.f32 %v1932, %v3227
      %v3229 = vpop.f32.mrf.mxu0
      %v3230 = vadd.f32 %v1936, %v3229
      %3231 = vmatprep.mubr.f32.mxu0 0.0
      %3232 = vmatmul.mubr.f32.gmra.mxu0 %v1983
      %v3233 = vpop.f32.mrf.mxu0
      %v3234 = vadd.f32 %v1932, %v3233
      %v3235 = vpop.f32.mrf.mxu0
      %v3236 = vadd.f32 %v1936, %v3235
      %3237 = vmatprep.mubr.f32.mxu0 0.0
      %3238 = vmatmul.mubr.f32.gmra.mxu0 %v1986
      %v3239 = vpop.f32.mrf.mxu0
      %v3240 = vadd.f32 %v1932, %v3239
      %v3241 = vpop.f32.mrf.mxu0
      %v3242 = vadd.f32 %v1936, %v3241
      %3243 = vmatprep.mubr.f32.mxu0 0.0
      %3244 = vmatmul.mubr.f32.gmra.mxu0 %v1989
      %v3245 = vpop.f32.mrf.mxu0
      %v3246 = vadd.f32 %v1932, %v3245
      %v3247 = vpop.f32.mrf.mxu0
      %v3248 = vadd.f32 %v1936, %v3247
      %3249 = vmatprep.mubr.f32.mxu0 0.0
      %3250 = vmatmul.mubr.f32.gmra.mxu0 %v1992
      %v3251 = vpop.f32.mrf.mxu0
      %v3252 = vadd.f32 %v1932, %v3251
      %v3253 = vpop.f32.mrf.mxu0
      %v3254 = vadd.f32 %v1936, %v3253
      %3255 = vmatprep.mubr.f32.mxu0 0.0
      %3256 = vmatmul.mubr.f32.gmra.mxu0 %v1995
      %v3257 = vpop.f32.mrf.mxu0
      %v3258 = vadd.f32 %v1932, %v3257
      %v3259 = vpop.f32.mrf.mxu0
      %v3260 = vadd.f32 %v1936, %v3259
      %3261 = vmatprep.mubr.f32.mxu0 0.0
      %3262 = vmatmul.mubr.f32.gmra.mxu0 %v1998
      %v3263 = vpop.f32.mrf.mxu0
      %v3264 = vadd.f32 %v1932, %v3263
      %v3265 = vpop.f32.mrf.mxu0
      %v3266 = vadd.f32 %v1936, %v3265
      %3267 = vmatprep.mubr.f32.mxu0 0.0
      %3268 = vmatmul.mubr.f32.gmra.mxu0 %v2001
      %v3269 = vpop.f32.mrf.mxu0
      %v3270 = vadd.f32 %v1932, %v3269
      %v3271 = vpop.f32.mrf.mxu0
      %v3272 = vadd.f32 %v1936, %v3271
      %3273 = vmatprep.mubr.f32.mxu0 0.0
      %3274 = vmatmul.mubr.f32.gmra.mxu0 %v2004
      %v3275 = vpop.f32.mrf.mxu0
      %v3276 = vadd.f32 %v1932, %v3275
      %v3277 = vpop.f32.mrf.mxu0
      %v3278 = vadd.f32 %v1936, %v3277
      %3279 = vmatprep.mubr.f32.mxu0 0.0
      %3280 = vmatmul.mubr.f32.gmra.mxu0 %v2007
      %v3281 = vpop.f32.mrf.mxu0
      %v3282 = vadd.f32 %v1932, %v3281
      %v3283 = vpop.f32.mrf.mxu0
      %v3284 = vadd.f32 %v1936, %v3283
      %3285 = vmatprep.mubr.f32.mxu0 0.0
      %3286 = vmatmul.mubr.f32.gmra.mxu0 %v2010
      %v3287 = vpop.f32.mrf.mxu0
      %v3288 = vadd.f32 %v1932, %v3287
      %v3289 = vpop.f32.mrf.mxu0
      %v3290 = vadd.f32 %v1936, %v3289
      %3291 = vmatprep.mubr.f32.mxu0 0.0
      %3292 = vmatmul.mubr.f32.gmra.mxu0 %v2013
      %v3293 = vpop.f32.mrf.mxu0
      %v3294 = vadd.f32 %v1932, %v3293
      %v3295 = vpop.f32.mrf.mxu0
      %v3296 = vadd.f32 %v1936, %v3295
      %3297 = vmatprep.mubr.f32.mxu0 0.0
      %3298 = vmatmul.mubr.f32.gmra.mxu0 %v2016
      %v3299 = vpop.f32.mrf.mxu0
      %v3300 = vadd.f32 %v1932, %v3299
      %v3301 = vpop.f32.mrf.mxu0
      %v3302 = vadd.f32 %v1936, %v3301
      %3303 = vmatprep.mubr.f32.mxu0 0.0
      %3304 = vmatmul.mubr.f32.gmra.mxu0 %v2019
      %v3305 = vpop.f32.mrf.mxu0
      %v3306 = vadd.f32 %v1932, %v3305
      %v3307 = vpop.f32.mrf.mxu0
      %v3308 = vadd.f32 %v1936, %v3307
      %3309 = vmatprep.mubr.f32.mxu0 0.0
      %3310 = vmatmul.mubr.f32.gmra.mxu0 %v2022
      %v3311 = vpop.f32.mrf.mxu0
      %v3312 = vadd.f32 %v1932, %v3311
      %v3313 = vpop.f32.mrf.mxu0
      %v3314 = vadd.f32 %v1936, %v3313
      %3315 = vmatprep.mubr.f32.mxu0 0.0
      %3316 = vmatmul.mubr.f32.gmra.mxu0 %v2025
      %v3317 = vpop.f32.mrf.mxu0
      %v3318 = vadd.f32 %v1932, %v3317
      %v3319 = vpop.f32.mrf.mxu0
      %v3320 = vadd.f32 %v1936, %v3319
      %3321 = vmatprep.mubr.f32.mxu0 0.0
      %3322 = vmatmul.mubr.f32.gmra.mxu0 %v2028
      %v3323 = vpop.f32.mrf.mxu0
      %v3324 = vadd.f32 %v1932, %v3323
      %v3325 = vpop.f32.mrf.mxu0
      %v3326 = vadd.f32 %v1936, %v3325
      %3327 = vmatprep.mubr.f32.mxu0 0.0
      %3328 = vmatmul.mubr.f32.gmra.mxu0 %v2031
      %v3329 = vpop.f32.mrf.mxu0
      %v3330 = vadd.f32 %v1932, %v3329
      %v3331 = vpop.f32.mrf.mxu0
      %v3332 = vadd.f32 %v1936, %v3331
      %3333 = vmatprep.mubr.f32.mxu0 0.0
      %3334 = vmatmul.mubr.f32.gmra.mxu0 %v2034
      %v3335 = vpop.f32.mrf.mxu0
      %v3336 = vadd.f32 %v1932, %v3335
      %v3337 = vpop.f32.mrf.mxu0
      %v3338 = vadd.f32 %v1936, %v3337
      %3339 = vmatprep.mubr.f32.mxu0 0.0
      %3340 = vmatmul.mubr.f32.gmra.mxu0 %v2037
      %v3341 = vpop.f32.mrf.mxu0
      %v3342 = vadd.f32 %v1932, %v3341
      %v3343 = vpop.f32.mrf.mxu0
      %v3344 = vadd.f32 %v1936, %v3343
      %3345 = vmatprep.mubr.f32.mxu0 0.0
      %3346 = vmatmul.mubr.f32.gmra.mxu0 %v2040
      %v3347 = vpop.f32.mrf.mxu0
      %v3348 = vadd.f32 %v1932, %v3347
      %v3349 = vpop.f32.mrf.mxu0
      %v3350 = vadd.f32 %v1936, %v3349
      %3351 = vmatprep.mubr.f32.mxu0 0.0
      %3352 = vmatmul.mubr.f32.gmra.mxu0 %v2043
      %v3353 = vpop.f32.mrf.mxu0
      %v3354 = vadd.f32 %v1932, %v3353
      %v3355 = vpop.f32.mrf.mxu0
      %v3356 = vadd.f32 %v1936, %v3355
      %3357 = vmatprep.mubr.f32.mxu0 0.0
      %3358 = vmatmul.mubr.f32.gmra.mxu0 %v2046
      %v3359 = vpop.f32.mrf.mxu0
      %v3360 = vadd.f32 %v1932, %v3359
      %v3361 = vpop.f32.mrf.mxu0
      %v3362 = vadd.f32 %v1936, %v3361
      %3363 = vmatprep.mubr.f32.mxu0 0.0
      %3364 = vmatmul.mubr.f32.gmra.mxu0 %v2049
      %v3365 = vpop.f32.mrf.mxu0
      %v3366 = vadd.f32 %v1932, %v3365
      %v3367 = vpop.f32.mrf.mxu0
      %v3368 = vadd.f32 %v1936, %v3367
      %3369 = vmatprep.mubr.f32.mxu0 0.0
      %3370 = vmatmul.mubr.f32.gmra.mxu0 %v2052
      %v3371 = vpop.f32.mrf.mxu0
      %v3372 = vadd.f32 %v1932, %v3371
      %v3373 = vpop.f32.mrf.mxu0
      %v3374 = vadd.f32 %v1936, %v3373
      %3375 = vdwg.mxu0
      %3376 = vmatprep.subr.mxu0 0.0
      %3377 = vmatpush1.msra.mxu0 0.0
      %3378 = vmatprep.subr.mxu0 0.0
      %3379 = vmatpush1.msra.mxu0 0.0
      %3380 = vmatprep.subr.mxu0 0.0
      %3381 = vmatpush1.msra.mxu0 0.0
      %3382 = vmatprep.subr.mxu0 0.0
      %3383 = vmatpush1.msra.mxu0 0.0
      %3384 = vmatprep.subr.mxu0 0.0
      %3385 = vmatpush1.msra.mxu0 0.0
      %3386 = vmatprep.subr.mxu0 0.0
      %3387 = vmatpush1.msra.mxu0 0.0
      %3388 = vmatprep.subr.mxu0 0.0
      %3389 = vmatpush1.msra.mxu0 0.0
      %3390 = vmatprep.subr.mxu0 0.0
      %3391 = vmatpush1.msra.mxu0 0.0
      %3392 = vmatprep.subr.mxu0 0.0
      %3393 = vmatpush1.msra.mxu0 0.0
      %3394 = vmatprep.subr.mxu0 0.0
      %3395 = vmatpush1.msra.mxu0 0.0
      %3396 = vmatprep.subr.mxu0 0.0
      %3397 = vmatpush1.msra.mxu0 0.0
      %3398 = vmatprep.subr.mxu0 %v2089
      %3399 = vmatpush1.msra.mxu0 %v2086
      %3400 = vmatprep.subr.mxu0 %v1880
      %3401 = vmatpush1.msra.mxu0 %v1879
      %3402 = vmatprep.subr.mxu0 %v1868
      %3403 = vmatpush1.msra.mxu0 %v1867
      %3404 = vmatprep.subr.mxu0 %v1856
      %3405 = vmatpush1.msra.mxu0 %v1855
      %3406 = vmatprep.subr.mxu0 %v1844
      %3407 = vmatpush1.msra.mxu0 %v1843
      %3408 = vmatprep.subr.mxu0 0.0
      %3409 = vmatpush2.msra.mxu0 0.0
      %3410 = vmatprep.subr.mxu0 0.0
      %3411 = vmatpush2.msra.mxu0 0.0
      %3412 = vmatprep.subr.mxu0 0.0
      %3413 = vmatpush2.msra.mxu0 0.0
      %3414 = vmatprep.subr.mxu0 0.0
      %3415 = vmatpush2.msra.mxu0 0.0
      %3416 = vmatprep.subr.mxu0 0.0
      %3417 = vmatpush2.msra.mxu0 0.0
      %3418 = vmatprep.subr.mxu0 0.0
      %3419 = vmatpush2.msra.mxu0 0.0
      %3420 = vmatprep.subr.mxu0 0.0
      %3421 = vmatpush2.msra.mxu0 0.0
      %3422 = vmatprep.subr.mxu0 0.0
      %3423 = vmatpush2.msra.mxu0 0.0
      %3424 = vmatprep.subr.mxu0 0.0
      %3425 = vmatpush2.msra.mxu0 0.0
      %3426 = vmatprep.subr.mxu0 0.0
      %3427 = vmatpush2.msra.mxu0 0.0
      %3428 = vmatprep.subr.mxu0 0.0
      %3429 = vmatpush2.msra.mxu0 0.0
      %3430 = vmatprep.subr.mxu0 0.0
      %3431 = vmatpush2.msra.mxu0 0.0
      %3432 = vmatprep.subr.mxu0 0.0
      %3433 = vmatpush2.msra.mxu0 0.0
      %3434 = vmatprep.subr.mxu0 0.0
      %3435 = vmatpush2.msra.mxu0 0.0
      %3436 = vmatprep.subr.mxu0 0.0
      %3437 = vmatpush2.msra.mxu0 0.0
      %3438 = vmatprep.subr.mxu0 0.0
      %3439 = vmatpush2.msra.mxu0 0.0
      %3440 = vmatprep.mubr.f32.mxu0 0.0
      %3441 = vmatmul.mubr.f32.gmra.mxu0 %v1959
      %v3442 = vpop.f32.mrf.mxu0
      %v3443 = vadd.f32 %v1940, %v3442
      %v3444 = vpop.f32.mrf.mxu0
      %v3445 = vadd.f32 %v1944, %v3444
      %3446 = vmatprep.mubr.f32.mxu0 0.0
      %3447 = vmatmul.mubr.f32.gmra.mxu0 %v1962
      %v3448 = vpop.f32.mrf.mxu0
      %v3449 = vadd.f32 %v1940, %v3448
      %v3450 = vpop.f32.mrf.mxu0
      %v3451 = vadd.f32 %v1944, %v3450
      %3452 = vmatprep.mubr.f32.mxu0 0.0
      %3453 = vmatmul.mubr.f32.gmra.mxu0 %v1965
      %v3454 = vpop.f32.mrf.mxu0
      %v3455 = vadd.f32 %v1940, %v3454
      %v3456 = vpop.f32.mrf.mxu0
      %v3457 = vadd.f32 %v1944, %v3456
      %3458 = vmatprep.mubr.f32.mxu0 0.0
      %3459 = vmatmul.mubr.f32.gmra.mxu0 %v1968
      %v3460 = vpop.f32.mrf.mxu0
      %v3461 = vadd.f32 %v1940, %v3460
      %v3462 = vpop.f32.mrf.mxu0
      %v3463 = vadd.f32 %v1944, %v3462
      %3464 = vmatprep.mubr.f32.mxu0 0.0
      %3465 = vmatmul.mubr.f32.gmra.mxu0 %v1971
      %v3466 = vpop.f32.mrf.mxu0
      %v3467 = vadd.f32 %v1940, %v3466
      %v3468 = vpop.f32.mrf.mxu0
      %v3469 = vadd.f32 %v1944, %v3468
      %3470 = vmatprep.mubr.f32.mxu0 0.0
      %3471 = vmatmul.mubr.f32.gmra.mxu0 %v1974
      %v3472 = vpop.f32.mrf.mxu0
      %v3473 = vadd.f32 %v1940, %v3472
      %v3474 = vpop.f32.mrf.mxu0
      %v3475 = vadd.f32 %v1944, %v3474
      %3476 = vmatprep.mubr.f32.mxu0 0.0
      %3477 = vmatmul.mubr.f32.gmra.mxu0 %v1977
      %v3478 = vpop.f32.mrf.mxu0
      %v3479 = vadd.f32 %v1940, %v3478
      %v3480 = vpop.f32.mrf.mxu0
      %v3481 = vadd.f32 %v1944, %v3480
      %3482 = vmatprep.mubr.f32.mxu0 0.0
      %3483 = vmatmul.mubr.f32.gmra.mxu0 %v1980
      %v3484 = vpop.f32.mrf.mxu0
      %v3485 = vadd.f32 %v1940, %v3484
      %v3486 = vpop.f32.mrf.mxu0
      %v3487 = vadd.f32 %v1944, %v3486
      %3488 = vmatprep.mubr.f32.mxu0 0.0
      %3489 = vmatmul.mubr.f32.gmra.mxu0 %v1983
      %v3490 = vpop.f32.mrf.mxu0
      %v3491 = vadd.f32 %v1940, %v3490
      %v3492 = vpop.f32.mrf.mxu0
      %v3493 = vadd.f32 %v1944, %v3492
      %3494 = vmatprep.mubr.f32.mxu0 0.0
      %3495 = vmatmul.mubr.f32.gmra.mxu0 %v1986
      %v3496 = vpop.f32.mrf.mxu0
      %v3497 = vadd.f32 %v1940, %v3496
      %v3498 = vpop.f32.mrf.mxu0
      %v3499 = vadd.f32 %v1944, %v3498
      %3500 = vmatprep.mubr.f32.mxu0 0.0
      %3501 = vmatmul.mubr.f32.gmra.mxu0 %v1989
      %v3502 = vpop.f32.mrf.mxu0
      %v3503 = vadd.f32 %v1940, %v3502
      %v3504 = vpop.f32.mrf.mxu0
      %v3505 = vadd.f32 %v1944, %v3504
      %3506 = vmatprep.mubr.f32.mxu0 0.0
      %3507 = vmatmul.mubr.f32.gmra.mxu0 %v1992
      %v3508 = vpop.f32.mrf.mxu0
      %v3509 = vadd.f32 %v1940, %v3508
      %v3510 = vpop.f32.mrf.mxu0
      %v3511 = vadd.f32 %v1944, %v3510
      %3512 = vmatprep.mubr.f32.mxu0 0.0
      %3513 = vmatmul.mubr.f32.gmra.mxu0 %v1995
      %v3514 = vpop.f32.mrf.mxu0
      %v3515 = vadd.f32 %v1940, %v3514
      %v3516 = vpop.f32.mrf.mxu0
      %v3517 = vadd.f32 %v1944, %v3516
      %3518 = vmatprep.mubr.f32.mxu0 0.0
      %3519 = vmatmul.mubr.f32.gmra.mxu0 %v1998
      %v3520 = vpop.f32.mrf.mxu0
      %v3521 = vadd.f32 %v1940, %v3520
      %v3522 = vpop.f32.mrf.mxu0
      %v3523 = vadd.f32 %v1944, %v3522
      %3524 = vmatprep.mubr.f32.mxu0 0.0
      %3525 = vmatmul.mubr.f32.gmra.mxu0 %v2001
      %v3526 = vpop.f32.mrf.mxu0
      %v3527 = vadd.f32 %v1940, %v3526
      %v3528 = vpop.f32.mrf.mxu0
      %v3529 = vadd.f32 %v1944, %v3528
      %3530 = vmatprep.mubr.f32.mxu0 0.0
      %3531 = vmatmul.mubr.f32.gmra.mxu0 %v2004
      %v3532 = vpop.f32.mrf.mxu0
      %v3533 = vadd.f32 %v1940, %v3532
      %v3534 = vpop.f32.mrf.mxu0
      %v3535 = vadd.f32 %v1944, %v3534
      %3536 = vmatprep.mubr.f32.mxu0 0.0
      %3537 = vmatmul.mubr.f32.gmra.mxu0 %v2007
      %v3538 = vpop.f32.mrf.mxu0
      %v3539 = vadd.f32 %v1940, %v3538
      %v3540 = vpop.f32.mrf.mxu0
      %v3541 = vadd.f32 %v1944, %v3540
      %3542 = vmatprep.mubr.f32.mxu0 0.0
      %3543 = vmatmul.mubr.f32.gmra.mxu0 %v2010
      %v3544 = vpop.f32.mrf.mxu0
      %v3545 = vadd.f32 %v1940, %v3544
      %v3546 = vpop.f32.mrf.mxu0
      %v3547 = vadd.f32 %v1944, %v3546
      %3548 = vmatprep.mubr.f32.mxu0 0.0
      %3549 = vmatmul.mubr.f32.gmra.mxu0 %v2013
      %v3550 = vpop.f32.mrf.mxu0
      %v3551 = vadd.f32 %v1940, %v3550
      %v3552 = vpop.f32.mrf.mxu0
      %v3553 = vadd.f32 %v1944, %v3552
      %3554 = vmatprep.mubr.f32.mxu0 0.0
      %3555 = vmatmul.mubr.f32.gmra.mxu0 %v2016
      %v3556 = vpop.f32.mrf.mxu0
      %v3557 = vadd.f32 %v1940, %v3556
      %v3558 = vpop.f32.mrf.mxu0
      %v3559 = vadd.f32 %v1944, %v3558
      %3560 = vmatprep.mubr.f32.mxu0 0.0
      %3561 = vmatmul.mubr.f32.gmra.mxu0 %v2019
      %v3562 = vpop.f32.mrf.mxu0
      %v3563 = vadd.f32 %v1940, %v3562
      %v3564 = vpop.f32.mrf.mxu0
      %v3565 = vadd.f32 %v1944, %v3564
      %3566 = vmatprep.mubr.f32.mxu0 0.0
      %3567 = vmatmul.mubr.f32.gmra.mxu0 %v2022
      %v3568 = vpop.f32.mrf.mxu0
      %v3569 = vadd.f32 %v1940, %v3568
      %v3570 = vpop.f32.mrf.mxu0
      %v3571 = vadd.f32 %v1944, %v3570
      %3572 = vmatprep.mubr.f32.mxu0 0.0
      %3573 = vmatmul.mubr.f32.gmra.mxu0 %v2025
      %v3574 = vpop.f32.mrf.mxu0
      %v3575 = vadd.f32 %v1940, %v3574
      %v3576 = vpop.f32.mrf.mxu0
      %v3577 = vadd.f32 %v1944, %v3576
      %3578 = vmatprep.mubr.f32.mxu0 0.0
      %3579 = vmatmul.mubr.f32.gmra.mxu0 %v2028
      %v3580 = vpop.f32.mrf.mxu0
      %v3581 = vadd.f32 %v1940, %v3580
      %v3582 = vpop.f32.mrf.mxu0
      %v3583 = vadd.f32 %v1944, %v3582
      %3584 = vmatprep.mubr.f32.mxu0 0.0
      %3585 = vmatmul.mubr.f32.gmra.mxu0 %v2031
      %v3586 = vpop.f32.mrf.mxu0
      %v3587 = vadd.f32 %v1940, %v3586
      %v3588 = vpop.f32.mrf.mxu0
      %v3589 = vadd.f32 %v1944, %v3588
      %3590 = vmatprep.mubr.f32.mxu0 0.0
      %3591 = vmatmul.mubr.f32.gmra.mxu0 %v2034
      %v3592 = vpop.f32.mrf.mxu0
      %v3593 = vadd.f32 %v1940, %v3592
      %v3594 = vpop.f32.mrf.mxu0
      %v3595 = vadd.f32 %v1944, %v3594
      %3596 = vmatprep.mubr.f32.mxu0 0.0
      %3597 = vmatmul.mubr.f32.gmra.mxu0 %v2037
      %v3598 = vpop.f32.mrf.mxu0
      %v3599 = vadd.f32 %v1940, %v3598
      %v3600 = vpop.f32.mrf.mxu0
      %v3601 = vadd.f32 %v1944, %v3600
      %3602 = vmatprep.mubr.f32.mxu0 0.0
      %3603 = vmatmul.mubr.f32.gmra.mxu0 %v2040
      %v3604 = vpop.f32.mrf.mxu0
      %v3605 = vadd.f32 %v1940, %v3604
      %v3606 = vpop.f32.mrf.mxu0
      %v3607 = vadd.f32 %v1944, %v3606
      %3608 = vmatprep.mubr.f32.mxu0 0.0
      %3609 = vmatmul.mubr.f32.gmra.mxu0 %v2043
      %v3610 = vpop.f32.mrf.mxu0
      %v3611 = vadd.f32 %v1940, %v3610
      %v3612 = vpop.f32.mrf.mxu0
      %v3613 = vadd.f32 %v1944, %v3612
      %3614 = vmatprep.mubr.f32.mxu0 0.0
      %3615 = vmatmul.mubr.f32.gmra.mxu0 %v2046
      %v3616 = vpop.f32.mrf.mxu0
      %v3617 = vadd.f32 %v1940, %v3616
      %v3618 = vpop.f32.mrf.mxu0
      %v3619 = vadd.f32 %v1944, %v3618
      %3620 = vmatprep.mubr.f32.mxu0 0.0
      %3621 = vmatmul.mubr.f32.gmra.mxu0 %v2049
      %v3622 = vpop.f32.mrf.mxu0
      %v3623 = vadd.f32 %v1940, %v3622
      %v3624 = vpop.f32.mrf.mxu0
      %v3625 = vadd.f32 %v1944, %v3624
      %3626 = vmatprep.mubr.f32.mxu0 0.0
      %3627 = vmatmul.mubr.f32.gmra.mxu0 %v2052
      %v3628 = vpop.f32.mrf.mxu0
      %v3629 = vadd.f32 %v1940, %v3628
      %v3630 = vpop.f32.mrf.mxu0
      %v3631 = vadd.f32 %v1944, %v3630
      %3632 = vdwg.mxu0
      %v3633 = vmax.f32 %v2158, 0.0
      %v3634 = vmax.f32 %v2160, 0.0
      %v3635 = vmax.f32 %v2415, 0.0
      %v3636 = vmax.f32 %v2417, 0.0
      %v3637 = vmax.f32 %v2672, 0.0
      %v3638 = vmax.f32 %v2674, 0.0
      %v3639 = vmax.f32 %v2929, 0.0
      %v3640 = vmax.f32 %v2931, 0.0
      %v3641 = vmax.f32 %v3186, 0.0
      %v3642 = vmax.f32 %v3188, 0.0
      %v3643 = vmax.f32 %v3443, 0.0
      %v3644 = vmax.f32 %v3445, 0.0
      %v3645 = vmax.f32 %v2164, 0.0
      %v3646 = vmax.f32 %v2166, 0.0
      %v3647 = vmax.f32 %v2421, 0.0
      %v3648 = vmax.f32 %v2423, 0.0
      %v3649 = vmax.f32 %v2678, 0.0
      %v3650 = vmax.f32 %v2680, 0.0
      %v3651 = vmax.f32 %v2935, 0.0
      %v3652 = vmax.f32 %v2937, 0.0
      %v3653 = vmax.f32 %v3192, 0.0
      %v3654 = vmax.f32 %v3194, 0.0
      %v3655 = vmax.f32 %v3449, 0.0
      %v3656 = vmax.f32 %v3451, 0.0
      %v3657 = vmax.f32 %v2170, 0.0
      %v3658 = vmax.f32 %v2172, 0.0
      %v3659 = vmax.f32 %v2427, 0.0
      %v3660 = vmax.f32 %v2429, 0.0
      %v3661 = vmax.f32 %v2684, 0.0
      %v3662 = vmax.f32 %v2686, 0.0
      %v3663 = vmax.f32 %v2941, 0.0
      %v3664 = vmax.f32 %v2943, 0.0
      %v3665 = vmax.f32 %v3198, 0.0
      %v3666 = vmax.f32 %v3200, 0.0
      %v3667 = vmax.f32 %v3455, 0.0
      %v3668 = vmax.f32 %v3457, 0.0
      %v3669 = vmax.f32 %v2176, 0.0
      %v3670 = vmax.f32 %v2178, 0.0
      %v3671 = vmax.f32 %v2433, 0.0
      %v3672 = vmax.f32 %v2435, 0.0
      %v3673 = vmax.f32 %v2690, 0.0
      %v3674 = vmax.f32 %v2692, 0.0
      %v3675 = vmax.f32 %v2947, 0.0
      %v3676 = vmax.f32 %v2949, 0.0
      %v3677 = vmax.f32 %v3204, 0.0
      %v3678 = vmax.f32 %v3206, 0.0
      %v3679 = vmax.f32 %v3461, 0.0
      %v3680 = vmax.f32 %v3463, 0.0
      %v3681 = vmax.f32 %v2182, 0.0
      %v3682 = vmax.f32 %v2184, 0.0
      %v3683 = vmax.f32 %v2439, 0.0
      %v3684 = vmax.f32 %v2441, 0.0
      %v3685 = vmax.f32 %v2696, 0.0
      %v3686 = vmax.f32 %v2698, 0.0
      %v3687 = vmax.f32 %v2953, 0.0
      %v3688 = vmax.f32 %v2955, 0.0
      %v3689 = vmax.f32 %v3210, 0.0
      %v3690 = vmax.f32 %v3212, 0.0
      %v3691 = vmax.f32 %v3467, 0.0
      %v3692 = vmax.f32 %v3469, 0.0
      %v3693 = vmax.f32 %v2188, 0.0
      %v3694 = vmax.f32 %v2190, 0.0
      %v3695 = vmax.f32 %v2445, 0.0
      %v3696 = vmax.f32 %v2447, 0.0
      %v3697 = vmax.f32 %v2702, 0.0
      %v3698 = vmax.f32 %v2704, 0.0
      %v3699 = vmax.f32 %v2959, 0.0
      %v3700 = vmax.f32 %v2961, 0.0
      %v3701 = vmax.f32 %v3216, 0.0
      %v3702 = vmax.f32 %v3218, 0.0
      %v3703 = vmax.f32 %v3473, 0.0
      %v3704 = vmax.f32 %v3475, 0.0
      %v3705 = vmax.f32 %v2194, 0.0
      %v3706 = vmax.f32 %v2196, 0.0
      %v3707 = vmax.f32 %v2451, 0.0
      %v3708 = vmax.f32 %v2453, 0.0
      %v3709 = vmax.f32 %v2708, 0.0
      %v3710 = vmax.f32 %v2710, 0.0
      %v3711 = vmax.f32 %v2965, 0.0
      %v3712 = vmax.f32 %v2967, 0.0
      %v3713 = vmax.f32 %v3222, 0.0
      %v3714 = vmax.f32 %v3224, 0.0
      %v3715 = vmax.f32 %v3479, 0.0
      %v3716 = vmax.f32 %v3481, 0.0
      %v3717 = vmax.f32 %v2200, 0.0
      %v3718 = vmax.f32 %v2202, 0.0
      %v3719 = vmax.f32 %v2457, 0.0
      %v3720 = vmax.f32 %v2459, 0.0
      %v3721 = vmax.f32 %v2714, 0.0
      %v3722 = vmax.f32 %v2716, 0.0
      %v3723 = vmax.f32 %v2971, 0.0
      %v3724 = vmax.f32 %v2973, 0.0
      %v3725 = vmax.f32 %v3228, 0.0
      %v3726 = vmax.f32 %v3230, 0.0
      %v3727 = vmax.f32 %v3485, 0.0
      %v3728 = vmax.f32 %v3487, 0.0
      %v3729 = vmax.f32 %v2206, 0.0
      %v3730 = vmax.f32 %v2208, 0.0
      %v3731 = vmax.f32 %v2463, 0.0
      %v3732 = vmax.f32 %v2465, 0.0
      %v3733 = vmax.f32 %v2720, 0.0
      %v3734 = vmax.f32 %v2722, 0.0
      %v3735 = vmax.f32 %v2977, 0.0
      %v3736 = vmax.f32 %v2979, 0.0
      %v3737 = vmax.f32 %v3234, 0.0
      %v3738 = vmax.f32 %v3236, 0.0
      %v3739 = vmax.f32 %v3491, 0.0
      %v3740 = vmax.f32 %v3493, 0.0
      %v3741 = vmax.f32 %v2212, 0.0
      %v3742 = vmax.f32 %v2214, 0.0
      %v3743 = vmax.f32 %v2469, 0.0
      %v3744 = vmax.f32 %v2471, 0.0
      %v3745 = vmax.f32 %v2726, 0.0
      %v3746 = vmax.f32 %v2728, 0.0
      %v3747 = vmax.f32 %v2983, 0.0
      %v3748 = vmax.f32 %v2985, 0.0
      %v3749 = vmax.f32 %v3240, 0.0
      %v3750 = vmax.f32 %v3242, 0.0
      %v3751 = vmax.f32 %v3497, 0.0
      %v3752 = vmax.f32 %v3499, 0.0
      %v3753 = vmax.f32 %v2218, 0.0
      %v3754 = vmax.f32 %v2220, 0.0
      %v3755 = vmax.f32 %v2475, 0.0
      %v3756 = vmax.f32 %v2477, 0.0
      %v3757 = vmax.f32 %v2732, 0.0
      %v3758 = vmax.f32 %v2734, 0.0
      %v3759 = vmax.f32 %v2989, 0.0
      %v3760 = vmax.f32 %v2991, 0.0
      %v3761 = vmax.f32 %v3246, 0.0
      %v3762 = vmax.f32 %v3248, 0.0
      %v3763 = vmax.f32 %v3503, 0.0
      %v3764 = vmax.f32 %v3505, 0.0
      %v3765 = vmax.f32 %v2224, 0.0
      %v3766 = vmax.f32 %v2226, 0.0
      %v3767 = vmax.f32 %v2481, 0.0
      %v3768 = vmax.f32 %v2483, 0.0
      %v3769 = vmax.f32 %v2738, 0.0
      %v3770 = vmax.f32 %v2740, 0.0
      %v3771 = vmax.f32 %v2995, 0.0
      %v3772 = vmax.f32 %v2997, 0.0
      %v3773 = vmax.f32 %v3252, 0.0
      %v3774 = vmax.f32 %v3254, 0.0
      %v3775 = vmax.f32 %v3509, 0.0
      %v3776 = vmax.f32 %v3511, 0.0
      %v3777 = vmax.f32 %v2230, 0.0
      %v3778 = vmax.f32 %v2232, 0.0
      %v3779 = vmax.f32 %v2487, 0.0
      %v3780 = vmax.f32 %v2489, 0.0
      %v3781 = vmax.f32 %v2744, 0.0
      %v3782 = vmax.f32 %v2746, 0.0
      %v3783 = vmax.f32 %v3001, 0.0
      %v3784 = vmax.f32 %v3003, 0.0
      %v3785 = vmax.f32 %v3258, 0.0
      %v3786 = vmax.f32 %v3260, 0.0
      %v3787 = vmax.f32 %v3515, 0.0
      %v3788 = vmax.f32 %v3517, 0.0
      %v3789 = vmax.f32 %v2236, 0.0
      %v3790 = vmax.f32 %v2238, 0.0
      %v3791 = vmax.f32 %v2493, 0.0
      %v3792 = vmax.f32 %v2495, 0.0
      %v3793 = vmax.f32 %v2750, 0.0
      %v3794 = vmax.f32 %v2752, 0.0
      %v3795 = vmax.f32 %v3007, 0.0
      %v3796 = vmax.f32 %v3009, 0.0
      %v3797 = vmax.f32 %v3264, 0.0
      %v3798 = vmax.f32 %v3266, 0.0
      %v3799 = vmax.f32 %v3521, 0.0
      %v3800 = vmax.f32 %v3523, 0.0
      %v3801 = vmax.f32 %v2242, 0.0
      %v3802 = vmax.f32 %v2244, 0.0
      %v3803 = vmax.f32 %v2499, 0.0
      %v3804 = vmax.f32 %v2501, 0.0
      %v3805 = vmax.f32 %v2756, 0.0
      %v3806 = vmax.f32 %v2758, 0.0
      %v3807 = vmax.f32 %v3013, 0.0
      %v3808 = vmax.f32 %v3015, 0.0
      %v3809 = vmax.f32 %v3270, 0.0
      %v3810 = vmax.f32 %v3272, 0.0
      %v3811 = vmax.f32 %v3527, 0.0
      %v3812 = vmax.f32 %v3529, 0.0
      %v3813 = vmax.f32 %v2248, 0.0
      %v3814 = vmax.f32 %v2250, 0.0
      %v3815 = vmax.f32 %v2505, 0.0
      %v3816 = vmax.f32 %v2507, 0.0
      %v3817 = vmax.f32 %v2762, 0.0
      %v3818 = vmax.f32 %v2764, 0.0
      %v3819 = vmax.f32 %v3019, 0.0
      %v3820 = vmax.f32 %v3021, 0.0
      %v3821 = vmax.f32 %v3276, 0.0
      %v3822 = vmax.f32 %v3278, 0.0
      %v3823 = vmax.f32 %v3533, 0.0
      %v3824 = vmax.f32 %v3535, 0.0
      %v3825 = vmax.f32 %v2254, 0.0
      %v3826 = vmax.f32 %v2256, 0.0
      %v3827 = vmax.f32 %v2511, 0.0
      %v3828 = vmax.f32 %v2513, 0.0
      %v3829 = vmax.f32 %v2768, 0.0
      %v3830 = vmax.f32 %v2770, 0.0
      %v3831 = vmax.f32 %v3025, 0.0
      %v3832 = vmax.f32 %v3027, 0.0
      %v3833 = vmax.f32 %v3282, 0.0
      %v3834 = vmax.f32 %v3284, 0.0
      %v3835 = vmax.f32 %v3539, 0.0
      %v3836 = vmax.f32 %v3541, 0.0
      %v3837 = vmax.f32 %v2260, 0.0
      %v3838 = vmax.f32 %v2262, 0.0
      %v3839 = vmax.f32 %v2517, 0.0
      %v3840 = vmax.f32 %v2519, 0.0
      %v3841 = vmax.f32 %v2774, 0.0
      %v3842 = vmax.f32 %v2776, 0.0
      %v3843 = vmax.f32 %v3031, 0.0
      %v3844 = vmax.f32 %v3033, 0.0
      %v3845 = vmax.f32 %v3288, 0.0
      %v3846 = vmax.f32 %v3290, 0.0
      %v3847 = vmax.f32 %v3545, 0.0
      %v3848 = vmax.f32 %v3547, 0.0
      %v3849 = vmax.f32 %v2266, 0.0
      %v3850 = vmax.f32 %v2268, 0.0
      %v3851 = vmax.f32 %v2523, 0.0
      %v3852 = vmax.f32 %v2525, 0.0
      %v3853 = vmax.f32 %v2780, 0.0
      %v3854 = vmax.f32 %v2782, 0.0
      %v3855 = vmax.f32 %v3037, 0.0
      %v3856 = vmax.f32 %v3039, 0.0
      %v3857 = vmax.f32 %v3294, 0.0
      %v3858 = vmax.f32 %v3296, 0.0
      %v3859 = vmax.f32 %v3551, 0.0
      %v3860 = vmax.f32 %v3553, 0.0
      %v3861 = vmax.f32 %v2272, 0.0
      %v3862 = vmax.f32 %v2274, 0.0
      %v3863 = vmax.f32 %v2529, 0.0
      %v3864 = vmax.f32 %v2531, 0.0
      %v3865 = vmax.f32 %v2786, 0.0
      %v3866 = vmax.f32 %v2788, 0.0
      %v3867 = vmax.f32 %v3043, 0.0
      %v3868 = vmax.f32 %v3045, 0.0
      %v3869 = vmax.f32 %v3300, 0.0
      %v3870 = vmax.f32 %v3302, 0.0
      %v3871 = vmax.f32 %v3557, 0.0
      %v3872 = vmax.f32 %v3559, 0.0
      %v3873 = vmax.f32 %v2278, 0.0
      %v3874 = vmax.f32 %v2280, 0.0
      %v3875 = vmax.f32 %v2535, 0.0
      %v3876 = vmax.f32 %v2537, 0.0
      %v3877 = vmax.f32 %v2792, 0.0
      %v3878 = vmax.f32 %v2794, 0.0
      %v3879 = vmax.f32 %v3049, 0.0
      %v3880 = vmax.f32 %v3051, 0.0
      %v3881 = vmax.f32 %v3306, 0.0
      %v3882 = vmax.f32 %v3308, 0.0
      %v3883 = vmax.f32 %v3563, 0.0
      %v3884 = vmax.f32 %v3565, 0.0
      %v3885 = vmax.f32 %v2284, 0.0
      %v3886 = vmax.f32 %v2286, 0.0
      %v3887 = vmax.f32 %v2541, 0.0
      %v3888 = vmax.f32 %v2543, 0.0
      %v3889 = vmax.f32 %v2798, 0.0
      %v3890 = vmax.f32 %v2800, 0.0
      %v3891 = vmax.f32 %v3055, 0.0
      %v3892 = vmax.f32 %v3057, 0.0
      %v3893 = vmax.f32 %v3312, 0.0
      %v3894 = vmax.f32 %v3314, 0.0
      %v3895 = vmax.f32 %v3569, 0.0
      %v3896 = vmax.f32 %v3571, 0.0
      %v3897 = vmax.f32 %v2290, 0.0
      %v3898 = vmax.f32 %v2292, 0.0
      %v3899 = vmax.f32 %v2547, 0.0
      %v3900 = vmax.f32 %v2549, 0.0
      %v3901 = vmax.f32 %v2804, 0.0
      %v3902 = vmax.f32 %v2806, 0.0
      %v3903 = vmax.f32 %v3061, 0.0
      %v3904 = vmax.f32 %v3063, 0.0
      %v3905 = vmax.f32 %v3318, 0.0
      %v3906 = vmax.f32 %v3320, 0.0
      %v3907 = vmax.f32 %v3575, 0.0
      %v3908 = vmax.f32 %v3577, 0.0
      %v3909 = vmax.f32 %v2296, 0.0
      %v3910 = vmax.f32 %v2298, 0.0
      %v3911 = vmax.f32 %v2553, 0.0
      %v3912 = vmax.f32 %v2555, 0.0
      %v3913 = vmax.f32 %v2810, 0.0
      %v3914 = vmax.f32 %v2812, 0.0
      %v3915 = vmax.f32 %v3067, 0.0
      %v3916 = vmax.f32 %v3069, 0.0
      %v3917 = vmax.f32 %v3324, 0.0
      %v3918 = vmax.f32 %v3326, 0.0
      %v3919 = vmax.f32 %v3581, 0.0
      %v3920 = vmax.f32 %v3583, 0.0
      %v3921 = vmax.f32 %v2302, 0.0
      %v3922 = vmax.f32 %v2304, 0.0
      %v3923 = vmax.f32 %v2559, 0.0
      %v3924 = vmax.f32 %v2561, 0.0
      %v3925 = vmax.f32 %v2816, 0.0
      %v3926 = vmax.f32 %v2818, 0.0
      %v3927 = vmax.f32 %v3073, 0.0
      %v3928 = vmax.f32 %v3075, 0.0
      %v3929 = vmax.f32 %v3330, 0.0
      %v3930 = vmax.f32 %v3332, 0.0
      %v3931 = vmax.f32 %v3587, 0.0
      %v3932 = vmax.f32 %v3589, 0.0
      %v3933 = vmax.f32 %v2308, 0.0
      %v3934 = vmax.f32 %v2310, 0.0
      %v3935 = vmax.f32 %v2565, 0.0
      %v3936 = vmax.f32 %v2567, 0.0
      %v3937 = vmax.f32 %v2822, 0.0
      %v3938 = vmax.f32 %v2824, 0.0
      %v3939 = vmax.f32 %v3079, 0.0
      %v3940 = vmax.f32 %v3081, 0.0
      %v3941 = vmax.f32 %v3336, 0.0
      %v3942 = vmax.f32 %v3338, 0.0
      %v3943 = vmax.f32 %v3593, 0.0
      %v3944 = vmax.f32 %v3595, 0.0
      %v3945 = vmax.f32 %v2314, 0.0
      %v3946 = vmax.f32 %v2316, 0.0
      %v3947 = vmax.f32 %v2571, 0.0
      %v3948 = vmax.f32 %v2573, 0.0
      %v3949 = vmax.f32 %v2828, 0.0
      %v3950 = vmax.f32 %v2830, 0.0
      %v3951 = vmax.f32 %v3085, 0.0
      %v3952 = vmax.f32 %v3087, 0.0
      %v3953 = vmax.f32 %v3342, 0.0
      %v3954 = vmax.f32 %v3344, 0.0
      %v3955 = vmax.f32 %v3599, 0.0
      %v3956 = vmax.f32 %v3601, 0.0
      %v3957 = vmax.f32 %v2320, 0.0
      %v3958 = vmax.f32 %v2322, 0.0
      %v3959 = vmax.f32 %v2577, 0.0
      %v3960 = vmax.f32 %v2579, 0.0
      %v3961 = vmax.f32 %v2834, 0.0
      %v3962 = vmax.f32 %v2836, 0.0
      %v3963 = vmax.f32 %v3091, 0.0
      %v3964 = vmax.f32 %v3093, 0.0
      %v3965 = vmax.f32 %v3348, 0.0
      %v3966 = vmax.f32 %v3350, 0.0
      %v3967 = vmax.f32 %v3605, 0.0
      %v3968 = vmax.f32 %v3607, 0.0
      %v3969 = vmax.f32 %v2326, 0.0
      %v3970 = vmax.f32 %v2328, 0.0
      %v3971 = vmax.f32 %v2583, 0.0
      %v3972 = vmax.f32 %v2585, 0.0
      %v3973 = vmax.f32 %v2840, 0.0
      %v3974 = vmax.f32 %v2842, 0.0
      %v3975 = vmax.f32 %v3097, 0.0
      %v3976 = vmax.f32 %v3099, 0.0
      %v3977 = vmax.f32 %v3354, 0.0
      %v3978 = vmax.f32 %v3356, 0.0
      %v3979 = vmax.f32 %v3611, 0.0
      %v3980 = vmax.f32 %v3613, 0.0
      %v3981 = vmax.f32 %v2332, 0.0
      %v3982 = vmax.f32 %v2334, 0.0
      %v3983 = vmax.f32 %v2589, 0.0
      %v3984 = vmax.f32 %v2591, 0.0
      %v3985 = vmax.f32 %v2846, 0.0
      %v3986 = vmax.f32 %v2848, 0.0
      %v3987 = vmax.f32 %v3103, 0.0
      %v3988 = vmax.f32 %v3105, 0.0
      %v3989 = vmax.f32 %v3360, 0.0
      %v3990 = vmax.f32 %v3362, 0.0
      %v3991 = vmax.f32 %v3617, 0.0
      %v3992 = vmax.f32 %v3619, 0.0
      %v3993 = vmax.f32 %v2338, 0.0
      %v3994 = vmax.f32 %v2340, 0.0
      %v3995 = vmax.f32 %v2595, 0.0
      %v3996 = vmax.f32 %v2597, 0.0
      %v3997 = vmax.f32 %v2852, 0.0
      %v3998 = vmax.f32 %v2854, 0.0
      %v3999 = vmax.f32 %v3109, 0.0
      %v4000 = vmax.f32 %v3111, 0.0
      %v4001 = vmax.f32 %v3366, 0.0
      %v4002 = vmax.f32 %v3368, 0.0
      %v4003 = vmax.f32 %v3623, 0.0
      %v4004 = vmax.f32 %v3625, 0.0
      %v4005 = vmax.f32 %v2344, 0.0
      %v4006 = vmax.f32 %v2346, 0.0
      %v4007 = vmax.f32 %v2601, 0.0
      %v4008 = vmax.f32 %v2603, 0.0
      %v4009 = vmax.f32 %v2858, 0.0
      %v4010 = vmax.f32 %v2860, 0.0
      %v4011 = vmax.f32 %v3115, 0.0
      %v4012 = vmax.f32 %v3117, 0.0
      %v4013 = vmax.f32 %v3372, 0.0
      %v4014 = vmax.f32 %v3374, 0.0
      %v4015 = vmax.f32 %v3629, 0.0
      %v4016 = vmax.f32 %v3631, 0.0
      %v4017 = vld [vmem:[%s3] sm:$0xff]
      %v4018 = vld [vmem:[%s3 + $0x8] sm:$0xff]
      %v4019 = vld [vmem:[%s3 + $0x10] sm:$0xff]
      %v4020 = vld [vmem:[%s3 + $0x18] sm:$0xff]
      %v4021 = vld [vmem:[%s3 + $0x20] sm:$0xff]
      %v4022 = vld [vmem:[%s3 + $0x28] sm:$0xff]
      %v4023 = vld [vmem:[%s3 + $0x30] sm:$0xff]
      %v4024 = vld [vmem:[%s3 + $0x38] sm:$0xff]
      %v4025 = vld [vmem:[%s3 + $0x40] sm:$0xff]
      %v4026 = vld [vmem:[%s3 + $0x48] sm:$0xff]
      %v4027 = vld [vmem:[%s3 + $0x50] sm:$0xff]
      %v4028 = vld [vmem:[%s3 + $0x58] sm:$0xff]
      %v4029 = vld [vmem:[%s3 + $0x60] sm:$0xff]
      %v4030 = vld [vmem:[%s3 + $0x68] sm:$0xff]
      %v4031 = vld [vmem:[%s3 + $0x70] sm:$0xff]
      %v4032 = vld [vmem:[%s3 + $0x78] sm:$0xff]
      %v4033 = vld [vmem:[%s3 + $0x80] sm:$0xff]
      %v4034 = vld [vmem:[%s3 + $0x88] sm:$0xff]
      %v4035 = vld [vmem:[%s3 + $0x90] sm:$0xff]
      %v4036 = vld [vmem:[%s3 + $0x98] sm:$0xff]
      %v4037 = vld [vmem:[%s3 + $0xa0] sm:$0xff]
      %v4038 = vld [vmem:[%s3 + $0xa8] sm:$0xff]
      %v4039 = vld [vmem:[%s3 + $0xb0] sm:$0xff]
      %v4040 = vld [vmem:[%s3 + $0xb8] sm:$0xff]
      %v4041 = vld [vmem:[%s3 + $0xc0] sm:$0xff]
      %v4042 = vld [vmem:[%s3 + $0xc8] sm:$0xff]
      %v4043 = vld [vmem:[%s3 + $0xd0] sm:$0xff]
      %v4044 = vld [vmem:[%s3 + $0xd8] sm:$0xff]
      %v4045 = vld [vmem:[%s3 + $0xe0] sm:$0xff]
      %v4046 = vld [vmem:[%s3 + $0xe8] sm:$0xff]
      %v4047 = vld [vmem:[%s3 + $0xf0] sm:$0xff]
      %v4048 = vld [vmem:[%s3 + $0xf8] sm:$0xff]
      %v4049 = vld [vmem:[%s3 + $0x100] sm:$0xff]
      %v4050 = vld [vmem:[%s3 + $0x108] sm:$0xff]
      %v4051 = vld [vmem:[%s3 + $0x110] sm:$0xff]
      %v4052 = vld [vmem:[%s3 + $0x118] sm:$0xff]
      %v4053 = vld [vmem:[%s3 + $0x120] sm:$0xff]
      %v4054 = vld [vmem:[%s3 + $0x128] sm:$0xff]
      %v4055 = vld [vmem:[%s3 + $0x130] sm:$0xff]
      %v4056 = vld [vmem:[%s3 + $0x138] sm:$0xff]
      %v4057 = vld [vmem:[%s3 + $0x140] sm:$0xff]
      %v4058 = vld [vmem:[%s3 + $0x148] sm:$0xff]
      %v4059 = vld [vmem:[%s3 + $0x150] sm:$0xff]
      %v4060 = vld [vmem:[%s3 + $0x158] sm:$0xff]
      %v4061 = vld [vmem:[%s3 + $0x160] sm:$0xff]
      %v4062 = vld [vmem:[%s3 + $0x168] sm:$0xff]
      %v4063 = vld [vmem:[%s3 + $0x170] sm:$0xff]
      %v4064 = vld [vmem:[%s3 + $0x178] sm:$0xff]
      %v4065 = vld [vmem:[%s3 + $0x180] sm:$0xff]
      %v4066 = vld [vmem:[%s3 + $0x188] sm:$0xff]
      %v4067 = vld [vmem:[%s3 + $0x190] sm:$0xff]
      %v4068 = vld [vmem:[%s3 + $0x198] sm:$0xff]
      %v4069 = vld [vmem:[%s3 + $0x1a0] sm:$0xff]
      %v4070 = vld [vmem:[%s3 + $0x1a8] sm:$0xff]
      %v4071 = vld [vmem:[%s3 + $0x1b0] sm:$0xff]
      %v4072 = vld [vmem:[%s3 + $0x1b8] sm:$0xff]
      %v4073 = vld [vmem:[%s3 + $0x1c0] sm:$0xff]
      %v4074 = vld [vmem:[%s3 + $0x1c8] sm:$0xff]
      %v4075 = vld [vmem:[%s3 + $0x1d0] sm:$0xff]
      %v4076 = vld [vmem:[%s3 + $0x1d8] sm:$0xff]
      %v4077 = vld [vmem:[%s3 + $0x1e0] sm:$0xff]
      %v4078 = vld [vmem:[%s3 + $0x1e8] sm:$0xff]
      %v4079 = vld [vmem:[%s3 + $0x1f0] sm:$0xff]
      %v4080 = vld [vmem:[%s3 + $0x1f8] sm:$0xff]
      %v4081 = vld [vmem:[%s3 + $0x200] sm:$0xff]
      %v4082 = vld [vmem:[%s3 + $0x208] sm:$0xff]
      %v4083 = vld [vmem:[%s3 + $0x210] sm:$0xff]
      %v4084 = vld [vmem:[%s3 + $0x218] sm:$0xff]
      %v4085 = vld [vmem:[%s3 + $0x220] sm:$0xff]
      %v4086 = vld [vmem:[%s3 + $0x228] sm:$0xff]
      %v4087 = vld [vmem:[%s3 + $0x230] sm:$0xff]
      %v4088 = vld [vmem:[%s3 + $0x238] sm:$0xff]
      %v4089 = vld [vmem:[%s3 + $0x240] sm:$0xff]
      %v4090 = vld [vmem:[%s3 + $0x248] sm:$0xff]
      %v4091 = vld [vmem:[%s3 + $0x250] sm:$0xff]
      %v4092 = vld [vmem:[%s3 + $0x258] sm:$0xff]
      %v4093 = vld [vmem:[%s3 + $0x260] sm:$0xff]
      %v4094 = vld [vmem:[%s3 + $0x268] sm:$0xff]
      %v4095 = vld [vmem:[%s3 + $0x270] sm:$0xff]
      %v4096 = vld [vmem:[%s3 + $0x278] sm:$0xff]
      %v4097 = vld [vmem:[%s3 + $0x280] sm:$0xff]
      %v4098 = vld [vmem:[%s3 + $0x288] sm:$0xff]
      %v4099 = vld [vmem:[%s3 + $0x290] sm:$0xff]
      %v4100 = vld [vmem:[%s3 + $0x298] sm:$0xff]
      %v4101 = vld [vmem:[%s3 + $0x2a0] sm:$0xff]
      %v4102 = vld [vmem:[%s3 + $0x2a8] sm:$0xff]
      %v4103 = vld [vmem:[%s3 + $0x2b0] sm:$0xff]
      %v4104 = vld [vmem:[%s3 + $0x2b8] sm:$0xff]
      %v4105 = vld [vmem:[%s3 + $0x2c0] sm:$0xff]
      %v4106 = vld [vmem:[%s3 + $0x2c8] sm:$0xff]
      %v4107 = vld [vmem:[%s3 + $0x2d0] sm:$0xff]
      %v4108 = vld [vmem:[%s3 + $0x2d8] sm:$0xff]
      %v4109 = vld [vmem:[%s3 + $0x2e0] sm:$0xff]
      %v4110 = vld [vmem:[%s3 + $0x2e8] sm:$0xff]
      %v4111 = vld [vmem:[%s3 + $0x2f0] sm:$0xff]
      %v4112 = vld [vmem:[%s3 + $0x2f8] sm:$0xff]
      %v4113 = vld [vmem:[%s3 + $0x300] sm:$0xff]
      %v4114 = vld [vmem:[%s3 + $0x308] sm:$0xff]
      %v4115 = vld [vmem:[%s3 + $0x310] sm:$0xff]
      %v4116 = vld [vmem:[%s3 + $0x318] sm:$0xff]
      %v4117 = vld [vmem:[%s3 + $0x320] sm:$0xff]
      %v4118 = vld [vmem:[%s3 + $0x328] sm:$0xff]
      %v4119 = vld [vmem:[%s3 + $0x330] sm:$0xff]
      %v4120 = vld [vmem:[%s3 + $0x338] sm:$0xff]
      %v4121 = vld [vmem:[%s3 + $0x340] sm:$0xff]
      %v4122 = vld [vmem:[%s3 + $0x348] sm:$0xff]
      %v4123 = vld [vmem:[%s3 + $0x350] sm:$0xff]
      %v4124 = vld [vmem:[%s3 + $0x358] sm:$0xff]
      %v4125 = vld [vmem:[%s3 + $0x360] sm:$0xff]
      %v4126 = vld [vmem:[%s3 + $0x368] sm:$0xff]
      %v4127 = vld [vmem:[%s3 + $0x370] sm:$0xff]
      %v4128 = vld [vmem:[%s3 + $0x378] sm:$0xff]
      %v4129 = vld [vmem:[%s3 + $0x380] sm:$0xff]
      %v4130 = vld [vmem:[%s3 + $0x388] sm:$0xff]
      %v4131 = vld [vmem:[%s3 + $0x390] sm:$0xff]
      %v4132 = vld [vmem:[%s3 + $0x398] sm:$0xff]
      %v4133 = vld [vmem:[%s3 + $0x3a0] sm:$0xff]
      %v4134 = vld [vmem:[%s3 + $0x3a8] sm:$0xff]
      %v4135 = vld [vmem:[%s3 + $0x3b0] sm:$0xff]
      %v4136 = vld [vmem:[%s3 + $0x3b8] sm:$0xff]
      %v4137 = vld [vmem:[%s3 + $0x3c0] sm:$0xff]
      %v4138 = vld [vmem:[%s3 + $0x3c8] sm:$0xff]
      %v4139 = vld [vmem:[%s3 + $0x3d0] sm:$0xff]
      %v4140 = vld [vmem:[%s3 + $0x3d8] sm:$0xff]
      %v4141 = vld [vmem:[%s3 + $0x3e0] sm:$0xff]
      %v4142 = vld [vmem:[%s3 + $0x3e8] sm:$0xff]
      %v4143 = vld [vmem:[%s3 + $0x3f0] sm:$0xff]
      %v4144 = vld [vmem:[%s3 + $0x3f8] sm:$0xff]
      %v4145 = vld [vmem:[%s3 + $0x400] sm:$0xff]
      %v4146 = vld [vmem:[%s3 + $0x408] sm:$0xff]
      %v4147 = vld [vmem:[%s3 + $0x410] sm:$0xff]
      %v4148 = vld [vmem:[%s3 + $0x418] sm:$0xff]
      %v4149 = vld [vmem:[%s3 + $0x420] sm:$0xff]
      %v4150 = vld [vmem:[%s3 + $0x428] sm:$0xff]
      %v4151 = vld [vmem:[%s3 + $0x430] sm:$0xff]
      %v4152 = vld [vmem:[%s3 + $0x438] sm:$0xff]
      %v4153 = vld [vmem:[%s3 + $0x440] sm:$0xff]
      %v4154 = vld [vmem:[%s3 + $0x448] sm:$0xff]
      %v4155 = vld [vmem:[%s3 + $0x450] sm:$0xff]
      %v4156 = vld [vmem:[%s3 + $0x458] sm:$0xff]
      %v4157 = vld [vmem:[%s3 + $0x460] sm:$0xff]
      %v4158 = vld [vmem:[%s3 + $0x468] sm:$0xff]
      %v4159 = vld [vmem:[%s3 + $0x470] sm:$0xff]
      %v4160 = vld [vmem:[%s3 + $0x478] sm:$0xff]
      %v4161 = vld [vmem:[%s3 + $0x480] sm:$0xff]
      %v4162 = vld [vmem:[%s3 + $0x488] sm:$0xff]
      %v4163 = vld [vmem:[%s3 + $0x490] sm:$0xff]
      %v4164 = vld [vmem:[%s3 + $0x498] sm:$0xff]
      %v4165 = vld [vmem:[%s3 + $0x4a0] sm:$0xff]
      %v4166 = vld [vmem:[%s3 + $0x4a8] sm:$0xff]
      %v4167 = vld [vmem:[%s3 + $0x4b0] sm:$0xff]
      %v4168 = vld [vmem:[%s3 + $0x4b8] sm:$0xff]
      %v4169 = vld [vmem:[%s3 + $0x4c0] sm:$0xff]
      %v4170 = vld [vmem:[%s3 + $0x4c8] sm:$0xff]
      %v4171 = vld [vmem:[%s3 + $0x4d0] sm:$0xff]
      %v4172 = vld [vmem:[%s3 + $0x4d8] sm:$0xff]
      %v4173 = vld [vmem:[%s3 + $0x4e0] sm:$0xff]
      %v4174 = vld [vmem:[%s3 + $0x4e8] sm:$0xff]
      %v4175 = vld [vmem:[%s3 + $0x4f0] sm:$0xff]
      %v4176 = vld [vmem:[%s3 + $0x4f8] sm:$0xff]
      %v4177 = vld [vmem:[%s3 + $0x500] sm:$0xff]
      %v4178 = vld [vmem:[%s3 + $0x508] sm:$0xff]
      %v4179 = vld [vmem:[%s3 + $0x510] sm:$0xff]
      %v4180 = vld [vmem:[%s3 + $0x518] sm:$0xff]
      %v4181 = vld [vmem:[%s3 + $0x520] sm:$0xff]
      %v4182 = vld [vmem:[%s3 + $0x528] sm:$0xff]
      %v4183 = vld [vmem:[%s3 + $0x530] sm:$0xff]
      %v4184 = vld [vmem:[%s3 + $0x538] sm:$0xff]
      %v4185 = vld [vmem:[%s3 + $0x540] sm:$0xff]
      %v4186 = vld [vmem:[%s3 + $0x548] sm:$0xff]
      %v4187 = vld [vmem:[%s3 + $0x550] sm:$0xff]
      %v4188 = vld [vmem:[%s3 + $0x558] sm:$0xff]
      %v4189 = vld [vmem:[%s3 + $0x560] sm:$0xff]
      %v4190 = vld [vmem:[%s3 + $0x568] sm:$0xff]
      %v4191 = vld [vmem:[%s3 + $0x570] sm:$0xff]
      %v4192 = vld [vmem:[%s3 + $0x578] sm:$0xff]
      %v4193 = vld [vmem:[%s3 + $0x580] sm:$0xff]
      %v4194 = vld [vmem:[%s3 + $0x588] sm:$0xff]
      %v4195 = vld [vmem:[%s3 + $0x590] sm:$0xff]
      %v4196 = vld [vmem:[%s3 + $0x598] sm:$0xff]
      %v4197 = vld [vmem:[%s3 + $0x5a0] sm:$0xff]
      %v4198 = vld [vmem:[%s3 + $0x5a8] sm:$0xff]
      %v4199 = vld [vmem:[%s3 + $0x5b0] sm:$0xff]
      %v4200 = vld [vmem:[%s3 + $0x5b8] sm:$0xff]
      %v4201 = vld [vmem:[%s3 + $0x5c0] sm:$0xff]
      %v4202 = vld [vmem:[%s3 + $0x5c8] sm:$0xff]
      %v4203 = vld [vmem:[%s3 + $0x5d0] sm:$0xff]
      %v4204 = vld [vmem:[%s3 + $0x5d8] sm:$0xff]
      %v4205 = vld [vmem:[%s3 + $0x5e0] sm:$0xff]
      %v4206 = vld [vmem:[%s3 + $0x5e8] sm:$0xff]
      %v4207 = vld [vmem:[%s3 + $0x5f0] sm:$0xff]
      %v4208 = vld [vmem:[%s3 + $0x5f8] sm:$0xff]
      %v4209 = vld [vmem:[%s4] sm:$0x1]
      %v4211 = vlaneseq
      %v4212 = vshrl.u32 %v4211, 7
      %v4213 = vsub.s32 0, %v4212
      %v4214 = vrot.slane %v4209, %v4213
      %4216 = vmatprep.subr.mxu0 0.0
      %4217 = vmatpush1.msra.mxu0 %v4032
      %4218 = vmatprep.subr.mxu0 0.0
      %4219 = vmatpush1.msra.mxu0 %v4031
      %4220 = vmatprep.subr.mxu0 0.0
      %4221 = vmatpush1.msra.mxu0 %v4030
      %4222 = vmatprep.subr.mxu0 0.0
      %4223 = vmatpush1.msra.mxu0 %v4029
      %4224 = vmatprep.subr.mxu0 0.0
      %4225 = vmatpush1.msra.mxu0 %v4028
      %4226 = vmatprep.subr.mxu0 0.0
      %4227 = vmatpush1.msra.mxu0 %v4027
      %4228 = vmatprep.subr.mxu0 0.0
      %4229 = vmatpush1.msra.mxu0 %v4026
      %4230 = vmatprep.subr.mxu0 0.0
      %4231 = vmatpush1.msra.mxu0 %v4025
      %4232 = vmatprep.subr.mxu0 0.0
      %4233 = vmatpush1.msra.mxu0 %v4024
      %4234 = vmatprep.subr.mxu0 0.0
      %4235 = vmatpush1.msra.mxu0 %v4023
      %4236 = vmatprep.subr.mxu0 0.0
      %4237 = vmatpush1.msra.mxu0 %v4022
      %4238 = vmatprep.subr.mxu0 0.0
      %4239 = vmatpush1.msra.mxu0 %v4021
      %4240 = vmatprep.subr.mxu0 0.0
      %4241 = vmatpush1.msra.mxu0 %v4020
      %4242 = vmatprep.subr.mxu0 0.0
      %4243 = vmatpush1.msra.mxu0 %v4019
      %4244 = vmatprep.subr.mxu0 0.0
      %4245 = vmatpush1.msra.mxu0 %v4018
      %4246 = vmatprep.subr.mxu0 0.0
      %4247 = vmatpush1.msra.mxu0 %v4017
      %4248 = vmatprep.subr.mxu0 0.0
      %4249 = vmatpush2.msra.mxu0 %v4048
      %4250 = vmatprep.subr.mxu0 0.0
      %4251 = vmatpush2.msra.mxu0 %v4047
      %4252 = vmatprep.subr.mxu0 0.0
      %4253 = vmatpush2.msra.mxu0 %v4046
      %4254 = vmatprep.subr.mxu0 0.0
      %4255 = vmatpush2.msra.mxu0 %v4045
      %4256 = vmatprep.subr.mxu0 0.0
      %4257 = vmatpush2.msra.mxu0 %v4044
      %4258 = vmatprep.subr.mxu0 0.0
      %4259 = vmatpush2.msra.mxu0 %v4043
      %4260 = vmatprep.subr.mxu0 0.0
      %4261 = vmatpush2.msra.mxu0 %v4042
      %4262 = vmatprep.subr.mxu0 0.0
      %4263 = vmatpush2.msra.mxu0 %v4041
      %4264 = vmatprep.subr.mxu0 0.0
      %4265 = vmatpush2.msra.mxu0 %v4040
      %4266 = vmatprep.subr.mxu0 0.0
      %4267 = vmatpush2.msra.mxu0 %v4039
      %4268 = vmatprep.subr.mxu0 0.0
      %4269 = vmatpush2.msra.mxu0 %v4038
      %4270 = vmatprep.subr.mxu0 0.0
      %4271 = vmatpush2.msra.mxu0 %v4037
      %4272 = vmatprep.subr.mxu0 0.0
      %4273 = vmatpush2.msra.mxu0 %v4036
      %4274 = vmatprep.subr.mxu0 0.0
      %4275 = vmatpush2.msra.mxu0 %v4035
      %4276 = vmatprep.subr.mxu0 0.0
      %4277 = vmatpush2.msra.mxu0 %v4034
      %4278 = vmatprep.subr.mxu0 0.0
      %4279 = vmatpush2.msra.mxu0 %v4033
      %4280 = vmatprep.mubr.f32.mxu0 %v3634
      %4281 = vmatmul.mubr.f32.gmra.mxu0 %v3633
      %v4282 = vpop.f32.mrf.mxu0
      %v4283 = vadd.f32 %v4214, %v4282
      %v4284 = vpop.f32.mrf.mxu0
      %4285 = vmatprep.mubr.f32.mxu0 %v3646
      %4286 = vmatmul.mubr.f32.gmra.mxu0 %v3645
      %v4287 = vpop.f32.mrf.mxu0
      %v4288 = vadd.f32 %v4214, %v4287
      %v4289 = vpop.f32.mrf.mxu0
      %4290 = vmatprep.mubr.f32.mxu0 %v3658
      %4291 = vmatmul.mubr.f32.gmra.mxu0 %v3657
      %v4292 = vpop.f32.mrf.mxu0
      %v4293 = vadd.f32 %v4214, %v4292
      %v4294 = vpop.f32.mrf.mxu0
      %4295 = vmatprep.mubr.f32.mxu0 %v3670
      %4296 = vmatmul.mubr.f32.gmra.mxu0 %v3669
      %v4297 = vpop.f32.mrf.mxu0
      %v4298 = vadd.f32 %v4214, %v4297
      %v4299 = vpop.f32.mrf.mxu0
      %4300 = vmatprep.mubr.f32.mxu0 %v3682
      %4301 = vmatmul.mubr.f32.gmra.mxu0 %v3681
      %v4302 = vpop.f32.mrf.mxu0
      %v4303 = vadd.f32 %v4214, %v4302
      %v4304 = vpop.f32.mrf.mxu0
      %4305 = vmatprep.mubr.f32.mxu0 %v3694
      %4306 = vmatmul.mubr.f32.gmra.mxu0 %v3693
      %v4307 = vpop.f32.mrf.mxu0
      %v4308 = vadd.f32 %v4214, %v4307
      %v4309 = vpop.f32.mrf.mxu0
      %4310 = vmatprep.mubr.f32.mxu0 %v3706
      %4311 = vmatmul.mubr.f32.gmra.mxu0 %v3705
      %v4312 = vpop.f32.mrf.mxu0
      %v4313 = vadd.f32 %v4214, %v4312
      %v4314 = vpop.f32.mrf.mxu0
      %4315 = vmatprep.mubr.f32.mxu0 %v3718
      %4316 = vmatmul.mubr.f32.gmra.mxu0 %v3717
      %v4317 = vpop.f32.mrf.mxu0
      %v4318 = vadd.f32 %v4214, %v4317
      %v4319 = vpop.f32.mrf.mxu0
      %4320 = vmatprep.mubr.f32.mxu0 %v3730
      %4321 = vmatmul.mubr.f32.gmra.mxu0 %v3729
      %v4322 = vpop.f32.mrf.mxu0
      %v4323 = vadd.f32 %v4214, %v4322
      %v4324 = vpop.f32.mrf.mxu0
      %4325 = vmatprep.mubr.f32.mxu0 %v3742
      %4326 = vmatmul.mubr.f32.gmra.mxu0 %v3741
      %v4327 = vpop.f32.mrf.mxu0
      %v4328 = vadd.f32 %v4214, %v4327
      %v4329 = vpop.f32.mrf.mxu0
      %4330 = vmatprep.mubr.f32.mxu0 %v3754
      %4331 = vmatmul.mubr.f32.gmra.mxu0 %v3753
      %v4332 = vpop.f32.mrf.mxu0
      %v4333 = vadd.f32 %v4214, %v4332
      %v4334 = vpop.f32.mrf.mxu0
      %4335 = vmatprep.mubr.f32.mxu0 %v3766
      %4336 = vmatmul.mubr.f32.gmra.mxu0 %v3765
      %v4337 = vpop.f32.mrf.mxu0
      %v4338 = vadd.f32 %v4214, %v4337
      %v4339 = vpop.f32.mrf.mxu0
      %4340 = vmatprep.mubr.f32.mxu0 %v3778
      %4341 = vmatmul.mubr.f32.gmra.mxu0 %v3777
      %v4342 = vpop.f32.mrf.mxu0
      %v4343 = vadd.f32 %v4214, %v4342
      %v4344 = vpop.f32.mrf.mxu0
      %4345 = vmatprep.mubr.f32.mxu0 %v3790
      %4346 = vmatmul.mubr.f32.gmra.mxu0 %v3789
      %v4347 = vpop.f32.mrf.mxu0
      %v4348 = vadd.f32 %v4214, %v4347
      %v4349 = vpop.f32.mrf.mxu0
      %4350 = vmatprep.mubr.f32.mxu0 %v3802
      %4351 = vmatmul.mubr.f32.gmra.mxu0 %v3801
      %v4352 = vpop.f32.mrf.mxu0
      %v4353 = vadd.f32 %v4214, %v4352
      %v4354 = vpop.f32.mrf.mxu0
      %4355 = vmatprep.mubr.f32.mxu0 %v3814
      %4356 = vmatmul.mubr.f32.gmra.mxu0 %v3813
      %v4357 = vpop.f32.mrf.mxu0
      %v4358 = vadd.f32 %v4214, %v4357
      %v4359 = vpop.f32.mrf.mxu0
      %4360 = vmatprep.mubr.f32.mxu0 %v3826
      %4361 = vmatmul.mubr.f32.gmra.mxu0 %v3825
      %v4362 = vpop.f32.mrf.mxu0
      %v4363 = vadd.f32 %v4214, %v4362
      %v4364 = vpop.f32.mrf.mxu0
      %4365 = vmatprep.mubr.f32.mxu0 %v3838
      %4366 = vmatmul.mubr.f32.gmra.mxu0 %v3837
      %v4367 = vpop.f32.mrf.mxu0
      %v4368 = vadd.f32 %v4214, %v4367
      %v4369 = vpop.f32.mrf.mxu0
      %4370 = vmatprep.mubr.f32.mxu0 %v3850
      %4371 = vmatmul.mubr.f32.gmra.mxu0 %v3849
      %v4372 = vpop.f32.mrf.mxu0
      %v4373 = vadd.f32 %v4214, %v4372
      %v4374 = vpop.f32.mrf.mxu0
      %4375 = vmatprep.mubr.f32.mxu0 %v3862
      %4376 = vmatmul.mubr.f32.gmra.mxu0 %v3861
      %v4377 = vpop.f32.mrf.mxu0
      %v4378 = vadd.f32 %v4214, %v4377
      %v4379 = vpop.f32.mrf.mxu0
      %4380 = vmatprep.mubr.f32.mxu0 %v3874
      %4381 = vmatmul.mubr.f32.gmra.mxu0 %v3873
      %v4382 = vpop.f32.mrf.mxu0
      %v4383 = vadd.f32 %v4214, %v4382
      %v4384 = vpop.f32.mrf.mxu0
      %4385 = vmatprep.mubr.f32.mxu0 %v3886
      %4386 = vmatmul.mubr.f32.gmra.mxu0 %v3885
      %v4387 = vpop.f32.mrf.mxu0
      %v4388 = vadd.f32 %v4214, %v4387
      %v4389 = vpop.f32.mrf.mxu0
      %4390 = vmatprep.mubr.f32.mxu0 %v3898
      %4391 = vmatmul.mubr.f32.gmra.mxu0 %v3897
      %v4392 = vpop.f32.mrf.mxu0
      %v4393 = vadd.f32 %v4214, %v4392
      %v4394 = vpop.f32.mrf.mxu0
      %4395 = vmatprep.mubr.f32.mxu0 %v3910
      %4396 = vmatmul.mubr.f32.gmra.mxu0 %v3909
      %v4397 = vpop.f32.mrf.mxu0
      %v4398 = vadd.f32 %v4214, %v4397
      %v4399 = vpop.f32.mrf.mxu0
      %4400 = vmatprep.mubr.f32.mxu0 %v3922
      %4401 = vmatmul.mubr.f32.gmra.mxu0 %v3921
      %v4402 = vpop.f32.mrf.mxu0
      %v4403 = vadd.f32 %v4214, %v4402
      %v4404 = vpop.f32.mrf.mxu0
      %4405 = vmatprep.mubr.f32.mxu0 %v3934
      %4406 = vmatmul.mubr.f32.gmra.mxu0 %v3933
      %v4407 = vpop.f32.mrf.mxu0
      %v4408 = vadd.f32 %v4214, %v4407
      %v4409 = vpop.f32.mrf.mxu0
      %4410 = vmatprep.mubr.f32.mxu0 %v3946
      %4411 = vmatmul.mubr.f32.gmra.mxu0 %v3945
      %v4412 = vpop.f32.mrf.mxu0
      %v4413 = vadd.f32 %v4214, %v4412
      %v4414 = vpop.f32.mrf.mxu0
      %4415 = vmatprep.mubr.f32.mxu0 %v3958
      %4416 = vmatmul.mubr.f32.gmra.mxu0 %v3957
      %v4417 = vpop.f32.mrf.mxu0
      %v4418 = vadd.f32 %v4214, %v4417
      %v4419 = vpop.f32.mrf.mxu0
      %4420 = vmatprep.mubr.f32.mxu0 %v3970
      %4421 = vmatmul.mubr.f32.gmra.mxu0 %v3969
      %v4422 = vpop.f32.mrf.mxu0
      %v4423 = vadd.f32 %v4214, %v4422
      %v4424 = vpop.f32.mrf.mxu0
      %4425 = vmatprep.mubr.f32.mxu0 %v3982
      %4426 = vmatmul.mubr.f32.gmra.mxu0 %v3981
      %v4427 = vpop.f32.mrf.mxu0
      %v4428 = vadd.f32 %v4214, %v4427
      %v4429 = vpop.f32.mrf.mxu0
      %4430 = vmatprep.mubr.f32.mxu0 %v3994
      %4431 = vmatmul.mubr.f32.gmra.mxu0 %v3993
      %v4432 = vpop.f32.mrf.mxu0
      %v4433 = vadd.f32 %v4214, %v4432
      %v4434 = vpop.f32.mrf.mxu0
      %4435 = vmatprep.mubr.f32.mxu0 %v4006
      %4436 = vmatmul.mubr.f32.gmra.mxu0 %v4005
      %v4437 = vpop.f32.mrf.mxu0
      %v4438 = vadd.f32 %v4214, %v4437
      %v4439 = vpop.f32.mrf.mxu0
      %4440 = vdwg.mxu0
      %4441 = vmatprep.subr.mxu0 0.0
      %4442 = vmatpush1.msra.mxu0 %v4064
      %4443 = vmatprep.subr.mxu0 0.0
      %4444 = vmatpush1.msra.mxu0 %v4063
      %4445 = vmatprep.subr.mxu0 0.0
      %4446 = vmatpush1.msra.mxu0 %v4062
      %4447 = vmatprep.subr.mxu0 0.0
      %4448 = vmatpush1.msra.mxu0 %v4061
      %4449 = vmatprep.subr.mxu0 0.0
      %4450 = vmatpush1.msra.mxu0 %v4060
      %4451 = vmatprep.subr.mxu0 0.0
      %4452 = vmatpush1.msra.mxu0 %v4059
      %4453 = vmatprep.subr.mxu0 0.0
      %4454 = vmatpush1.msra.mxu0 %v4058
      %4455 = vmatprep.subr.mxu0 0.0
      %4456 = vmatpush1.msra.mxu0 %v4057
      %4457 = vmatprep.subr.mxu0 0.0
      %4458 = vmatpush1.msra.mxu0 %v4056
      %4459 = vmatprep.subr.mxu0 0.0
      %4460 = vmatpush1.msra.mxu0 %v4055
      %4461 = vmatprep.subr.mxu0 0.0
      %4462 = vmatpush1.msra.mxu0 %v4054
      %4463 = vmatprep.subr.mxu0 0.0
      %4464 = vmatpush1.msra.mxu0 %v4053
      %4465 = vmatprep.subr.mxu0 0.0
      %4466 = vmatpush1.msra.mxu0 %v4052
      %4467 = vmatprep.subr.mxu0 0.0
      %4468 = vmatpush1.msra.mxu0 %v4051
      %4469 = vmatprep.subr.mxu0 0.0
      %4470 = vmatpush1.msra.mxu0 %v4050
      %4471 = vmatprep.subr.mxu0 0.0
      %4472 = vmatpush1.msra.mxu0 %v4049
      %4473 = vmatprep.subr.mxu0 0.0
      %4474 = vmatpush2.msra.mxu0 %v4080
      %4475 = vmatprep.subr.mxu0 0.0
      %4476 = vmatpush2.msra.mxu0 %v4079
      %4477 = vmatprep.subr.mxu0 0.0
      %4478 = vmatpush2.msra.mxu0 %v4078
      %4479 = vmatprep.subr.mxu0 0.0
      %4480 = vmatpush2.msra.mxu0 %v4077
      %4481 = vmatprep.subr.mxu0 0.0
      %4482 = vmatpush2.msra.mxu0 %v4076
      %4483 = vmatprep.subr.mxu0 0.0
      %4484 = vmatpush2.msra.mxu0 %v4075
      %4485 = vmatprep.subr.mxu0 0.0
      %4486 = vmatpush2.msra.mxu0 %v4074
      %4487 = vmatprep.subr.mxu0 0.0
      %4488 = vmatpush2.msra.mxu0 %v4073
      %4489 = vmatprep.subr.mxu0 0.0
      %4490 = vmatpush2.msra.mxu0 %v4072
      %4491 = vmatprep.subr.mxu0 0.0
      %4492 = vmatpush2.msra.mxu0 %v4071
      %4493 = vmatprep.subr.mxu0 0.0
      %4494 = vmatpush2.msra.mxu0 %v4070
      %4495 = vmatprep.subr.mxu0 0.0
      %4496 = vmatpush2.msra.mxu0 %v4069
      %4497 = vmatprep.subr.mxu0 0.0
      %4498 = vmatpush2.msra.mxu0 %v4068
      %4499 = vmatprep.subr.mxu0 0.0
      %4500 = vmatpush2.msra.mxu0 %v4067
      %4501 = vmatprep.subr.mxu0 0.0
      %4502 = vmatpush2.msra.mxu0 %v4066
      %4503 = vmatprep.subr.mxu0 0.0
      %4504 = vmatpush2.msra.mxu0 %v4065
      %4505 = vmatprep.mubr.f32.mxu0 %v3636
      %4506 = vmatmul.mubr.f32.gmra.mxu0 %v3635
      %v4507 = vpop.f32.mrf.mxu0
      %v4508 = vadd.f32 %v4283, %v4507
      %v4509 = vpop.f32.mrf.mxu0
      %4510 = vmatprep.mubr.f32.mxu0 %v3648
      %4511 = vmatmul.mubr.f32.gmra.mxu0 %v3647
      %v4512 = vpop.f32.mrf.mxu0
      %v4513 = vadd.f32 %v4288, %v4512
      %v4514 = vpop.f32.mrf.mxu0
      %4515 = vmatprep.mubr.f32.mxu0 %v3660
      %4516 = vmatmul.mubr.f32.gmra.mxu0 %v3659
      %v4517 = vpop.f32.mrf.mxu0
      %v4518 = vadd.f32 %v4293, %v4517
      %v4519 = vpop.f32.mrf.mxu0
      %4520 = vmatprep.mubr.f32.mxu0 %v3672
      %4521 = vmatmul.mubr.f32.gmra.mxu0 %v3671
      %v4522 = vpop.f32.mrf.mxu0
      %v4523 = vadd.f32 %v4298, %v4522
      %v4524 = vpop.f32.mrf.mxu0
      %4525 = vmatprep.mubr.f32.mxu0 %v3684
      %4526 = vmatmul.mubr.f32.gmra.mxu0 %v3683
      %v4527 = vpop.f32.mrf.mxu0
      %v4528 = vadd.f32 %v4303, %v4527
      %v4529 = vpop.f32.mrf.mxu0
      %4530 = vmatprep.mubr.f32.mxu0 %v3696
      %4531 = vmatmul.mubr.f32.gmra.mxu0 %v3695
      %v4532 = vpop.f32.mrf.mxu0
      %v4533 = vadd.f32 %v4308, %v4532
      %v4534 = vpop.f32.mrf.mxu0
      %4535 = vmatprep.mubr.f32.mxu0 %v3708
      %4536 = vmatmul.mubr.f32.gmra.mxu0 %v3707
      %v4537 = vpop.f32.mrf.mxu0
      %v4538 = vadd.f32 %v4313, %v4537
      %v4539 = vpop.f32.mrf.mxu0
      %4540 = vmatprep.mubr.f32.mxu0 %v3720
      %4541 = vmatmul.mubr.f32.gmra.mxu0 %v3719
      %v4542 = vpop.f32.mrf.mxu0
      %v4543 = vadd.f32 %v4318, %v4542
      %v4544 = vpop.f32.mrf.mxu0
      %4545 = vmatprep.mubr.f32.mxu0 %v3732
      %4546 = vmatmul.mubr.f32.gmra.mxu0 %v3731
      %v4547 = vpop.f32.mrf.mxu0
      %v4548 = vadd.f32 %v4323, %v4547
      %v4549 = vpop.f32.mrf.mxu0
      %4550 = vmatprep.mubr.f32.mxu0 %v3744
      %4551 = vmatmul.mubr.f32.gmra.mxu0 %v3743
      %v4552 = vpop.f32.mrf.mxu0
      %v4553 = vadd.f32 %v4328, %v4552
      %v4554 = vpop.f32.mrf.mxu0
      %4555 = vmatprep.mubr.f32.mxu0 %v3756
      %4556 = vmatmul.mubr.f32.gmra.mxu0 %v3755
      %v4557 = vpop.f32.mrf.mxu0
      %v4558 = vadd.f32 %v4333, %v4557
      %v4559 = vpop.f32.mrf.mxu0
      %4560 = vmatprep.mubr.f32.mxu0 %v3768
      %4561 = vmatmul.mubr.f32.gmra.mxu0 %v3767
      %v4562 = vpop.f32.mrf.mxu0
      %v4563 = vadd.f32 %v4338, %v4562
      %v4564 = vpop.f32.mrf.mxu0
      %4565 = vmatprep.mubr.f32.mxu0 %v3780
      %4566 = vmatmul.mubr.f32.gmra.mxu0 %v3779
      %v4567 = vpop.f32.mrf.mxu0
      %v4568 = vadd.f32 %v4343, %v4567
      %v4569 = vpop.f32.mrf.mxu0
      %4570 = vmatprep.mubr.f32.mxu0 %v3792
      %4571 = vmatmul.mubr.f32.gmra.mxu0 %v3791
      %v4572 = vpop.f32.mrf.mxu0
      %v4573 = vadd.f32 %v4348, %v4572
      %v4574 = vpop.f32.mrf.mxu0
      %4575 = vmatprep.mubr.f32.mxu0 %v3804
      %4576 = vmatmul.mubr.f32.gmra.mxu0 %v3803
      %v4577 = vpop.f32.mrf.mxu0
      %v4578 = vadd.f32 %v4353, %v4577
      %v4579 = vpop.f32.mrf.mxu0
      %4580 = vmatprep.mubr.f32.mxu0 %v3816
      %4581 = vmatmul.mubr.f32.gmra.mxu0 %v3815
      %v4582 = vpop.f32.mrf.mxu0
      %v4583 = vadd.f32 %v4358, %v4582
      %v4584 = vpop.f32.mrf.mxu0
      %4585 = vmatprep.mubr.f32.mxu0 %v3828
      %4586 = vmatmul.mubr.f32.gmra.mxu0 %v3827
      %v4587 = vpop.f32.mrf.mxu0
      %v4588 = vadd.f32 %v4363, %v4587
      %v4589 = vpop.f32.mrf.mxu0
      %4590 = vmatprep.mubr.f32.mxu0 %v3840
      %4591 = vmatmul.mubr.f32.gmra.mxu0 %v3839
      %v4592 = vpop.f32.mrf.mxu0
      %v4593 = vadd.f32 %v4368, %v4592
      %v4594 = vpop.f32.mrf.mxu0
      %4595 = vmatprep.mubr.f32.mxu0 %v3852
      %4596 = vmatmul.mubr.f32.gmra.mxu0 %v3851
      %v4597 = vpop.f32.mrf.mxu0
      %v4598 = vadd.f32 %v4373, %v4597
      %v4599 = vpop.f32.mrf.mxu0
      %4600 = vmatprep.mubr.f32.mxu0 %v3864
      %4601 = vmatmul.mubr.f32.gmra.mxu0 %v3863
      %v4602 = vpop.f32.mrf.mxu0
      %v4603 = vadd.f32 %v4378, %v4602
      %v4604 = vpop.f32.mrf.mxu0
      %4605 = vmatprep.mubr.f32.mxu0 %v3876
      %4606 = vmatmul.mubr.f32.gmra.mxu0 %v3875
      %v4607 = vpop.f32.mrf.mxu0
      %v4608 = vadd.f32 %v4383, %v4607
      %v4609 = vpop.f32.mrf.mxu0
      %4610 = vmatprep.mubr.f32.mxu0 %v3888
      %4611 = vmatmul.mubr.f32.gmra.mxu0 %v3887
      %v4612 = vpop.f32.mrf.mxu0
      %v4613 = vadd.f32 %v4388, %v4612
      %v4614 = vpop.f32.mrf.mxu0
      %4615 = vmatprep.mubr.f32.mxu0 %v3900
      %4616 = vmatmul.mubr.f32.gmra.mxu0 %v3899
      %v4617 = vpop.f32.mrf.mxu0
      %v4618 = vadd.f32 %v4393, %v4617
      %v4619 = vpop.f32.mrf.mxu0
      %4620 = vmatprep.mubr.f32.mxu0 %v3912
      %4621 = vmatmul.mubr.f32.gmra.mxu0 %v3911
      %v4622 = vpop.f32.mrf.mxu0
      %v4623 = vadd.f32 %v4398, %v4622
      %v4624 = vpop.f32.mrf.mxu0
      %4625 = vmatprep.mubr.f32.mxu0 %v3924
      %4626 = vmatmul.mubr.f32.gmra.mxu0 %v3923
      %v4627 = vpop.f32.mrf.mxu0
      %v4628 = vadd.f32 %v4403, %v4627
      %v4629 = vpop.f32.mrf.mxu0
      %4630 = vmatprep.mubr.f32.mxu0 %v3936
      %4631 = vmatmul.mubr.f32.gmra.mxu0 %v3935
      %v4632 = vpop.f32.mrf.mxu0
      %v4633 = vadd.f32 %v4408, %v4632
      %v4634 = vpop.f32.mrf.mxu0
      %4635 = vmatprep.mubr.f32.mxu0 %v3948
      %4636 = vmatmul.mubr.f32.gmra.mxu0 %v3947
      %v4637 = vpop.f32.mrf.mxu0
      %v4638 = vadd.f32 %v4413, %v4637
      %v4639 = vpop.f32.mrf.mxu0
      %4640 = vmatprep.mubr.f32.mxu0 %v3960
      %4641 = vmatmul.mubr.f32.gmra.mxu0 %v3959
      %v4642 = vpop.f32.mrf.mxu0
      %v4643 = vadd.f32 %v4418, %v4642
      %v4644 = vpop.f32.mrf.mxu0
      %4645 = vmatprep.mubr.f32.mxu0 %v3972
      %4646 = vmatmul.mubr.f32.gmra.mxu0 %v3971
      %v4647 = vpop.f32.mrf.mxu0
      %v4648 = vadd.f32 %v4423, %v4647
      %v4649 = vpop.f32.mrf.mxu0
      %4650 = vmatprep.mubr.f32.mxu0 %v3984
      %4651 = vmatmul.mubr.f32.gmra.mxu0 %v3983
      %v4652 = vpop.f32.mrf.mxu0
      %v4653 = vadd.f32 %v4428, %v4652
      %v4654 = vpop.f32.mrf.mxu0
      %4655 = vmatprep.mubr.f32.mxu0 %v3996
      %4656 = vmatmul.mubr.f32.gmra.mxu0 %v3995
      %v4657 = vpop.f32.mrf.mxu0
      %v4658 = vadd.f32 %v4433, %v4657
      %v4659 = vpop.f32.mrf.mxu0
      %4660 = vmatprep.mubr.f32.mxu0 %v4008
      %4661 = vmatmul.mubr.f32.gmra.mxu0 %v4007
      %v4662 = vpop.f32.mrf.mxu0
      %v4663 = vadd.f32 %v4438, %v4662
      %v4664 = vpop.f32.mrf.mxu0
      %4665 = vdwg.mxu0
      %4666 = vmatprep.subr.mxu0 0.0
      %4667 = vmatpush1.msra.mxu0 %v4096
      %4668 = vmatprep.subr.mxu0 0.0
      %4669 = vmatpush1.msra.mxu0 %v4095
      %4670 = vmatprep.subr.mxu0 0.0
      %4671 = vmatpush1.msra.mxu0 %v4094
      %4672 = vmatprep.subr.mxu0 0.0
      %4673 = vmatpush1.msra.mxu0 %v4093
      %4674 = vmatprep.subr.mxu0 0.0
      %4675 = vmatpush1.msra.mxu0 %v4092
      %4676 = vmatprep.subr.mxu0 0.0
      %4677 = vmatpush1.msra.mxu0 %v4091
      %4678 = vmatprep.subr.mxu0 0.0
      %4679 = vmatpush1.msra.mxu0 %v4090
      %4680 = vmatprep.subr.mxu0 0.0
      %4681 = vmatpush1.msra.mxu0 %v4089
      %4682 = vmatprep.subr.mxu0 0.0
      %4683 = vmatpush1.msra.mxu0 %v4088
      %4684 = vmatprep.subr.mxu0 0.0
      %4685 = vmatpush1.msra.mxu0 %v4087
      %4686 = vmatprep.subr.mxu0 0.0
      %4687 = vmatpush1.msra.mxu0 %v4086
      %4688 = vmatprep.subr.mxu0 0.0
      %4689 = vmatpush1.msra.mxu0 %v4085
      %4690 = vmatprep.subr.mxu0 0.0
      %4691 = vmatpush1.msra.mxu0 %v4084
      %4692 = vmatprep.subr.mxu0 0.0
      %4693 = vmatpush1.msra.mxu0 %v4083
      %4694 = vmatprep.subr.mxu0 0.0
      %4695 = vmatpush1.msra.mxu0 %v4082
      %4696 = vmatprep.subr.mxu0 0.0
      %4697 = vmatpush1.msra.mxu0 %v4081
      %4698 = vmatprep.subr.mxu0 0.0
      %4699 = vmatpush2.msra.mxu0 %v4112
      %4700 = vmatprep.subr.mxu0 0.0
      %4701 = vmatpush2.msra.mxu0 %v4111
      %4702 = vmatprep.subr.mxu0 0.0
      %4703 = vmatpush2.msra.mxu0 %v4110
      %4704 = vmatprep.subr.mxu0 0.0
      %4705 = vmatpush2.msra.mxu0 %v4109
      %4706 = vmatprep.subr.mxu0 0.0
      %4707 = vmatpush2.msra.mxu0 %v4108
      %4708 = vmatprep.subr.mxu0 0.0
      %4709 = vmatpush2.msra.mxu0 %v4107
      %4710 = vmatprep.subr.mxu0 0.0
      %4711 = vmatpush2.msra.mxu0 %v4106
      %4712 = vmatprep.subr.mxu0 0.0
      %4713 = vmatpush2.msra.mxu0 %v4105
      %4714 = vmatprep.subr.mxu0 0.0
      %4715 = vmatpush2.msra.mxu0 %v4104
      %4716 = vmatprep.subr.mxu0 0.0
      %4717 = vmatpush2.msra.mxu0 %v4103
      %4718 = vmatprep.subr.mxu0 0.0
      %4719 = vmatpush2.msra.mxu0 %v4102
      %4720 = vmatprep.subr.mxu0 0.0
      %4721 = vmatpush2.msra.mxu0 %v4101
      %4722 = vmatprep.subr.mxu0 0.0
      %4723 = vmatpush2.msra.mxu0 %v4100
      %4724 = vmatprep.subr.mxu0 0.0
      %4725 = vmatpush2.msra.mxu0 %v4099
      %4726 = vmatprep.subr.mxu0 0.0
      %4727 = vmatpush2.msra.mxu0 %v4098
      %4728 = vmatprep.subr.mxu0 0.0
      %4729 = vmatpush2.msra.mxu0 %v4097
      %4730 = vmatprep.mubr.f32.mxu0 %v3638
      %4731 = vmatmul.mubr.f32.gmra.mxu0 %v3637
      %v4732 = vpop.f32.mrf.mxu0
      %v4733 = vadd.f32 %v4508, %v4732
      %v4734 = vpop.f32.mrf.mxu0
      %4735 = vmatprep.mubr.f32.mxu0 %v3650
      %4736 = vmatmul.mubr.f32.gmra.mxu0 %v3649
      %v4737 = vpop.f32.mrf.mxu0
      %v4738 = vadd.f32 %v4513, %v4737
      %v4739 = vpop.f32.mrf.mxu0
      %4740 = vmatprep.mubr.f32.mxu0 %v3662
      %4741 = vmatmul.mubr.f32.gmra.mxu0 %v3661
      %v4742 = vpop.f32.mrf.mxu0
      %v4743 = vadd.f32 %v4518, %v4742
      %v4744 = vpop.f32.mrf.mxu0
      %4745 = vmatprep.mubr.f32.mxu0 %v3674
      %4746 = vmatmul.mubr.f32.gmra.mxu0 %v3673
      %v4747 = vpop.f32.mrf.mxu0
      %v4748 = vadd.f32 %v4523, %v4747
      %v4749 = vpop.f32.mrf.mxu0
      %4750 = vmatprep.mubr.f32.mxu0 %v3686
      %4751 = vmatmul.mubr.f32.gmra.mxu0 %v3685
      %v4752 = vpop.f32.mrf.mxu0
      %v4753 = vadd.f32 %v4528, %v4752
      %v4754 = vpop.f32.mrf.mxu0
      %4755 = vmatprep.mubr.f32.mxu0 %v3698
      %4756 = vmatmul.mubr.f32.gmra.mxu0 %v3697
      %v4757 = vpop.f32.mrf.mxu0
      %v4758 = vadd.f32 %v4533, %v4757
      %v4759 = vpop.f32.mrf.mxu0
      %4760 = vmatprep.mubr.f32.mxu0 %v3710
      %4761 = vmatmul.mubr.f32.gmra.mxu0 %v3709
      %v4762 = vpop.f32.mrf.mxu0
      %v4763 = vadd.f32 %v4538, %v4762
      %v4764 = vpop.f32.mrf.mxu0
      %4765 = vmatprep.mubr.f32.mxu0 %v3722
      %4766 = vmatmul.mubr.f32.gmra.mxu0 %v3721
      %v4767 = vpop.f32.mrf.mxu0
      %v4768 = vadd.f32 %v4543, %v4767
      %v4769 = vpop.f32.mrf.mxu0
      %4770 = vmatprep.mubr.f32.mxu0 %v3734
      %4771 = vmatmul.mubr.f32.gmra.mxu0 %v3733
      %v4772 = vpop.f32.mrf.mxu0
      %v4773 = vadd.f32 %v4548, %v4772
      %v4774 = vpop.f32.mrf.mxu0
      %4775 = vmatprep.mubr.f32.mxu0 %v3746
      %4776 = vmatmul.mubr.f32.gmra.mxu0 %v3745
      %v4777 = vpop.f32.mrf.mxu0
      %v4778 = vadd.f32 %v4553, %v4777
      %v4779 = vpop.f32.mrf.mxu0
      %4780 = vmatprep.mubr.f32.mxu0 %v3758
      %4781 = vmatmul.mubr.f32.gmra.mxu0 %v3757
      %v4782 = vpop.f32.mrf.mxu0
      %v4783 = vadd.f32 %v4558, %v4782
      %v4784 = vpop.f32.mrf.mxu0
      %4785 = vmatprep.mubr.f32.mxu0 %v3770
      %4786 = vmatmul.mubr.f32.gmra.mxu0 %v3769
      %v4787 = vpop.f32.mrf.mxu0
      %v4788 = vadd.f32 %v4563, %v4787
      %v4789 = vpop.f32.mrf.mxu0
      %4790 = vmatprep.mubr.f32.mxu0 %v3782
      %4791 = vmatmul.mubr.f32.gmra.mxu0 %v3781
      %v4792 = vpop.f32.mrf.mxu0
      %v4793 = vadd.f32 %v4568, %v4792
      %v4794 = vpop.f32.mrf.mxu0
      %4795 = vmatprep.mubr.f32.mxu0 %v3794
      %4796 = vmatmul.mubr.f32.gmra.mxu0 %v3793
      %v4797 = vpop.f32.mrf.mxu0
      %v4798 = vadd.f32 %v4573, %v4797
      %v4799 = vpop.f32.mrf.mxu0
      %4800 = vmatprep.mubr.f32.mxu0 %v3806
      %4801 = vmatmul.mubr.f32.gmra.mxu0 %v3805
      %v4802 = vpop.f32.mrf.mxu0
      %v4803 = vadd.f32 %v4578, %v4802
      %v4804 = vpop.f32.mrf.mxu0
      %4805 = vmatprep.mubr.f32.mxu0 %v3818
      %4806 = vmatmul.mubr.f32.gmra.mxu0 %v3817
      %v4807 = vpop.f32.mrf.mxu0
      %v4808 = vadd.f32 %v4583, %v4807
      %v4809 = vpop.f32.mrf.mxu0
      %4810 = vmatprep.mubr.f32.mxu0 %v3830
      %4811 = vmatmul.mubr.f32.gmra.mxu0 %v3829
      %v4812 = vpop.f32.mrf.mxu0
      %v4813 = vadd.f32 %v4588, %v4812
      %v4814 = vpop.f32.mrf.mxu0
      %4815 = vmatprep.mubr.f32.mxu0 %v3842
      %4816 = vmatmul.mubr.f32.gmra.mxu0 %v3841
      %v4817 = vpop.f32.mrf.mxu0
      %v4818 = vadd.f32 %v4593, %v4817
      %v4819 = vpop.f32.mrf.mxu0
      %4820 = vmatprep.mubr.f32.mxu0 %v3854
      %4821 = vmatmul.mubr.f32.gmra.mxu0 %v3853
      %v4822 = vpop.f32.mrf.mxu0
      %v4823 = vadd.f32 %v4598, %v4822
      %v4824 = vpop.f32.mrf.mxu0
      %4825 = vmatprep.mubr.f32.mxu0 %v3866
      %4826 = vmatmul.mubr.f32.gmra.mxu0 %v3865
      %v4827 = vpop.f32.mrf.mxu0
      %v4828 = vadd.f32 %v4603, %v4827
      %v4829 = vpop.f32.mrf.mxu0
      %4830 = vmatprep.mubr.f32.mxu0 %v3878
      %4831 = vmatmul.mubr.f32.gmra.mxu0 %v3877
      %v4832 = vpop.f32.mrf.mxu0
      %v4833 = vadd.f32 %v4608, %v4832
      %v4834 = vpop.f32.mrf.mxu0
      %4835 = vmatprep.mubr.f32.mxu0 %v3890
      %4836 = vmatmul.mubr.f32.gmra.mxu0 %v3889
      %v4837 = vpop.f32.mrf.mxu0
      %v4838 = vadd.f32 %v4613, %v4837
      %v4839 = vpop.f32.mrf.mxu0
      %4840 = vmatprep.mubr.f32.mxu0 %v3902
      %4841 = vmatmul.mubr.f32.gmra.mxu0 %v3901
      %v4842 = vpop.f32.mrf.mxu0
      %v4843 = vadd.f32 %v4618, %v4842
      %v4844 = vpop.f32.mrf.mxu0
      %4845 = vmatprep.mubr.f32.mxu0 %v3914
      %4846 = vmatmul.mubr.f32.gmra.mxu0 %v3913
      %v4847 = vpop.f32.mrf.mxu0
      %v4848 = vadd.f32 %v4623, %v4847
      %v4849 = vpop.f32.mrf.mxu0
      %4850 = vmatprep.mubr.f32.mxu0 %v3926
      %4851 = vmatmul.mubr.f32.gmra.mxu0 %v3925
      %v4852 = vpop.f32.mrf.mxu0
      %v4853 = vadd.f32 %v4628, %v4852
      %v4854 = vpop.f32.mrf.mxu0
      %4855 = vmatprep.mubr.f32.mxu0 %v3938
      %4856 = vmatmul.mubr.f32.gmra.mxu0 %v3937
      %v4857 = vpop.f32.mrf.mxu0
      %v4858 = vadd.f32 %v4633, %v4857
      %v4859 = vpop.f32.mrf.mxu0
      %4860 = vmatprep.mubr.f32.mxu0 %v3950
      %4861 = vmatmul.mubr.f32.gmra.mxu0 %v3949
      %v4862 = vpop.f32.mrf.mxu0
      %v4863 = vadd.f32 %v4638, %v4862
      %v4864 = vpop.f32.mrf.mxu0
      %4865 = vmatprep.mubr.f32.mxu0 %v3962
      %4866 = vmatmul.mubr.f32.gmra.mxu0 %v3961
      %v4867 = vpop.f32.mrf.mxu0
      %v4868 = vadd.f32 %v4643, %v4867
      %v4869 = vpop.f32.mrf.mxu0
      %4870 = vmatprep.mubr.f32.mxu0 %v3974
      %4871 = vmatmul.mubr.f32.gmra.mxu0 %v3973
      %v4872 = vpop.f32.mrf.mxu0
      %v4873 = vadd.f32 %v4648, %v4872
      %v4874 = vpop.f32.mrf.mxu0
      %4875 = vmatprep.mubr.f32.mxu0 %v3986
      %4876 = vmatmul.mubr.f32.gmra.mxu0 %v3985
      %v4877 = vpop.f32.mrf.mxu0
      %v4878 = vadd.f32 %v4653, %v4877
      %v4879 = vpop.f32.mrf.mxu0
      %4880 = vmatprep.mubr.f32.mxu0 %v3998
      %4881 = vmatmul.mubr.f32.gmra.mxu0 %v3997
      %v4882 = vpop.f32.mrf.mxu0
      %v4883 = vadd.f32 %v4658, %v4882
      %v4884 = vpop.f32.mrf.mxu0
      %4885 = vmatprep.mubr.f32.mxu0 %v4010
      %4886 = vmatmul.mubr.f32.gmra.mxu0 %v4009
      %v4887 = vpop.f32.mrf.mxu0
      %v4888 = vadd.f32 %v4663, %v4887
      %v4889 = vpop.f32.mrf.mxu0
      %4890 = vdwg.mxu0
      %4891 = vmatprep.subr.mxu0 0.0
      %4892 = vmatpush1.msra.mxu0 %v4128
      %4893 = vmatprep.subr.mxu0 0.0
      %4894 = vmatpush1.msra.mxu0 %v4127
      %4895 = vmatprep.subr.mxu0 0.0
      %4896 = vmatpush1.msra.mxu0 %v4126
      %4897 = vmatprep.subr.mxu0 0.0
      %4898 = vmatpush1.msra.mxu0 %v4125
      %4899 = vmatprep.subr.mxu0 0.0
      %4900 = vmatpush1.msra.mxu0 %v4124
      %4901 = vmatprep.subr.mxu0 0.0
      %4902 = vmatpush1.msra.mxu0 %v4123
      %4903 = vmatprep.subr.mxu0 0.0
      %4904 = vmatpush1.msra.mxu0 %v4122
      %4905 = vmatprep.subr.mxu0 0.0
      %4906 = vmatpush1.msra.mxu0 %v4121
      %4907 = vmatprep.subr.mxu0 0.0
      %4908 = vmatpush1.msra.mxu0 %v4120
      %4909 = vmatprep.subr.mxu0 0.0
      %4910 = vmatpush1.msra.mxu0 %v4119
      %4911 = vmatprep.subr.mxu0 0.0
      %4912 = vmatpush1.msra.mxu0 %v4118
      %4913 = vmatprep.subr.mxu0 0.0
      %4914 = vmatpush1.msra.mxu0 %v4117
      %4915 = vmatprep.subr.mxu0 0.0
      %4916 = vmatpush1.msra.mxu0 %v4116
      %4917 = vmatprep.subr.mxu0 0.0
      %4918 = vmatpush1.msra.mxu0 %v4115
      %4919 = vmatprep.subr.mxu0 0.0
      %4920 = vmatpush1.msra.mxu0 %v4114
      %4921 = vmatprep.subr.mxu0 0.0
      %4922 = vmatpush1.msra.mxu0 %v4113
      %4923 = vmatprep.subr.mxu0 0.0
      %4924 = vmatpush2.msra.mxu0 %v4144
      %4925 = vmatprep.subr.mxu0 0.0
      %4926 = vmatpush2.msra.mxu0 %v4143
      %4927 = vmatprep.subr.mxu0 0.0
      %4928 = vmatpush2.msra.mxu0 %v4142
      %4929 = vmatprep.subr.mxu0 0.0
      %4930 = vmatpush2.msra.mxu0 %v4141
      %4931 = vmatprep.subr.mxu0 0.0
      %4932 = vmatpush2.msra.mxu0 %v4140
      %4933 = vmatprep.subr.mxu0 0.0
      %4934 = vmatpush2.msra.mxu0 %v4139
      %4935 = vmatprep.subr.mxu0 0.0
      %4936 = vmatpush2.msra.mxu0 %v4138
      %4937 = vmatprep.subr.mxu0 0.0
      %4938 = vmatpush2.msra.mxu0 %v4137
      %4939 = vmatprep.subr.mxu0 0.0
      %4940 = vmatpush2.msra.mxu0 %v4136
      %4941 = vmatprep.subr.mxu0 0.0
      %4942 = vmatpush2.msra.mxu0 %v4135
      %4943 = vmatprep.subr.mxu0 0.0
      %4944 = vmatpush2.msra.mxu0 %v4134
      %4945 = vmatprep.subr.mxu0 0.0
      %4946 = vmatpush2.msra.mxu0 %v4133
      %4947 = vmatprep.subr.mxu0 0.0
      %4948 = vmatpush2.msra.mxu0 %v4132
      %4949 = vmatprep.subr.mxu0 0.0
      %4950 = vmatpush2.msra.mxu0 %v4131
      %4951 = vmatprep.subr.mxu0 0.0
      %4952 = vmatpush2.msra.mxu0 %v4130
      %4953 = vmatprep.subr.mxu0 0.0
      %4954 = vmatpush2.msra.mxu0 %v4129
      %4955 = vmatprep.mubr.f32.mxu0 %v3640
      %4956 = vmatmul.mubr.f32.gmra.mxu0 %v3639
      %v4957 = vpop.f32.mrf.mxu0
      %v4958 = vadd.f32 %v4733, %v4957
      %v4959 = vpop.f32.mrf.mxu0
      %4960 = vmatprep.mubr.f32.mxu0 %v3652
      %4961 = vmatmul.mubr.f32.gmra.mxu0 %v3651
      %v4962 = vpop.f32.mrf.mxu0
      %v4963 = vadd.f32 %v4738, %v4962
      %v4964 = vpop.f32.mrf.mxu0
      %4965 = vmatprep.mubr.f32.mxu0 %v3664
      %4966 = vmatmul.mubr.f32.gmra.mxu0 %v3663
      %v4967 = vpop.f32.mrf.mxu0
      %v4968 = vadd.f32 %v4743, %v4967
      %v4969 = vpop.f32.mrf.mxu0
      %4970 = vmatprep.mubr.f32.mxu0 %v3676
      %4971 = vmatmul.mubr.f32.gmra.mxu0 %v3675
      %v4972 = vpop.f32.mrf.mxu0
      %v4973 = vadd.f32 %v4748, %v4972
      %v4974 = vpop.f32.mrf.mxu0
      %4975 = vmatprep.mubr.f32.mxu0 %v3688
      %4976 = vmatmul.mubr.f32.gmra.mxu0 %v3687
      %v4977 = vpop.f32.mrf.mxu0
      %v4978 = vadd.f32 %v4753, %v4977
      %v4979 = vpop.f32.mrf.mxu0
      %4980 = vmatprep.mubr.f32.mxu0 %v3700
      %4981 = vmatmul.mubr.f32.gmra.mxu0 %v3699
      %v4982 = vpop.f32.mrf.mxu0
      %v4983 = vadd.f32 %v4758, %v4982
      %v4984 = vpop.f32.mrf.mxu0
      %4985 = vmatprep.mubr.f32.mxu0 %v3712
      %4986 = vmatmul.mubr.f32.gmra.mxu0 %v3711
      %v4987 = vpop.f32.mrf.mxu0
      %v4988 = vadd.f32 %v4763, %v4987
      %v4989 = vpop.f32.mrf.mxu0
      %4990 = vmatprep.mubr.f32.mxu0 %v3724
      %4991 = vmatmul.mubr.f32.gmra.mxu0 %v3723
      %v4992 = vpop.f32.mrf.mxu0
      %v4993 = vadd.f32 %v4768, %v4992
      %v4994 = vpop.f32.mrf.mxu0
      %4995 = vmatprep.mubr.f32.mxu0 %v3736
      %4996 = vmatmul.mubr.f32.gmra.mxu0 %v3735
      %v4997 = vpop.f32.mrf.mxu0
      %v4998 = vadd.f32 %v4773, %v4997
      %v4999 = vpop.f32.mrf.mxu0
      %5000 = vmatprep.mubr.f32.mxu0 %v3748
      %5001 = vmatmul.mubr.f32.gmra.mxu0 %v3747
      %v5002 = vpop.f32.mrf.mxu0
      %v5003 = vadd.f32 %v4778, %v5002
      %v5004 = vpop.f32.mrf.mxu0
      %5005 = vmatprep.mubr.f32.mxu0 %v3760
      %5006 = vmatmul.mubr.f32.gmra.mxu0 %v3759
      %v5007 = vpop.f32.mrf.mxu0
      %v5008 = vadd.f32 %v4783, %v5007
      %v5009 = vpop.f32.mrf.mxu0
      %5010 = vmatprep.mubr.f32.mxu0 %v3772
      %5011 = vmatmul.mubr.f32.gmra.mxu0 %v3771
      %v5012 = vpop.f32.mrf.mxu0
      %v5013 = vadd.f32 %v4788, %v5012
      %v5014 = vpop.f32.mrf.mxu0
      %5015 = vmatprep.mubr.f32.mxu0 %v3784
      %5016 = vmatmul.mubr.f32.gmra.mxu0 %v3783
      %v5017 = vpop.f32.mrf.mxu0
      %v5018 = vadd.f32 %v4793, %v5017
      %v5019 = vpop.f32.mrf.mxu0
      %5020 = vmatprep.mubr.f32.mxu0 %v3796
      %5021 = vmatmul.mubr.f32.gmra.mxu0 %v3795
      %v5022 = vpop.f32.mrf.mxu0
      %v5023 = vadd.f32 %v4798, %v5022
      %v5024 = vpop.f32.mrf.mxu0
      %5025 = vmatprep.mubr.f32.mxu0 %v3808
      %5026 = vmatmul.mubr.f32.gmra.mxu0 %v3807
      %v5027 = vpop.f32.mrf.mxu0
      %v5028 = vadd.f32 %v4803, %v5027
      %v5029 = vpop.f32.mrf.mxu0
      %5030 = vmatprep.mubr.f32.mxu0 %v3820
      %5031 = vmatmul.mubr.f32.gmra.mxu0 %v3819
      %v5032 = vpop.f32.mrf.mxu0
      %v5033 = vadd.f32 %v4808, %v5032
      %v5034 = vpop.f32.mrf.mxu0
      %5035 = vmatprep.mubr.f32.mxu0 %v3832
      %5036 = vmatmul.mubr.f32.gmra.mxu0 %v3831
      %v5037 = vpop.f32.mrf.mxu0
      %v5038 = vadd.f32 %v4813, %v5037
      %v5039 = vpop.f32.mrf.mxu0
      %5040 = vmatprep.mubr.f32.mxu0 %v3844
      %5041 = vmatmul.mubr.f32.gmra.mxu0 %v3843
      %v5042 = vpop.f32.mrf.mxu0
      %v5043 = vadd.f32 %v4818, %v5042
      %v5044 = vpop.f32.mrf.mxu0
      %5045 = vmatprep.mubr.f32.mxu0 %v3856
      %5046 = vmatmul.mubr.f32.gmra.mxu0 %v3855
      %v5047 = vpop.f32.mrf.mxu0
      %v5048 = vadd.f32 %v4823, %v5047
      %v5049 = vpop.f32.mrf.mxu0
      %5050 = vmatprep.mubr.f32.mxu0 %v3868
      %5051 = vmatmul.mubr.f32.gmra.mxu0 %v3867
      %v5052 = vpop.f32.mrf.mxu0
      %v5053 = vadd.f32 %v4828, %v5052
      %v5054 = vpop.f32.mrf.mxu0
      %5055 = vmatprep.mubr.f32.mxu0 %v3880
      %5056 = vmatmul.mubr.f32.gmra.mxu0 %v3879
      %v5057 = vpop.f32.mrf.mxu0
      %v5058 = vadd.f32 %v4833, %v5057
      %v5059 = vpop.f32.mrf.mxu0
      %5060 = vmatprep.mubr.f32.mxu0 %v3892
      %5061 = vmatmul.mubr.f32.gmra.mxu0 %v3891
      %v5062 = vpop.f32.mrf.mxu0
      %v5063 = vadd.f32 %v4838, %v5062
      %v5064 = vpop.f32.mrf.mxu0
      %5065 = vmatprep.mubr.f32.mxu0 %v3904
      %5066 = vmatmul.mubr.f32.gmra.mxu0 %v3903
      %v5067 = vpop.f32.mrf.mxu0
      %v5068 = vadd.f32 %v4843, %v5067
      %v5069 = vpop.f32.mrf.mxu0
      %5070 = vmatprep.mubr.f32.mxu0 %v3916
      %5071 = vmatmul.mubr.f32.gmra.mxu0 %v3915
      %v5072 = vpop.f32.mrf.mxu0
      %v5073 = vadd.f32 %v4848, %v5072
      %v5074 = vpop.f32.mrf.mxu0
      %5075 = vmatprep.mubr.f32.mxu0 %v3928
      %5076 = vmatmul.mubr.f32.gmra.mxu0 %v3927
      %v5077 = vpop.f32.mrf.mxu0
      %v5078 = vadd.f32 %v4853, %v5077
      %v5079 = vpop.f32.mrf.mxu0
      %5080 = vmatprep.mubr.f32.mxu0 %v3940
      %5081 = vmatmul.mubr.f32.gmra.mxu0 %v3939
      %v5082 = vpop.f32.mrf.mxu0
      %v5083 = vadd.f32 %v4858, %v5082
      %v5084 = vpop.f32.mrf.mxu0
      %5085 = vmatprep.mubr.f32.mxu0 %v3952
      %5086 = vmatmul.mubr.f32.gmra.mxu0 %v3951
      %v5087 = vpop.f32.mrf.mxu0
      %v5088 = vadd.f32 %v4863, %v5087
      %v5089 = vpop.f32.mrf.mxu0
      %5090 = vmatprep.mubr.f32.mxu0 %v3964
      %5091 = vmatmul.mubr.f32.gmra.mxu0 %v3963
      %v5092 = vpop.f32.mrf.mxu0
      %v5093 = vadd.f32 %v4868, %v5092
      %v5094 = vpop.f32.mrf.mxu0
      %5095 = vmatprep.mubr.f32.mxu0 %v3976
      %5096 = vmatmul.mubr.f32.gmra.mxu0 %v3975
      %v5097 = vpop.f32.mrf.mxu0
      %v5098 = vadd.f32 %v4873, %v5097
      %v5099 = vpop.f32.mrf.mxu0
      %5100 = vmatprep.mubr.f32.mxu0 %v3988
      %5101 = vmatmul.mubr.f32.gmra.mxu0 %v3987
      %v5102 = vpop.f32.mrf.mxu0
      %v5103 = vadd.f32 %v4878, %v5102
      %v5104 = vpop.f32.mrf.mxu0
      %5105 = vmatprep.mubr.f32.mxu0 %v4000
      %5106 = vmatmul.mubr.f32.gmra.mxu0 %v3999
      %v5107 = vpop.f32.mrf.mxu0
      %v5108 = vadd.f32 %v4883, %v5107
      %v5109 = vpop.f32.mrf.mxu0
      %5110 = vmatprep.mubr.f32.mxu0 %v4012
      %5111 = vmatmul.mubr.f32.gmra.mxu0 %v4011
      %v5112 = vpop.f32.mrf.mxu0
      %v5113 = vadd.f32 %v4888, %v5112
      %v5114 = vpop.f32.mrf.mxu0
      %5115 = vdwg.mxu0
      %5116 = vmatprep.subr.mxu0 0.0
      %5117 = vmatpush1.msra.mxu0 %v4160
      %5118 = vmatprep.subr.mxu0 0.0
      %5119 = vmatpush1.msra.mxu0 %v4159
      %5120 = vmatprep.subr.mxu0 0.0
      %5121 = vmatpush1.msra.mxu0 %v4158
      %5122 = vmatprep.subr.mxu0 0.0
      %5123 = vmatpush1.msra.mxu0 %v4157
      %5124 = vmatprep.subr.mxu0 0.0
      %5125 = vmatpush1.msra.mxu0 %v4156
      %5126 = vmatprep.subr.mxu0 0.0
      %5127 = vmatpush1.msra.mxu0 %v4155
      %5128 = vmatprep.subr.mxu0 0.0
      %5129 = vmatpush1.msra.mxu0 %v4154
      %5130 = vmatprep.subr.mxu0 0.0
      %5131 = vmatpush1.msra.mxu0 %v4153
      %5132 = vmatprep.subr.mxu0 0.0
      %5133 = vmatpush1.msra.mxu0 %v4152
      %5134 = vmatprep.subr.mxu0 0.0
      %5135 = vmatpush1.msra.mxu0 %v4151
      %5136 = vmatprep.subr.mxu0 0.0
      %5137 = vmatpush1.msra.mxu0 %v4150
      %5138 = vmatprep.subr.mxu0 0.0
      %5139 = vmatpush1.msra.mxu0 %v4149
      %5140 = vmatprep.subr.mxu0 0.0
      %5141 = vmatpush1.msra.mxu0 %v4148
      %5142 = vmatprep.subr.mxu0 0.0
      %5143 = vmatpush1.msra.mxu0 %v4147
      %5144 = vmatprep.subr.mxu0 0.0
      %5145 = vmatpush1.msra.mxu0 %v4146
      %5146 = vmatprep.subr.mxu0 0.0
      %5147 = vmatpush1.msra.mxu0 %v4145
      %5148 = vmatprep.subr.mxu0 0.0
      %5149 = vmatpush2.msra.mxu0 %v4176
      %5150 = vmatprep.subr.mxu0 0.0
      %5151 = vmatpush2.msra.mxu0 %v4175
      %5152 = vmatprep.subr.mxu0 0.0
      %5153 = vmatpush2.msra.mxu0 %v4174
      %5154 = vmatprep.subr.mxu0 0.0
      %5155 = vmatpush2.msra.mxu0 %v4173
      %5156 = vmatprep.subr.mxu0 0.0
      %5157 = vmatpush2.msra.mxu0 %v4172
      %5158 = vmatprep.subr.mxu0 0.0
      %5159 = vmatpush2.msra.mxu0 %v4171
      %5160 = vmatprep.subr.mxu0 0.0
      %5161 = vmatpush2.msra.mxu0 %v4170
      %5162 = vmatprep.subr.mxu0 0.0
      %5163 = vmatpush2.msra.mxu0 %v4169
      %5164 = vmatprep.subr.mxu0 0.0
      %5165 = vmatpush2.msra.mxu0 %v4168
      %5166 = vmatprep.subr.mxu0 0.0
      %5167 = vmatpush2.msra.mxu0 %v4167
      %5168 = vmatprep.subr.mxu0 0.0
      %5169 = vmatpush2.msra.mxu0 %v4166
      %5170 = vmatprep.subr.mxu0 0.0
      %5171 = vmatpush2.msra.mxu0 %v4165
      %5172 = vmatprep.subr.mxu0 0.0
      %5173 = vmatpush2.msra.mxu0 %v4164
      %5174 = vmatprep.subr.mxu0 0.0
      %5175 = vmatpush2.msra.mxu0 %v4163
      %5176 = vmatprep.subr.mxu0 0.0
      %5177 = vmatpush2.msra.mxu0 %v4162
      %5178 = vmatprep.subr.mxu0 0.0
      %5179 = vmatpush2.msra.mxu0 %v4161
      %5180 = vmatprep.mubr.f32.mxu0 %v3642
      %5181 = vmatmul.mubr.f32.gmra.mxu0 %v3641
      %v5182 = vpop.f32.mrf.mxu0
      %v5183 = vadd.f32 %v4958, %v5182
      %v5184 = vpop.f32.mrf.mxu0
      %5185 = vmatprep.mubr.f32.mxu0 %v3654
      %5186 = vmatmul.mubr.f32.gmra.mxu0 %v3653
      %v5187 = vpop.f32.mrf.mxu0
      %v5188 = vadd.f32 %v4963, %v5187
      %v5189 = vpop.f32.mrf.mxu0
      %5190 = vmatprep.mubr.f32.mxu0 %v3666
      %5191 = vmatmul.mubr.f32.gmra.mxu0 %v3665
      %v5192 = vpop.f32.mrf.mxu0
      %v5193 = vadd.f32 %v4968, %v5192
      %v5194 = vpop.f32.mrf.mxu0
      %5195 = vmatprep.mubr.f32.mxu0 %v3678
      %5196 = vmatmul.mubr.f32.gmra.mxu0 %v3677
      %v5197 = vpop.f32.mrf.mxu0
      %v5198 = vadd.f32 %v4973, %v5197
      %v5199 = vpop.f32.mrf.mxu0
      %5200 = vmatprep.mubr.f32.mxu0 %v3690
      %5201 = vmatmul.mubr.f32.gmra.mxu0 %v3689
      %v5202 = vpop.f32.mrf.mxu0
      %v5203 = vadd.f32 %v4978, %v5202
      %v5204 = vpop.f32.mrf.mxu0
      %5205 = vmatprep.mubr.f32.mxu0 %v3702
      %5206 = vmatmul.mubr.f32.gmra.mxu0 %v3701
      %v5207 = vpop.f32.mrf.mxu0
      %v5208 = vadd.f32 %v4983, %v5207
      %v5209 = vpop.f32.mrf.mxu0
      %5210 = vmatprep.mubr.f32.mxu0 %v3714
      %5211 = vmatmul.mubr.f32.gmra.mxu0 %v3713
      %v5212 = vpop.f32.mrf.mxu0
      %v5213 = vadd.f32 %v4988, %v5212
      %v5214 = vpop.f32.mrf.mxu0
      %5215 = vmatprep.mubr.f32.mxu0 %v3726
      %5216 = vmatmul.mubr.f32.gmra.mxu0 %v3725
      %v5217 = vpop.f32.mrf.mxu0
      %v5218 = vadd.f32 %v4993, %v5217
      %v5219 = vpop.f32.mrf.mxu0
      %5220 = vmatprep.mubr.f32.mxu0 %v3738
      %5221 = vmatmul.mubr.f32.gmra.mxu0 %v3737
      %v5222 = vpop.f32.mrf.mxu0
      %v5223 = vadd.f32 %v4998, %v5222
      %v5224 = vpop.f32.mrf.mxu0
      %5225 = vmatprep.mubr.f32.mxu0 %v3750
      %5226 = vmatmul.mubr.f32.gmra.mxu0 %v3749
      %v5227 = vpop.f32.mrf.mxu0
      %v5228 = vadd.f32 %v5003, %v5227
      %v5229 = vpop.f32.mrf.mxu0
      %5230 = vmatprep.mubr.f32.mxu0 %v3762
      %5231 = vmatmul.mubr.f32.gmra.mxu0 %v3761
      %v5232 = vpop.f32.mrf.mxu0
      %v5233 = vadd.f32 %v5008, %v5232
      %v5234 = vpop.f32.mrf.mxu0
      %5235 = vmatprep.mubr.f32.mxu0 %v3774
      %5236 = vmatmul.mubr.f32.gmra.mxu0 %v3773
      %v5237 = vpop.f32.mrf.mxu0
      %v5238 = vadd.f32 %v5013, %v5237
      %v5239 = vpop.f32.mrf.mxu0
      %5240 = vmatprep.mubr.f32.mxu0 %v3786
      %5241 = vmatmul.mubr.f32.gmra.mxu0 %v3785
      %v5242 = vpop.f32.mrf.mxu0
      %v5243 = vadd.f32 %v5018, %v5242
      %v5244 = vpop.f32.mrf.mxu0
      %5245 = vmatprep.mubr.f32.mxu0 %v3798
      %5246 = vmatmul.mubr.f32.gmra.mxu0 %v3797
      %v5247 = vpop.f32.mrf.mxu0
      %v5248 = vadd.f32 %v5023, %v5247
      %v5249 = vpop.f32.mrf.mxu0
      %5250 = vmatprep.mubr.f32.mxu0 %v3810
      %5251 = vmatmul.mubr.f32.gmra.mxu0 %v3809
      %v5252 = vpop.f32.mrf.mxu0
      %v5253 = vadd.f32 %v5028, %v5252
      %v5254 = vpop.f32.mrf.mxu0
      %5255 = vmatprep.mubr.f32.mxu0 %v3822
      %5256 = vmatmul.mubr.f32.gmra.mxu0 %v3821
      %v5257 = vpop.f32.mrf.mxu0
      %v5258 = vadd.f32 %v5033, %v5257
      %v5259 = vpop.f32.mrf.mxu0
      %5260 = vmatprep.mubr.f32.mxu0 %v3834
      %5261 = vmatmul.mubr.f32.gmra.mxu0 %v3833
      %v5262 = vpop.f32.mrf.mxu0
      %v5263 = vadd.f32 %v5038, %v5262
      %v5264 = vpop.f32.mrf.mxu0
      %5265 = vmatprep.mubr.f32.mxu0 %v3846
      %5266 = vmatmul.mubr.f32.gmra.mxu0 %v3845
      %v5267 = vpop.f32.mrf.mxu0
      %v5268 = vadd.f32 %v5043, %v5267
      %v5269 = vpop.f32.mrf.mxu0
      %5270 = vmatprep.mubr.f32.mxu0 %v3858
      %5271 = vmatmul.mubr.f32.gmra.mxu0 %v3857
      %v5272 = vpop.f32.mrf.mxu0
      %v5273 = vadd.f32 %v5048, %v5272
      %v5274 = vpop.f32.mrf.mxu0
      %5275 = vmatprep.mubr.f32.mxu0 %v3870
      %5276 = vmatmul.mubr.f32.gmra.mxu0 %v3869
      %v5277 = vpop.f32.mrf.mxu0
      %v5278 = vadd.f32 %v5053, %v5277
      %v5279 = vpop.f32.mrf.mxu0
      %5280 = vmatprep.mubr.f32.mxu0 %v3882
      %5281 = vmatmul.mubr.f32.gmra.mxu0 %v3881
      %v5282 = vpop.f32.mrf.mxu0
      %v5283 = vadd.f32 %v5058, %v5282
      %v5284 = vpop.f32.mrf.mxu0
      %5285 = vmatprep.mubr.f32.mxu0 %v3894
      %5286 = vmatmul.mubr.f32.gmra.mxu0 %v3893
      %v5287 = vpop.f32.mrf.mxu0
      %v5288 = vadd.f32 %v5063, %v5287
      %v5289 = vpop.f32.mrf.mxu0
      %5290 = vmatprep.mubr.f32.mxu0 %v3906
      %5291 = vmatmul.mubr.f32.gmra.mxu0 %v3905
      %v5292 = vpop.f32.mrf.mxu0
      %v5293 = vadd.f32 %v5068, %v5292
      %v5294 = vpop.f32.mrf.mxu0
      %5295 = vmatprep.mubr.f32.mxu0 %v3918
      %5296 = vmatmul.mubr.f32.gmra.mxu0 %v3917
      %v5297 = vpop.f32.mrf.mxu0
      %v5298 = vadd.f32 %v5073, %v5297
      %v5299 = vpop.f32.mrf.mxu0
      %5300 = vmatprep.mubr.f32.mxu0 %v3930
      %5301 = vmatmul.mubr.f32.gmra.mxu0 %v3929
      %v5302 = vpop.f32.mrf.mxu0
      %v5303 = vadd.f32 %v5078, %v5302
      %v5304 = vpop.f32.mrf.mxu0
      %5305 = vmatprep.mubr.f32.mxu0 %v3942
      %5306 = vmatmul.mubr.f32.gmra.mxu0 %v3941
      %v5307 = vpop.f32.mrf.mxu0
      %v5308 = vadd.f32 %v5083, %v5307
      %v5309 = vpop.f32.mrf.mxu0
      %5310 = vmatprep.mubr.f32.mxu0 %v3954
      %5311 = vmatmul.mubr.f32.gmra.mxu0 %v3953
      %v5312 = vpop.f32.mrf.mxu0
      %v5313 = vadd.f32 %v5088, %v5312
      %v5314 = vpop.f32.mrf.mxu0
      %5315 = vmatprep.mubr.f32.mxu0 %v3966
      %5316 = vmatmul.mubr.f32.gmra.mxu0 %v3965
      %v5317 = vpop.f32.mrf.mxu0
      %v5318 = vadd.f32 %v5093, %v5317
      %v5319 = vpop.f32.mrf.mxu0
      %5320 = vmatprep.mubr.f32.mxu0 %v3978
      %5321 = vmatmul.mubr.f32.gmra.mxu0 %v3977
      %v5322 = vpop.f32.mrf.mxu0
      %v5323 = vadd.f32 %v5098, %v5322
      %v5324 = vpop.f32.mrf.mxu0
      %5325 = vmatprep.mubr.f32.mxu0 %v3990
      %5326 = vmatmul.mubr.f32.gmra.mxu0 %v3989
      %v5327 = vpop.f32.mrf.mxu0
      %v5328 = vadd.f32 %v5103, %v5327
      %v5329 = vpop.f32.mrf.mxu0
      %5330 = vmatprep.mubr.f32.mxu0 %v4002
      %5331 = vmatmul.mubr.f32.gmra.mxu0 %v4001
      %v5332 = vpop.f32.mrf.mxu0
      %v5333 = vadd.f32 %v5108, %v5332
      %v5334 = vpop.f32.mrf.mxu0
      %5335 = vmatprep.mubr.f32.mxu0 %v4014
      %5336 = vmatmul.mubr.f32.gmra.mxu0 %v4013
      %v5337 = vpop.f32.mrf.mxu0
      %v5338 = vadd.f32 %v5113, %v5337
      %v5339 = vpop.f32.mrf.mxu0
      %5340 = vdwg.mxu0
      %5341 = vmatprep.subr.mxu0 0.0
      %5342 = vmatpush1.msra.mxu0 %v4192
      %5343 = vmatprep.subr.mxu0 0.0
      %5344 = vmatpush1.msra.mxu0 %v4191
      %5345 = vmatprep.subr.mxu0 0.0
      %5346 = vmatpush1.msra.mxu0 %v4190
      %5347 = vmatprep.subr.mxu0 0.0
      %5348 = vmatpush1.msra.mxu0 %v4189
      %5349 = vmatprep.subr.mxu0 0.0
      %5350 = vmatpush1.msra.mxu0 %v4188
      %5351 = vmatprep.subr.mxu0 0.0
      %5352 = vmatpush1.msra.mxu0 %v4187
      %5353 = vmatprep.subr.mxu0 0.0
      %5354 = vmatpush1.msra.mxu0 %v4186
      %5355 = vmatprep.subr.mxu0 0.0
      %5356 = vmatpush1.msra.mxu0 %v4185
      %5357 = vmatprep.subr.mxu0 0.0
      %5358 = vmatpush1.msra.mxu0 %v4184
      %5359 = vmatprep.subr.mxu0 0.0
      %5360 = vmatpush1.msra.mxu0 %v4183
      %5361 = vmatprep.subr.mxu0 0.0
      %5362 = vmatpush1.msra.mxu0 %v4182
      %5363 = vmatprep.subr.mxu0 0.0
      %5364 = vmatpush1.msra.mxu0 %v4181
      %5365 = vmatprep.subr.mxu0 0.0
      %5366 = vmatpush1.msra.mxu0 %v4180
      %5367 = vmatprep.subr.mxu0 0.0
      %5368 = vmatpush1.msra.mxu0 %v4179
      %5369 = vmatprep.subr.mxu0 0.0
      %5370 = vmatpush1.msra.mxu0 %v4178
      %5371 = vmatprep.subr.mxu0 0.0
      %5372 = vmatpush1.msra.mxu0 %v4177
      %5373 = vmatprep.subr.mxu0 0.0
      %5374 = vmatpush2.msra.mxu0 %v4208
      %5375 = vmatprep.subr.mxu0 0.0
      %5376 = vmatpush2.msra.mxu0 %v4207
      %5377 = vmatprep.subr.mxu0 0.0
      %5378 = vmatpush2.msra.mxu0 %v4206
      %5379 = vmatprep.subr.mxu0 0.0
      %5380 = vmatpush2.msra.mxu0 %v4205
      %5381 = vmatprep.subr.mxu0 0.0
      %5382 = vmatpush2.msra.mxu0 %v4204
      %5383 = vmatprep.subr.mxu0 0.0
      %5384 = vmatpush2.msra.mxu0 %v4203
      %5385 = vmatprep.subr.mxu0 0.0
      %5386 = vmatpush2.msra.mxu0 %v4202
      %5387 = vmatprep.subr.mxu0 0.0
      %5388 = vmatpush2.msra.mxu0 %v4201
      %5389 = vmatprep.subr.mxu0 0.0
      %5390 = vmatpush2.msra.mxu0 %v4200
      %5391 = vmatprep.subr.mxu0 0.0
      %5392 = vmatpush2.msra.mxu0 %v4199
      %5393 = vmatprep.subr.mxu0 0.0
      %5394 = vmatpush2.msra.mxu0 %v4198
      %5395 = vmatprep.subr.mxu0 0.0
      %5396 = vmatpush2.msra.mxu0 %v4197
      %5397 = vmatprep.subr.mxu0 0.0
      %5398 = vmatpush2.msra.mxu0 %v4196
      %5399 = vmatprep.subr.mxu0 0.0
      %5400 = vmatpush2.msra.mxu0 %v4195
      %5401 = vmatprep.subr.mxu0 0.0
      %5402 = vmatpush2.msra.mxu0 %v4194
      %5403 = vmatprep.subr.mxu0 0.0
      %5404 = vmatpush2.msra.mxu0 %v4193
      %5405 = vmatprep.mubr.f32.mxu0 %v3644
      %5406 = vmatmul.mubr.f32.gmra.mxu0 %v3643
      %v5407 = vpop.f32.mrf.mxu0
      %v5408 = vadd.f32 %v5183, %v5407
      %v5409 = vpop.f32.mrf.mxu0
      %5410 = vmatprep.mubr.f32.mxu0 %v3656
      %5411 = vmatmul.mubr.f32.gmra.mxu0 %v3655
      %v5412 = vpop.f32.mrf.mxu0
      %v5413 = vadd.f32 %v5188, %v5412
      %v5414 = vpop.f32.mrf.mxu0
      %5415 = vmatprep.mubr.f32.mxu0 %v3668
      %5416 = vmatmul.mubr.f32.gmra.mxu0 %v3667
      %v5417 = vpop.f32.mrf.mxu0
      %v5418 = vadd.f32 %v5193, %v5417
      %v5419 = vpop.f32.mrf.mxu0
      %5420 = vmatprep.mubr.f32.mxu0 %v3680
      %5421 = vmatmul.mubr.f32.gmra.mxu0 %v3679
      %v5422 = vpop.f32.mrf.mxu0
      %v5423 = vadd.f32 %v5198, %v5422
      %v5424 = vpop.f32.mrf.mxu0
      %5425 = vmatprep.mubr.f32.mxu0 %v3692
      %5426 = vmatmul.mubr.f32.gmra.mxu0 %v3691
      %v5427 = vpop.f32.mrf.mxu0
      %v5428 = vadd.f32 %v5203, %v5427
      %v5429 = vpop.f32.mrf.mxu0
      %5430 = vmatprep.mubr.f32.mxu0 %v3704
      %5431 = vmatmul.mubr.f32.gmra.mxu0 %v3703
      %v5432 = vpop.f32.mrf.mxu0
      %v5433 = vadd.f32 %v5208, %v5432
      %v5434 = vpop.f32.mrf.mxu0
      %5435 = vmatprep.mubr.f32.mxu0 %v3716
      %5436 = vmatmul.mubr.f32.gmra.mxu0 %v3715
      %v5437 = vpop.f32.mrf.mxu0
      %v5438 = vadd.f32 %v5213, %v5437
      %v5439 = vpop.f32.mrf.mxu0
      %5440 = vmatprep.mubr.f32.mxu0 %v3728
      %5441 = vmatmul.mubr.f32.gmra.mxu0 %v3727
      %v5442 = vpop.f32.mrf.mxu0
      %v5443 = vadd.f32 %v5218, %v5442
      %v5444 = vpop.f32.mrf.mxu0
      %5445 = vmatprep.mubr.f32.mxu0 %v3740
      %5446 = vmatmul.mubr.f32.gmra.mxu0 %v3739
      %v5447 = vpop.f32.mrf.mxu0
      %v5448 = vadd.f32 %v5223, %v5447
      %v5449 = vpop.f32.mrf.mxu0
      %5450 = vmatprep.mubr.f32.mxu0 %v3752
      %5451 = vmatmul.mubr.f32.gmra.mxu0 %v3751
      %v5452 = vpop.f32.mrf.mxu0
      %v5453 = vadd.f32 %v5228, %v5452
      %v5454 = vpop.f32.mrf.mxu0
      %5455 = vmatprep.mubr.f32.mxu0 %v3764
      %5456 = vmatmul.mubr.f32.gmra.mxu0 %v3763
      %v5457 = vpop.f32.mrf.mxu0
      %v5458 = vadd.f32 %v5233, %v5457
      %v5459 = vpop.f32.mrf.mxu0
      %5460 = vmatprep.mubr.f32.mxu0 %v3776
      %5461 = vmatmul.mubr.f32.gmra.mxu0 %v3775
      %v5462 = vpop.f32.mrf.mxu0
      %v5463 = vadd.f32 %v5238, %v5462
      %v5464 = vpop.f32.mrf.mxu0
      %5465 = vmatprep.mubr.f32.mxu0 %v3788
      %5466 = vmatmul.mubr.f32.gmra.mxu0 %v3787
      %v5467 = vpop.f32.mrf.mxu0
      %v5468 = vadd.f32 %v5243, %v5467
      %v5469 = vpop.f32.mrf.mxu0
      %5470 = vmatprep.mubr.f32.mxu0 %v3800
      %5471 = vmatmul.mubr.f32.gmra.mxu0 %v3799
      %v5472 = vpop.f32.mrf.mxu0
      %v5473 = vadd.f32 %v5248, %v5472
      %v5474 = vpop.f32.mrf.mxu0
      %5475 = vmatprep.mubr.f32.mxu0 %v3812
      %5476 = vmatmul.mubr.f32.gmra.mxu0 %v3811
      %v5477 = vpop.f32.mrf.mxu0
      %v5478 = vadd.f32 %v5253, %v5477
      %v5479 = vpop.f32.mrf.mxu0
      %5480 = vmatprep.mubr.f32.mxu0 %v3824
      %5481 = vmatmul.mubr.f32.gmra.mxu0 %v3823
      %v5482 = vpop.f32.mrf.mxu0
      %v5483 = vadd.f32 %v5258, %v5482
      %v5484 = vpop.f32.mrf.mxu0
      %5485 = vmatprep.mubr.f32.mxu0 %v3836
      %5486 = vmatmul.mubr.f32.gmra.mxu0 %v3835
      %v5487 = vpop.f32.mrf.mxu0
      %v5488 = vadd.f32 %v5263, %v5487
      %v5489 = vpop.f32.mrf.mxu0
      %5490 = vmatprep.mubr.f32.mxu0 %v3848
      %5491 = vmatmul.mubr.f32.gmra.mxu0 %v3847
      %v5492 = vpop.f32.mrf.mxu0
      %v5493 = vadd.f32 %v5268, %v5492
      %v5494 = vpop.f32.mrf.mxu0
      %5495 = vmatprep.mubr.f32.mxu0 %v3860
      %5496 = vmatmul.mubr.f32.gmra.mxu0 %v3859
      %v5497 = vpop.f32.mrf.mxu0
      %v5498 = vadd.f32 %v5273, %v5497
      %v5499 = vpop.f32.mrf.mxu0
      %5500 = vmatprep.mubr.f32.mxu0 %v3872
      %5501 = vmatmul.mubr.f32.gmra.mxu0 %v3871
      %v5502 = vpop.f32.mrf.mxu0
      %v5503 = vadd.f32 %v5278, %v5502
      %v5504 = vpop.f32.mrf.mxu0
      %5505 = vmatprep.mubr.f32.mxu0 %v3884
      %5506 = vmatmul.mubr.f32.gmra.mxu0 %v3883
      %v5507 = vpop.f32.mrf.mxu0
      %v5508 = vadd.f32 %v5283, %v5507
      %v5509 = vpop.f32.mrf.mxu0
      %5510 = vmatprep.mubr.f32.mxu0 %v3896
      %5511 = vmatmul.mubr.f32.gmra.mxu0 %v3895
      %v5512 = vpop.f32.mrf.mxu0
      %v5513 = vadd.f32 %v5288, %v5512
      %v5514 = vpop.f32.mrf.mxu0
      %5515 = vmatprep.mubr.f32.mxu0 %v3908
      %5516 = vmatmul.mubr.f32.gmra.mxu0 %v3907
      %v5517 = vpop.f32.mrf.mxu0
      %v5518 = vadd.f32 %v5293, %v5517
      %v5519 = vpop.f32.mrf.mxu0
      %5520 = vmatprep.mubr.f32.mxu0 %v3920
      %5521 = vmatmul.mubr.f32.gmra.mxu0 %v3919
      %v5522 = vpop.f32.mrf.mxu0
      %v5523 = vadd.f32 %v5298, %v5522
      %v5524 = vpop.f32.mrf.mxu0
      %5525 = vmatprep.mubr.f32.mxu0 %v3932
      %5526 = vmatmul.mubr.f32.gmra.mxu0 %v3931
      %v5527 = vpop.f32.mrf.mxu0
      %v5528 = vadd.f32 %v5303, %v5527
      %v5529 = vpop.f32.mrf.mxu0
      %5530 = vmatprep.mubr.f32.mxu0 %v3944
      %5531 = vmatmul.mubr.f32.gmra.mxu0 %v3943
      %v5532 = vpop.f32.mrf.mxu0
      %v5533 = vadd.f32 %v5308, %v5532
      %v5534 = vpop.f32.mrf.mxu0
      %5535 = vmatprep.mubr.f32.mxu0 %v3956
      %5536 = vmatmul.mubr.f32.gmra.mxu0 %v3955
      %v5537 = vpop.f32.mrf.mxu0
      %v5538 = vadd.f32 %v5313, %v5537
      %v5539 = vpop.f32.mrf.mxu0
      %5540 = vmatprep.mubr.f32.mxu0 %v3968
      %5541 = vmatmul.mubr.f32.gmra.mxu0 %v3967
      %v5542 = vpop.f32.mrf.mxu0
      %v5543 = vadd.f32 %v5318, %v5542
      %v5544 = vpop.f32.mrf.mxu0
      %5545 = vmatprep.mubr.f32.mxu0 %v3980
      %5546 = vmatmul.mubr.f32.gmra.mxu0 %v3979
      %v5547 = vpop.f32.mrf.mxu0
      %v5548 = vadd.f32 %v5323, %v5547
      %v5549 = vpop.f32.mrf.mxu0
      %5550 = vmatprep.mubr.f32.mxu0 %v3992
      %5551 = vmatmul.mubr.f32.gmra.mxu0 %v3991
      %v5552 = vpop.f32.mrf.mxu0
      %v5553 = vadd.f32 %v5328, %v5552
      %v5554 = vpop.f32.mrf.mxu0
      %5555 = vmatprep.mubr.f32.mxu0 %v4004
      %5556 = vmatmul.mubr.f32.gmra.mxu0 %v4003
      %v5557 = vpop.f32.mrf.mxu0
      %v5558 = vadd.f32 %v5333, %v5557
      %v5559 = vpop.f32.mrf.mxu0
      %5560 = vmatprep.mubr.f32.mxu0 %v4016
      %5561 = vmatmul.mubr.f32.gmra.mxu0 %v4015
      %v5562 = vpop.f32.mrf.mxu0
      %v5563 = vadd.f32 %v5338, %v5562
      %v5564 = vpop.f32.mrf.mxu0
      %5565 = vdwg.mxu0
      %5566 = vst [vmem:[%s246] sm:$0xff] %v5408
      %5567 = vst [vmem:[%s246 + $0x8] sm:$0xff] %v5413
      %5568 = vst [vmem:[%s246 + $0x10] sm:$0xff] %v5418
      %5569 = vst [vmem:[%s246 + $0x18] sm:$0xff] %v5423
      %5570 = vst [vmem:[%s246 + $0x20] sm:$0xff] %v5428
      %5571 = vst [vmem:[%s246 + $0x28] sm:$0xff] %v5433
      %5572 = vst [vmem:[%s246 + $0x30] sm:$0xff] %v5438
      %5573 = vst [vmem:[%s246 + $0x38] sm:$0xff] %v5443
      %5574 = vst [vmem:[%s246 + $0x40] sm:$0xff] %v5448
      %5575 = vst [vmem:[%s246 + $0x48] sm:$0xff] %v5453
      %5576 = vst [vmem:[%s246 + $0x50] sm:$0xff] %v5458
      %5577 = vst [vmem:[%s246 + $0x58] sm:$0xff] %v5463
      %5578 = vst [vmem:[%s246 + $0x60] sm:$0xff] %v5468
      %5579 = vst [vmem:[%s246 + $0x68] sm:$0xff] %v5473
      %5580 = vst [vmem:[%s246 + $0x70] sm:$0xff] %v5478
      %5581 = vst [vmem:[%s246 + $0x78] sm:$0xff] %v5483
      %5582 = vst [vmem:[%s246 + $0x80] sm:$0xff] %v5488
      %5583 = vst [vmem:[%s246 + $0x88] sm:$0xff] %v5493
      %5584 = vst [vmem:[%s246 + $0x90] sm:$0xff] %v5498
      %5585 = vst [vmem:[%s246 + $0x98] sm:$0xff] %v5503
      %5586 = vst [vmem:[%s246 + $0xa0] sm:$0xff] %v5508
      %5587 = vst [vmem:[%s246 + $0xa8] sm:$0xff] %v5513
      %5588 = vst [vmem:[%s246 + $0xb0] sm:$0xff] %v5518
      %5589 = vst [vmem:[%s246 + $0xb8] sm:$0xff] %v5523
      %5590 = vst [vmem:[%s246 + $0xc0] sm:$0xff] %v5528
      %5591 = vst [vmem:[%s246 + $0xc8] sm:$0xff] %v5533
      %5592 = vst [vmem:[%s246 + $0xd0] sm:$0xff] %v5538
      %5593 = vst [vmem:[%s246 + $0xd8] sm:$0xff] %v5543
      %5594 = vst [vmem:[%s246 + $0xe0] sm:$0xff] %v5548
      %5595 = vst [vmem:[%s246 + $0xe8] sm:$0xff] %v5553
      %5596 = vst [vmem:[%s246 + $0xf0] sm:$0xff] %v5558
      %5597 = vst [vmem:[%s246 + $0xf8] sm:$0xff] %v5563
      %s5598 = smul.u32 32, %s21
      %p5599 = scmp.lt.s32.totalorder %s20, 1
      %s5600 = scalar_select %p5599, %s20, 1
      %p5601 = scmp.lt.s32.totalorder %s5598, 31
      %s5602 = scalar_select %p5601, %s5598, 31
      %s5603 = smul.addr %s5600, 32
      %s5604 = sadd.s32 %s5602, %s5603
      %s5605 = smul.addr %s5604, 8
      %s5606 = scalar_lea.vmem %s5, %s5605
      // Predicated region
      $region41: #{_center_head_impl.1} parent=39 // pred_check
        %p5607 = pneg %p158
      $region42: #{_center_head_impl.1} parent=39 // pred_check_branch
        %5609 = sbr.rel (%p5607) target = $region44
      $region43: #{_center_head_impl.1} parent=39 // pred_region
        %s5610 = smul.u32 32, %s21
      $region44: #{_center_head_impl.1} parent=39 // pred_fallthru
        _
    $region40: #{_center_head_impl.1} parent=5 // pred_fallthru
      _
    %p5611 = scmp.le.s32.totalorder 2, %s11
    // Predicated region
    $region45: #{_center_head_impl.1} parent=5 // pred_check
      %p5612 = pneg %p5611
    $region46: #{_center_head_impl.1} parent=5 // pred_check_branch
      %5614 = sbr.rel (%p5612) target = $region48
    $region47: #{_center_head_impl.1} parent=5 // pred_region
      %s5615 = ssub.s32 %s11, 2
      // Predicated region
      $region49: #{_center_head_impl.1} parent=47 // pred_check
        %p5616 = pneg %p164
      $region50: #{_center_head_impl.1} parent=47 // pred_check_branch
        %5618 = sbr.rel (%p5616) target = $region52
      $region51: #{_center_head_impl.1} parent=47 // pred_region
        %s5619 = smul.u32 32, %s23
        %p5620 = scmp.lt.s32.totalorder %s22, 1
        %s5621 = scalar_select %p5620, %s22, 1
        %p5622 = scmp.lt.s32.totalorder %s5619, 31
        %s5623 = scalar_select %p5622, %s5619, 31
        %s5624 = smul.addr %s5621, 32
        %s5625 = sadd.s32 %s5623, %s5624
        %s5626 = smul.addr %s5625, 8
        %s5627 = scalar_lea.vmem %s5, %s5626
      $region52: #{_center_head_impl.1} parent=47 // pred_fallthru
        _
    $region48: #{_center_head_impl.1} parent=5 // pred_fallthru
      _
  $region6: #{_center_head_impl.1} parent=0 // loop_footer
    %s15 = sadd.s32 1, %s11
  $region7: #{_center_head_impl.1} parent=0 // loop_footer_branch
    %10 = sbr.rel target = $region3
  $region8: #{_center_head_impl.1} parent=0 // loop_exit
    _

// kernel: custom-call
$region0: #{custom-call}
  %s0 = inlined_call_operand.vmem [shape: f32[1536], index: 0, kind: output, shape index: {}]

// kernel: _center_head_impl.1
$region0: #{_center_head_impl.1}
  #allocation0 [shape = 'u32[]', space=smem, size = 0x4, offset = 0x4, fixed_abs, tag = 'smem constant byte address 0x4 - core index']
  #allocation1 [shape = 'u32[144,128]{1,0:T(1,128)}', space=vmem, size = 0x12000, scoped, tag = 'internal scratch']
  %s0 = inlined_call_operand.vmem [shape: f32[2,256,36], index: 0, kind: input, shape index: {}]
  %s1 = inlined_call_operand.vmem [shape: f32[36,1536], index: 1, kind: input, shape index: {}]
  %s2 = inlined_call_operand.vmem [shape: f32[1,1536], index: 2, kind: input, shape index: {}]
  %s3 = inlined_call_operand.vmem [shape: f32[1536,128], index: 3, kind: input, shape index: {}]
  %s4 = inlined_call_operand.vmem [shape: f32[1,128], index: 4, kind: input, shape index: {}]
  %s5 = inlined_call_operand.vmem [shape: f32[2,256,128], index: 5, kind: output, shape index: {}]
  %s6 = sld [smem:[#allocation0]]
  $region53: #{_center_head_impl.1} parent=0
    _
  %s8 = ssub.s32 1, %s6
  %s9 = scalar_select 0, %s8, %s6
  loop: start=0, step=1, limit=4
  $region2: #{_center_head_impl.1} parent=0 // loop_pre_header
    _
  $region3: #{_center_head_impl.1} parent=0 // loop_header
    %s11 = sphi 0, %s15
    %p12 = scmp.ge.s32.totalorder %s11, 4
    %s18 = sphi 0, %s30
    %s19 = sphi 0, %s26
    %s20 = sphi 0, %s18
    %s21 = sphi 0, %s19
    %s22 = sphi 0, %s20
    %s23 = sphi 0, %s21
    %s35 = sphi 0, %s37
    %s38 = sphi 0, %s35
    %s39 = sphi 0, %s38
    %s55 = sphi 0, %s39
    %s59 = sphi 0, %s59
    %s61 = sphi 0, %s59
    %s62 = sphi 0, %s61
    %s76 = sphi 0, %s62
    %s80 = sphi 0, %s80
    %s82 = sphi 0, %s80
    %s83 = sphi 0, %s82
    %s97 = sphi 0, %s83
    %s101 = sphi 0, %s101
    %s103 = sphi 0, %s101
    %s104 = sphi 0, %s103
    %s118 = sphi 0, %s104
    %s122 = sphi 0, %s122
    %s124 = sphi 0, %s122
    %s125 = sphi 0, %s124
    %s139 = sphi 0, %s125
    %s147 = sphi 0, %s149
    %s150 = sphi 0, %s147
    %s151 = sphi 0, %s150
    %s167 = sphi 0, %s151
  $region4: #{_center_head_impl.1} parent=0 // loop_header_branch
    %14 = sbr.rel (%p12) target = $region8
  $region5: #{_center_head_impl.1} parent=0 // loop_body
    %s16 = ssub.s32 %s11, 1
    %s17 = ssub.s32 %s11, 2
    %s24 = sadd.s32 1, %s19
    %p25 = scmp.ge.s32.totalorder %s24, 1
    %s26 = scalar_select %p25, 0, %s24
    %s27 = sadd.s32 1, %s18
    %s28 = scalar_select %p25, %s27, %s18
    %p29 = scmp.ge.s32.totalorder %s28, 2
    %s30 = scalar_select %p29, 0, %s28
    %s31 = ssub.s32 %s18, %s30
    %s32 = ssub.s32 %s19, %s26
    %s33 = sor.u32 %s31, %s32
    %p34 = scmp.eq.s32.totalorder %s33, 0
    %s36 = sadd.s32 %s35, 1
    %s37 = scalar_select %p34, %s35, %s36
    %p40 = pneg %p34
    %p41 = scmp.eq.s32.totalorder %s11, 1
    %p42 = por %p40, %p41
    %p43 = scmp.ne.s32.totalorder %s35, %s38
    %p44 = scmp.eq.s32.totalorder %s11, 0
    %p45 = por %p43, %p44
    %p46 = scmp.ne.s32.totalorder %s35, %s38
    %p47 = scmp.eq.s32.totalorder %s16, 1
    %p48 = por %p46, %p47
    %p49 = scmp.ne.s32.totalorder %s38, %s39
    %p50 = scmp.eq.s32.totalorder %s16, 0
    %p51 = por %p49, %p50
    %p52 = scmp.ne.s32.totalorder %s38, %s39
    %p53 = scmp.eq.s32.totalorder %s17, 1
    %p54 = por %p52, %p53
    %p56 = scmp.ne.s32.totalorder %s39, %s55
    %p57 = scmp.eq.s32.totalorder %s17, 0
    %p58 = por %p56, %p57
    %s60 = sadd.s32 %s59, 1
    %p63 = scmp.eq.s32.totalorder %s11, 1
    %p64 = scmp.ne.s32.totalorder %s59, %s61
    %p65 = scmp.eq.s32.totalorder %s11, 0
    %p66 = por %p64, %p65
    %p67 = scmp.ne.s32.totalorder %s59, %s61
    %p68 = scmp.eq.s32.totalorder %s16, 1
    %p69 = por %p67, %p68
    %p70 = scmp.ne.s32.totalorder %s61, %s62
    %p71 = scmp.eq.s32.totalorder %s16, 0
    %p72 = por %p70, %p71
    %p73 = scmp.ne.s32.totalorder %s61, %s62
    %p74 = scmp.eq.s32.totalorder %s17, 1
    %p75 = por %p73, %p74
    %p77 = scmp.ne.s32.totalorder %s62, %s76
    %p78 = scmp.eq.s32.totalorder %s17, 0
    %p79 = por %p77, %p78
    %s81 = sadd.s32 %s80, 1
    %p84 = scmp.eq.s32.totalorder %s11, 1
    %p85 = scmp.ne.s32.totalorder %s80, %s82
    %p86 = scmp.eq.s32.totalorder %s11, 0
    %p87 = por %p85, %p86
    %p88 = scmp.ne.s32.totalorder %s80, %s82
    %p89 = scmp.eq.s32.totalorder %s16, 1
    %p90 = por %p88, %p89
    %p91 = scmp.ne.s32.totalorder %s82, %s83
    %p92 = scmp.eq.s32.totalorder %s16, 0
    %p93 = por %p91, %p92
    %p94 = scmp.ne.s32.totalorder %s82, %s83
    %p95 = scmp.eq.s32.totalorder %s17, 1
    %p96 = por %p94, %p95
    %p98 = scmp.ne.s32.totalorder %s83, %s97
    %p99 = scmp.eq.s32.totalorder %s17, 0
    %p100 = por %p98, %p99
    %s102 = sadd.s32 %s101, 1
    %p105 = scmp.eq.s32.totalorder %s11, 1
    %p106 = scmp.ne.s32.totalorder %s101, %s103
    %p107 = scmp.eq.s32.totalorder %s11, 0
    %p108 = por %p106, %p107
    %p109 = scmp.ne.s32.totalorder %s101, %s103
    %p110 = scmp.eq.s32.totalorder %s16, 1
    %p111 = por %p109, %p110
    %p112 = scmp.ne.s32.totalorder %s103, %s104
    %p113 = scmp.eq.s32.totalorder %s16, 0
    %p114 = por %p112, %p113
    %p115 = scmp.ne.s32.totalorder %s103, %s104
    %p116 = scmp.eq.s32.totalorder %s17, 1
    %p117 = por %p115, %p116
    %p119 = scmp.ne.s32.totalorder %s104, %s118
    %p120 = scmp.eq.s32.totalorder %s17, 0
    %p121 = por %p119, %p120
    %s123 = sadd.s32 %s122, 1
    %p126 = scmp.eq.s32.totalorder %s11, 1
    %p127 = scmp.ne.s32.totalorder %s122, %s124
    %p128 = scmp.eq.s32.totalorder %s11, 0
    %p129 = por %p127, %p128
    %p130 = scmp.ne.s32.totalorder %s122, %s124
    %p131 = scmp.eq.s32.totalorder %s16, 1
    %p132 = por %p130, %p131
    %p133 = scmp.ne.s32.totalorder %s124, %s125
    %p134 = scmp.eq.s32.totalorder %s16, 0
    %p135 = por %p133, %p134
    %p136 = scmp.ne.s32.totalorder %s124, %s125
    %p137 = scmp.eq.s32.totalorder %s17, 1
    %p138 = por %p136, %p137
    %p140 = scmp.ne.s32.totalorder %s125, %s139
    %p141 = scmp.eq.s32.totalorder %s17, 0
    %p142 = por %p140, %p141
    %s143 = ssub.s32 %s18, %s30
    %s144 = ssub.s32 %s19, %s26
    %s145 = sor.u32 %s143, %s144
    %p146 = scmp.eq.s32.totalorder %s145, 0
    %s148 = sadd.s32 %s147, 1
    %s149 = scalar_select %p146, %s147, %s148
    %p152 = pneg %p146
    %p153 = scmp.eq.s32.totalorder %s11, 1
    %p154 = por %p152, %p153
    %p155 = scmp.ne.s32.totalorder %s147, %s150
    %p156 = scmp.eq.s32.totalorder %s11, 0
    %p157 = por %p155, %p156
    %p158 = scmp.ne.s32.totalorder %s147, %s150
    %p159 = scmp.eq.s32.totalorder %s16, 1
    %p160 = por %p158, %p159
    %p161 = scmp.ne.s32.totalorder %s150, %s151
    %p162 = scmp.eq.s32.totalorder %s16, 0
    %p163 = por %p161, %p162
    %p164 = scmp.ne.s32.totalorder %s150, %s151
    %p165 = scmp.eq.s32.totalorder %s17, 1
    %p166 = por %p164, %p165
    %p168 = scmp.ne.s32.totalorder %s151, %s167
    %p169 = scmp.eq.s32.totalorder %s17, 0
    %p170 = por %p168, %p169
    %p171 = scmp.le.s32.totalorder 1, %s11
    %p172 = scmp.lt.s32.totalorder %s11, 3
    %p173 = pnand %p171, %p172
    %p174 = pneg %p173
    // Predicated region
    $region9: #{_center_head_impl.1} parent=5 // pred_check
      _
    $region10: #{_center_head_impl.1} parent=5 // pred_check_branch
      %176 = sbr.rel (%p173) target = $region12
    $region11: #{_center_head_impl.1} parent=5 // pred_region
      %s177 = ssub.s32 %s11, 1
      // Predicated region
      $region13: #{_center_head_impl.1} parent=11 // pred_check
        %p178 = pneg %p72
      $region14: #{_center_head_impl.1} parent=11 // pred_check_branch
        %180 = sbr.rel (%p178) target = $region16
      $region15: #{_center_head_impl.1} parent=11 // pred_region
        _
      $region16: #{_center_head_impl.1} parent=11 // pred_fallthru
        _
      // Predicated region
      $region17: #{_center_head_impl.1} parent=11 // pred_check
        %p181 = pneg %p93
      $region18: #{_center_head_impl.1} parent=11 // pred_check_branch
        %183 = sbr.rel (%p181) target = $region20
      $region19: #{_center_head_impl.1} parent=11 // pred_region
        _
      $region20: #{_center_head_impl.1} parent=11 // pred_fallthru
        _
      // Predicated region
      $region21: #{_center_head_impl.1} parent=11 // pred_check
        %p184 = pneg %p114
      $region22: #{_center_head_impl.1} parent=11 // pred_check_branch
        %186 = sbr.rel (%p184) target = $region24
      $region23: #{_center_head_impl.1} parent=11 // pred_region
        _
      $region24: #{_center_head_impl.1} parent=11 // pred_fallthru
        _
      // Predicated region
      $region25: #{_center_head_impl.1} parent=11 // pred_check
        %p187 = pneg %p135
      $region26: #{_center_head_impl.1} parent=11 // pred_check_branch
        %189 = sbr.rel (%p187) target = $region28
      $region27: #{_center_head_impl.1} parent=11 // pred_region
        _
      $region28: #{_center_head_impl.1} parent=11 // pred_fallthru
        _
    $region12: #{_center_head_impl.1} parent=5 // pred_fallthru
      _
    %p190 = scmp.lt.s32.totalorder %s11, 2
    // Predicated region
    $region29: #{_center_head_impl.1} parent=5 // pred_check
      %p191 = pneg %p190
    $region30: #{_center_head_impl.1} parent=5 // pred_check_branch
      %193 = sbr.rel (%p191) target = $region32
    $region31: #{_center_head_impl.1} parent=5 // pred_region
      // Predicated region
      $region33: #{_center_head_impl.1} parent=31 // pred_check
        %p194 = pneg %p45
      $region34: #{_center_head_impl.1} parent=31 // pred_check_branch
        %196 = sbr.rel (%p194) target = $region36
      $region35: #{_center_head_impl.1} parent=31 // pred_region
        %s197 = smul.u32 32, %s19
        %p198 = scmp.lt.s32.totalorder %s18, 1
        %s199 = scalar_select %p198, %s18, 1
        %p200 = scmp.lt.s32.totalorder %s197, 31
        %s201 = scalar_select %p200, %s197, 31
        %s202 = smul.addr %s199, 32
        %s203 = sadd.s32 %s201, %s202
        %s204 = smul.addr %s203, 8
        %s205 = scalar_lea.vmem %s0, %s204
        %s206 = smul.u32 32, %s19
      $region36: #{_center_head_impl.1} parent=31 // pred_fallthru
        _
    $region32: #{_center_head_impl.1} parent=5 // pred_fallthru
      _
    %p207 = scmp.le.s32.totalorder 1, %s11
    %p208 = scmp.lt.s32.totalorder %s11, 3
    %p209 = pnand %p207, %p208
    %p210 = pneg %p209
    // Predicated region
    $region37: #{_center_head_impl.1} parent=5 // pred_check
      _
    $region38: #{_center_head_impl.1} parent=5 // pred_check_branch
      %212 = sbr.rel (%p209) target = $region40
    $region39: #{_center_head_impl.1} parent=5 // pred_region
      %s213 = ssub.s32 %s11, 1
      %s214 = smul.u32 32, %s21
      %p215 = scmp.lt.s32.totalorder %s20, 1
      %s216 = scalar_select %p215, %s20, 1
      %p217 = scmp.lt.s32.totalorder %s214, 31
      %s218 = scalar_select %p217, %s214, 31
      %s219 = smul.addr %s216, 32
      %s220 = sadd.s32 %s218, %s219
      %s221 = smul.addr %s220, 8
      %s222 = scalar_lea.vmem %s0, %s221
      %p223 = pneg %p51
      %p224 = pneg %p48
      %p225 = pneg %p72
      %p226 = pneg %p69
      %p227 = pneg %p93
      %p228 = pneg %p90
      %p229 = pneg %p114
      %p230 = pneg %p111
      %p231 = pneg %p135
      %p232 = pneg %p132
      %p233 = pneg %p163
      %p234 = pneg %p160
      %s235 = smul.u32 32, %s21
      %p236 = scmp.lt.s32.totalorder %s20, 1
      %s237 = scalar_select %p236, %s20, 1
      %p238 = scmp.lt.s32.totalorder %s235, 31
      %s239 = scalar_select %p238, %s235, 31
      %s240 = smul.addr %s237, 32
      %s241 = sadd.s32 %s239, %s240
      %s242 = smul.addr %s241, 8
      %s243 = scalar_lea.vmem %s5, %s242
      %s244 = smul.u32 32, %s21
      %p245 = scmp.lt.s32.totalorder %s20, 1
      %s246 = scalar_select %p245, %s20, 1
      %p247 = scmp.lt.s32.totalorder %s244, 31
      %s248 = scalar_select %p247, %s244, 31
      %s249 = smul.addr %s246, 32
      %s250 = sadd.s32 %s248, %s249
      %s251 = smul.addr %s250, 8
      %s252 = scalar_lea.vmem %s0, %s251
      %s253 = smul.u32 32, %s21
      %s254 = smul.u32 32, %s21
      %p255 = scmp.lt.s32.totalorder %s20, 1
      %s256 = scalar_select %p255, %s20, 1
      %p257 = scmp.lt.s32.totalorder %s254, 31
      %s258 = scalar_select %p257, %s254, 31
      %s259 = smul.addr %s256, 32
      %s260 = sadd.s32 %s258, %s259
      %s261 = smul.addr %s260, 8
      %s262 = scalar_lea.vmem %s5, %s261
      %s263 = smul.u32 32, %s21
      %v264 = vld [vmem:[%s252] sm:$0xff]
      %v265 = vld [vmem:[%s252 + $0x8] sm:$0xff]
      %v266 = vld [vmem:[%s252 + $0x10] sm:$0xff]
      %v267 = vld [vmem:[%s252 + $0x18] sm:$0xff]
      %v268 = vld [vmem:[%s252 + $0x20] sm:$0xff]
      %v269 = vld [vmem:[%s252 + $0x28] sm:$0xff]
      %v270 = vld [vmem:[%s252 + $0x30] sm:$0xff]
      %v271 = vld [vmem:[%s252 + $0x38] sm:$0xff]
      %v272 = vld [vmem:[%s252 + $0x40] sm:$0xff]
      %v273 = vld [vmem:[%s252 + $0x48] sm:$0xff]
      %v274 = vld [vmem:[%s252 + $0x50] sm:$0xff]
      %v275 = vld [vmem:[%s252 + $0x58] sm:$0xff]
      %v276 = vld [vmem:[%s252 + $0x60] sm:$0xff]
      %v277 = vld [vmem:[%s252 + $0x68] sm:$0xff]
      %v278 = vld [vmem:[%s252 + $0x70] sm:$0xff]
      %v279 = vld [vmem:[%s252 + $0x78] sm:$0xff]
      %v280 = vld [vmem:[%s252 + $0x80] sm:$0xff]
      %v281 = vld [vmem:[%s252 + $0x88] sm:$0xff]
      %v282 = vld [vmem:[%s252 + $0x90] sm:$0xff]
      %v283 = vld [vmem:[%s252 + $0x98] sm:$0xff]
      %v284 = vld [vmem:[%s252 + $0xa0] sm:$0xff]
      %v285 = vld [vmem:[%s252 + $0xa8] sm:$0xff]
      %v286 = vld [vmem:[%s252 + $0xb0] sm:$0xff]
      %v287 = vld [vmem:[%s252 + $0xb8] sm:$0xff]
      %v288 = vld [vmem:[%s252 + $0xc0] sm:$0xff]
      %v289 = vld [vmem:[%s252 + $0xc8] sm:$0xff]
      %v290 = vld [vmem:[%s252 + $0xd0] sm:$0xff]
      %v291 = vld [vmem:[%s252 + $0xd8] sm:$0xff]
      %v292 = vld [vmem:[%s252 + $0xe0] sm:$0xff]
      %v293 = vld [vmem:[%s252 + $0xe8] sm:$0xff]
      %v294 = vld [vmem:[%s252 + $0xf0] sm:$0xff]
      %v295 = vld [vmem:[%s252 + $0xf8] sm:$0xff]
      %v296 = vld [vmem:[%s1] sm:$0xff]
      %v297 = vld [vmem:[%s1 + $0x8] sm:$0xff]
      %v298 = vld [vmem:[%s1 + $0x10] sm:$0xff]
      %v299 = vld [vmem:[%s1 + $0x18] sm:$0xff]
      %v300 = vld [vmem:[%s1 + $0x20] sm:$0xff]
      %v301 = vld [vmem:[%s1 + $0x28] sm:$0xff]
      %v302 = vld [vmem:[%s1 + $0x30] sm:$0xff]
      %v303 = vld [vmem:[%s1 + $0x38] sm:$0xff]
      %v304 = vld [vmem:[%s1 + $0x40] sm:$0xff]
      %v305 = vld [vmem:[%s1 + $0x48] sm:$0xff]
      %v306 = vld [vmem:[%s1 + $0x50] sm:$0xff]
      %v307 = vld [vmem:[%s1 + $0x58] sm:$0xff]
      %v308 = vld [vmem:[%s1 + $0x60] sm:$0xff]
      %v309 = vld [vmem:[%s1 + $0x68] sm:$0xff]
      %v310 = vld [vmem:[%s1 + $0x70] sm:$0xff]
      %v311 = vld [vmem:[%s1 + $0x78] sm:$0xff]
      %v312 = vld [vmem:[%s1 + $0x80] sm:$0xff]
      %v313 = vld [vmem:[%s1 + $0x88] sm:$0xff]
      %v314 = vld [vmem:[%s1 + $0x90] sm:$0xff]
      %v315 = vld [vmem:[%s1 + $0x98] sm:$0xff]
      %v316 = vld [vmem:[%s1 + $0xa0] sm:$0xff]
      %v317 = vld [vmem:[%s1 + $0xa8] sm:$0xff]
      %v318 = vld [vmem:[%s1 + $0xb0] sm:$0xff]
      %v319 = vld [vmem:[%s1 + $0xb8] sm:$0xff]
      %v320 = vld [vmem:[%s1 + $0xc0] sm:$0xff]
      %v321 = vld [vmem:[%s1 + $0xc8] sm:$0xff]
      %v322 = vld [vmem:[%s1 + $0xd0] sm:$0xff]
      %v323 = vld [vmem:[%s1 + $0xd8] sm:$0xff]
      %v324 = vld [vmem:[%s1 + $0xe0] sm:$0xff]
      %v325 = vld [vmem:[%s1 + $0xe8] sm:$0xff]
      %v326 = vld [vmem:[%s1 + $0xf0] sm:$0xff]
      %v327 = vld [vmem:[%s1 + $0xf8] sm:$0xff]
      %v328 = vld [vmem:[%s1 + $0x100] sm:$0xff]
      %v329 = vld [vmem:[%s1 + $0x108] sm:$0xff]
      %v330 = vld [vmem:[%s1 + $0x110] sm:$0xff]
      %v331 = vld [vmem:[%s1 + $0x118] sm:$0xff]
      %v332 = vld [vmem:[%s1 + $0x120] sm:$0xff]
      %v333 = vld [vmem:[%s1 + $0x128] sm:$0xff]
      %v334 = vld [vmem:[%s1 + $0x130] sm:$0xff]
      %v335 = vld [vmem:[%s1 + $0x138] sm:$0xff]
      %v336 = vld [vmem:[%s1 + $0x140] sm:$0xff]
      %v337 = vld [vmem:[%s1 + $0x148] sm:$0xff]
      %v338 = vld [vmem:[%s1 + $0x150] sm:$0xff]
      %v339 = vld [vmem:[%s1 + $0x158] sm:$0xff]
      %v340 = vld [vmem:[%s1 + $0x160] sm:$0xff]
      %v341 = vld [vmem:[%s1 + $0x168] sm:$0xff]
      %v342 = vld [vmem:[%s1 + $0x170] sm:$0xff]
      %v343 = vld [vmem:[%s1 + $0x178] sm:$0xff]
      %v344 = vld [vmem:[%s1 + $0x180] sm:$0xf]
      %v345 = vld [vmem:[%s1 + $0x188] sm:$0xf]
      %v346 = vld [vmem:[%s1 + $0x190] sm:$0xf]
      %v347 = vld [vmem:[%s1 + $0x198] sm:$0xf]
      %v348 = vld [vmem:[%s1 + $0x1a0] sm:$0xf]
      %v349 = vld [vmem:[%s1 + $0x1a8] sm:$0xf]
      %v350 = vld [vmem:[%s1 + $0x1b0] sm:$0xf]
      %v351 = vld [vmem:[%s1 + $0x1b8] sm:$0xf]
      %v352 = vld [vmem:[%s1 + $0x1c0] sm:$0xf]
      %v353 = vld [vmem:[%s1 + $0x1c8] sm:$0xf]
      %v354 = vld [vmem:[%s1 + $0x1d0] sm:$0xf]
      %v355 = vld [vmem:[%s1 + $0x1d8] sm:$0xf]
      %v356 = vld [vmem:[%s2] sm:$0xff]
      %v357 = vld [vmem:[%s2 + $0x8] sm:$0xf]
      %v360 = vlaneseq
      %v361 = vshrl.u32 %v360, 7
      %v362 = vsub.s32 0, %v361
      %v363 = vrot.slane %v356, %v362
      %v364 = vlaneseq
      %v365 = vshrl.u32 %v364, 7
      %v366 = vsub.s32 1, %v365
      %v367 = vrot.slane %v356, %v366
      %v368 = vlaneseq
      %v369 = vshrl.u32 %v368, 7
      %v370 = vsub.s32 2, %v369
      %v371 = vrot.slane %v356, %v370
      %v372 = vlaneseq
      %v373 = vshrl.u32 %v372, 7
      %v374 = vsub.s32 3, %v373
      %v375 = vrot.slane %v356, %v374
      %v376 = vlaneseq
      %v377 = vshrl.u32 %v376, 7
      %v378 = vsub.s32 4, %v377
      %v379 = vrot.slane %v356, %v378
      %v380 = vlaneseq
      %v381 = vshrl.u32 %v380, 7
      %v382 = vsub.s32 5, %v381
      %v383 = vrot.slane %v356, %v382
      %v384 = vlaneseq
      %v385 = vshrl.u32 %v384, 7
      %v386 = vsub.s32 6, %v385
      %v387 = vrot.slane %v356, %v386
      %v388 = vlaneseq
      %v389 = vshrl.u32 %v388, 7
      %v390 = vsub.s32 7, %v389
      %v391 = vrot.slane %v356, %v390
      %v392 = vlaneseq
      %v393 = vshrl.u32 %v392, 7
      %v394 = vsub.s32 0, %v393
      %v395 = vrot.slane %v357, %v394
      %v396 = vlaneseq
      %v397 = vshrl.u32 %v396, 7
      %v398 = vsub.s32 1, %v397
      %v399 = vrot.slane %v357, %v398
      %v400 = vlaneseq
      %v401 = vshrl.u32 %v400, 7
      %v402 = vsub.s32 2, %v401
      %v403 = vrot.slane %v357, %v402
      %v404 = vlaneseq
      %v405 = vshrl.u32 %v404, 7
      %v406 = vsub.s32 3, %v405
      %v407 = vrot.slane %v357, %v406
      %vm420 = vcmask 293888
      %v422 = vsel %vm420, %v264, 0
      %v425 = vsel %vm420, %v265, 0
      %v428 = vsel %vm420, %v266, 0
      %v431 = vsel %vm420, %v267, 0
      %v434 = vsel %vm420, %v268, 0
      %v437 = vsel %vm420, %v269, 0
      %v440 = vsel %vm420, %v270, 0
      %v443 = vsel %vm420, %v271, 0
      %v446 = vsel %vm420, %v272, 0
      %v449 = vsel %vm420, %v273, 0
      %v452 = vsel %vm420, %v274, 0
      %v455 = vsel %vm420, %v275, 0
      %v458 = vsel %vm420, %v276, 0
      %v461 = vsel %vm420, %v277, 0
      %v464 = vsel %vm420, %v278, 0
      %v467 = vsel %vm420, %v279, 0
      %v470 = vsel %vm420, %v280, 0
      %v473 = vsel %vm420, %v281, 0
      %v476 = vsel %vm420, %v282, 0
      %v479 = vsel %vm420, %v283, 0
      %v482 = vsel %vm420, %v284, 0
      %v485 = vsel %vm420, %v285, 0
      %v488 = vsel %vm420, %v286, 0
      %v491 = vsel %vm420, %v287, 0
      %v494 = vsel %vm420, %v288, 0
      %v497 = vsel %vm420, %v289, 0
      %v500 = vsel %vm420, %v290, 0
      %v503 = vsel %vm420, %v291, 0
      %v506 = vsel %vm420, %v292, 0
      %v509 = vsel %vm420, %v293, 0
      %v512 = vsel %vm420, %v294, 0
      %v515 = vsel %vm420, %v295, 0
      %vm517 = vcmask 1043456
      %v519 = vsel %vm517, %v344, 0
      %v522 = vsel %vm517, %v345, 0
      %v525 = vsel %vm517, %v346, 0
      %v528 = vsel %vm517, %v347, 0
      %v531 = vsel %vm517, %v348, 0
      %v534 = vsel %vm517, %v349, 0
      %v537 = vsel %vm517, %v350, 0
      %v540 = vsel %vm517, %v351, 0
      %v543 = vsel %vm517, %v352, 0
      %v546 = vsel %vm517, %v353, 0
      %v549 = vsel %vm517, %v354, 0
      %v552 = vsel %vm517, %v355, 0
      %554 = vmatprep.subr.mxu0 0.0
      %555 = vmatpush1.msra.mxu0 0.0
      %556 = vmatprep.subr.mxu0 0.0
      %557 = vmatpush1.msra.mxu0 0.0
      %558 = vmatprep.subr.mxu0 0.0
      %559 = vmatpush1.msra.mxu0 0.0
      %560 = vmatprep.subr.mxu0 0.0
      %561 = vmatpush1.msra.mxu0 0.0
      %562 = vmatprep.subr.mxu0 0.0
      %563 = vmatpush1.msra.mxu0 0.0
      %564 = vmatprep.subr.mxu0 0.0
      %565 = vmatpush1.msra.mxu0 0.0
      %566 = vmatprep.subr.mxu0 0.0
      %567 = vmatpush1.msra.mxu0 0.0
      %568 = vmatprep.subr.mxu0 0.0
      %569 = vmatpush1.msra.mxu0 0.0
      %570 = vmatprep.subr.mxu0 0.0
      %571 = vmatpush1.msra.mxu0 0.0
      %572 = vmatprep.subr.mxu0 0.0
      %573 = vmatpush1.msra.mxu0 0.0
      %574 = vmatprep.subr.mxu0 0.0
      %575 = vmatpush1.msra.mxu0 0.0
      %576 = vmatprep.subr.mxu0 %v522
      %577 = vmatpush1.msra.mxu0 %v519
      %578 = vmatprep.subr.mxu0 %v333
      %579 = vmatpush1.msra.mxu0 %v332
      %580 = vmatprep.subr.mxu0 %v321
      %581 = vmatpush1.msra.mxu0 %v320
      %582 = vmatprep.subr.mxu0 %v309
      %583 = vmatpush1.msra.mxu0 %v308
      %584 = vmatprep.subr.mxu0 %v297
      %585 = vmatpush1.msra.mxu0 %v296
      %586 = vmatprep.subr.mxu0 0.0
      %587 = vmatpush2.msra.mxu0 0.0
      %588 = vmatprep.subr.mxu0 0.0
      %589 = vmatpush2.msra.mxu0 0.0
      %590 = vmatprep.subr.mxu0 0.0
      %591 = vmatpush2.msra.mxu0 0.0
      %592 = vmatprep.subr.mxu0 0.0
      %593 = vmatpush2.msra.mxu0 0.0
      %594 = vmatprep.subr.mxu0 0.0
      %595 = vmatpush2.msra.mxu0 0.0
      %596 = vmatprep.subr.mxu0 0.0
      %597 = vmatpush2.msra.mxu0 0.0
      %598 = vmatprep.subr.mxu0 0.0
      %599 = vmatpush2.msra.mxu0 0.0
      %600 = vmatprep.subr.mxu0 0.0
      %601 = vmatpush2.msra.mxu0 0.0
      %602 = vmatprep.subr.mxu0 0.0
      %603 = vmatpush2.msra.mxu0 0.0
      %604 = vmatprep.subr.mxu0 0.0
      %605 = vmatpush2.msra.mxu0 0.0
      %606 = vmatprep.subr.mxu0 0.0
      %607 = vmatpush2.msra.mxu0 0.0
      %608 = vmatprep.subr.mxu0 0.0
      %609 = vmatpush2.msra.mxu0 0.0
      %610 = vmatprep.subr.mxu0 0.0
      %611 = vmatpush2.msra.mxu0 0.0
      %612 = vmatprep.subr.mxu0 0.0
      %613 = vmatpush2.msra.mxu0 0.0
      %614 = vmatprep.subr.mxu0 0.0
      %615 = vmatpush2.msra.mxu0 0.0
      %616 = vmatprep.subr.mxu0 0.0
      %617 = vmatpush2.msra.mxu0 0.0
      %618 = vmatprep.mubr.f32.mxu0 0.0
      %619 = vmatmul.mubr.f32.gmra.mxu0 %v422
      %v620 = vpop.f32.mrf.mxu0
      %v621 = vadd.f32 %v363, %v620
      %v622 = vpop.f32.mrf.mxu0
      %v623 = vadd.f32 %v367, %v622
      %624 = vmatprep.mubr.f32.mxu0 0.0
      %625 = vmatmul.mubr.f32.gmra.mxu0 %v425
      %v626 = vpop.f32.mrf.mxu0
      %v627 = vadd.f32 %v363, %v626
      %v628 = vpop.f32.mrf.mxu0
      %v629 = vadd.f32 %v367, %v628
      %630 = vmatprep.mubr.f32.mxu0 0.0
      %631 = vmatmul.mubr.f32.gmra.mxu0 %v428
      %v632 = vpop.f32.mrf.mxu0
      %v633 = vadd.f32 %v363, %v632
      %v634 = vpop.f32.mrf.mxu0
      %v635 = vadd.f32 %v367, %v634
      %636 = vmatprep.mubr.f32.mxu0 0.0
      %637 = vmatmul.mubr.f32.gmra.mxu0 %v431
      %v638 = vpop.f32.mrf.mxu0
      %v639 = vadd.f32 %v363, %v638
      %v640 = vpop.f32.mrf.mxu0
      %v641 = vadd.f32 %v367, %v640
      %642 = vmatprep.mubr.f32.mxu0 0.0
      %643 = vmatmul.mubr.f32.gmra.mxu0 %v434
      %v644 = vpop.f32.mrf.mxu0
      %v645 = vadd.f32 %v363, %v644
      %v646 = vpop.f32.mrf.mxu0
      %v647 = vadd.f32 %v367, %v646
      %648 = vmatprep.mubr.f32.mxu0 0.0
      %649 = vmatmul.mubr.f32.gmra.mxu0 %v437
      %v650 = vpop.f32.mrf.mxu0
      %v651 = vadd.f32 %v363, %v650
      %v652 = vpop.f32.mrf.mxu0
      %v653 = vadd.f32 %v367, %v652
      %654 = vmatprep.mubr.f32.mxu0 0.0
      %655 = vmatmul.mubr.f32.gmra.mxu0 %v440
      %v656 = vpop.f32.mrf.mxu0
      %v657 = vadd.f32 %v363, %v656
      %v658 = vpop.f32.mrf.mxu0
      %v659 = vadd.f32 %v367, %v658
      %660 = vmatprep.mubr.f32.mxu0 0.0
      %661 = vmatmul.mubr.f32.gmra.mxu0 %v443
      %v662 = vpop.f32.mrf.mxu0
      %v663 = vadd.f32 %v363, %v662
      %v664 = vpop.f32.mrf.mxu0
      %v665 = vadd.f32 %v367, %v664
      %666 = vmatprep.mubr.f32.mxu0 0.0
      %667 = vmatmul.mubr.f32.gmra.mxu0 %v446
      %v668 = vpop.f32.mrf.mxu0
      %v669 = vadd.f32 %v363, %v668
      %v670 = vpop.f32.mrf.mxu0
      %v671 = vadd.f32 %v367, %v670
      %672 = vmatprep.mubr.f32.mxu0 0.0
      %673 = vmatmul.mubr.f32.gmra.mxu0 %v449
      %v674 = vpop.f32.mrf.mxu0
      %v675 = vadd.f32 %v363, %v674
      %v676 = vpop.f32.mrf.mxu0
      %v677 = vadd.f32 %v367, %v676
      %678 = vmatprep.mubr.f32.mxu0 0.0
      %679 = vmatmul.mubr.f32.gmra.mxu0 %v452
      %v680 = vpop.f32.mrf.mxu0
      %v681 = vadd.f32 %v363, %v680
      %v682 = vpop.f32.mrf.mxu0
      %v683 = vadd.f32 %v367, %v682
      %684 = vmatprep.mubr.f32.mxu0 0.0
      %685 = vmatmul.mubr.f32.gmra.mxu0 %v455
      %v686 = vpop.f32.mrf.mxu0
      %v687 = vadd.f32 %v363, %v686
      %v688 = vpop.f32.mrf.mxu0
      %v689 = vadd.f32 %v367, %v688
      %690 = vmatprep.mubr.f32.mxu0 0.0
      %691 = vmatmul.mubr.f32.gmra.mxu0 %v458
      %v692 = vpop.f32.mrf.mxu0
      %v693 = vadd.f32 %v363, %v692
      %v694 = vpop.f32.mrf.mxu0
      %v695 = vadd.f32 %v367, %v694
      %696 = vmatprep.mubr.f32.mxu0 0.0
      %697 = vmatmul.mubr.f32.gmra.mxu0 %v461
      %v698 = vpop.f32.mrf.mxu0
      %v699 = vadd.f32 %v363, %v698
      %v700 = vpop.f32.mrf.mxu0
      %v701 = vadd.f32 %v367, %v700
      %702 = vmatprep.mubr.f32.mxu0 0.0
      %703 = vmatmul.mubr.f32.gmra.mxu0 %v464
      %v704 = vpop.f32.mrf.mxu0
      %v705 = vadd.f32 %v363, %v704
      %v706 = vpop.f32.mrf.mxu0
      %v707 = vadd.f32 %v367, %v706
      %708 = vmatprep.mubr.f32.mxu0 0.0
      %709 = vmatmul.mubr.f32.gmra.mxu0 %v467
      %v710 = vpop.f32.mrf.mxu0
      %v711 = vadd.f32 %v363, %v710
      %v712 = vpop.f32.mrf.mxu0
      %v713 = vadd.f32 %v367, %v712
      %714 = vmatprep.mubr.f32.mxu0 0.0
      %715 = vmatmul.mubr.f32.gmra.mxu0 %v470
      %v716 = vpop.f32.mrf.mxu0
      %v717 = vadd.f32 %v363, %v716
      %v718 = vpop.f32.mrf.mxu0
      %v719 = vadd.f32 %v367, %v718
      %720 = vmatprep.mubr.f32.mxu0 0.0
      %721 = vmatmul.mubr.f32.gmra.mxu0 %v473
      %v722 = vpop.f32.mrf.mxu0
      %v723 = vadd.f32 %v363, %v722
      %v724 = vpop.f32.mrf.mxu0
      %v725 = vadd.f32 %v367, %v724
      %726 = vmatprep.mubr.f32.mxu0 0.0
      %727 = vmatmul.mubr.f32.gmra.mxu0 %v476
      %v728 = vpop.f32.mrf.mxu0
      %v729 = vadd.f32 %v363, %v728
      %v730 = vpop.f32.mrf.mxu0
      %v731 = vadd.f32 %v367, %v730
      %732 = vmatprep.mubr.f32.mxu0 0.0
      %733 = vmatmul.mubr.f32.gmra.mxu0 %v479
      %v734 = vpop.f32.mrf.mxu0
      %v735 = vadd.f32 %v363, %v734
      %v736 = vpop.f32.mrf.mxu0
      %v737 = vadd.f32 %v367, %v736
      %738 = vmatprep.mubr.f32.mxu0 0.0
      %739 = vmatmul.mubr.f32.gmra.mxu0 %v482
      %v740 = vpop.f32.mrf.mxu0
      %v741 = vadd.f32 %v363, %v740
      %v742 = vpop.f32.mrf.mxu0
      %v743 = vadd.f32 %v367, %v742
      %744 = vmatprep.mubr.f32.mxu0 0.0
      %745 = vmatmul.mubr.f32.gmra.mxu0 %v485
      %v746 = vpop.f32.mrf.mxu0
      %v747 = vadd.f32 %v363, %v746
      %v748 = vpop.f32.mrf.mxu0
      %v749 = vadd.f32 %v367, %v748
      %750 = vmatprep.mubr.f32.mxu0 0.0
      %751 = vmatmul.mubr.f32.gmra.mxu0 %v488
      %v752 = vpop.f32.mrf.mxu0
      %v753 = vadd.f32 %v363, %v752
      %v754 = vpop.f32.mrf.mxu0
      %v755 = vadd.f32 %v367, %v754
      %756 = vmatprep.mubr.f32.mxu0 0.0
      %757 = vmatmul.mubr.f32.gmra.mxu0 %v491
      %v758 = vpop.f32.mrf.mxu0
      %v759 = vadd.f32 %v363, %v758
      %v760 = vpop.f32.mrf.mxu0
      %v761 = vadd.f32 %v367, %v760
      %762 = vmatprep.mubr.f32.mxu0 0.0
      %763 = vmatmul.mubr.f32.gmra.mxu0 %v494
      %v764 = vpop.f32.mrf.mxu0
      %v765 = vadd.f32 %v363, %v764
      %v766 = vpop.f32.mrf.mxu0
      %v767 = vadd.f32 %v367, %v766
      %768 = vmatprep.mubr.f32.mxu0 0.0
      %769 = vmatmul.mubr.f32.gmra.mxu0 %v497
      %v770 = vpop.f32.mrf.mxu0
      %v771 = vadd.f32 %v363, %v770
      %v772 = vpop.f32.mrf.mxu0
      %v773 = vadd.f32 %v367, %v772
      %774 = vmatprep.mubr.f32.mxu0 0.0
      %775 = vmatmul.mubr.f32.gmra.mxu0 %v500
      %v776 = vpop.f32.mrf.mxu0
      %v777 = vadd.f32 %v363, %v776
      %v778 = vpop.f32.mrf.mxu0
      %v779 = vadd.f32 %v367, %v778
      %780 = vmatprep.mubr.f32.mxu0 0.0
      %781 = vmatmul.mubr.f32.gmra.mxu0 %v503
      %v782 = vpop.f32.mrf.mxu0
      %v783 = vadd.f32 %v363, %v782
      %v784 = vpop.f32.mrf.mxu0
      %v785 = vadd.f32 %v367, %v784
      %786 = vmatprep.mubr.f32.mxu0 0.0
      %787 = vmatmul.mubr.f32.gmra.mxu0 %v506
      %v788 = vpop.f32.mrf.mxu0
      %v789 = vadd.f32 %v363, %v788
      %v790 = vpop.f32.mrf.mxu0
      %v791 = vadd.f32 %v367, %v790
      %792 = vmatprep.mubr.f32.mxu0 0.0
      %793 = vmatmul.mubr.f32.gmra.mxu0 %v509
      %v794 = vpop.f32.mrf.mxu0
      %v795 = vadd.f32 %v363, %v794
      %v796 = vpop.f32.mrf.mxu0
      %v797 = vadd.f32 %v367, %v796
      %798 = vmatprep.mubr.f32.mxu0 0.0
      %799 = vmatmul.mubr.f32.gmra.mxu0 %v512
      %v800 = vpop.f32.mrf.mxu0
      %v801 = vadd.f32 %v363, %v800
      %v802 = vpop.f32.mrf.mxu0
      %v803 = vadd.f32 %v367, %v802
      %804 = vmatprep.mubr.f32.mxu0 0.0
      %805 = vmatmul.mubr.f32.gmra.mxu0 %v515
      %v806 = vpop.f32.mrf.mxu0
      %v807 = vadd.f32 %v363, %v806
      %v808 = vpop.f32.mrf.mxu0
      %v809 = vadd.f32 %v367, %v808
      %810 = vdwg.mxu0
      %811 = vmatprep.subr.mxu0 0.0
      %812 = vmatpush1.msra.mxu0 0.0
      %813 = vmatprep.subr.mxu0 0.0
      %814 = vmatpush1.msra.mxu0 0.0
      %815 = vmatprep.subr.mxu0 0.0
      %816 = vmatpush1.msra.mxu0 0.0
      %817 = vmatprep.subr.mxu0 0.0
      %818 = vmatpush1.msra.mxu0 0.0
      %819 = vmatprep.subr.mxu0 0.0
      %820 = vmatpush1.msra.mxu0 0.0
      %821 = vmatprep.subr.mxu0 0.0
      %822 = vmatpush1.msra.mxu0 0.0
      %823 = vmatprep.subr.mxu0 0.0
      %824 = vmatpush1.msra.mxu0 0.0
      %825 = vmatprep.subr.mxu0 0.0
      %826 = vmatpush1.msra.mxu0 0.0
      %827 = vmatprep.subr.mxu0 0.0
      %828 = vmatpush1.msra.mxu0 0.0
      %829 = vmatprep.subr.mxu0 0.0
      %830 = vmatpush1.msra.mxu0 0.0
      %831 = vmatprep.subr.mxu0 0.0
      %832 = vmatpush1.msra.mxu0 0.0
      %833 = vmatprep.subr.mxu0 %v528
      %834 = vmatpush1.msra.mxu0 %v525
      %835 = vmatprep.subr.mxu0 %v335
      %836 = vmatpush1.msra.mxu0 %v334
      %837 = vmatprep.subr.mxu0 %v323
      %838 = vmatpush1.msra.mxu0 %v322
      %839 = vmatprep.subr.mxu0 %v311
      %840 = vmatpush1.msra.mxu0 %v310
      %841 = vmatprep.subr.mxu0 %v299
      %842 = vmatpush1.msra.mxu0 %v298
      %843 = vmatprep.subr.mxu0 0.0
      %844 = vmatpush2.msra.mxu0 0.0
      %845 = vmatprep.subr.mxu0 0.0
      %846 = vmatpush2.msra.mxu0 0.0
      %847 = vmatprep.subr.mxu0 0.0
      %848 = vmatpush2.msra.mxu0 0.0
      %849 = vmatprep.subr.mxu0 0.0
      %850 = vmatpush2.msra.mxu0 0.0
      %851 = vmatprep.subr.mxu0 0.0
      %852 = vmatpush2.msra.mxu0 0.0
      %853 = vmatprep.subr.mxu0 0.0
      %854 = vmatpush2.msra.mxu0 0.0
      %855 = vmatprep.subr.mxu0 0.0
      %856 = vmatpush2.msra.mxu0 0.0
      %857 = vmatprep.subr.mxu0 0.0
      %858 = vmatpush2.msra.mxu0 0.0
      %859 = vmatprep.subr.mxu0 0.0
      %860 = vmatpush2.msra.mxu0 0.0
      %861 = vmatprep.subr.mxu0 0.0
      %862 = vmatpush2.msra.mxu0 0.0
      %863 = vmatprep.subr.mxu0 0.0
      %864 = vmatpush2.msra.mxu0 0.0
      %865 = vmatprep.subr.mxu0 0.0
      %866 = vmatpush2.msra.mxu0 0.0
      %867 = vmatprep.subr.mxu0 0.0
      %868 = vmatpush2.msra.mxu0 0.0
      %869 = vmatprep.subr.mxu0 0.0
      %870 = vmatpush2.msra.mxu0 0.0
      %871 = vmatprep.subr.mxu0 0.0
      %872 = vmatpush2.msra.mxu0 0.0
      %873 = vmatprep.subr.mxu0 0.0
      %874 = vmatpush2.msra.mxu0 0.0
      %875 = vmatprep.mubr.f32.mxu0 0.0
      %876 = vmatmul.mubr.f32.gmra.mxu0 %v422
      %v877 = vpop.f32.mrf.mxu0
      %v878 = vadd.f32 %v371, %v877
      %v879 = vpop.f32.mrf.mxu0
      %v880 = vadd.f32 %v375, %v879
      %881 = vmatprep.mubr.f32.mxu0 0.0
      %882 = vmatmul.mubr.f32.gmra.mxu0 %v425
      %v883 = vpop.f32.mrf.mxu0
      %v884 = vadd.f32 %v371, %v883
      %v885 = vpop.f32.mrf.mxu0
      %v886 = vadd.f32 %v375, %v885
      %887 = vmatprep.mubr.f32.mxu0 0.0
      %888 = vmatmul.mubr.f32.gmra.mxu0 %v428
      %v889 = vpop.f32.mrf.mxu0
      %v890 = vadd.f32 %v371, %v889
      %v891 = vpop.f32.mrf.mxu0
      %v892 = vadd.f32 %v375, %v891
      %893 = vmatprep.mubr.f32.mxu0 0.0
      %894 = vmatmul.mubr.f32.gmra.mxu0 %v431
      %v895 = vpop.f32.mrf.mxu0
      %v896 = vadd.f32 %v371, %v895
      %v897 = vpop.f32.mrf.mxu0
      %v898 = vadd.f32 %v375, %v897
      %899 = vmatprep.mubr.f32.mxu0 0.0
      %900 = vmatmul.mubr.f32.gmra.mxu0 %v434
      %v901 = vpop.f32.mrf.mxu0
      %v902 = vadd.f32 %v371, %v901
      %v903 = vpop.f32.mrf.mxu0
      %v904 = vadd.f32 %v375, %v903
      %905 = vmatprep.mubr.f32.mxu0 0.0
      %906 = vmatmul.mubr.f32.gmra.mxu0 %v437
      %v907 = vpop.f32.mrf.mxu0
      %v908 = vadd.f32 %v371, %v907
      %v909 = vpop.f32.mrf.mxu0
      %v910 = vadd.f32 %v375, %v909
      %911 = vmatprep.mubr.f32.mxu0 0.0
      %912 = vmatmul.mubr.f32.gmra.mxu0 %v440
      %v913 = vpop.f32.mrf.mxu0
      %v914 = vadd.f32 %v371, %v913
      %v915 = vpop.f32.mrf.mxu0
      %v916 = vadd.f32 %v375, %v915
      %917 = vmatprep.mubr.f32.mxu0 0.0
      %918 = vmatmul.mubr.f32.gmra.mxu0 %v443
      %v919 = vpop.f32.mrf.mxu0
      %v920 = vadd.f32 %v371, %v919
      %v921 = vpop.f32.mrf.mxu0
      %v922 = vadd.f32 %v375, %v921
      %923 = vmatprep.mubr.f32.mxu0 0.0
      %924 = vmatmul.mubr.f32.gmra.mxu0 %v446
      %v925 = vpop.f32.mrf.mxu0
      %v926 = vadd.f32 %v371, %v925
      %v927 = vpop.f32.mrf.mxu0
      %v928 = vadd.f32 %v375, %v927
      %929 = vmatprep.mubr.f32.mxu0 0.0
      %930 = vmatmul.mubr.f32.gmra.mxu0 %v449
      %v931 = vpop.f32.mrf.mxu0
      %v932 = vadd.f32 %v371, %v931
      %v933 = vpop.f32.mrf.mxu0
      %v934 = vadd.f32 %v375, %v933
      %935 = vmatprep.mubr.f32.mxu0 0.0
      %936 = vmatmul.mubr.f32.gmra.mxu0 %v452
      %v937 = vpop.f32.mrf.mxu0
      %v938 = vadd.f32 %v371, %v937
      %v939 = vpop.f32.mrf.mxu0
      %v940 = vadd.f32 %v375, %v939
      %941 = vmatprep.mubr.f32.mxu0 0.0
      %942 = vmatmul.mubr.f32.gmra.mxu0 %v455
      %v943 = vpop.f32.mrf.mxu0
      %v944 = vadd.f32 %v371, %v943
      %v945 = vpop.f32.mrf.mxu0
      %v946 = vadd.f32 %v375, %v945
      %947 = vmatprep.mubr.f32.mxu0 0.0
      %948 = vmatmul.mubr.f32.gmra.mxu0 %v458
      %v949 = vpop.f32.mrf.mxu0
      %v950 = vadd.f32 %v371, %v949
      %v951 = vpop.f32.mrf.mxu0
      %v952 = vadd.f32 %v375, %v951
      %953 = vmatprep.mubr.f32.mxu0 0.0
      %954 = vmatmul.mubr.f32.gmra.mxu0 %v461
      %v955 = vpop.f32.mrf.mxu0
      %v956 = vadd.f32 %v371, %v955
      %v957 = vpop.f32.mrf.mxu0
      %v958 = vadd.f32 %v375, %v957
      %959 = vmatprep.mubr.f32.mxu0 0.0
      %960 = vmatmul.mubr.f32.gmra.mxu0 %v464
      %v961 = vpop.f32.mrf.mxu0
      %v962 = vadd.f32 %v371, %v961
      %v963 = vpop.f32.mrf.mxu0
      %v964 = vadd.f32 %v375, %v963
      %965 = vmatprep.mubr.f32.mxu0 0.0
      %966 = vmatmul.mubr.f32.gmra.mxu0 %v467
      %v967 = vpop.f32.mrf.mxu0
      %v968 = vadd.f32 %v371, %v967
      %v969 = vpop.f32.mrf.mxu0
      %v970 = vadd.f32 %v375, %v969
      %971 = vmatprep.mubr.f32.mxu0 0.0
      %972 = vmatmul.mubr.f32.gmra.mxu0 %v470
      %v973 = vpop.f32.mrf.mxu0
      %v974 = vadd.f32 %v371, %v973
      %v975 = vpop.f32.mrf.mxu0
      %v976 = vadd.f32 %v375, %v975
      %977 = vmatprep.mubr.f32.mxu0 0.0
      %978 = vmatmul.mubr.f32.gmra.mxu0 %v473
      %v979 = vpop.f32.mrf.mxu0
      %v980 = vadd.f32 %v371, %v979
      %v981 = vpop.f32.mrf.mxu0
      %v982 = vadd.f32 %v375, %v981
      %983 = vmatprep.mubr.f32.mxu0 0.0
      %984 = vmatmul.mubr.f32.gmra.mxu0 %v476
      %v985 = vpop.f32.mrf.mxu0
      %v986 = vadd.f32 %v371, %v985
      %v987 = vpop.f32.mrf.mxu0
      %v988 = vadd.f32 %v375, %v987
      %989 = vmatprep.mubr.f32.mxu0 0.0
      %990 = vmatmul.mubr.f32.gmra.mxu0 %v479
      %v991 = vpop.f32.mrf.mxu0
      %v992 = vadd.f32 %v371, %v991
      %v993 = vpop.f32.mrf.mxu0
      %v994 = vadd.f32 %v375, %v993
      %995 = vmatprep.mubr.f32.mxu0 0.0
      %996 = vmatmul.mubr.f32.gmra.mxu0 %v482
      %v997 = vpop.f32.mrf.mxu0
      %v998 = vadd.f32 %v371, %v997
      %v999 = vpop.f32.mrf.mxu0
      %v1000 = vadd.f32 %v375, %v999
      %1001 = vmatprep.mubr.f32.mxu0 0.0
      %1002 = vmatmul.mubr.f32.gmra.mxu0 %v485
      %v1003 = vpop.f32.mrf.mxu0
      %v1004 = vadd.f32 %v371, %v1003
      %v1005 = vpop.f32.mrf.mxu0
      %v1006 = vadd.f32 %v375, %v1005
      %1007 = vmatprep.mubr.f32.mxu0 0.0
      %1008 = vmatmul.mubr.f32.gmra.mxu0 %v488
      %v1009 = vpop.f32.mrf.mxu0
      %v1010 = vadd.f32 %v371, %v1009
      %v1011 = vpop.f32.mrf.mxu0
      %v1012 = vadd.f32 %v375, %v1011
      %1013 = vmatprep.mubr.f32.mxu0 0.0
      %1014 = vmatmul.mubr.f32.gmra.mxu0 %v491
      %v1015 = vpop.f32.mrf.mxu0
      %v1016 = vadd.f32 %v371, %v1015
      %v1017 = vpop.f32.mrf.mxu0
      %v1018 = vadd.f32 %v375, %v1017
      %1019 = vmatprep.mubr.f32.mxu0 0.0
      %1020 = vmatmul.mubr.f32.gmra.mxu0 %v494
      %v1021 = vpop.f32.mrf.mxu0
      %v1022 = vadd.f32 %v371, %v1021
      %v1023 = vpop.f32.mrf.mxu0
      %v1024 = vadd.f32 %v375, %v1023
      %1025 = vmatprep.mubr.f32.mxu0 0.0
      %1026 = vmatmul.mubr.f32.gmra.mxu0 %v497
      %v1027 = vpop.f32.mrf.mxu0
      %v1028 = vadd.f32 %v371, %v1027
      %v1029 = vpop.f32.mrf.mxu0
      %v1030 = vadd.f32 %v375, %v1029
      %1031 = vmatprep.mubr.f32.mxu0 0.0
      %1032 = vmatmul.mubr.f32.gmra.mxu0 %v500
      %v1033 = vpop.f32.mrf.mxu0
      %v1034 = vadd.f32 %v371, %v1033
      %v1035 = vpop.f32.mrf.mxu0
      %v1036 = vadd.f32 %v375, %v1035
      %1037 = vmatprep.mubr.f32.mxu0 0.0
      %1038 = vmatmul.mubr.f32.gmra.mxu0 %v503
      %v1039 = vpop.f32.mrf.mxu0
      %v1040 = vadd.f32 %v371, %v1039
      %v1041 = vpop.f32.mrf.mxu0
      %v1042 = vadd.f32 %v375, %v1041
      %1043 = vmatprep.mubr.f32.mxu0 0.0
      %1044 = vmatmul.mubr.f32.gmra.mxu0 %v506
      %v1045 = vpop.f32.mrf.mxu0
      %v1046 = vadd.f32 %v371, %v1045
      %v1047 = vpop.f32.mrf.mxu0
      %v1048 = vadd.f32 %v375, %v1047
      %1049 = vmatprep.mubr.f32.mxu0 0.0
      %1050 = vmatmul.mubr.f32.gmra.mxu0 %v509
      %v1051 = vpop.f32.mrf.mxu0
      %v1052 = vadd.f32 %v371, %v1051
      %v1053 = vpop.f32.mrf.mxu0
      %v1054 = vadd.f32 %v375, %v1053
      %1055 = vmatprep.mubr.f32.mxu0 0.0
      %1056 = vmatmul.mubr.f32.gmra.mxu0 %v512
      %v1057 = vpop.f32.mrf.mxu0
      %v1058 = vadd.f32 %v371, %v1057
      %v1059 = vpop.f32.mrf.mxu0
      %v1060 = vadd.f32 %v375, %v1059
      %1061 = vmatprep.mubr.f32.mxu0 0.0
      %1062 = vmatmul.mubr.f32.gmra.mxu0 %v515
      %v1063 = vpop.f32.mrf.mxu0
      %v1064 = vadd.f32 %v371, %v1063
      %v1065 = vpop.f32.mrf.mxu0
      %v1066 = vadd.f32 %v375, %v1065
      %1067 = vdwg.mxu0
      %1068 = vmatprep.subr.mxu0 0.0
      %1069 = vmatpush1.msra.mxu0 0.0
      %1070 = vmatprep.subr.mxu0 0.0
      %1071 = vmatpush1.msra.mxu0 0.0
      %1072 = vmatprep.subr.mxu0 0.0
      %1073 = vmatpush1.msra.mxu0 0.0
      %1074 = vmatprep.subr.mxu0 0.0
      %1075 = vmatpush1.msra.mxu0 0.0
      %1076 = vmatprep.subr.mxu0 0.0
      %1077 = vmatpush1.msra.mxu0 0.0
      %1078 = vmatprep.subr.mxu0 0.0
      %1079 = vmatpush1.msra.mxu0 0.0
      %1080 = vmatprep.subr.mxu0 0.0
      %1081 = vmatpush1.msra.mxu0 0.0
      %1082 = vmatprep.subr.mxu0 0.0
      %1083 = vmatpush1.msra.mxu0 0.0
      %1084 = vmatprep.subr.mxu0 0.0
      %1085 = vmatpush1.msra.mxu0 0.0
      %1086 = vmatprep.subr.mxu0 0.0
      %1087 = vmatpush1.msra.mxu0 0.0
      %1088 = vmatprep.subr.mxu0 0.0
      %1089 = vmatpush1.msra.mxu0 0.0
      %1090 = vmatprep.subr.mxu0 %v534
      %1091 = vmatpush1.msra.mxu0 %v531
      %1092 = vmatprep.subr.mxu0 %v337
      %1093 = vmatpush1.msra.mxu0 %v336
      %1094 = vmatprep.subr.mxu0 %v325
      %1095 = vmatpush1.msra.mxu0 %v324
      %1096 = vmatprep.subr.mxu0 %v313
      %1097 = vmatpush1.msra.mxu0 %v312
      %1098 = vmatprep.subr.mxu0 %v301
      %1099 = vmatpush1.msra.mxu0 %v300
      %1100 = vmatprep.subr.mxu0 0.0
      %1101 = vmatpush2.msra.mxu0 0.0
      %1102 = vmatprep.subr.mxu0 0.0
      %1103 = vmatpush2.msra.mxu0 0.0
      %1104 = vmatprep.subr.mxu0 0.0
      %1105 = vmatpush2.msra.mxu0 0.0
      %1106 = vmatprep.subr.mxu0 0.0
      %1107 = vmatpush2.msra.mxu0 0.0
      %1108 = vmatprep.subr.mxu0 0.0
      %1109 = vmatpush2.msra.mxu0 0.0
      %1110 = vmatprep.subr.mxu0 0.0
      %1111 = vmatpush2.msra.mxu0 0.0
      %1112 = vmatprep.subr.mxu0 0.0
      %1113 = vmatpush2.msra.mxu0 0.0
      %1114 = vmatprep.subr.mxu0 0.0
      %1115 = vmatpush2.msra.mxu0 0.0
      %1116 = vmatprep.subr.mxu0 0.0
      %1117 = vmatpush2.msra.mxu0 0.0
      %1118 = vmatprep.subr.mxu0 0.0
      %1119 = vmatpush2.msra.mxu0 0.0
      %1120 = vmatprep.subr.mxu0 0.0
      %1121 = vmatpush2.msra.mxu0 0.0
      %1122 = vmatprep.subr.mxu0 0.0
      %1123 = vmatpush2.msra.mxu0 0.0
      %1124 = vmatprep.subr.mxu0 0.0
      %1125 = vmatpush2.msra.mxu0 0.0
      %1126 = vmatprep.subr.mxu0 0.0
      %1127 = vmatpush2.msra.mxu0 0.0
      %1128 = vmatprep.subr.mxu0 0.0
      %1129 = vmatpush2.msra.mxu0 0.0
      %1130 = vmatprep.subr.mxu0 0.0
      %1131 = vmatpush2.msra.mxu0 0.0
      %1132 = vmatprep.mubr.f32.mxu0 0.0
      %1133 = vmatmul.mubr.f32.gmra.mxu0 %v422
      %v1134 = vpop.f32.mrf.mxu0
      %v1135 = vadd.f32 %v379, %v1134
      %v1136 = vpop.f32.mrf.mxu0
      %v1137 = vadd.f32 %v383, %v1136
      %1138 = vmatprep.mubr.f32.mxu0 0.0
      %1139 = vmatmul.mubr.f32.gmra.mxu0 %v425
      %v1140 = vpop.f32.mrf.mxu0
      %v1141 = vadd.f32 %v379, %v1140
      %v1142 = vpop.f32.mrf.mxu0
      %v1143 = vadd.f32 %v383, %v1142
      %1144 = vmatprep.mubr.f32.mxu0 0.0
      %1145 = vmatmul.mubr.f32.gmra.mxu0 %v428
      %v1146 = vpop.f32.mrf.mxu0
      %v1147 = vadd.f32 %v379, %v1146
      %v1148 = vpop.f32.mrf.mxu0
      %v1149 = vadd.f32 %v383, %v1148
      %1150 = vmatprep.mubr.f32.mxu0 0.0
      %1151 = vmatmul.mubr.f32.gmra.mxu0 %v431
      %v1152 = vpop.f32.mrf.mxu0
      %v1153 = vadd.f32 %v379, %v1152
      %v1154 = vpop.f32.mrf.mxu0
      %v1155 = vadd.f32 %v383, %v1154
      %1156 = vmatprep.mubr.f32.mxu0 0.0
      %1157 = vmatmul.mubr.f32.gmra.mxu0 %v434
      %v1158 = vpop.f32.mrf.mxu0
      %v1159 = vadd.f32 %v379, %v1158
      %v1160 = vpop.f32.mrf.mxu0
      %v1161 = vadd.f32 %v383, %v1160
      %1162 = vmatprep.mubr.f32.mxu0 0.0
      %1163 = vmatmul.mubr.f32.gmra.mxu0 %v437
      %v1164 = vpop.f32.mrf.mxu0
      %v1165 = vadd.f32 %v379, %v1164
      %v1166 = vpop.f32.mrf.mxu0
      %v1167 = vadd.f32 %v383, %v1166
      %1168 = vmatprep.mubr.f32.mxu0 0.0
      %1169 = vmatmul.mubr.f32.gmra.mxu0 %v440
      %v1170 = vpop.f32.mrf.mxu0
      %v1171 = vadd.f32 %v379, %v1170
      %v1172 = vpop.f32.mrf.mxu0
      %v1173 = vadd.f32 %v383, %v1172
      %1174 = vmatprep.mubr.f32.mxu0 0.0
      %1175 = vmatmul.mubr.f32.gmra.mxu0 %v443
      %v1176 = vpop.f32.mrf.mxu0
      %v1177 = vadd.f32 %v379, %v1176
      %v1178 = vpop.f32.mrf.mxu0
      %v1179 = vadd.f32 %v383, %v1178
      %1180 = vmatprep.mubr.f32.mxu0 0.0
      %1181 = vmatmul.mubr.f32.gmra.mxu0 %v446
      %v1182 = vpop.f32.mrf.mxu0
      %v1183 = vadd.f32 %v379, %v1182
      %v1184 = vpop.f32.mrf.mxu0
      %v1185 = vadd.f32 %v383, %v1184
      %1186 = vmatprep.mubr.f32.mxu0 0.0
      %1187 = vmatmul.mubr.f32.gmra.mxu0 %v449
      %v1188 = vpop.f32.mrf.mxu0
      %v1189 = vadd.f32 %v379, %v1188
      %v1190 = vpop.f32.mrf.mxu0
      %v1191 = vadd.f32 %v383, %v1190
      %1192 = vmatprep.mubr.f32.mxu0 0.0
      %1193 = vmatmul.mubr.f32.gmra.mxu0 %v452
      %v1194 = vpop.f32.mrf.mxu0
      %v1195 = vadd.f32 %v379, %v1194
      %v1196 = vpop.f32.mrf.mxu0
      %v1197 = vadd.f32 %v383, %v1196
      %1198 = vmatprep.mubr.f32.mxu0 0.0
      %1199 = vmatmul.mubr.f32.gmra.mxu0 %v455
      %v1200 = vpop.f32.mrf.mxu0
      %v1201 = vadd.f32 %v379, %v1200
      %v1202 = vpop.f32.mrf.mxu0
      %v1203 = vadd.f32 %v383, %v1202
      %1204 = vmatprep.mubr.f32.mxu0 0.0
      %1205 = vmatmul.mubr.f32.gmra.mxu0 %v458
      %v1206 = vpop.f32.mrf.mxu0
      %v1207 = vadd.f32 %v379, %v1206
      %v1208 = vpop.f32.mrf.mxu0
      %v1209 = vadd.f32 %v383, %v1208
      %1210 = vmatprep.mubr.f32.mxu0 0.0
      %1211 = vmatmul.mubr.f32.gmra.mxu0 %v461
      %v1212 = vpop.f32.mrf.mxu0
      %v1213 = vadd.f32 %v379, %v1212
      %v1214 = vpop.f32.mrf.mxu0
      %v1215 = vadd.f32 %v383, %v1214
      %1216 = vmatprep.mubr.f32.mxu0 0.0
      %1217 = vmatmul.mubr.f32.gmra.mxu0 %v464
      %v1218 = vpop.f32.mrf.mxu0
      %v1219 = vadd.f32 %v379, %v1218
      %v1220 = vpop.f32.mrf.mxu0
      %v1221 = vadd.f32 %v383, %v1220
      %1222 = vmatprep.mubr.f32.mxu0 0.0
      %1223 = vmatmul.mubr.f32.gmra.mxu0 %v467
      %v1224 = vpop.f32.mrf.mxu0
      %v1225 = vadd.f32 %v379, %v1224
      %v1226 = vpop.f32.mrf.mxu0
      %v1227 = vadd.f32 %v383, %v1226
      %1228 = vmatprep.mubr.f32.mxu0 0.0
      %1229 = vmatmul.mubr.f32.gmra.mxu0 %v470
      %v1230 = vpop.f32.mrf.mxu0
      %v1231 = vadd.f32 %v379, %v1230
      %v1232 = vpop.f32.mrf.mxu0
      %v1233 = vadd.f32 %v383, %v1232
      %1234 = vmatprep.mubr.f32.mxu0 0.0
      %1235 = vmatmul.mubr.f32.gmra.mxu0 %v473
      %v1236 = vpop.f32.mrf.mxu0
      %v1237 = vadd.f32 %v379, %v1236
      %v1238 = vpop.f32.mrf.mxu0
      %v1239 = vadd.f32 %v383, %v1238
      %1240 = vmatprep.mubr.f32.mxu0 0.0
      %1241 = vmatmul.mubr.f32.gmra.mxu0 %v476
      %v1242 = vpop.f32.mrf.mxu0
      %v1243 = vadd.f32 %v379, %v1242
      %v1244 = vpop.f32.mrf.mxu0
      %v1245 = vadd.f32 %v383, %v1244
      %1246 = vmatprep.mubr.f32.mxu0 0.0
      %1247 = vmatmul.mubr.f32.gmra.mxu0 %v479
      %v1248 = vpop.f32.mrf.mxu0
      %v1249 = vadd.f32 %v379, %v1248
      %v1250 = vpop.f32.mrf.mxu0
      %v1251 = vadd.f32 %v383, %v1250
      %1252 = vmatprep.mubr.f32.mxu0 0.0
      %1253 = vmatmul.mubr.f32.gmra.mxu0 %v482
      %v1254 = vpop.f32.mrf.mxu0
      %v1255 = vadd.f32 %v379, %v1254
      %v1256 = vpop.f32.mrf.mxu0
      %v1257 = vadd.f32 %v383, %v1256
      %1258 = vmatprep.mubr.f32.mxu0 0.0
      %1259 = vmatmul.mubr.f32.gmra.mxu0 %v485
      %v1260 = vpop.f32.mrf.mxu0
      %v1261 = vadd.f32 %v379, %v1260
      %v1262 = vpop.f32.mrf.mxu0
      %v1263 = vadd.f32 %v383, %v1262
      %1264 = vmatprep.mubr.f32.mxu0 0.0
      %1265 = vmatmul.mubr.f32.gmra.mxu0 %v488
      %v1266 = vpop.f32.mrf.mxu0
      %v1267 = vadd.f32 %v379, %v1266
      %v1268 = vpop.f32.mrf.mxu0
      %v1269 = vadd.f32 %v383, %v1268
      %1270 = vmatprep.mubr.f32.mxu0 0.0
      %1271 = vmatmul.mubr.f32.gmra.mxu0 %v491
      %v1272 = vpop.f32.mrf.mxu0
      %v1273 = vadd.f32 %v379, %v1272
      %v1274 = vpop.f32.mrf.mxu0
      %v1275 = vadd.f32 %v383, %v1274
      %1276 = vmatprep.mubr.f32.mxu0 0.0
      %1277 = vmatmul.mubr.f32.gmra.mxu0 %v494
      %v1278 = vpop.f32.mrf.mxu0
      %v1279 = vadd.f32 %v379, %v1278
      %v1280 = vpop.f32.mrf.mxu0
      %v1281 = vadd.f32 %v383, %v1280
      %1282 = vmatprep.mubr.f32.mxu0 0.0
      %1283 = vmatmul.mubr.f32.gmra.mxu0 %v497
      %v1284 = vpop.f32.mrf.mxu0
      %v1285 = vadd.f32 %v379, %v1284
      %v1286 = vpop.f32.mrf.mxu0
      %v1287 = vadd.f32 %v383, %v1286
      %1288 = vmatprep.mubr.f32.mxu0 0.0
      %1289 = vmatmul.mubr.f32.gmra.mxu0 %v500
      %v1290 = vpop.f32.mrf.mxu0
      %v1291 = vadd.f32 %v379, %v1290
      %v1292 = vpop.f32.mrf.mxu0
      %v1293 = vadd.f32 %v383, %v1292
      %1294 = vmatprep.mubr.f32.mxu0 0.0
      %1295 = vmatmul.mubr.f32.gmra.mxu0 %v503
      %v1296 = vpop.f32.mrf.mxu0
      %v1297 = vadd.f32 %v379, %v1296
      %v1298 = vpop.f32.mrf.mxu0
      %v1299 = vadd.f32 %v383, %v1298
      %1300 = vmatprep.mubr.f32.mxu0 0.0
      %1301 = vmatmul.mubr.f32.gmra.mxu0 %v506
      %v1302 = vpop.f32.mrf.mxu0
      %v1303 = vadd.f32 %v379, %v1302
      %v1304 = vpop.f32.mrf.mxu0
      %v1305 = vadd.f32 %v383, %v1304
      %1306 = vmatprep.mubr.f32.mxu0 0.0
      %1307 = vmatmul.mubr.f32.gmra.mxu0 %v509
      %v1308 = vpop.f32.mrf.mxu0
      %v1309 = vadd.f32 %v379, %v1308
      %v1310 = vpop.f32.mrf.mxu0
      %v1311 = vadd.f32 %v383, %v1310
      %1312 = vmatprep.mubr.f32.mxu0 0.0
      %1313 = vmatmul.mubr.f32.gmra.mxu0 %v512
      %v1314 = vpop.f32.mrf.mxu0
      %v1315 = vadd.f32 %v379, %v1314
      %v1316 = vpop.f32.mrf.mxu0
      %v1317 = vadd.f32 %v383, %v1316
      %1318 = vmatprep.mubr.f32.mxu0 0.0
      %1319 = vmatmul.mubr.f32.gmra.mxu0 %v515
      %v1320 = vpop.f32.mrf.mxu0
      %v1321 = vadd.f32 %v379, %v1320
      %v1322 = vpop.f32.mrf.mxu0
      %v1323 = vadd.f32 %v383, %v1322
      %1324 = vdwg.mxu0
      %1325 = vmatprep.subr.mxu0 0.0
      %1326 = vmatpush1.msra.mxu0 0.0
      %1327 = vmatprep.subr.mxu0 0.0
      %1328 = vmatpush1.msra.mxu0 0.0
      %1329 = vmatprep.subr.mxu0 0.0
      %1330 = vmatpush1.msra.mxu0 0.0
      %1331 = vmatprep.subr.mxu0 0.0
      %1332 = vmatpush1.msra.mxu0 0.0
      %1333 = vmatprep.subr.mxu0 0.0
      %1334 = vmatpush1.msra.mxu0 0.0
      %1335 = vmatprep.subr.mxu0 0.0
      %1336 = vmatpush1.msra.mxu0 0.0
      %1337 = vmatprep.subr.mxu0 0.0
      %1338 = vmatpush1.msra.mxu0 0.0
      %1339 = vmatprep.subr.mxu0 0.0
      %1340 = vmatpush1.msra.mxu0 0.0
      %1341 = vmatprep.subr.mxu0 0.0
      %1342 = vmatpush1.msra.mxu0 0.0
      %1343 = vmatprep.subr.mxu0 0.0
      %1344 = vmatpush1.msra.mxu0 0.0
      %1345 = vmatprep.subr.mxu0 0.0
      %1346 = vmatpush1.msra.mxu0 0.0
      %1347 = vmatprep.subr.mxu0 %v540
      %1348 = vmatpush1.msra.mxu0 %v537
      %1349 = vmatprep.subr.mxu0 %v339
      %1350 = vmatpush1.msra.mxu0 %v338
      %1351 = vmatprep.subr.mxu0 %v327
      %1352 = vmatpush1.msra.mxu0 %v326
      %1353 = vmatprep.subr.mxu0 %v315
      %1354 = vmatpush1.msra.mxu0 %v314
      %1355 = vmatprep.subr.mxu0 %v303
      %1356 = vmatpush1.msra.mxu0 %v302
      %1357 = vmatprep.subr.mxu0 0.0
      %1358 = vmatpush2.msra.mxu0 0.0
      %1359 = vmatprep.subr.mxu0 0.0
      %1360 = vmatpush2.msra.mxu0 0.0
      %1361 = vmatprep.subr.mxu0 0.0
      %1362 = vmatpush2.msra.mxu0 0.0
      %1363 = vmatprep.subr.mxu0 0.0
      %1364 = vmatpush2.msra.mxu0 0.0
      %1365 = vmatprep.subr.mxu0 0.0
      %1366 = vmatpush2.msra.mxu0 0.0
      %1367 = vmatprep.subr.mxu0 0.0
      %1368 = vmatpush2.msra.mxu0 0.0
      %1369 = vmatprep.subr.mxu0 0.0
      %1370 = vmatpush2.msra.mxu0 0.0
      %1371 = vmatprep.subr.mxu0 0.0
      %1372 = vmatpush2.msra.mxu0 0.0
      %1373 = vmatprep.subr.mxu0 0.0
      %1374 = vmatpush2.msra.mxu0 0.0
      %1375 = vmatprep.subr.mxu0 0.0
      %1376 = vmatpush2.msra.mxu0 0.0
      %1377 = vmatprep.subr.mxu0 0.0
      %1378 = vmatpush2.msra.mxu0 0.0
      %1379 = vmatprep.subr.mxu0 0.0
      %1380 = vmatpush2.msra.mxu0 0.0
      %1381 = vmatprep.subr.mxu0 0.0
      %1382 = vmatpush2.msra.mxu0 0.0
      %1383 = vmatprep.subr.mxu0 0.0
      %1384 = vmatpush2.msra.mxu0 0.0
      %1385 = vmatprep.subr.mxu0 0.0
      %1386 = vmatpush2.msra.mxu0 0.0
      %1387 = vmatprep.subr.mxu0 0.0
      %1388 = vmatpush2.msra.mxu0 0.0
      %1389 = vmatprep.mubr.f32.mxu0 0.0
      %1390 = vmatmul.mubr.f32.gmra.mxu0 %v422
      %v1391 = vpop.f32.mrf.mxu0
      %v1392 = vadd.f32 %v387, %v1391
      %v1393 = vpop.f32.mrf.mxu0
      %v1394 = vadd.f32 %v391, %v1393
      %1395 = vmatprep.mubr.f32.mxu0 0.0
      %1396 = vmatmul.mubr.f32.gmra.mxu0 %v425
      %v1397 = vpop.f32.mrf.mxu0
      %v1398 = vadd.f32 %v387, %v1397
      %v1399 = vpop.f32.mrf.mxu0
      %v1400 = vadd.f32 %v391, %v1399
      %1401 = vmatprep.mubr.f32.mxu0 0.0
      %1402 = vmatmul.mubr.f32.gmra.mxu0 %v428
      %v1403 = vpop.f32.mrf.mxu0
      %v1404 = vadd.f32 %v387, %v1403
      %v1405 = vpop.f32.mrf.mxu0
      %v1406 = vadd.f32 %v391, %v1405
      %1407 = vmatprep.mubr.f32.mxu0 0.0
      %1408 = vmatmul.mubr.f32.gmra.mxu0 %v431
      %v1409 = vpop.f32.mrf.mxu0
      %v1410 = vadd.f32 %v387, %v1409
      %v1411 = vpop.f32.mrf.mxu0
      %v1412 = vadd.f32 %v391, %v1411
      %1413 = vmatprep.mubr.f32.mxu0 0.0
      %1414 = vmatmul.mubr.f32.gmra.mxu0 %v434
      %v1415 = vpop.f32.mrf.mxu0
      %v1416 = vadd.f32 %v387, %v1415
      %v1417 = vpop.f32.mrf.mxu0
      %v1418 = vadd.f32 %v391, %v1417
      %1419 = vmatprep.mubr.f32.mxu0 0.0
      %1420 = vmatmul.mubr.f32.gmra.mxu0 %v437
      %v1421 = vpop.f32.mrf.mxu0
      %v1422 = vadd.f32 %v387, %v1421
      %v1423 = vpop.f32.mrf.mxu0
      %v1424 = vadd.f32 %v391, %v1423
      %1425 = vmatprep.mubr.f32.mxu0 0.0
      %1426 = vmatmul.mubr.f32.gmra.mxu0 %v440
      %v1427 = vpop.f32.mrf.mxu0
      %v1428 = vadd.f32 %v387, %v1427
      %v1429 = vpop.f32.mrf.mxu0
      %v1430 = vadd.f32 %v391, %v1429
      %1431 = vmatprep.mubr.f32.mxu0 0.0
      %1432 = vmatmul.mubr.f32.gmra.mxu0 %v443
      %v1433 = vpop.f32.mrf.mxu0
      %v1434 = vadd.f32 %v387, %v1433
      %v1435 = vpop.f32.mrf.mxu0
      %v1436 = vadd.f32 %v391, %v1435
      %1437 = vmatprep.mubr.f32.mxu0 0.0
      %1438 = vmatmul.mubr.f32.gmra.mxu0 %v446
      %v1439 = vpop.f32.mrf.mxu0
      %v1440 = vadd.f32 %v387, %v1439
      %v1441 = vpop.f32.mrf.mxu0
      %v1442 = vadd.f32 %v391, %v1441
      %1443 = vmatprep.mubr.f32.mxu0 0.0
      %1444 = vmatmul.mubr.f32.gmra.mxu0 %v449
      %v1445 = vpop.f32.mrf.mxu0
      %v1446 = vadd.f32 %v387, %v1445
      %v1447 = vpop.f32.mrf.mxu0
      %v1448 = vadd.f32 %v391, %v1447
      %1449 = vmatprep.mubr.f32.mxu0 0.0
      %1450 = vmatmul.mubr.f32.gmra.mxu0 %v452
      %v1451 = vpop.f32.mrf.mxu0
      %v1452 = vadd.f32 %v387, %v1451
      %v1453 = vpop.f32.mrf.mxu0
      %v1454 = vadd.f32 %v391, %v1453
      %1455 = vmatprep.mubr.f32.mxu0 0.0
      %1456 = vmatmul.mubr.f32.gmra.mxu0 %v455
      %v1457 = vpop.f32.mrf.mxu0
      %v1458 = vadd.f32 %v387, %v1457
      %v1459 = vpop.f32.mrf.mxu0
      %v1460 = vadd.f32 %v391, %v1459
      %1461 = vmatprep.mubr.f32.mxu0 0.0
      %1462 = vmatmul.mubr.f32.gmra.mxu0 %v458
      %v1463 = vpop.f32.mrf.mxu0
      %v1464 = vadd.f32 %v387, %v1463
      %v1465 = vpop.f32.mrf.mxu0
      %v1466 = vadd.f32 %v391, %v1465
      %1467 = vmatprep.mubr.f32.mxu0 0.0
      %1468 = vmatmul.mubr.f32.gmra.mxu0 %v461
      %v1469 = vpop.f32.mrf.mxu0
      %v1470 = vadd.f32 %v387, %v1469
      %v1471 = vpop.f32.mrf.mxu0
      %v1472 = vadd.f32 %v391, %v1471
      %1473 = vmatprep.mubr.f32.mxu0 0.0
      %1474 = vmatmul.mubr.f32.gmra.mxu0 %v464
      %v1475 = vpop.f32.mrf.mxu0
      %v1476 = vadd.f32 %v387, %v1475
      %v1477 = vpop.f32.mrf.mxu0
      %v1478 = vadd.f32 %v391, %v1477
      %1479 = vmatprep.mubr.f32.mxu0 0.0
      %1480 = vmatmul.mubr.f32.gmra.mxu0 %v467
      %v1481 = vpop.f32.mrf.mxu0
      %v1482 = vadd.f32 %v387, %v1481
      %v1483 = vpop.f32.mrf.mxu0
      %v1484 = vadd.f32 %v391, %v1483
      %1485 = vmatprep.mubr.f32.mxu0 0.0
      %1486 = vmatmul.mubr.f32.gmra.mxu0 %v470
      %v1487 = vpop.f32.mrf.mxu0
      %v1488 = vadd.f32 %v387, %v1487
      %v1489 = vpop.f32.mrf.mxu0
      %v1490 = vadd.f32 %v391, %v1489
      %1491 = vmatprep.mubr.f32.mxu0 0.0
      %1492 = vmatmul.mubr.f32.gmra.mxu0 %v473
      %v1493 = vpop.f32.mrf.mxu0
      %v1494 = vadd.f32 %v387, %v1493
      %v1495 = vpop.f32.mrf.mxu0
      %v1496 = vadd.f32 %v391, %v1495
      %1497 = vmatprep.mubr.f32.mxu0 0.0
      %1498 = vmatmul.mubr.f32.gmra.mxu0 %v476
      %v1499 = vpop.f32.mrf.mxu0
      %v1500 = vadd.f32 %v387, %v1499
      %v1501 = vpop.f32.mrf.mxu0
      %v1502 = vadd.f32 %v391, %v1501
      %1503 = vmatprep.mubr.f32.mxu0 0.0
      %1504 = vmatmul.mubr.f32.gmra.mxu0 %v479
      %v1505 = vpop.f32.mrf.mxu0
      %v1506 = vadd.f32 %v387, %v1505
      %v1507 = vpop.f32.mrf.mxu0
      %v1508 = vadd.f32 %v391, %v1507
      %1509 = vmatprep.mubr.f32.mxu0 0.0
      %1510 = vmatmul.mubr.f32.gmra.mxu0 %v482
      %v1511 = vpop.f32.mrf.mxu0
      %v1512 = vadd.f32 %v387, %v1511
      %v1513 = vpop.f32.mrf.mxu0
      %v1514 = vadd.f32 %v391, %v1513
      %1515 = vmatprep.mubr.f32.mxu0 0.0
      %1516 = vmatmul.mubr.f32.gmra.mxu0 %v485
      %v1517 = vpop.f32.mrf.mxu0
      %v1518 = vadd.f32 %v387, %v1517
      %v1519 = vpop.f32.mrf.mxu0
      %v1520 = vadd.f32 %v391, %v1519
      %1521 = vmatprep.mubr.f32.mxu0 0.0
      %1522 = vmatmul.mubr.f32.gmra.mxu0 %v488
      %v1523 = vpop.f32.mrf.mxu0
      %v1524 = vadd.f32 %v387, %v1523
      %v1525 = vpop.f32.mrf.mxu0
      %v1526 = vadd.f32 %v391, %v1525
      %1527 = vmatprep.mubr.f32.mxu0 0.0
      %1528 = vmatmul.mubr.f32.gmra.mxu0 %v491
      %v1529 = vpop.f32.mrf.mxu0
      %v1530 = vadd.f32 %v387, %v1529
      %v1531 = vpop.f32.mrf.mxu0
      %v1532 = vadd.f32 %v391, %v1531
      %1533 = vmatprep.mubr.f32.mxu0 0.0
      %1534 = vmatmul.mubr.f32.gmra.mxu0 %v494
      %v1535 = vpop.f32.mrf.mxu0
      %v1536 = vadd.f32 %v387, %v1535
      %v1537 = vpop.f32.mrf.mxu0
      %v1538 = vadd.f32 %v391, %v1537
      %1539 = vmatprep.mubr.f32.mxu0 0.0
      %1540 = vmatmul.mubr.f32.gmra.mxu0 %v497
      %v1541 = vpop.f32.mrf.mxu0
      %v1542 = vadd.f32 %v387, %v1541
      %v1543 = vpop.f32.mrf.mxu0
      %v1544 = vadd.f32 %v391, %v1543
      %1545 = vmatprep.mubr.f32.mxu0 0.0
      %1546 = vmatmul.mubr.f32.gmra.mxu0 %v500
      %v1547 = vpop.f32.mrf.mxu0
      %v1548 = vadd.f32 %v387, %v1547
      %v1549 = vpop.f32.mrf.mxu0
      %v1550 = vadd.f32 %v391, %v1549
      %1551 = vmatprep.mubr.f32.mxu0 0.0
      %1552 = vmatmul.mubr.f32.gmra.mxu0 %v503
      %v1553 = vpop.f32.mrf.mxu0
      %v1554 = vadd.f32 %v387, %v1553
      %v1555 = vpop.f32.mrf.mxu0
      %v1556 = vadd.f32 %v391, %v1555
      %1557 = vmatprep.mubr.f32.mxu0 0.0
      %1558 = vmatmul.mubr.f32.gmra.mxu0 %v506
      %v1559 = vpop.f32.mrf.mxu0
      %v1560 = vadd.f32 %v387, %v1559
      %v1561 = vpop.f32.mrf.mxu0
      %v1562 = vadd.f32 %v391, %v1561
      %1563 = vmatprep.mubr.f32.mxu0 0.0
      %1564 = vmatmul.mubr.f32.gmra.mxu0 %v509
      %v1565 = vpop.f32.mrf.mxu0
      %v1566 = vadd.f32 %v387, %v1565
      %v1567 = vpop.f32.mrf.mxu0
      %v1568 = vadd.f32 %v391, %v1567
      %1569 = vmatprep.mubr.f32.mxu0 0.0
      %1570 = vmatmul.mubr.f32.gmra.mxu0 %v512
      %v1571 = vpop.f32.mrf.mxu0
      %v1572 = vadd.f32 %v387, %v1571
      %v1573 = vpop.f32.mrf.mxu0
      %v1574 = vadd.f32 %v391, %v1573
      %1575 = vmatprep.mubr.f32.mxu0 0.0
      %1576 = vmatmul.mubr.f32.gmra.mxu0 %v515
      %v1577 = vpop.f32.mrf.mxu0
      %v1578 = vadd.f32 %v387, %v1577
      %v1579 = vpop.f32.mrf.mxu0
      %v1580 = vadd.f32 %v391, %v1579
      %1581 = vdwg.mxu0
      %1582 = vmatprep.subr.mxu0 0.0
      %1583 = vmatpush1.msra.mxu0 0.0
      %1584 = vmatprep.subr.mxu0 0.0
      %1585 = vmatpush1.msra.mxu0 0.0
      %1586 = vmatprep.subr.mxu0 0.0
      %1587 = vmatpush1.msra.mxu0 0.0
      %1588 = vmatprep.subr.mxu0 0.0
      %1589 = vmatpush1.msra.mxu0 0.0
      %1590 = vmatprep.subr.mxu0 0.0
      %1591 = vmatpush1.msra.mxu0 0.0
      %1592 = vmatprep.subr.mxu0 0.0
      %1593 = vmatpush1.msra.mxu0 0.0
      %1594 = vmatprep.subr.mxu0 0.0
      %1595 = vmatpush1.msra.mxu0 0.0
      %1596 = vmatprep.subr.mxu0 0.0
      %1597 = vmatpush1.msra.mxu0 0.0
      %1598 = vmatprep.subr.mxu0 0.0
      %1599 = vmatpush1.msra.mxu0 0.0
      %1600 = vmatprep.subr.mxu0 0.0
      %1601 = vmatpush1.msra.mxu0 0.0
      %1602 = vmatprep.subr.mxu0 0.0
      %1603 = vmatpush1.msra.mxu0 0.0
      %1604 = vmatprep.subr.mxu0 %v546
      %1605 = vmatpush1.msra.mxu0 %v543
      %1606 = vmatprep.subr.mxu0 %v341
      %1607 = vmatpush1.msra.mxu0 %v340
      %1608 = vmatprep.subr.mxu0 %v329
      %1609 = vmatpush1.msra.mxu0 %v328
      %1610 = vmatprep.subr.mxu0 %v317
      %1611 = vmatpush1.msra.mxu0 %v316
      %1612 = vmatprep.subr.mxu0 %v305
      %1613 = vmatpush1.msra.mxu0 %v304
      %1614 = vmatprep.subr.mxu0 0.0
      %1615 = vmatpush2.msra.mxu0 0.0
      %1616 = vmatprep.subr.mxu0 0.0
      %1617 = vmatpush2.msra.mxu0 0.0
      %1618 = vmatprep.subr.mxu0 0.0
      %1619 = vmatpush2.msra.mxu0 0.0
      %1620 = vmatprep.subr.mxu0 0.0
      %1621 = vmatpush2.msra.mxu0 0.0
      %1622 = vmatprep.subr.mxu0 0.0
      %1623 = vmatpush2.msra.mxu0 0.0
      %1624 = vmatprep.subr.mxu0 0.0
      %1625 = vmatpush2.msra.mxu0 0.0
      %1626 = vmatprep.subr.mxu0 0.0
      %1627 = vmatpush2.msra.mxu0 0.0
      %1628 = vmatprep.subr.mxu0 0.0
      %1629 = vmatpush2.msra.mxu0 0.0
      %1630 = vmatprep.subr.mxu0 0.0
      %1631 = vmatpush2.msra.mxu0 0.0
      %1632 = vmatprep.subr.mxu0 0.0
      %1633 = vmatpush2.msra.mxu0 0.0
      %1634 = vmatprep.subr.mxu0 0.0
      %1635 = vmatpush2.msra.mxu0 0.0
      %1636 = vmatprep.subr.mxu0 0.0
      %1637 = vmatpush2.msra.mxu0 0.0
      %1638 = vmatprep.subr.mxu0 0.0
      %1639 = vmatpush2.msra.mxu0 0.0
      %1640 = vmatprep.subr.mxu0 0.0
      %1641 = vmatpush2.msra.mxu0 0.0
      %1642 = vmatprep.subr.mxu0 0.0
      %1643 = vmatpush2.msra.mxu0 0.0
      %1644 = vmatprep.subr.mxu0 0.0
      %1645 = vmatpush2.msra.mxu0 0.0
      %1646 = vmatprep.mubr.f32.mxu0 0.0
      %1647 = vmatmul.mubr.f32.gmra.mxu0 %v422
      %v1648 = vpop.f32.mrf.mxu0
      %v1649 = vadd.f32 %v395, %v1648
      %v1650 = vpop.f32.mrf.mxu0
      %v1651 = vadd.f32 %v399, %v1650
      %1652 = vmatprep.mubr.f32.mxu0 0.0
      %1653 = vmatmul.mubr.f32.gmra.mxu0 %v425
      %v1654 = vpop.f32.mrf.mxu0
      %v1655 = vadd.f32 %v395, %v1654
      %v1656 = vpop.f32.mrf.mxu0
      %v1657 = vadd.f32 %v399, %v1656
      %1658 = vmatprep.mubr.f32.mxu0 0.0
      %1659 = vmatmul.mubr.f32.gmra.mxu0 %v428
      %v1660 = vpop.f32.mrf.mxu0
      %v1661 = vadd.f32 %v395, %v1660
      %v1662 = vpop.f32.mrf.mxu0
      %v1663 = vadd.f32 %v399, %v1662
      %1664 = vmatprep.mubr.f32.mxu0 0.0
      %1665 = vmatmul.mubr.f32.gmra.mxu0 %v431
      %v1666 = vpop.f32.mrf.mxu0
      %v1667 = vadd.f32 %v395, %v1666
      %v1668 = vpop.f32.mrf.mxu0
      %v1669 = vadd.f32 %v399, %v1668
      %1670 = vmatprep.mubr.f32.mxu0 0.0
      %1671 = vmatmul.mubr.f32.gmra.mxu0 %v434
      %v1672 = vpop.f32.mrf.mxu0
      %v1673 = vadd.f32 %v395, %v1672
      %v1674 = vpop.f32.mrf.mxu0
      %v1675 = vadd.f32 %v399, %v1674
      %1676 = vmatprep.mubr.f32.mxu0 0.0
      %1677 = vmatmul.mubr.f32.gmra.mxu0 %v437
      %v1678 = vpop.f32.mrf.mxu0
      %v1679 = vadd.f32 %v395, %v1678
      %v1680 = vpop.f32.mrf.mxu0
      %v1681 = vadd.f32 %v399, %v1680
      %1682 = vmatprep.mubr.f32.mxu0 0.0
      %1683 = vmatmul.mubr.f32.gmra.mxu0 %v440
      %v1684 = vpop.f32.mrf.mxu0
      %v1685 = vadd.f32 %v395, %v1684
      %v1686 = vpop.f32.mrf.mxu0
      %v1687 = vadd.f32 %v399, %v1686
      %1688 = vmatprep.mubr.f32.mxu0 0.0
      %1689 = vmatmul.mubr.f32.gmra.mxu0 %v443
      %v1690 = vpop.f32.mrf.mxu0
      %v1691 = vadd.f32 %v395, %v1690
      %v1692 = vpop.f32.mrf.mxu0
      %v1693 = vadd.f32 %v399, %v1692
      %1694 = vmatprep.mubr.f32.mxu0 0.0
      %1695 = vmatmul.mubr.f32.gmra.mxu0 %v446
      %v1696 = vpop.f32.mrf.mxu0
      %v1697 = vadd.f32 %v395, %v1696
      %v1698 = vpop.f32.mrf.mxu0
      %v1699 = vadd.f32 %v399, %v1698
      %1700 = vmatprep.mubr.f32.mxu0 0.0
      %1701 = vmatmul.mubr.f32.gmra.mxu0 %v449
      %v1702 = vpop.f32.mrf.mxu0
      %v1703 = vadd.f32 %v395, %v1702
      %v1704 = vpop.f32.mrf.mxu0
      %v1705 = vadd.f32 %v399, %v1704
      %1706 = vmatprep.mubr.f32.mxu0 0.0
      %1707 = vmatmul.mubr.f32.gmra.mxu0 %v452
      %v1708 = vpop.f32.mrf.mxu0
      %v1709 = vadd.f32 %v395, %v1708
      %v1710 = vpop.f32.mrf.mxu0
      %v1711 = vadd.f32 %v399, %v1710
      %1712 = vmatprep.mubr.f32.mxu0 0.0
      %1713 = vmatmul.mubr.f32.gmra.mxu0 %v455
      %v1714 = vpop.f32.mrf.mxu0
      %v1715 = vadd.f32 %v395, %v1714
      %v1716 = vpop.f32.mrf.mxu0
      %v1717 = vadd.f32 %v399, %v1716
      %1718 = vmatprep.mubr.f32.mxu0 0.0
      %1719 = vmatmul.mubr.f32.gmra.mxu0 %v458
      %v1720 = vpop.f32.mrf.mxu0
      %v1721 = vadd.f32 %v395, %v1720
      %v1722 = vpop.f32.mrf.mxu0
      %v1723 = vadd.f32 %v399, %v1722
      %1724 = vmatprep.mubr.f32.mxu0 0.0
      %1725 = vmatmul.mubr.f32.gmra.mxu0 %v461
      %v1726 = vpop.f32.mrf.mxu0
      %v1727 = vadd.f32 %v395, %v1726
      %v1728 = vpop.f32.mrf.mxu0
      %v1729 = vadd.f32 %v399, %v1728
      %1730 = vmatprep.mubr.f32.mxu0 0.0
      %1731 = vmatmul.mubr.f32.gmra.mxu0 %v464
      %v1732 = vpop.f32.mrf.mxu0
      %v1733 = vadd.f32 %v395, %v1732
      %v1734 = vpop.f32.mrf.mxu0
      %v1735 = vadd.f32 %v399, %v1734
      %1736 = vmatprep.mubr.f32.mxu0 0.0
      %1737 = vmatmul.mubr.f32.gmra.mxu0 %v467
      %v1738 = vpop.f32.mrf.mxu0
      %v1739 = vadd.f32 %v395, %v1738
      %v1740 = vpop.f32.mrf.mxu0
      %v1741 = vadd.f32 %v399, %v1740
      %1742 = vmatprep.mubr.f32.mxu0 0.0
      %1743 = vmatmul.mubr.f32.gmra.mxu0 %v470
      %v1744 = vpop.f32.mrf.mxu0
      %v1745 = vadd.f32 %v395, %v1744
      %v1746 = vpop.f32.mrf.mxu0
      %v1747 = vadd.f32 %v399, %v1746
      %1748 = vmatprep.mubr.f32.mxu0 0.0
      %1749 = vmatmul.mubr.f32.gmra.mxu0 %v473
      %v1750 = vpop.f32.mrf.mxu0
      %v1751 = vadd.f32 %v395, %v1750
      %v1752 = vpop.f32.mrf.mxu0
      %v1753 = vadd.f32 %v399, %v1752
      %1754 = vmatprep.mubr.f32.mxu0 0.0
      %1755 = vmatmul.mubr.f32.gmra.mxu0 %v476
      %v1756 = vpop.f32.mrf.mxu0
      %v1757 = vadd.f32 %v395, %v1756
      %v1758 = vpop.f32.mrf.mxu0
      %v1759 = vadd.f32 %v399, %v1758
      %1760 = vmatprep.mubr.f32.mxu0 0.0
      %1761 = vmatmul.mubr.f32.gmra.mxu0 %v479
      %v1762 = vpop.f32.mrf.mxu0
      %v1763 = vadd.f32 %v395, %v1762
      %v1764 = vpop.f32.mrf.mxu0
      %v1765 = vadd.f32 %v399, %v1764
      %1766 = vmatprep.mubr.f32.mxu0 0.0
      %1767 = vmatmul.mubr.f32.gmra.mxu0 %v482
      %v1768 = vpop.f32.mrf.mxu0
      %v1769 = vadd.f32 %v395, %v1768
      %v1770 = vpop.f32.mrf.mxu0
      %v1771 = vadd.f32 %v399, %v1770
      %1772 = vmatprep.mubr.f32.mxu0 0.0
      %1773 = vmatmul.mubr.f32.gmra.mxu0 %v485
      %v1774 = vpop.f32.mrf.mxu0
      %v1775 = vadd.f32 %v395, %v1774
      %v1776 = vpop.f32.mrf.mxu0
      %v1777 = vadd.f32 %v399, %v1776
      %1778 = vmatprep.mubr.f32.mxu0 0.0
      %1779 = vmatmul.mubr.f32.gmra.mxu0 %v488
      %v1780 = vpop.f32.mrf.mxu0
      %v1781 = vadd.f32 %v395, %v1780
      %v1782 = vpop.f32.mrf.mxu0
      %v1783 = vadd.f32 %v399, %v1782
      %1784 = vmatprep.mubr.f32.mxu0 0.0
      %1785 = vmatmul.mubr.f32.gmra.mxu0 %v491
      %v1786 = vpop.f32.mrf.mxu0
      %v1787 = vadd.f32 %v395, %v1786
      %v1788 = vpop.f32.mrf.mxu0
      %v1789 = vadd.f32 %v399, %v1788
      %1790 = vmatprep.mubr.f32.mxu0 0.0
      %1791 = vmatmul.mubr.f32.gmra.mxu0 %v494
      %v1792 = vpop.f32.mrf.mxu0
      %v1793 = vadd.f32 %v395, %v1792
      %v1794 = vpop.f32.mrf.mxu0
      %v1795 = vadd.f32 %v399, %v1794
      %1796 = vmatprep.mubr.f32.mxu0 0.0
      %1797 = vmatmul.mubr.f32.gmra.mxu0 %v497
      %v1798 = vpop.f32.mrf.mxu0
      %v1799 = vadd.f32 %v395, %v1798
      %v1800 = vpop.f32.mrf.mxu0
      %v1801 = vadd.f32 %v399, %v1800
      %1802 = vmatprep.mubr.f32.mxu0 0.0
      %1803 = vmatmul.mubr.f32.gmra.mxu0 %v500
      %v1804 = vpop.f32.mrf.mxu0
      %v1805 = vadd.f32 %v395, %v1804
      %v1806 = vpop.f32.mrf.mxu0
      %v1807 = vadd.f32 %v399, %v1806
      %1808 = vmatprep.mubr.f32.mxu0 0.0
      %1809 = vmatmul.mubr.f32.gmra.mxu0 %v503
      %v1810 = vpop.f32.mrf.mxu0
      %v1811 = vadd.f32 %v395, %v1810
      %v1812 = vpop.f32.mrf.mxu0
      %v1813 = vadd.f32 %v399, %v1812
      %1814 = vmatprep.mubr.f32.mxu0 0.0
      %1815 = vmatmul.mubr.f32.gmra.mxu0 %v506
      %v1816 = vpop.f32.mrf.mxu0
      %v1817 = vadd.f32 %v395, %v1816
      %v1818 = vpop.f32.mrf.mxu0
      %v1819 = vadd.f32 %v399, %v1818
      %1820 = vmatprep.mubr.f32.mxu0 0.0
      %1821 = vmatmul.mubr.f32.gmra.mxu0 %v509
      %v1822 = vpop.f32.mrf.mxu0
      %v1823 = vadd.f32 %v395, %v1822
      %v1824 = vpop.f32.mrf.mxu0
      %v1825 = vadd.f32 %v399, %v1824
      %1826 = vmatprep.mubr.f32.mxu0 0.0
      %1827 = vmatmul.mubr.f32.gmra.mxu0 %v512
      %v1828 = vpop.f32.mrf.mxu0
      %v1829 = vadd.f32 %v395, %v1828
      %v1830 = vpop.f32.mrf.mxu0
      %v1831 = vadd.f32 %v399, %v1830
      %1832 = vmatprep.mubr.f32.mxu0 0.0
      %1833 = vmatmul.mubr.f32.gmra.mxu0 %v515
      %v1834 = vpop.f32.mrf.mxu0
      %v1835 = vadd.f32 %v395, %v1834
      %v1836 = vpop.f32.mrf.mxu0
      %v1837 = vadd.f32 %v399, %v1836
      %1838 = vdwg.mxu0
      %1839 = vmatprep.subr.mxu0 0.0
      %1840 = vmatpush1.msra.mxu0 0.0
      %1841 = vmatprep.subr.mxu0 0.0
      %1842 = vmatpush1.msra.mxu0 0.0
      %1843 = vmatprep.subr.mxu0 0.0
      %1844 = vmatpush1.msra.mxu0 0.0
      %1845 = vmatprep.subr.mxu0 0.0
      %1846 = vmatpush1.msra.mxu0 0.0
      %1847 = vmatprep.subr.mxu0 0.0
      %1848 = vmatpush1.msra.mxu0 0.0
      %1849 = vmatprep.subr.mxu0 0.0
      %1850 = vmatpush1.msra.mxu0 0.0
      %1851 = vmatprep.subr.mxu0 0.0
      %1852 = vmatpush1.msra.mxu0 0.0
      %1853 = vmatprep.subr.mxu0 0.0
      %1854 = vmatpush1.msra.mxu0 0.0
      %1855 = vmatprep.subr.mxu0 0.0
      %1856 = vmatpush1.msra.mxu0 0.0
      %1857 = vmatprep.subr.mxu0 0.0
      %1858 = vmatpush1.msra.mxu0 0.0
      %1859 = vmatprep.subr.mxu0 0.0
      %1860 = vmatpush1.msra.mxu0 0.0
      %1861 = vmatprep.subr.mxu0 %v552
      %1862 = vmatpush1.msra.mxu0 %v549
      %1863 = vmatprep.subr.mxu0 %v343
      %1864 = vmatpush1.msra.mxu0 %v342
      %1865 = vmatprep.subr.mxu0 %v331
      %1866 = vmatpush1.msra.mxu0 %v330
      %1867 = vmatprep.subr.mxu0 %v319
      %1868 = vmatpush1.msra.mxu0 %v318
      %1869 = vmatprep.subr.mxu0 %v307
      %1870 = vmatpush1.msra.mxu0 %v306
      %1871 = vmatprep.subr.mxu0 0.0
      %1872 = vmatpush2.msra.mxu0 0.0
      %1873 = vmatprep.subr.mxu0 0.0
      %1874 = vmatpush2.msra.mxu0 0.0
      %1875 = vmatprep.subr.mxu0 0.0
      %1876 = vmatpush2.msra.mxu0 0.0
      %1877 = vmatprep.subr.mxu0 0.0
      %1878 = vmatpush2.msra.mxu0 0.0
      %1879 = vmatprep.subr.mxu0 0.0
      %1880 = vmatpush2.msra.mxu0 0.0
      %1881 = vmatprep.subr.mxu0 0.0
      %1882 = vmatpush2.msra.mxu0 0.0
      %1883 = vmatprep.subr.mxu0 0.0
      %1884 = vmatpush2.msra.mxu0 0.0
      %1885 = vmatprep.subr.mxu0 0.0
      %1886 = vmatpush2.msra.mxu0 0.0
      %1887 = vmatprep.subr.mxu0 0.0
      %1888 = vmatpush2.msra.mxu0 0.0
      %1889 = vmatprep.subr.mxu0 0.0
      %1890 = vmatpush2.msra.mxu0 0.0
      %1891 = vmatprep.subr.mxu0 0.0
      %1892 = vmatpush2.msra.mxu0 0.0
      %1893 = vmatprep.subr.mxu0 0.0
      %1894 = vmatpush2.msra.mxu0 0.0
      %1895 = vmatprep.subr.mxu0 0.0
      %1896 = vmatpush2.msra.mxu0 0.0
      %1897 = vmatprep.subr.mxu0 0.0
      %1898 = vmatpush2.msra.mxu0 0.0
      %1899 = vmatprep.subr.mxu0 0.0
      %1900 = vmatpush2.msra.mxu0 0.0
      %1901 = vmatprep.subr.mxu0 0.0
      %1902 = vmatpush2.msra.mxu0 0.0
      %1903 = vmatprep.mubr.f32.mxu0 0.0
      %1904 = vmatmul.mubr.f32.gmra.mxu0 %v422
      %v1905 = vpop.f32.mrf.mxu0
      %v1906 = vadd.f32 %v403, %v1905
      %v1907 = vpop.f32.mrf.mxu0
      %v1908 = vadd.f32 %v407, %v1907
      %1909 = vmatprep.mubr.f32.mxu0 0.0
      %1910 = vmatmul.mubr.f32.gmra.mxu0 %v425
      %v1911 = vpop.f32.mrf.mxu0
      %v1912 = vadd.f32 %v403, %v1911
      %v1913 = vpop.f32.mrf.mxu0
      %v1914 = vadd.f32 %v407, %v1913
      %1915 = vmatprep.mubr.f32.mxu0 0.0
      %1916 = vmatmul.mubr.f32.gmra.mxu0 %v428
      %v1917 = vpop.f32.mrf.mxu0
      %v1918 = vadd.f32 %v403, %v1917
      %v1919 = vpop.f32.mrf.mxu0
      %v1920 = vadd.f32 %v407, %v1919
      %1921 = vmatprep.mubr.f32.mxu0 0.0
      %1922 = vmatmul.mubr.f32.gmra.mxu0 %v431
      %v1923 = vpop.f32.mrf.mxu0
      %v1924 = vadd.f32 %v403, %v1923
      %v1925 = vpop.f32.mrf.mxu0
      %v1926 = vadd.f32 %v407, %v1925
      %1927 = vmatprep.mubr.f32.mxu0 0.0
      %1928 = vmatmul.mubr.f32.gmra.mxu0 %v434
      %v1929 = vpop.f32.mrf.mxu0
      %v1930 = vadd.f32 %v403, %v1929
      %v1931 = vpop.f32.mrf.mxu0
      %v1932 = vadd.f32 %v407, %v1931
      %1933 = vmatprep.mubr.f32.mxu0 0.0
      %1934 = vmatmul.mubr.f32.gmra.mxu0 %v437
      %v1935 = vpop.f32.mrf.mxu0
      %v1936 = vadd.f32 %v403, %v1935
      %v1937 = vpop.f32.mrf.mxu0
      %v1938 = vadd.f32 %v407, %v1937
      %1939 = vmatprep.mubr.f32.mxu0 0.0
      %1940 = vmatmul.mubr.f32.gmra.mxu0 %v440
      %v1941 = vpop.f32.mrf.mxu0
      %v1942 = vadd.f32 %v403, %v1941
      %v1943 = vpop.f32.mrf.mxu0
      %v1944 = vadd.f32 %v407, %v1943
      %1945 = vmatprep.mubr.f32.mxu0 0.0
      %1946 = vmatmul.mubr.f32.gmra.mxu0 %v443
      %v1947 = vpop.f32.mrf.mxu0
      %v1948 = vadd.f32 %v403, %v1947
      %v1949 = vpop.f32.mrf.mxu0
      %v1950 = vadd.f32 %v407, %v1949
      %1951 = vmatprep.mubr.f32.mxu0 0.0
      %1952 = vmatmul.mubr.f32.gmra.mxu0 %v446
      %v1953 = vpop.f32.mrf.mxu0
      %v1954 = vadd.f32 %v403, %v1953
      %v1955 = vpop.f32.mrf.mxu0
      %v1956 = vadd.f32 %v407, %v1955
      %1957 = vmatprep.mubr.f32.mxu0 0.0
      %1958 = vmatmul.mubr.f32.gmra.mxu0 %v449
      %v1959 = vpop.f32.mrf.mxu0
      %v1960 = vadd.f32 %v403, %v1959
      %v1961 = vpop.f32.mrf.mxu0
      %v1962 = vadd.f32 %v407, %v1961
      %1963 = vmatprep.mubr.f32.mxu0 0.0
      %1964 = vmatmul.mubr.f32.gmra.mxu0 %v452
      %v1965 = vpop.f32.mrf.mxu0
      %v1966 = vadd.f32 %v403, %v1965
      %v1967 = vpop.f32.mrf.mxu0
      %v1968 = vadd.f32 %v407, %v1967
      %1969 = vmatprep.mubr.f32.mxu0 0.0
      %1970 = vmatmul.mubr.f32.gmra.mxu0 %v455
      %v1971 = vpop.f32.mrf.mxu0
      %v1972 = vadd.f32 %v403, %v1971
      %v1973 = vpop.f32.mrf.mxu0
      %v1974 = vadd.f32 %v407, %v1973
      %1975 = vmatprep.mubr.f32.mxu0 0.0
      %1976 = vmatmul.mubr.f32.gmra.mxu0 %v458
      %v1977 = vpop.f32.mrf.mxu0
      %v1978 = vadd.f32 %v403, %v1977
      %v1979 = vpop.f32.mrf.mxu0
      %v1980 = vadd.f32 %v407, %v1979
      %1981 = vmatprep.mubr.f32.mxu0 0.0
      %1982 = vmatmul.mubr.f32.gmra.mxu0 %v461
      %v1983 = vpop.f32.mrf.mxu0
      %v1984 = vadd.f32 %v403, %v1983
      %v1985 = vpop.f32.mrf.mxu0
      %v1986 = vadd.f32 %v407, %v1985
      %1987 = vmatprep.mubr.f32.mxu0 0.0
      %1988 = vmatmul.mubr.f32.gmra.mxu0 %v464
      %v1989 = vpop.f32.mrf.mxu0
      %v1990 = vadd.f32 %v403, %v1989
      %v1991 = vpop.f32.mrf.mxu0
      %v1992 = vadd.f32 %v407, %v1991
      %1993 = vmatprep.mubr.f32.mxu0 0.0
      %1994 = vmatmul.mubr.f32.gmra.mxu0 %v467
      %v1995 = vpop.f32.mrf.mxu0
      %v1996 = vadd.f32 %v403, %v1995
      %v1997 = vpop.f32.mrf.mxu0
      %v1998 = vadd.f32 %v407, %v1997
      %1999 = vmatprep.mubr.f32.mxu0 0.0
      %2000 = vmatmul.mubr.f32.gmra.mxu0 %v470
      %v2001 = vpop.f32.mrf.mxu0
      %v2002 = vadd.f32 %v403, %v2001
      %v2003 = vpop.f32.mrf.mxu0
      %v2004 = vadd.f32 %v407, %v2003
      %2005 = vmatprep.mubr.f32.mxu0 0.0
      %2006 = vmatmul.mubr.f32.gmra.mxu0 %v473
      %v2007 = vpop.f32.mrf.mxu0
      %v2008 = vadd.f32 %v403, %v2007
      %v2009 = vpop.f32.mrf.mxu0
      %v2010 = vadd.f32 %v407, %v2009
      %2011 = vmatprep.mubr.f32.mxu0 0.0
      %2012 = vmatmul.mubr.f32.gmra.mxu0 %v476
      %v2013 = vpop.f32.mrf.mxu0
      %v2014 = vadd.f32 %v403, %v2013
      %v2015 = vpop.f32.mrf.mxu0
      %v2016 = vadd.f32 %v407, %v2015
      %2017 = vmatprep.mubr.f32.mxu0 0.0
      %2018 = vmatmul.mubr.f32.gmra.mxu0 %v479
      %v2019 = vpop.f32.mrf.mxu0
      %v2020 = vadd.f32 %v403, %v2019
      %v2021 = vpop.f32.mrf.mxu0
      %v2022 = vadd.f32 %v407, %v2021
      %2023 = vmatprep.mubr.f32.mxu0 0.0
      %2024 = vmatmul.mubr.f32.gmra.mxu0 %v482
      %v2025 = vpop.f32.mrf.mxu0
      %v2026 = vadd.f32 %v403, %v2025
      %v2027 = vpop.f32.mrf.mxu0
      %v2028 = vadd.f32 %v407, %v2027
      %2029 = vmatprep.mubr.f32.mxu0 0.0
      %2030 = vmatmul.mubr.f32.gmra.mxu0 %v485
      %v2031 = vpop.f32.mrf.mxu0
      %v2032 = vadd.f32 %v403, %v2031
      %v2033 = vpop.f32.mrf.mxu0
      %v2034 = vadd.f32 %v407, %v2033
      %2035 = vmatprep.mubr.f32.mxu0 0.0
      %2036 = vmatmul.mubr.f32.gmra.mxu0 %v488
      %v2037 = vpop.f32.mrf.mxu0
      %v2038 = vadd.f32 %v403, %v2037
      %v2039 = vpop.f32.mrf.mxu0
      %v2040 = vadd.f32 %v407, %v2039
      %2041 = vmatprep.mubr.f32.mxu0 0.0
      %2042 = vmatmul.mubr.f32.gmra.mxu0 %v491
      %v2043 = vpop.f32.mrf.mxu0
      %v2044 = vadd.f32 %v403, %v2043
      %v2045 = vpop.f32.mrf.mxu0
      %v2046 = vadd.f32 %v407, %v2045
      %2047 = vmatprep.mubr.f32.mxu0 0.0
      %2048 = vmatmul.mubr.f32.gmra.mxu0 %v494
      %v2049 = vpop.f32.mrf.mxu0
      %v2050 = vadd.f32 %v403, %v2049
      %v2051 = vpop.f32.mrf.mxu0
      %v2052 = vadd.f32 %v407, %v2051
      %2053 = vmatprep.mubr.f32.mxu0 0.0
      %2054 = vmatmul.mubr.f32.gmra.mxu0 %v497
      %v2055 = vpop.f32.mrf.mxu0
      %v2056 = vadd.f32 %v403, %v2055
      %v2057 = vpop.f32.mrf.mxu0
      %v2058 = vadd.f32 %v407, %v2057
      %2059 = vmatprep.mubr.f32.mxu0 0.0
      %2060 = vmatmul.mubr.f32.gmra.mxu0 %v500
      %v2061 = vpop.f32.mrf.mxu0
      %v2062 = vadd.f32 %v403, %v2061
      %v2063 = vpop.f32.mrf.mxu0
      %v2064 = vadd.f32 %v407, %v2063
      %2065 = vmatprep.mubr.f32.mxu0 0.0
      %2066 = vmatmul.mubr.f32.gmra.mxu0 %v503
      %v2067 = vpop.f32.mrf.mxu0
      %v2068 = vadd.f32 %v403, %v2067
      %v2069 = vpop.f32.mrf.mxu0
      %v2070 = vadd.f32 %v407, %v2069
      %2071 = vmatprep.mubr.f32.mxu0 0.0
      %2072 = vmatmul.mubr.f32.gmra.mxu0 %v506
      %v2073 = vpop.f32.mrf.mxu0
      %v2074 = vadd.f32 %v403, %v2073
      %v2075 = vpop.f32.mrf.mxu0
      %v2076 = vadd.f32 %v407, %v2075
      %2077 = vmatprep.mubr.f32.mxu0 0.0
      %2078 = vmatmul.mubr.f32.gmra.mxu0 %v509
      %v2079 = vpop.f32.mrf.mxu0
      %v2080 = vadd.f32 %v403, %v2079
      %v2081 = vpop.f32.mrf.mxu0
      %v2082 = vadd.f32 %v407, %v2081
      %2083 = vmatprep.mubr.f32.mxu0 0.0
      %2084 = vmatmul.mubr.f32.gmra.mxu0 %v512
      %v2085 = vpop.f32.mrf.mxu0
      %v2086 = vadd.f32 %v403, %v2085
      %v2087 = vpop.f32.mrf.mxu0
      %v2088 = vadd.f32 %v407, %v2087
      %2089 = vmatprep.mubr.f32.mxu0 0.0
      %2090 = vmatmul.mubr.f32.gmra.mxu0 %v515
      %v2091 = vpop.f32.mrf.mxu0
      %v2092 = vadd.f32 %v403, %v2091
      %v2093 = vpop.f32.mrf.mxu0
      %v2094 = vadd.f32 %v407, %v2093
      %2095 = vdwg.mxu0
      %v2096 = vmax.f32 %v621, 0.0
      %v2097 = vmax.f32 %v623, 0.0
      %v2098 = vmax.f32 %v878, 0.0
      %v2099 = vmax.f32 %v880, 0.0
      %v2100 = vmax.f32 %v1135, 0.0
      %v2101 = vmax.f32 %v1137, 0.0
      %v2102 = vmax.f32 %v1392, 0.0
      %v2103 = vmax.f32 %v1394, 0.0
      %v2104 = vmax.f32 %v1649, 0.0
      %v2105 = vmax.f32 %v1651, 0.0
      %v2106 = vmax.f32 %v1906, 0.0
      %v2107 = vmax.f32 %v1908, 0.0
      %v2108 = vmax.f32 %v627, 0.0
      %v2109 = vmax.f32 %v629, 0.0
      %v2110 = vmax.f32 %v884, 0.0
      %v2111 = vmax.f32 %v886, 0.0
      %v2112 = vmax.f32 %v1141, 0.0
      %v2113 = vmax.f32 %v1143, 0.0
      %v2114 = vmax.f32 %v1398, 0.0
      %v2115 = vmax.f32 %v1400, 0.0
      %v2116 = vmax.f32 %v1655, 0.0
      %v2117 = vmax.f32 %v1657, 0.0
      %v2118 = vmax.f32 %v1912, 0.0
      %v2119 = vmax.f32 %v1914, 0.0
      %v2120 = vmax.f32 %v633, 0.0
      %v2121 = vmax.f32 %v635, 0.0
      %v2122 = vmax.f32 %v890, 0.0
      %v2123 = vmax.f32 %v892, 0.0
      %v2124 = vmax.f32 %v1147, 0.0
      %v2125 = vmax.f32 %v1149, 0.0
      %v2126 = vmax.f32 %v1404, 0.0
      %v2127 = vmax.f32 %v1406, 0.0
      %v2128 = vmax.f32 %v1661, 0.0
      %v2129 = vmax.f32 %v1663, 0.0
      %v2130 = vmax.f32 %v1918, 0.0
      %v2131 = vmax.f32 %v1920, 0.0
      %v2132 = vmax.f32 %v639, 0.0
      %v2133 = vmax.f32 %v641, 0.0
      %v2134 = vmax.f32 %v896, 0.0
      %v2135 = vmax.f32 %v898, 0.0
      %v2136 = vmax.f32 %v1153, 0.0
      %v2137 = vmax.f32 %v1155, 0.0
      %v2138 = vmax.f32 %v1410, 0.0
      %v2139 = vmax.f32 %v1412, 0.0
      %v2140 = vmax.f32 %v1667, 0.0
      %v2141 = vmax.f32 %v1669, 0.0
      %v2142 = vmax.f32 %v1924, 0.0
      %v2143 = vmax.f32 %v1926, 0.0
      %v2144 = vmax.f32 %v645, 0.0
      %v2145 = vmax.f32 %v647, 0.0
      %v2146 = vmax.f32 %v902, 0.0
      %v2147 = vmax.f32 %v904, 0.0
      %v2148 = vmax.f32 %v1159, 0.0
      %v2149 = vmax.f32 %v1161, 0.0
      %v2150 = vmax.f32 %v1416, 0.0
      %v2151 = vmax.f32 %v1418, 0.0
      %v2152 = vmax.f32 %v1673, 0.0
      %v2153 = vmax.f32 %v1675, 0.0
      %v2154 = vmax.f32 %v1930, 0.0
      %v2155 = vmax.f32 %v1932, 0.0
      %v2156 = vmax.f32 %v651, 0.0
      %v2157 = vmax.f32 %v653, 0.0
      %v2158 = vmax.f32 %v908, 0.0
      %v2159 = vmax.f32 %v910, 0.0
      %v2160 = vmax.f32 %v1165, 0.0
      %v2161 = vmax.f32 %v1167, 0.0
      %v2162 = vmax.f32 %v1422, 0.0
      %v2163 = vmax.f32 %v1424, 0.0
      %v2164 = vmax.f32 %v1679, 0.0
      %v2165 = vmax.f32 %v1681, 0.0
      %v2166 = vmax.f32 %v1936, 0.0
      %v2167 = vmax.f32 %v1938, 0.0
      %v2168 = vmax.f32 %v657, 0.0
      %v2169 = vmax.f32 %v659, 0.0
      %v2170 = vmax.f32 %v914, 0.0
      %v2171 = vmax.f32 %v916, 0.0
      %v2172 = vmax.f32 %v1171, 0.0
      %v2173 = vmax.f32 %v1173, 0.0
      %v2174 = vmax.f32 %v1428, 0.0
      %v2175 = vmax.f32 %v1430, 0.0
      %v2176 = vmax.f32 %v1685, 0.0
      %v2177 = vmax.f32 %v1687, 0.0
      %v2178 = vmax.f32 %v1942, 0.0
      %v2179 = vmax.f32 %v1944, 0.0
      %v2180 = vmax.f32 %v663, 0.0
      %v2181 = vmax.f32 %v665, 0.0
      %v2182 = vmax.f32 %v920, 0.0
      %v2183 = vmax.f32 %v922, 0.0
      %v2184 = vmax.f32 %v1177, 0.0
      %v2185 = vmax.f32 %v1179, 0.0
      %v2186 = vmax.f32 %v1434, 0.0
      %v2187 = vmax.f32 %v1436, 0.0
      %v2188 = vmax.f32 %v1691, 0.0
      %v2189 = vmax.f32 %v1693, 0.0
      %v2190 = vmax.f32 %v1948, 0.0
      %v2191 = vmax.f32 %v1950, 0.0
      %v2192 = vmax.f32 %v669, 0.0
      %v2193 = vmax.f32 %v671, 0.0
      %v2194 = vmax.f32 %v926, 0.0
      %v2195 = vmax.f32 %v928, 0.0
      %v2196 = vmax.f32 %v1183, 0.0
      %v2197 = vmax.f32 %v1185, 0.0
      %v2198 = vmax.f32 %v1440, 0.0
      %v2199 = vmax.f32 %v1442, 0.0
      %v2200 = vmax.f32 %v1697, 0.0
      %v2201 = vmax.f32 %v1699, 0.0
      %v2202 = vmax.f32 %v1954, 0.0
      %v2203 = vmax.f32 %v1956, 0.0
      %v2204 = vmax.f32 %v675, 0.0
      %v2205 = vmax.f32 %v677, 0.0
      %v2206 = vmax.f32 %v932, 0.0
      %v2207 = vmax.f32 %v934, 0.0
      %v2208 = vmax.f32 %v1189, 0.0
      %v2209 = vmax.f32 %v1191, 0.0
      %v2210 = vmax.f32 %v1446, 0.0
      %v2211 = vmax.f32 %v1448, 0.0
      %v2212 = vmax.f32 %v1703, 0.0
      %v2213 = vmax.f32 %v1705, 0.0
      %v2214 = vmax.f32 %v1960, 0.0
      %v2215 = vmax.f32 %v1962, 0.0
      %v2216 = vmax.f32 %v681, 0.0
      %v2217 = vmax.f32 %v683, 0.0
      %v2218 = vmax.f32 %v938, 0.0
      %v2219 = vmax.f32 %v940, 0.0
      %v2220 = vmax.f32 %v1195, 0.0
      %v2221 = vmax.f32 %v1197, 0.0
      %v2222 = vmax.f32 %v1452, 0.0
      %v2223 = vmax.f32 %v1454, 0.0
      %v2224 = vmax.f32 %v1709, 0.0
      %v2225 = vmax.f32 %v1711, 0.0
      %v2226 = vmax.f32 %v1966, 0.0
      %v2227 = vmax.f32 %v1968, 0.0
      %v2228 = vmax.f32 %v687, 0.0
      %v2229 = vmax.f32 %v689, 0.0
      %v2230 = vmax.f32 %v944, 0.0
      %v2231 = vmax.f32 %v946, 0.0
      %v2232 = vmax.f32 %v1201, 0.0
      %v2233 = vmax.f32 %v1203, 0.0
      %v2234 = vmax.f32 %v1458, 0.0
      %v2235 = vmax.f32 %v1460, 0.0
      %v2236 = vmax.f32 %v1715, 0.0
      %v2237 = vmax.f32 %v1717, 0.0
      %v2238 = vmax.f32 %v1972, 0.0
      %v2239 = vmax.f32 %v1974, 0.0
      %v2240 = vmax.f32 %v693, 0.0
      %v2241 = vmax.f32 %v695, 0.0
      %v2242 = vmax.f32 %v950, 0.0
      %v2243 = vmax.f32 %v952, 0.0
      %v2244 = vmax.f32 %v1207, 0.0
      %v2245 = vmax.f32 %v1209, 0.0
      %v2246 = vmax.f32 %v1464, 0.0
      %v2247 = vmax.f32 %v1466, 0.0
      %v2248 = vmax.f32 %v1721, 0.0
      %v2249 = vmax.f32 %v1723, 0.0
      %v2250 = vmax.f32 %v1978, 0.0
      %v2251 = vmax.f32 %v1980, 0.0
      %v2252 = vmax.f32 %v699, 0.0
      %v2253 = vmax.f32 %v701, 0.0
      %v2254 = vmax.f32 %v956, 0.0
      %v2255 = vmax.f32 %v958, 0.0
      %v2256 = vmax.f32 %v1213, 0.0
      %v2257 = vmax.f32 %v1215, 0.0
      %v2258 = vmax.f32 %v1470, 0.0
      %v2259 = vmax.f32 %v1472, 0.0
      %v2260 = vmax.f32 %v1727, 0.0
      %v2261 = vmax.f32 %v1729, 0.0
      %v2262 = vmax.f32 %v1984, 0.0
      %v2263 = vmax.f32 %v1986, 0.0
      %v2264 = vmax.f32 %v705, 0.0
      %v2265 = vmax.f32 %v707, 0.0
      %v2266 = vmax.f32 %v962, 0.0
      %v2267 = vmax.f32 %v964, 0.0
      %v2268 = vmax.f32 %v1219, 0.0
      %v2269 = vmax.f32 %v1221, 0.0
      %v2270 = vmax.f32 %v1476, 0.0
      %v2271 = vmax.f32 %v1478, 0.0
      %v2272 = vmax.f32 %v1733, 0.0
      %v2273 = vmax.f32 %v1735, 0.0
      %v2274 = vmax.f32 %v1990, 0.0
      %v2275 = vmax.f32 %v1992, 0.0
      %v2276 = vmax.f32 %v711, 0.0
      %v2277 = vmax.f32 %v713, 0.0
      %v2278 = vmax.f32 %v968, 0.0
      %v2279 = vmax.f32 %v970, 0.0
      %v2280 = vmax.f32 %v1225, 0.0
      %v2281 = vmax.f32 %v1227, 0.0
      %v2282 = vmax.f32 %v1482, 0.0
      %v2283 = vmax.f32 %v1484, 0.0
      %v2284 = vmax.f32 %v1739, 0.0
      %v2285 = vmax.f32 %v1741, 0.0
      %v2286 = vmax.f32 %v1996, 0.0
      %v2287 = vmax.f32 %v1998, 0.0
      %v2288 = vmax.f32 %v717, 0.0
      %v2289 = vmax.f32 %v719, 0.0
      %v2290 = vmax.f32 %v974, 0.0
      %v2291 = vmax.f32 %v976, 0.0
      %v2292 = vmax.f32 %v1231, 0.0
      %v2293 = vmax.f32 %v1233, 0.0
      %v2294 = vmax.f32 %v1488, 0.0
      %v2295 = vmax.f32 %v1490, 0.0
      %v2296 = vmax.f32 %v1745, 0.0
      %v2297 = vmax.f32 %v1747, 0.0
      %v2298 = vmax.f32 %v2002, 0.0
      %v2299 = vmax.f32 %v2004, 0.0
      %v2300 = vmax.f32 %v723, 0.0
      %v2301 = vmax.f32 %v725, 0.0
      %v2302 = vmax.f32 %v980, 0.0
      %v2303 = vmax.f32 %v982, 0.0
      %v2304 = vmax.f32 %v1237, 0.0
      %v2305 = vmax.f32 %v1239, 0.0
      %v2306 = vmax.f32 %v1494, 0.0
      %v2307 = vmax.f32 %v1496, 0.0
      %v2308 = vmax.f32 %v1751, 0.0
      %v2309 = vmax.f32 %v1753, 0.0
      %v2310 = vmax.f32 %v2008, 0.0
      %v2311 = vmax.f32 %v2010, 0.0
      %v2312 = vmax.f32 %v729, 0.0
      %v2313 = vmax.f32 %v731, 0.0
      %v2314 = vmax.f32 %v986, 0.0
      %v2315 = vmax.f32 %v988, 0.0
      %v2316 = vmax.f32 %v1243, 0.0
      %v2317 = vmax.f32 %v1245, 0.0
      %v2318 = vmax.f32 %v1500, 0.0
      %v2319 = vmax.f32 %v1502, 0.0
      %v2320 = vmax.f32 %v1757, 0.0
      %v2321 = vmax.f32 %v1759, 0.0
      %v2322 = vmax.f32 %v2014, 0.0
      %v2323 = vmax.f32 %v2016, 0.0
      %v2324 = vmax.f32 %v735, 0.0
      %v2325 = vmax.f32 %v737, 0.0
      %v2326 = vmax.f32 %v992, 0.0
      %v2327 = vmax.f32 %v994, 0.0
      %v2328 = vmax.f32 %v1249, 0.0
      %v2329 = vmax.f32 %v1251, 0.0
      %v2330 = vmax.f32 %v1506, 0.0
      %v2331 = vmax.f32 %v1508, 0.0
      %v2332 = vmax.f32 %v1763, 0.0
      %v2333 = vmax.f32 %v1765, 0.0
      %v2334 = vmax.f32 %v2020, 0.0
      %v2335 = vmax.f32 %v2022, 0.0
      %v2336 = vmax.f32 %v741, 0.0
      %v2337 = vmax.f32 %v743, 0.0
      %v2338 = vmax.f32 %v998, 0.0
      %v2339 = vmax.f32 %v1000, 0.0
      %v2340 = vmax.f32 %v1255, 0.0
      %v2341 = vmax.f32 %v1257, 0.0
      %v2342 = vmax.f32 %v1512, 0.0
      %v2343 = vmax.f32 %v1514, 0.0
      %v2344 = vmax.f32 %v1769, 0.0
      %v2345 = vmax.f32 %v1771, 0.0
      %v2346 = vmax.f32 %v2026, 0.0
      %v2347 = vmax.f32 %v2028, 0.0
      %v2348 = vmax.f32 %v747, 0.0
      %v2349 = vmax.f32 %v749, 0.0
      %v2350 = vmax.f32 %v1004, 0.0
      %v2351 = vmax.f32 %v1006, 0.0
      %v2352 = vmax.f32 %v1261, 0.0
      %v2353 = vmax.f32 %v1263, 0.0
      %v2354 = vmax.f32 %v1518, 0.0
      %v2355 = vmax.f32 %v1520, 0.0
      %v2356 = vmax.f32 %v1775, 0.0
      %v2357 = vmax.f32 %v1777, 0.0
      %v2358 = vmax.f32 %v2032, 0.0
      %v2359 = vmax.f32 %v2034, 0.0
      %v2360 = vmax.f32 %v753, 0.0
      %v2361 = vmax.f32 %v755, 0.0
      %v2362 = vmax.f32 %v1010, 0.0
      %v2363 = vmax.f32 %v1012, 0.0
      %v2364 = vmax.f32 %v1267, 0.0
      %v2365 = vmax.f32 %v1269, 0.0
      %v2366 = vmax.f32 %v1524, 0.0
      %v2367 = vmax.f32 %v1526, 0.0
      %v2368 = vmax.f32 %v1781, 0.0
      %v2369 = vmax.f32 %v1783, 0.0
      %v2370 = vmax.f32 %v2038, 0.0
      %v2371 = vmax.f32 %v2040, 0.0
      %v2372 = vmax.f32 %v759, 0.0
      %v2373 = vmax.f32 %v761, 0.0
      %v2374 = vmax.f32 %v1016, 0.0
      %v2375 = vmax.f32 %v1018, 0.0
      %v2376 = vmax.f32 %v1273, 0.0
      %v2377 = vmax.f32 %v1275, 0.0
      %v2378 = vmax.f32 %v1530, 0.0
      %v2379 = vmax.f32 %v1532, 0.0
      %v2380 = vmax.f32 %v1787, 0.0
      %v2381 = vmax.f32 %v1789, 0.0
      %v2382 = vmax.f32 %v2044, 0.0
      %v2383 = vmax.f32 %v2046, 0.0
      %v2384 = vmax.f32 %v765, 0.0
      %v2385 = vmax.f32 %v767, 0.0
      %v2386 = vmax.f32 %v1022, 0.0
      %v2387 = vmax.f32 %v1024, 0.0
      %v2388 = vmax.f32 %v1279, 0.0
      %v2389 = vmax.f32 %v1281, 0.0
      %v2390 = vmax.f32 %v1536, 0.0
      %v2391 = vmax.f32 %v1538, 0.0
      %v2392 = vmax.f32 %v1793, 0.0
      %v2393 = vmax.f32 %v1795, 0.0
      %v2394 = vmax.f32 %v2050, 0.0
      %v2395 = vmax.f32 %v2052, 0.0
      %v2396 = vmax.f32 %v771, 0.0
      %v2397 = vmax.f32 %v773, 0.0
      %v2398 = vmax.f32 %v1028, 0.0
      %v2399 = vmax.f32 %v1030, 0.0
      %v2400 = vmax.f32 %v1285, 0.0
      %v2401 = vmax.f32 %v1287, 0.0
      %v2402 = vmax.f32 %v1542, 0.0
      %v2403 = vmax.f32 %v1544, 0.0
      %v2404 = vmax.f32 %v1799, 0.0
      %v2405 = vmax.f32 %v1801, 0.0
      %v2406 = vmax.f32 %v2056, 0.0
      %v2407 = vmax.f32 %v2058, 0.0
      %v2408 = vmax.f32 %v777, 0.0
      %v2409 = vmax.f32 %v779, 0.0
      %v2410 = vmax.f32 %v1034, 0.0
      %v2411 = vmax.f32 %v1036, 0.0
      %v2412 = vmax.f32 %v1291, 0.0
      %v2413 = vmax.f32 %v1293, 0.0
      %v2414 = vmax.f32 %v1548, 0.0
      %v2415 = vmax.f32 %v1550, 0.0
      %v2416 = vmax.f32 %v1805, 0.0
      %v2417 = vmax.f32 %v1807, 0.0
      %v2418 = vmax.f32 %v2062, 0.0
      %v2419 = vmax.f32 %v2064, 0.0
      %v2420 = vmax.f32 %v783, 0.0
      %v2421 = vmax.f32 %v785, 0.0
      %v2422 = vmax.f32 %v1040, 0.0
      %v2423 = vmax.f32 %v1042, 0.0
      %v2424 = vmax.f32 %v1297, 0.0
      %v2425 = vmax.f32 %v1299, 0.0
      %v2426 = vmax.f32 %v1554, 0.0
      %v2427 = vmax.f32 %v1556, 0.0
      %v2428 = vmax.f32 %v1811, 0.0
      %v2429 = vmax.f32 %v1813, 0.0
      %v2430 = vmax.f32 %v2068, 0.0
      %v2431 = vmax.f32 %v2070, 0.0
      %v2432 = vmax.f32 %v789, 0.0
      %v2433 = vmax.f32 %v791, 0.0
      %v2434 = vmax.f32 %v1046, 0.0
      %v2435 = vmax.f32 %v1048, 0.0
      %v2436 = vmax.f32 %v1303, 0.0
      %v2437 = vmax.f32 %v1305, 0.0
      %v2438 = vmax.f32 %v1560, 0.0
      %v2439 = vmax.f32 %v1562, 0.0
      %v2440 = vmax.f32 %v1817, 0.0
      %v2441 = vmax.f32 %v1819, 0.0
      %v2442 = vmax.f32 %v2074, 0.0
      %v2443 = vmax.f32 %v2076, 0.0
      %v2444 = vmax.f32 %v795, 0.0
      %v2445 = vmax.f32 %v797, 0.0
      %v2446 = vmax.f32 %v1052, 0.0
      %v2447 = vmax.f32 %v1054, 0.0
      %v2448 = vmax.f32 %v1309, 0.0
      %v2449 = vmax.f32 %v1311, 0.0
      %v2450 = vmax.f32 %v1566, 0.0
      %v2451 = vmax.f32 %v1568, 0.0
      %v2452 = vmax.f32 %v1823, 0.0
      %v2453 = vmax.f32 %v1825, 0.0
      %v2454 = vmax.f32 %v2080, 0.0
      %v2455 = vmax.f32 %v2082, 0.0
      %v2456 = vmax.f32 %v801, 0.0
      %v2457 = vmax.f32 %v803, 0.0
      %v2458 = vmax.f32 %v1058, 0.0
      %v2459 = vmax.f32 %v1060, 0.0
      %v2460 = vmax.f32 %v1315, 0.0
      %v2461 = vmax.f32 %v1317, 0.0
      %v2462 = vmax.f32 %v1572, 0.0
      %v2463 = vmax.f32 %v1574, 0.0
      %v2464 = vmax.f32 %v1829, 0.0
      %v2465 = vmax.f32 %v1831, 0.0
      %v2466 = vmax.f32 %v2086, 0.0
      %v2467 = vmax.f32 %v2088, 0.0
      %v2468 = vmax.f32 %v807, 0.0
      %v2469 = vmax.f32 %v809, 0.0
      %v2470 = vmax.f32 %v1064, 0.0
      %v2471 = vmax.f32 %v1066, 0.0
      %v2472 = vmax.f32 %v1321, 0.0
      %v2473 = vmax.f32 %v1323, 0.0
      %v2474 = vmax.f32 %v1578, 0.0
      %v2475 = vmax.f32 %v1580, 0.0
      %v2476 = vmax.f32 %v1835, 0.0
      %v2477 = vmax.f32 %v1837, 0.0
      %v2478 = vmax.f32 %v2092, 0.0
      %v2479 = vmax.f32 %v2094, 0.0
      %v2480 = vld [vmem:[%s3] sm:$0xff]
      %v2481 = vld [vmem:[%s3 + $0x8] sm:$0xff]
      %v2482 = vld [vmem:[%s3 + $0x10] sm:$0xff]
      %v2483 = vld [vmem:[%s3 + $0x18] sm:$0xff]
      %v2484 = vld [vmem:[%s3 + $0x20] sm:$0xff]
      %v2485 = vld [vmem:[%s3 + $0x28] sm:$0xff]
      %v2486 = vld [vmem:[%s3 + $0x30] sm:$0xff]
      %v2487 = vld [vmem:[%s3 + $0x38] sm:$0xff]
      %v2488 = vld [vmem:[%s3 + $0x40] sm:$0xff]
      %v2489 = vld [vmem:[%s3 + $0x48] sm:$0xff]
      %v2490 = vld [vmem:[%s3 + $0x50] sm:$0xff]
      %v2491 = vld [vmem:[%s3 + $0x58] sm:$0xff]
      %v2492 = vld [vmem:[%s3 + $0x60] sm:$0xff]
      %v2493 = vld [vmem:[%s3 + $0x68] sm:$0xff]
      %v2494 = vld [vmem:[%s3 + $0x70] sm:$0xff]
      %v2495 = vld [vmem:[%s3 + $0x78] sm:$0xff]
      %v2496 = vld [vmem:[%s3 + $0x80] sm:$0xff]
      %v2497 = vld [vmem:[%s3 + $0x88] sm:$0xff]
      %v2498 = vld [vmem:[%s3 + $0x90] sm:$0xff]
      %v2499 = vld [vmem:[%s3 + $0x98] sm:$0xff]
      %v2500 = vld [vmem:[%s3 + $0xa0] sm:$0xff]
      %v2501 = vld [vmem:[%s3 + $0xa8] sm:$0xff]
      %v2502 = vld [vmem:[%s3 + $0xb0] sm:$0xff]
      %v2503 = vld [vmem:[%s3 + $0xb8] sm:$0xff]
      %v2504 = vld [vmem:[%s3 + $0xc0] sm:$0xff]
      %v2505 = vld [vmem:[%s3 + $0xc8] sm:$0xff]
      %v2506 = vld [vmem:[%s3 + $0xd0] sm:$0xff]
      %v2507 = vld [vmem:[%s3 + $0xd8] sm:$0xff]
      %v2508 = vld [vmem:[%s3 + $0xe0] sm:$0xff]
      %v2509 = vld [vmem:[%s3 + $0xe8] sm:$0xff]
      %v2510 = vld [vmem:[%s3 + $0xf0] sm:$0xff]
      %v2511 = vld [vmem:[%s3 + $0xf8] sm:$0xff]
      %v2512 = vld [vmem:[%s3 + $0x100] sm:$0xff]
      %v2513 = vld [vmem:[%s3 + $0x108] sm:$0xff]
      %v2514 = vld [vmem:[%s3 + $0x110] sm:$0xff]
      %v2515 = vld [vmem:[%s3 + $0x118] sm:$0xff]
      %v2516 = vld [vmem:[%s3 + $0x120] sm:$0xff]
      %v2517 = vld [vmem:[%s3 + $0x128] sm:$0xff]
      %v2518 = vld [vmem:[%s3 + $0x130] sm:$0xff]
      %v2519 = vld [vmem:[%s3 + $0x138] sm:$0xff]
      %v2520 = vld [vmem:[%s3 + $0x140] sm:$0xff]
      %v2521 = vld [vmem:[%s3 + $0x148] sm:$0xff]
      %v2522 = vld [vmem:[%s3 + $0x150] sm:$0xff]
      %v2523 = vld [vmem:[%s3 + $0x158] sm:$0xff]
      %v2524 = vld [vmem:[%s3 + $0x160] sm:$0xff]
      %v2525 = vld [vmem:[%s3 + $0x168] sm:$0xff]
      %v2526 = vld [vmem:[%s3 + $0x170] sm:$0xff]
      %v2527 = vld [vmem:[%s3 + $0x178] sm:$0xff]
      %v2528 = vld [vmem:[%s3 + $0x180] sm:$0xff]
      %v2529 = vld [vmem:[%s3 + $0x188] sm:$0xff]
      %v2530 = vld [vmem:[%s3 + $0x190] sm:$0xff]
      %v2531 = vld [vmem:[%s3 + $0x198] sm:$0xff]
      %v2532 = vld [vmem:[%s3 + $0x1a0] sm:$0xff]
      %v2533 = vld [vmem:[%s3 + $0x1a8] sm:$0xff]
      %v2534 = vld [vmem:[%s3 + $0x1b0] sm:$0xff]
      %v2535 = vld [vmem:[%s3 + $0x1b8] sm:$0xff]
      %v2536 = vld [vmem:[%s3 + $0x1c0] sm:$0xff]
      %v2537 = vld [vmem:[%s3 + $0x1c8] sm:$0xff]
      %v2538 = vld [vmem:[%s3 + $0x1d0] sm:$0xff]
      %v2539 = vld [vmem:[%s3 + $0x1d8] sm:$0xff]
      %v2540 = vld [vmem:[%s3 + $0x1e0] sm:$0xff]
      %v2541 = vld [vmem:[%s3 + $0x1e8] sm:$0xff]
      %v2542 = vld [vmem:[%s3 + $0x1f0] sm:$0xff]
      %v2543 = vld [vmem:[%s3 + $0x1f8] sm:$0xff]
      %v2544 = vld [vmem:[%s3 + $0x200] sm:$0xff]
      %v2545 = vld [vmem:[%s3 + $0x208] sm:$0xff]
      %v2546 = vld [vmem:[%s3 + $0x210] sm:$0xff]
      %v2547 = vld [vmem:[%s3 + $0x218] sm:$0xff]
      %v2548 = vld [vmem:[%s3 + $0x220] sm:$0xff]
      %v2549 = vld [vmem:[%s3 + $0x228] sm:$0xff]
      %v2550 = vld [vmem:[%s3 + $0x230] sm:$0xff]
      %v2551 = vld [vmem:[%s3 + $0x238] sm:$0xff]
      %v2552 = vld [vmem:[%s3 + $0x240] sm:$0xff]
      %v2553 = vld [vmem:[%s3 + $0x248] sm:$0xff]
      %v2554 = vld [vmem:[%s3 + $0x250] sm:$0xff]
      %v2555 = vld [vmem:[%s3 + $0x258] sm:$0xff]
      %v2556 = vld [vmem:[%s3 + $0x260] sm:$0xff]
      %v2557 = vld [vmem:[%s3 + $0x268] sm:$0xff]
      %v2558 = vld [vmem:[%s3 + $0x270] sm:$0xff]
      %v2559 = vld [vmem:[%s3 + $0x278] sm:$0xff]
      %v2560 = vld [vmem:[%s3 + $0x280] sm:$0xff]
      %v2561 = vld [vmem:[%s3 + $0x288] sm:$0xff]
      %v2562 = vld [vmem:[%s3 + $0x290] sm:$0xff]
      %v2563 = vld [vmem:[%s3 + $0x298] sm:$0xff]
      %v2564 = vld [vmem:[%s3 + $0x2a0] sm:$0xff]
      %v2565 = vld [vmem:[%s3 + $0x2a8] sm:$0xff]
      %v2566 = vld [vmem:[%s3 + $0x2b0] sm:$0xff]
      %v2567 = vld [vmem:[%s3 + $0x2b8] sm:$0xff]
      %v2568 = vld [vmem:[%s3 + $0x2c0] sm:$0xff]
      %v2569 = vld [vmem:[%s3 + $0x2c8] sm:$0xff]
      %v2570 = vld [vmem:[%s3 + $0x2d0] sm:$0xff]
      %v2571 = vld [vmem:[%s3 + $0x2d8] sm:$0xff]
      %v2572 = vld [vmem:[%s3 + $0x2e0] sm:$0xff]
      %v2573 = vld [vmem:[%s3 + $0x2e8] sm:$0xff]
      %v2574 = vld [vmem:[%s3 + $0x2f0] sm:$0xff]
      %v2575 = vld [vmem:[%s3 + $0x2f8] sm:$0xff]
      %v2576 = vld [vmem:[%s3 + $0x300] sm:$0xff]
      %v2577 = vld [vmem:[%s3 + $0x308] sm:$0xff]
      %v2578 = vld [vmem:[%s3 + $0x310] sm:$0xff]
      %v2579 = vld [vmem:[%s3 + $0x318] sm:$0xff]
      %v2580 = vld [vmem:[%s3 + $0x320] sm:$0xff]
      %v2581 = vld [vmem:[%s3 + $0x328] sm:$0xff]
      %v2582 = vld [vmem:[%s3 + $0x330] sm:$0xff]
      %v2583 = vld [vmem:[%s3 + $0x338] sm:$0xff]
      %v2584 = vld [vmem:[%s3 + $0x340] sm:$0xff]
      %v2585 = vld [vmem:[%s3 + $0x348] sm:$0xff]
      %v2586 = vld [vmem:[%s3 + $0x350] sm:$0xff]
      %v2587 = vld [vmem:[%s3 + $0x358] sm:$0xff]
      %v2588 = vld [vmem:[%s3 + $0x360] sm:$0xff]
      %v2589 = vld [vmem:[%s3 + $0x368] sm:$0xff]
      %v2590 = vld [vmem:[%s3 + $0x370] sm:$0xff]
      %v2591 = vld [vmem:[%s3 + $0x378] sm:$0xff]
      %v2592 = vld [vmem:[%s3 + $0x380] sm:$0xff]
      %v2593 = vld [vmem:[%s3 + $0x388] sm:$0xff]
      %v2594 = vld [vmem:[%s3 + $0x390] sm:$0xff]
      %v2595 = vld [vmem:[%s3 + $0x398] sm:$0xff]
      %v2596 = vld [vmem:[%s3 + $0x3a0] sm:$0xff]
      %v2597 = vld [vmem:[%s3 + $0x3a8] sm:$0xff]
      %v2598 = vld [vmem:[%s3 + $0x3b0] sm:$0xff]
      %v2599 = vld [vmem:[%s3 + $0x3b8] sm:$0xff]
      %v2600 = vld [vmem:[%s3 + $0x3c0] sm:$0xff]
      %v2601 = vld [vmem:[%s3 + $0x3c8] sm:$0xff]
      %v2602 = vld [vmem:[%s3 + $0x3d0] sm:$0xff]
      %v2603 = vld [vmem:[%s3 + $0x3d8] sm:$0xff]
      %v2604 = vld [vmem:[%s3 + $0x3e0] sm:$0xff]
      %v2605 = vld [vmem:[%s3 + $0x3e8] sm:$0xff]
      %v2606 = vld [vmem:[%s3 + $0x3f0] sm:$0xff]
      %v2607 = vld [vmem:[%s3 + $0x3f8] sm:$0xff]
      %v2608 = vld [vmem:[%s3 + $0x400] sm:$0xff]
      %v2609 = vld [vmem:[%s3 + $0x408] sm:$0xff]
      %v2610 = vld [vmem:[%s3 + $0x410] sm:$0xff]
      %v2611 = vld [vmem:[%s3 + $0x418] sm:$0xff]
      %v2612 = vld [vmem:[%s3 + $0x420] sm:$0xff]
      %v2613 = vld [vmem:[%s3 + $0x428] sm:$0xff]
      %v2614 = vld [vmem:[%s3 + $0x430] sm:$0xff]
      %v2615 = vld [vmem:[%s3 + $0x438] sm:$0xff]
      %v2616 = vld [vmem:[%s3 + $0x440] sm:$0xff]
      %v2617 = vld [vmem:[%s3 + $0x448] sm:$0xff]
      %v2618 = vld [vmem:[%s3 + $0x450] sm:$0xff]
      %v2619 = vld [vmem:[%s3 + $0x458] sm:$0xff]
      %v2620 = vld [vmem:[%s3 + $0x460] sm:$0xff]
      %v2621 = vld [vmem:[%s3 + $0x468] sm:$0xff]
      %v2622 = vld [vmem:[%s3 + $0x470] sm:$0xff]
      %v2623 = vld [vmem:[%s3 + $0x478] sm:$0xff]
      %v2624 = vld [vmem:[%s3 + $0x480] sm:$0xff]
      %v2625 = vld [vmem:[%s3 + $0x488] sm:$0xff]
      %v2626 = vld [vmem:[%s3 + $0x490] sm:$0xff]
      %v2627 = vld [vmem:[%s3 + $0x498] sm:$0xff]
      %v2628 = vld [vmem:[%s3 + $0x4a0] sm:$0xff]
      %v2629 = vld [vmem:[%s3 + $0x4a8] sm:$0xff]
      %v2630 = vld [vmem:[%s3 + $0x4b0] sm:$0xff]
      %v2631 = vld [vmem:[%s3 + $0x4b8] sm:$0xff]
      %v2632 = vld [vmem:[%s3 + $0x4c0] sm:$0xff]
      %v2633 = vld [vmem:[%s3 + $0x4c8] sm:$0xff]
      %v2634 = vld [vmem:[%s3 + $0x4d0] sm:$0xff]
      %v2635 = vld [vmem:[%s3 + $0x4d8] sm:$0xff]
      %v2636 = vld [vmem:[%s3 + $0x4e0] sm:$0xff]
      %v2637 = vld [vmem:[%s3 + $0x4e8] sm:$0xff]
      %v2638 = vld [vmem:[%s3 + $0x4f0] sm:$0xff]
      %v2639 = vld [vmem:[%s3 + $0x4f8] sm:$0xff]
      %v2640 = vld [vmem:[%s3 + $0x500] sm:$0xff]
      %v2641 = vld [vmem:[%s3 + $0x508] sm:$0xff]
      %v2642 = vld [vmem:[%s3 + $0x510] sm:$0xff]
      %v2643 = vld [vmem:[%s3 + $0x518] sm:$0xff]
      %v2644 = vld [vmem:[%s3 + $0x520] sm:$0xff]
      %v2645 = vld [vmem:[%s3 + $0x528] sm:$0xff]
      %v2646 = vld [vmem:[%s3 + $0x530] sm:$0xff]
      %v2647 = vld [vmem:[%s3 + $0x538] sm:$0xff]
      %v2648 = vld [vmem:[%s3 + $0x540] sm:$0xff]
      %v2649 = vld [vmem:[%s3 + $0x548] sm:$0xff]
      %v2650 = vld [vmem:[%s3 + $0x550] sm:$0xff]
      %v2651 = vld [vmem:[%s3 + $0x558] sm:$0xff]
      %v2652 = vld [vmem:[%s3 + $0x560] sm:$0xff]
      %v2653 = vld [vmem:[%s3 + $0x568] sm:$0xff]
      %v2654 = vld [vmem:[%s3 + $0x570] sm:$0xff]
      %v2655 = vld [vmem:[%s3 + $0x578] sm:$0xff]
      %v2656 = vld [vmem:[%s3 + $0x580] sm:$0xff]
      %v2657 = vld [vmem:[%s3 + $0x588] sm:$0xff]
      %v2658 = vld [vmem:[%s3 + $0x590] sm:$0xff]
      %v2659 = vld [vmem:[%s3 + $0x598] sm:$0xff]
      %v2660 = vld [vmem:[%s3 + $0x5a0] sm:$0xff]
      %v2661 = vld [vmem:[%s3 + $0x5a8] sm:$0xff]
      %v2662 = vld [vmem:[%s3 + $0x5b0] sm:$0xff]
      %v2663 = vld [vmem:[%s3 + $0x5b8] sm:$0xff]
      %v2664 = vld [vmem:[%s3 + $0x5c0] sm:$0xff]
      %v2665 = vld [vmem:[%s3 + $0x5c8] sm:$0xff]
      %v2666 = vld [vmem:[%s3 + $0x5d0] sm:$0xff]
      %v2667 = vld [vmem:[%s3 + $0x5d8] sm:$0xff]
      %v2668 = vld [vmem:[%s3 + $0x5e0] sm:$0xff]
      %v2669 = vld [vmem:[%s3 + $0x5e8] sm:$0xff]
      %v2670 = vld [vmem:[%s3 + $0x5f0] sm:$0xff]
      %v2671 = vld [vmem:[%s3 + $0x5f8] sm:$0xff]
      %v2672 = vld [vmem:[%s4] sm:$0x1]
      %v2674 = vlaneseq
      %v2675 = vshrl.u32 %v2674, 7
      %v2676 = vsub.s32 0, %v2675
      %v2677 = vrot.slane %v2672, %v2676
      %2679 = vmatprep.subr.mxu0 0.0
      %2680 = vmatpush1.msra.mxu0 %v2495
      %2681 = vmatprep.subr.mxu0 0.0
      %2682 = vmatpush1.msra.mxu0 %v2494
      %2683 = vmatprep.subr.mxu0 0.0
      %2684 = vmatpush1.msra.mxu0 %v2493
      %2685 = vmatprep.subr.mxu0 0.0
      %2686 = vmatpush1.msra.mxu0 %v2492
      %2687 = vmatprep.subr.mxu0 0.0
      %2688 = vmatpush1.msra.mxu0 %v2491
      %2689 = vmatprep.subr.mxu0 0.0
      %2690 = vmatpush1.msra.mxu0 %v2490
      %2691 = vmatprep.subr.mxu0 0.0
      %2692 = vmatpush1.msra.mxu0 %v2489
      %2693 = vmatprep.subr.mxu0 0.0
      %2694 = vmatpush1.msra.mxu0 %v2488
      %2695 = vmatprep.subr.mxu0 0.0
      %2696 = vmatpush1.msra.mxu0 %v2487
      %2697 = vmatprep.subr.mxu0 0.0
      %2698 = vmatpush1.msra.mxu0 %v2486
      %2699 = vmatprep.subr.mxu0 0.0
      %2700 = vmatpush1.msra.mxu0 %v2485
      %2701 = vmatprep.subr.mxu0 0.0
      %2702 = vmatpush1.msra.mxu0 %v2484
      %2703 = vmatprep.subr.mxu0 0.0
      %2704 = vmatpush1.msra.mxu0 %v2483
      %2705 = vmatprep.subr.mxu0 0.0
      %2706 = vmatpush1.msra.mxu0 %v2482
      %2707 = vmatprep.subr.mxu0 0.0
      %2708 = vmatpush1.msra.mxu0 %v2481
      %2709 = vmatprep.subr.mxu0 0.0
      %2710 = vmatpush1.msra.mxu0 %v2480
      %2711 = vmatprep.subr.mxu0 0.0
      %2712 = vmatpush2.msra.mxu0 %v2511
      %2713 = vmatprep.subr.mxu0 0.0
      %2714 = vmatpush2.msra.mxu0 %v2510
      %2715 = vmatprep.subr.mxu0 0.0
      %2716 = vmatpush2.msra.mxu0 %v2509
      %2717 = vmatprep.subr.mxu0 0.0
      %2718 = vmatpush2.msra.mxu0 %v2508
      %2719 = vmatprep.subr.mxu0 0.0
      %2720 = vmatpush2.msra.mxu0 %v2507
      %2721 = vmatprep.subr.mxu0 0.0
      %2722 = vmatpush2.msra.mxu0 %v2506
      %2723 = vmatprep.subr.mxu0 0.0
      %2724 = vmatpush2.msra.mxu0 %v2505
      %2725 = vmatprep.subr.mxu0 0.0
      %2726 = vmatpush2.msra.mxu0 %v2504
      %2727 = vmatprep.subr.mxu0 0.0
      %2728 = vmatpush2.msra.mxu0 %v2503
      %2729 = vmatprep.subr.mxu0 0.0
      %2730 = vmatpush2.msra.mxu0 %v2502
      %2731 = vmatprep.subr.mxu0 0.0
      %2732 = vmatpush2.msra.mxu0 %v2501
      %2733 = vmatprep.subr.mxu0 0.0
      %2734 = vmatpush2.msra.mxu0 %v2500
      %2735 = vmatprep.subr.mxu0 0.0
      %2736 = vmatpush2.msra.mxu0 %v2499
      %2737 = vmatprep.subr.mxu0 0.0
      %2738 = vmatpush2.msra.mxu0 %v2498
      %2739 = vmatprep.subr.mxu0 0.0
      %2740 = vmatpush2.msra.mxu0 %v2497
      %2741 = vmatprep.subr.mxu0 0.0
      %2742 = vmatpush2.msra.mxu0 %v2496
      %2743 = vmatprep.mubr.f32.mxu0 %v2097
      %2744 = vmatmul.mubr.f32.gmra.mxu0 %v2096
      %v2745 = vpop.f32.mrf.mxu0
      %v2746 = vadd.f32 %v2677, %v2745
      %v2747 = vpop.f32.mrf.mxu0
      %2748 = vmatprep.mubr.f32.mxu0 %v2109
      %2749 = vmatmul.mubr.f32.gmra.mxu0 %v2108
      %v2750 = vpop.f32.mrf.mxu0
      %v2751 = vadd.f32 %v2677, %v2750
      %v2752 = vpop.f32.mrf.mxu0
      %2753 = vmatprep.mubr.f32.mxu0 %v2121
      %2754 = vmatmul.mubr.f32.gmra.mxu0 %v2120
      %v2755 = vpop.f32.mrf.mxu0
      %v2756 = vadd.f32 %v2677, %v2755
      %v2757 = vpop.f32.mrf.mxu0
      %2758 = vmatprep.mubr.f32.mxu0 %v2133
      %2759 = vmatmul.mubr.f32.gmra.mxu0 %v2132
      %v2760 = vpop.f32.mrf.mxu0
      %v2761 = vadd.f32 %v2677, %v2760
      %v2762 = vpop.f32.mrf.mxu0
      %2763 = vmatprep.mubr.f32.mxu0 %v2145
      %2764 = vmatmul.mubr.f32.gmra.mxu0 %v2144
      %v2765 = vpop.f32.mrf.mxu0
      %v2766 = vadd.f32 %v2677, %v2765
      %v2767 = vpop.f32.mrf.mxu0
      %2768 = vmatprep.mubr.f32.mxu0 %v2157
      %2769 = vmatmul.mubr.f32.gmra.mxu0 %v2156
      %v2770 = vpop.f32.mrf.mxu0
      %v2771 = vadd.f32 %v2677, %v2770
      %v2772 = vpop.f32.mrf.mxu0
      %2773 = vmatprep.mubr.f32.mxu0 %v2169
      %2774 = vmatmul.mubr.f32.gmra.mxu0 %v2168
      %v2775 = vpop.f32.mrf.mxu0
      %v2776 = vadd.f32 %v2677, %v2775
      %v2777 = vpop.f32.mrf.mxu0
      %2778 = vmatprep.mubr.f32.mxu0 %v2181
      %2779 = vmatmul.mubr.f32.gmra.mxu0 %v2180
      %v2780 = vpop.f32.mrf.mxu0
      %v2781 = vadd.f32 %v2677, %v2780
      %v2782 = vpop.f32.mrf.mxu0
      %2783 = vmatprep.mubr.f32.mxu0 %v2193
      %2784 = vmatmul.mubr.f32.gmra.mxu0 %v2192
      %v2785 = vpop.f32.mrf.mxu0
      %v2786 = vadd.f32 %v2677, %v2785
      %v2787 = vpop.f32.mrf.mxu0
      %2788 = vmatprep.mubr.f32.mxu0 %v2205
      %2789 = vmatmul.mubr.f32.gmra.mxu0 %v2204
      %v2790 = vpop.f32.mrf.mxu0
      %v2791 = vadd.f32 %v2677, %v2790
      %v2792 = vpop.f32.mrf.mxu0
      %2793 = vmatprep.mubr.f32.mxu0 %v2217
      %2794 = vmatmul.mubr.f32.gmra.mxu0 %v2216
      %v2795 = vpop.f32.mrf.mxu0
      %v2796 = vadd.f32 %v2677, %v2795
      %v2797 = vpop.f32.mrf.mxu0
      %2798 = vmatprep.mubr.f32.mxu0 %v2229
      %2799 = vmatmul.mubr.f32.gmra.mxu0 %v2228
      %v2800 = vpop.f32.mrf.mxu0
      %v2801 = vadd.f32 %v2677, %v2800
      %v2802 = vpop.f32.mrf.mxu0
      %2803 = vmatprep.mubr.f32.mxu0 %v2241
      %2804 = vmatmul.mubr.f32.gmra.mxu0 %v2240
      %v2805 = vpop.f32.mrf.mxu0
      %v2806 = vadd.f32 %v2677, %v2805
      %v2807 = vpop.f32.mrf.mxu0
      %2808 = vmatprep.mubr.f32.mxu0 %v2253
      %2809 = vmatmul.mubr.f32.gmra.mxu0 %v2252
      %v2810 = vpop.f32.mrf.mxu0
      %v2811 = vadd.f32 %v2677, %v2810
      %v2812 = vpop.f32.mrf.mxu0
      %2813 = vmatprep.mubr.f32.mxu0 %v2265
      %2814 = vmatmul.mubr.f32.gmra.mxu0 %v2264
      %v2815 = vpop.f32.mrf.mxu0
      %v2816 = vadd.f32 %v2677, %v2815
      %v2817 = vpop.f32.mrf.mxu0
      %2818 = vmatprep.mubr.f32.mxu0 %v2277
      %2819 = vmatmul.mubr.f32.gmra.mxu0 %v2276
      %v2820 = vpop.f32.mrf.mxu0
      %v2821 = vadd.f32 %v2677, %v2820
      %v2822 = vpop.f32.mrf.mxu0
      %2823 = vmatprep.mubr.f32.mxu0 %v2289
      %2824 = vmatmul.mubr.f32.gmra.mxu0 %v2288
      %v2825 = vpop.f32.mrf.mxu0
      %v2826 = vadd.f32 %v2677, %v2825
      %v2827 = vpop.f32.mrf.mxu0
      %2828 = vmatprep.mubr.f32.mxu0 %v2301
      %2829 = vmatmul.mubr.f32.gmra.mxu0 %v2300
      %v2830 = vpop.f32.mrf.mxu0
      %v2831 = vadd.f32 %v2677, %v2830
      %v2832 = vpop.f32.mrf.mxu0
      %2833 = vmatprep.mubr.f32.mxu0 %v2313
      %2834 = vmatmul.mubr.f32.gmra.mxu0 %v2312
      %v2835 = vpop.f32.mrf.mxu0
      %v2836 = vadd.f32 %v2677, %v2835
      %v2837 = vpop.f32.mrf.mxu0
      %2838 = vmatprep.mubr.f32.mxu0 %v2325
      %2839 = vmatmul.mubr.f32.gmra.mxu0 %v2324
      %v2840 = vpop.f32.mrf.mxu0
      %v2841 = vadd.f32 %v2677, %v2840
      %v2842 = vpop.f32.mrf.mxu0
      %2843 = vmatprep.mubr.f32.mxu0 %v2337
      %2844 = vmatmul.mubr.f32.gmra.mxu0 %v2336
      %v2845 = vpop.f32.mrf.mxu0
      %v2846 = vadd.f32 %v2677, %v2845
      %v2847 = vpop.f32.mrf.mxu0
      %2848 = vmatprep.mubr.f32.mxu0 %v2349
      %2849 = vmatmul.mubr.f32.gmra.mxu0 %v2348
      %v2850 = vpop.f32.mrf.mxu0
      %v2851 = vadd.f32 %v2677, %v2850
      %v2852 = vpop.f32.mrf.mxu0
      %2853 = vmatprep.mubr.f32.mxu0 %v2361
      %2854 = vmatmul.mubr.f32.gmra.mxu0 %v2360
      %v2855 = vpop.f32.mrf.mxu0
      %v2856 = vadd.f32 %v2677, %v2855
      %v2857 = vpop.f32.mrf.mxu0
      %2858 = vmatprep.mubr.f32.mxu0 %v2373
      %2859 = vmatmul.mubr.f32.gmra.mxu0 %v2372
      %v2860 = vpop.f32.mrf.mxu0
      %v2861 = vadd.f32 %v2677, %v2860
      %v2862 = vpop.f32.mrf.mxu0
      %2863 = vmatprep.mubr.f32.mxu0 %v2385
      %2864 = vmatmul.mubr.f32.gmra.mxu0 %v2384
      %v2865 = vpop.f32.mrf.mxu0
      %v2866 = vadd.f32 %v2677, %v2865
      %v2867 = vpop.f32.mrf.mxu0
      %2868 = vmatprep.mubr.f32.mxu0 %v2397
      %2869 = vmatmul.mubr.f32.gmra.mxu0 %v2396
      %v2870 = vpop.f32.mrf.mxu0
      %v2871 = vadd.f32 %v2677, %v2870
      %v2872 = vpop.f32.mrf.mxu0
      %2873 = vmatprep.mubr.f32.mxu0 %v2409
      %2874 = vmatmul.mubr.f32.gmra.mxu0 %v2408
      %v2875 = vpop.f32.mrf.mxu0
      %v2876 = vadd.f32 %v2677, %v2875
      %v2877 = vpop.f32.mrf.mxu0
      %2878 = vmatprep.mubr.f32.mxu0 %v2421
      %2879 = vmatmul.mubr.f32.gmra.mxu0 %v2420
      %v2880 = vpop.f32.mrf.mxu0
      %v2881 = vadd.f32 %v2677, %v2880
      %v2882 = vpop.f32.mrf.mxu0
      %2883 = vmatprep.mubr.f32.mxu0 %v2433
      %2884 = vmatmul.mubr.f32.gmra.mxu0 %v2432
      %v2885 = vpop.f32.mrf.mxu0
      %v2886 = vadd.f32 %v2677, %v2885
      %v2887 = vpop.f32.mrf.mxu0
      %2888 = vmatprep.mubr.f32.mxu0 %v2445
      %2889 = vmatmul.mubr.f32.gmra.mxu0 %v2444
      %v2890 = vpop.f32.mrf.mxu0
      %v2891 = vadd.f32 %v2677, %v2890
      %v2892 = vpop.f32.mrf.mxu0
      %2893 = vmatprep.mubr.f32.mxu0 %v2457
      %2894 = vmatmul.mubr.f32.gmra.mxu0 %v2456
      %v2895 = vpop.f32.mrf.mxu0
      %v2896 = vadd.f32 %v2677, %v2895
      %v2897 = vpop.f32.mrf.mxu0
      %2898 = vmatprep.mubr.f32.mxu0 %v2469
      %2899 = vmatmul.mubr.f32.gmra.mxu0 %v2468
      %v2900 = vpop.f32.mrf.mxu0
      %v2901 = vadd.f32 %v2677, %v2900
      %v2902 = vpop.f32.mrf.mxu0
      %2903 = vdwg.mxu0
      %2904 = vmatprep.subr.mxu0 0.0
      %2905 = vmatpush1.msra.mxu0 %v2527
      %2906 = vmatprep.subr.mxu0 0.0
      %2907 = vmatpush1.msra.mxu0 %v2526
      %2908 = vmatprep.subr.mxu0 0.0
      %2909 = vmatpush1.msra.mxu0 %v2525
      %2910 = vmatprep.subr.mxu0 0.0
      %2911 = vmatpush1.msra.mxu0 %v2524
      %2912 = vmatprep.subr.mxu0 0.0
      %2913 = vmatpush1.msra.mxu0 %v2523
      %2914 = vmatprep.subr.mxu0 0.0
      %2915 = vmatpush1.msra.mxu0 %v2522
      %2916 = vmatprep.subr.mxu0 0.0
      %2917 = vmatpush1.msra.mxu0 %v2521
      %2918 = vmatprep.subr.mxu0 0.0
      %2919 = vmatpush1.msra.mxu0 %v2520
      %2920 = vmatprep.subr.mxu0 0.0
      %2921 = vmatpush1.msra.mxu0 %v2519
      %2922 = vmatprep.subr.mxu0 0.0
      %2923 = vmatpush1.msra.mxu0 %v2518
      %2924 = vmatprep.subr.mxu0 0.0
      %2925 = vmatpush1.msra.mxu0 %v2517
      %2926 = vmatprep.subr.mxu0 0.0
      %2927 = vmatpush1.msra.mxu0 %v2516
      %2928 = vmatprep.subr.mxu0 0.0
      %2929 = vmatpush1.msra.mxu0 %v2515
      %2930 = vmatprep.subr.mxu0 0.0
      %2931 = vmatpush1.msra.mxu0 %v2514
      %2932 = vmatprep.subr.mxu0 0.0
      %2933 = vmatpush1.msra.mxu0 %v2513
      %2934 = vmatprep.subr.mxu0 0.0
      %2935 = vmatpush1.msra.mxu0 %v2512
      %2936 = vmatprep.subr.mxu0 0.0
      %2937 = vmatpush2.msra.mxu0 %v2543
      %2938 = vmatprep.subr.mxu0 0.0
      %2939 = vmatpush2.msra.mxu0 %v2542
      %2940 = vmatprep.subr.mxu0 0.0
      %2941 = vmatpush2.msra.mxu0 %v2541
      %2942 = vmatprep.subr.mxu0 0.0
      %2943 = vmatpush2.msra.mxu0 %v2540
      %2944 = vmatprep.subr.mxu0 0.0
      %2945 = vmatpush2.msra.mxu0 %v2539
      %2946 = vmatprep.subr.mxu0 0.0
      %2947 = vmatpush2.msra.mxu0 %v2538
      %2948 = vmatprep.subr.mxu0 0.0
      %2949 = vmatpush2.msra.mxu0 %v2537
      %2950 = vmatprep.subr.mxu0 0.0
      %2951 = vmatpush2.msra.mxu0 %v2536
      %2952 = vmatprep.subr.mxu0 0.0
      %2953 = vmatpush2.msra.mxu0 %v2535
      %2954 = vmatprep.subr.mxu0 0.0
      %2955 = vmatpush2.msra.mxu0 %v2534
      %2956 = vmatprep.subr.mxu0 0.0
      %2957 = vmatpush2.msra.mxu0 %v2533
      %2958 = vmatprep.subr.mxu0 0.0
      %2959 = vmatpush2.msra.mxu0 %v2532
      %2960 = vmatprep.subr.mxu0 0.0
      %2961 = vmatpush2.msra.mxu0 %v2531
      %2962 = vmatprep.subr.mxu0 0.0
      %2963 = vmatpush2.msra.mxu0 %v2530
      %2964 = vmatprep.subr.mxu0 0.0
      %2965 = vmatpush2.msra.mxu0 %v2529
      %2966 = vmatprep.subr.mxu0 0.0
      %2967 = vmatpush2.msra.mxu0 %v2528
      %2968 = vmatprep.mubr.f32.mxu0 %v2099
      %2969 = vmatmul.mubr.f32.gmra.mxu0 %v2098
      %v2970 = vpop.f32.mrf.mxu0
      %v2971 = vadd.f32 %v2746, %v2970
      %v2972 = vpop.f32.mrf.mxu0
      %2973 = vmatprep.mubr.f32.mxu0 %v2111
      %2974 = vmatmul.mubr.f32.gmra.mxu0 %v2110
      %v2975 = vpop.f32.mrf.mxu0
      %v2976 = vadd.f32 %v2751, %v2975
      %v2977 = vpop.f32.mrf.mxu0
      %2978 = vmatprep.mubr.f32.mxu0 %v2123
      %2979 = vmatmul.mubr.f32.gmra.mxu0 %v2122
      %v2980 = vpop.f32.mrf.mxu0
      %v2981 = vadd.f32 %v2756, %v2980
      %v2982 = vpop.f32.mrf.mxu0
      %2983 = vmatprep.mubr.f32.mxu0 %v2135
      %2984 = vmatmul.mubr.f32.gmra.mxu0 %v2134
      %v2985 = vpop.f32.mrf.mxu0
      %v2986 = vadd.f32 %v2761, %v2985
      %v2987 = vpop.f32.mrf.mxu0
      %2988 = vmatprep.mubr.f32.mxu0 %v2147
      %2989 = vmatmul.mubr.f32.gmra.mxu0 %v2146
      %v2990 = vpop.f32.mrf.mxu0
      %v2991 = vadd.f32 %v2766, %v2990
      %v2992 = vpop.f32.mrf.mxu0
      %2993 = vmatprep.mubr.f32.mxu0 %v2159
      %2994 = vmatmul.mubr.f32.gmra.mxu0 %v2158
      %v2995 = vpop.f32.mrf.mxu0
      %v2996 = vadd.f32 %v2771, %v2995
      %v2997 = vpop.f32.mrf.mxu0
      %2998 = vmatprep.mubr.f32.mxu0 %v2171
      %2999 = vmatmul.mubr.f32.gmra.mxu0 %v2170
      %v3000 = vpop.f32.mrf.mxu0
      %v3001 = vadd.f32 %v2776, %v3000
      %v3002 = vpop.f32.mrf.mxu0
      %3003 = vmatprep.mubr.f32.mxu0 %v2183
      %3004 = vmatmul.mubr.f32.gmra.mxu0 %v2182
      %v3005 = vpop.f32.mrf.mxu0
      %v3006 = vadd.f32 %v2781, %v3005
      %v3007 = vpop.f32.mrf.mxu0
      %3008 = vmatprep.mubr.f32.mxu0 %v2195
      %3009 = vmatmul.mubr.f32.gmra.mxu0 %v2194
      %v3010 = vpop.f32.mrf.mxu0
      %v3011 = vadd.f32 %v2786, %v3010
      %v3012 = vpop.f32.mrf.mxu0
      %3013 = vmatprep.mubr.f32.mxu0 %v2207
      %3014 = vmatmul.mubr.f32.gmra.mxu0 %v2206
      %v3015 = vpop.f32.mrf.mxu0
      %v3016 = vadd.f32 %v2791, %v3015
      %v3017 = vpop.f32.mrf.mxu0
      %3018 = vmatprep.mubr.f32.mxu0 %v2219
      %3019 = vmatmul.mubr.f32.gmra.mxu0 %v2218
      %v3020 = vpop.f32.mrf.mxu0
      %v3021 = vadd.f32 %v2796, %v3020
      %v3022 = vpop.f32.mrf.mxu0
      %3023 = vmatprep.mubr.f32.mxu0 %v2231
      %3024 = vmatmul.mubr.f32.gmra.mxu0 %v2230
      %v3025 = vpop.f32.mrf.mxu0
      %v3026 = vadd.f32 %v2801, %v3025
      %v3027 = vpop.f32.mrf.mxu0
      %3028 = vmatprep.mubr.f32.mxu0 %v2243
      %3029 = vmatmul.mubr.f32.gmra.mxu0 %v2242
      %v3030 = vpop.f32.mrf.mxu0
      %v3031 = vadd.f32 %v2806, %v3030
      %v3032 = vpop.f32.mrf.mxu0
      %3033 = vmatprep.mubr.f32.mxu0 %v2255
      %3034 = vmatmul.mubr.f32.gmra.mxu0 %v2254
      %v3035 = vpop.f32.mrf.mxu0
      %v3036 = vadd.f32 %v2811, %v3035
      %v3037 = vpop.f32.mrf.mxu0
      %3038 = vmatprep.mubr.f32.mxu0 %v2267
      %3039 = vmatmul.mubr.f32.gmra.mxu0 %v2266
      %v3040 = vpop.f32.mrf.mxu0
      %v3041 = vadd.f32 %v2816, %v3040
      %v3042 = vpop.f32.mrf.mxu0
      %3043 = vmatprep.mubr.f32.mxu0 %v2279
      %3044 = vmatmul.mubr.f32.gmra.mxu0 %v2278
      %v3045 = vpop.f32.mrf.mxu0
      %v3046 = vadd.f32 %v2821, %v3045
      %v3047 = vpop.f32.mrf.mxu0
      %3048 = vmatprep.mubr.f32.mxu0 %v2291
      %3049 = vmatmul.mubr.f32.gmra.mxu0 %v2290
      %v3050 = vpop.f32.mrf.mxu0
      %v3051 = vadd.f32 %v2826, %v3050
      %v3052 = vpop.f32.mrf.mxu0
      %3053 = vmatprep.mubr.f32.mxu0 %v2303
      %3054 = vmatmul.mubr.f32.gmra.mxu0 %v2302
      %v3055 = vpop.f32.mrf.mxu0
      %v3056 = vadd.f32 %v2831, %v3055
      %v3057 = vpop.f32.mrf.mxu0
      %3058 = vmatprep.mubr.f32.mxu0 %v2315
      %3059 = vmatmul.mubr.f32.gmra.mxu0 %v2314
      %v3060 = vpop.f32.mrf.mxu0
      %v3061 = vadd.f32 %v2836, %v3060
      %v3062 = vpop.f32.mrf.mxu0
      %3063 = vmatprep.mubr.f32.mxu0 %v2327
      %3064 = vmatmul.mubr.f32.gmra.mxu0 %v2326
      %v3065 = vpop.f32.mrf.mxu0
      %v3066 = vadd.f32 %v2841, %v3065
      %v3067 = vpop.f32.mrf.mxu0
      %3068 = vmatprep.mubr.f32.mxu0 %v2339
      %3069 = vmatmul.mubr.f32.gmra.mxu0 %v2338
      %v3070 = vpop.f32.mrf.mxu0
      %v3071 = vadd.f32 %v2846, %v3070
      %v3072 = vpop.f32.mrf.mxu0
      %3073 = vmatprep.mubr.f32.mxu0 %v2351
      %3074 = vmatmul.mubr.f32.gmra.mxu0 %v2350
      %v3075 = vpop.f32.mrf.mxu0
      %v3076 = vadd.f32 %v2851, %v3075
      %v3077 = vpop.f32.mrf.mxu0
      %3078 = vmatprep.mubr.f32.mxu0 %v2363
      %3079 = vmatmul.mubr.f32.gmra.mxu0 %v2362
      %v3080 = vpop.f32.mrf.mxu0
      %v3081 = vadd.f32 %v2856, %v3080
      %v3082 = vpop.f32.mrf.mxu0
      %3083 = vmatprep.mubr.f32.mxu0 %v2375
      %3084 = vmatmul.mubr.f32.gmra.mxu0 %v2374
      %v3085 = vpop.f32.mrf.mxu0
      %v3086 = vadd.f32 %v2861, %v3085
      %v3087 = vpop.f32.mrf.mxu0
      %3088 = vmatprep.mubr.f32.mxu0 %v2387
      %3089 = vmatmul.mubr.f32.gmra.mxu0 %v2386
      %v3090 = vpop.f32.mrf.mxu0
      %v3091 = vadd.f32 %v2866, %v3090
      %v3092 = vpop.f32.mrf.mxu0
      %3093 = vmatprep.mubr.f32.mxu0 %v2399
      %3094 = vmatmul.mubr.f32.gmra.mxu0 %v2398
      %v3095 = vpop.f32.mrf.mxu0
      %v3096 = vadd.f32 %v2871, %v3095
      %v3097 = vpop.f32.mrf.mxu0
      %3098 = vmatprep.mubr.f32.mxu0 %v2411
      %3099 = vmatmul.mubr.f32.gmra.mxu0 %v2410
      %v3100 = vpop.f32.mrf.mxu0
      %v3101 = vadd.f32 %v2876, %v3100
      %v3102 = vpop.f32.mrf.mxu0
      %3103 = vmatprep.mubr.f32.mxu0 %v2423
      %3104 = vmatmul.mubr.f32.gmra.mxu0 %v2422
      %v3105 = vpop.f32.mrf.mxu0
      %v3106 = vadd.f32 %v2881, %v3105
      %v3107 = vpop.f32.mrf.mxu0
      %3108 = vmatprep.mubr.f32.mxu0 %v2435
      %3109 = vmatmul.mubr.f32.gmra.mxu0 %v2434
      %v3110 = vpop.f32.mrf.mxu0
      %v3111 = vadd.f32 %v2886, %v3110
      %v3112 = vpop.f32.mrf.mxu0
      %3113 = vmatprep.mubr.f32.mxu0 %v2447
      %3114 = vmatmul.mubr.f32.gmra.mxu0 %v2446
      %v3115 = vpop.f32.mrf.mxu0
      %v3116 = vadd.f32 %v2891, %v3115
      %v3117 = vpop.f32.mrf.mxu0
      %3118 = vmatprep.mubr.f32.mxu0 %v2459
      %3119 = vmatmul.mubr.f32.gmra.mxu0 %v2458
      %v3120 = vpop.f32.mrf.mxu0
      %v3121 = vadd.f32 %v2896, %v3120
      %v3122 = vpop.f32.mrf.mxu0
      %3123 = vmatprep.mubr.f32.mxu0 %v2471
      %3124 = vmatmul.mubr.f32.gmra.mxu0 %v2470
      %v3125 = vpop.f32.mrf.mxu0
      %v3126 = vadd.f32 %v2901, %v3125
      %v3127 = vpop.f32.mrf.mxu0
      %3128 = vdwg.mxu0
      %3129 = vmatprep.subr.mxu0 0.0
      %3130 = vmatpush1.msra.mxu0 %v2559
      %3131 = vmatprep.subr.mxu0 0.0
      %3132 = vmatpush1.msra.mxu0 %v2558
      %3133 = vmatprep.subr.mxu0 0.0
      %3134 = vmatpush1.msra.mxu0 %v2557
      %3135 = vmatprep.subr.mxu0 0.0
      %3136 = vmatpush1.msra.mxu0 %v2556
      %3137 = vmatprep.subr.mxu0 0.0
      %3138 = vmatpush1.msra.mxu0 %v2555
      %3139 = vmatprep.subr.mxu0 0.0
      %3140 = vmatpush1.msra.mxu0 %v2554
      %3141 = vmatprep.subr.mxu0 0.0
      %3142 = vmatpush1.msra.mxu0 %v2553
      %3143 = vmatprep.subr.mxu0 0.0
      %3144 = vmatpush1.msra.mxu0 %v2552
      %3145 = vmatprep.subr.mxu0 0.0
      %3146 = vmatpush1.msra.mxu0 %v2551
      %3147 = vmatprep.subr.mxu0 0.0
      %3148 = vmatpush1.msra.mxu0 %v2550
      %3149 = vmatprep.subr.mxu0 0.0
      %3150 = vmatpush1.msra.mxu0 %v2549
      %3151 = vmatprep.subr.mxu0 0.0
      %3152 = vmatpush1.msra.mxu0 %v2548
      %3153 = vmatprep.subr.mxu0 0.0
      %3154 = vmatpush1.msra.mxu0 %v2547
      %3155 = vmatprep.subr.mxu0 0.0
      %3156 = vmatpush1.msra.mxu0 %v2546
      %3157 = vmatprep.subr.mxu0 0.0
      %3158 = vmatpush1.msra.mxu0 %v2545
      %3159 = vmatprep.subr.mxu0 0.0
      %3160 = vmatpush1.msra.mxu0 %v2544
      %3161 = vmatprep.subr.mxu0 0.0
      %3162 = vmatpush2.msra.mxu0 %v2575
      %3163 = vmatprep.subr.mxu0 0.0
      %3164 = vmatpush2.msra.mxu0 %v2574
      %3165 = vmatprep.subr.mxu0 0.0
      %3166 = vmatpush2.msra.mxu0 %v2573
      %3167 = vmatprep.subr.mxu0 0.0
      %3168 = vmatpush2.msra.mxu0 %v2572
      %3169 = vmatprep.subr.mxu0 0.0
      %3170 = vmatpush2.msra.mxu0 %v2571
      %3171 = vmatprep.subr.mxu0 0.0
      %3172 = vmatpush2.msra.mxu0 %v2570
      %3173 = vmatprep.subr.mxu0 0.0
      %3174 = vmatpush2.msra.mxu0 %v2569
      %3175 = vmatprep.subr.mxu0 0.0
      %3176 = vmatpush2.msra.mxu0 %v2568
      %3177 = vmatprep.subr.mxu0 0.0
      %3178 = vmatpush2.msra.mxu0 %v2567
      %3179 = vmatprep.subr.mxu0 0.0
      %3180 = vmatpush2.msra.mxu0 %v2566
      %3181 = vmatprep.subr.mxu0 0.0
      %3182 = vmatpush2.msra.mxu0 %v2565
      %3183 = vmatprep.subr.mxu0 0.0
      %3184 = vmatpush2.msra.mxu0 %v2564
      %3185 = vmatprep.subr.mxu0 0.0
      %3186 = vmatpush2.msra.mxu0 %v2563
      %3187 = vmatprep.subr.mxu0 0.0
      %3188 = vmatpush2.msra.mxu0 %v2562
      %3189 = vmatprep.subr.mxu0 0.0
      %3190 = vmatpush2.msra.mxu0 %v2561
      %3191 = vmatprep.subr.mxu0 0.0
      %3192 = vmatpush2.msra.mxu0 %v2560
      %3193 = vmatprep.mubr.f32.mxu0 %v2101
      %3194 = vmatmul.mubr.f32.gmra.mxu0 %v2100
      %v3195 = vpop.f32.mrf.mxu0
      %v3196 = vadd.f32 %v2971, %v3195
      %v3197 = vpop.f32.mrf.mxu0
      %3198 = vmatprep.mubr.f32.mxu0 %v2113
      %3199 = vmatmul.mubr.f32.gmra.mxu0 %v2112
      %v3200 = vpop.f32.mrf.mxu0
      %v3201 = vadd.f32 %v2976, %v3200
      %v3202 = vpop.f32.mrf.mxu0
      %3203 = vmatprep.mubr.f32.mxu0 %v2125
      %3204 = vmatmul.mubr.f32.gmra.mxu0 %v2124
      %v3205 = vpop.f32.mrf.mxu0
      %v3206 = vadd.f32 %v2981, %v3205
      %v3207 = vpop.f32.mrf.mxu0
      %3208 = vmatprep.mubr.f32.mxu0 %v2137
      %3209 = vmatmul.mubr.f32.gmra.mxu0 %v2136
      %v3210 = vpop.f32.mrf.mxu0
      %v3211 = vadd.f32 %v2986, %v3210
      %v3212 = vpop.f32.mrf.mxu0
      %3213 = vmatprep.mubr.f32.mxu0 %v2149
      %3214 = vmatmul.mubr.f32.gmra.mxu0 %v2148
      %v3215 = vpop.f32.mrf.mxu0
      %v3216 = vadd.f32 %v2991, %v3215
      %v3217 = vpop.f32.mrf.mxu0
      %3218 = vmatprep.mubr.f32.mxu0 %v2161
      %3219 = vmatmul.mubr.f32.gmra.mxu0 %v2160
      %v3220 = vpop.f32.mrf.mxu0
      %v3221 = vadd.f32 %v2996, %v3220
      %v3222 = vpop.f32.mrf.mxu0
      %3223 = vmatprep.mubr.f32.mxu0 %v2173
      %3224 = vmatmul.mubr.f32.gmra.mxu0 %v2172
      %v3225 = vpop.f32.mrf.mxu0
      %v3226 = vadd.f32 %v3001, %v3225
      %v3227 = vpop.f32.mrf.mxu0
      %3228 = vmatprep.mubr.f32.mxu0 %v2185
      %3229 = vmatmul.mubr.f32.gmra.mxu0 %v2184
      %v3230 = vpop.f32.mrf.mxu0
      %v3231 = vadd.f32 %v3006, %v3230
      %v3232 = vpop.f32.mrf.mxu0
      %3233 = vmatprep.mubr.f32.mxu0 %v2197
      %3234 = vmatmul.mubr.f32.gmra.mxu0 %v2196
      %v3235 = vpop.f32.mrf.mxu0
      %v3236 = vadd.f32 %v3011, %v3235
      %v3237 = vpop.f32.mrf.mxu0
      %3238 = vmatprep.mubr.f32.mxu0 %v2209
      %3239 = vmatmul.mubr.f32.gmra.mxu0 %v2208
      %v3240 = vpop.f32.mrf.mxu0
      %v3241 = vadd.f32 %v3016, %v3240
      %v3242 = vpop.f32.mrf.mxu0
      %3243 = vmatprep.mubr.f32.mxu0 %v2221
      %3244 = vmatmul.mubr.f32.gmra.mxu0 %v2220
      %v3245 = vpop.f32.mrf.mxu0
      %v3246 = vadd.f32 %v3021, %v3245
      %v3247 = vpop.f32.mrf.mxu0
      %3248 = vmatprep.mubr.f32.mxu0 %v2233
      %3249 = vmatmul.mubr.f32.gmra.mxu0 %v2232
      %v3250 = vpop.f32.mrf.mxu0
      %v3251 = vadd.f32 %v3026, %v3250
      %v3252 = vpop.f32.mrf.mxu0
      %3253 = vmatprep.mubr.f32.mxu0 %v2245
      %3254 = vmatmul.mubr.f32.gmra.mxu0 %v2244
      %v3255 = vpop.f32.mrf.mxu0
      %v3256 = vadd.f32 %v3031, %v3255
      %v3257 = vpop.f32.mrf.mxu0
      %3258 = vmatprep.mubr.f32.mxu0 %v2257
      %3259 = vmatmul.mubr.f32.gmra.mxu0 %v2256
      %v3260 = vpop.f32.mrf.mxu0
      %v3261 = vadd.f32 %v3036, %v3260
      %v3262 = vpop.f32.mrf.mxu0
      %3263 = vmatprep.mubr.f32.mxu0 %v2269
      %3264 = vmatmul.mubr.f32.gmra.mxu0 %v2268
      %v3265 = vpop.f32.mrf.mxu0
      %v3266 = vadd.f32 %v3041, %v3265
      %v3267 = vpop.f32.mrf.mxu0
      %3268 = vmatprep.mubr.f32.mxu0 %v2281
      %3269 = vmatmul.mubr.f32.gmra.mxu0 %v2280
      %v3270 = vpop.f32.mrf.mxu0
      %v3271 = vadd.f32 %v3046, %v3270
      %v3272 = vpop.f32.mrf.mxu0
      %3273 = vmatprep.mubr.f32.mxu0 %v2293
      %3274 = vmatmul.mubr.f32.gmra.mxu0 %v2292
      %v3275 = vpop.f32.mrf.mxu0
      %v3276 = vadd.f32 %v3051, %v3275
      %v3277 = vpop.f32.mrf.mxu0
      %3278 = vmatprep.mubr.f32.mxu0 %v2305
      %3279 = vmatmul.mubr.f32.gmra.mxu0 %v2304
      %v3280 = vpop.f32.mrf.mxu0
      %v3281 = vadd.f32 %v3056, %v3280
      %v3282 = vpop.f32.mrf.mxu0
      %3283 = vmatprep.mubr.f32.mxu0 %v2317
      %3284 = vmatmul.mubr.f32.gmra.mxu0 %v2316
      %v3285 = vpop.f32.mrf.mxu0
      %v3286 = vadd.f32 %v3061, %v3285
      %v3287 = vpop.f32.mrf.mxu0
      %3288 = vmatprep.mubr.f32.mxu0 %v2329
      %3289 = vmatmul.mubr.f32.gmra.mxu0 %v2328
      %v3290 = vpop.f32.mrf.mxu0
      %v3291 = vadd.f32 %v3066, %v3290
      %v3292 = vpop.f32.mrf.mxu0
      %3293 = vmatprep.mubr.f32.mxu0 %v2341
      %3294 = vmatmul.mubr.f32.gmra.mxu0 %v2340
      %v3295 = vpop.f32.mrf.mxu0
      %v3296 = vadd.f32 %v3071, %v3295
      %v3297 = vpop.f32.mrf.mxu0
      %3298 = vmatprep.mubr.f32.mxu0 %v2353
      %3299 = vmatmul.mubr.f32.gmra.mxu0 %v2352
      %v3300 = vpop.f32.mrf.mxu0
      %v3301 = vadd.f32 %v3076, %v3300
      %v3302 = vpop.f32.mrf.mxu0
      %3303 = vmatprep.mubr.f32.mxu0 %v2365
      %3304 = vmatmul.mubr.f32.gmra.mxu0 %v2364
      %v3305 = vpop.f32.mrf.mxu0
      %v3306 = vadd.f32 %v3081, %v3305
      %v3307 = vpop.f32.mrf.mxu0
      %3308 = vmatprep.mubr.f32.mxu0 %v2377
      %3309 = vmatmul.mubr.f32.gmra.mxu0 %v2376
      %v3310 = vpop.f32.mrf.mxu0
      %v3311 = vadd.f32 %v3086, %v3310
      %v3312 = vpop.f32.mrf.mxu0
      %3313 = vmatprep.mubr.f32.mxu0 %v2389
      %3314 = vmatmul.mubr.f32.gmra.mxu0 %v2388
      %v3315 = vpop.f32.mrf.mxu0
      %v3316 = vadd.f32 %v3091, %v3315
      %v3317 = vpop.f32.mrf.mxu0
      %3318 = vmatprep.mubr.f32.mxu0 %v2401
      %3319 = vmatmul.mubr.f32.gmra.mxu0 %v2400
      %v3320 = vpop.f32.mrf.mxu0
      %v3321 = vadd.f32 %v3096, %v3320
      %v3322 = vpop.f32.mrf.mxu0
      %3323 = vmatprep.mubr.f32.mxu0 %v2413
      %3324 = vmatmul.mubr.f32.gmra.mxu0 %v2412
      %v3325 = vpop.f32.mrf.mxu0
      %v3326 = vadd.f32 %v3101, %v3325
      %v3327 = vpop.f32.mrf.mxu0
      %3328 = vmatprep.mubr.f32.mxu0 %v2425
      %3329 = vmatmul.mubr.f32.gmra.mxu0 %v2424
      %v3330 = vpop.f32.mrf.mxu0
      %v3331 = vadd.f32 %v3106, %v3330
      %v3332 = vpop.f32.mrf.mxu0
      %3333 = vmatprep.mubr.f32.mxu0 %v2437
      %3334 = vmatmul.mubr.f32.gmra.mxu0 %v2436
      %v3335 = vpop.f32.mrf.mxu0
      %v3336 = vadd.f32 %v3111, %v3335
      %v3337 = vpop.f32.mrf.mxu0
      %3338 = vmatprep.mubr.f32.mxu0 %v2449
      %3339 = vmatmul.mubr.f32.gmra.mxu0 %v2448
      %v3340 = vpop.f32.mrf.mxu0
      %v3341 = vadd.f32 %v3116, %v3340
      %v3342 = vpop.f32.mrf.mxu0
      %3343 = vmatprep.mubr.f32.mxu0 %v2461
      %3344 = vmatmul.mubr.f32.gmra.mxu0 %v2460
      %v3345 = vpop.f32.mrf.mxu0
      %v3346 = vadd.f32 %v3121, %v3345
      %v3347 = vpop.f32.mrf.mxu0
      %3348 = vmatprep.mubr.f32.mxu0 %v2473
      %3349 = vmatmul.mubr.f32.gmra.mxu0 %v2472
      %v3350 = vpop.f32.mrf.mxu0
      %v3351 = vadd.f32 %v3126, %v3350
      %v3352 = vpop.f32.mrf.mxu0
      %3353 = vdwg.mxu0
      %3354 = vmatprep.subr.mxu0 0.0
      %3355 = vmatpush1.msra.mxu0 %v2591
      %3356 = vmatprep.subr.mxu0 0.0
      %3357 = vmatpush1.msra.mxu0 %v2590
      %3358 = vmatprep.subr.mxu0 0.0
      %3359 = vmatpush1.msra.mxu0 %v2589
      %3360 = vmatprep.subr.mxu0 0.0
      %3361 = vmatpush1.msra.mxu0 %v2588
      %3362 = vmatprep.subr.mxu0 0.0
      %3363 = vmatpush1.msra.mxu0 %v2587
      %3364 = vmatprep.subr.mxu0 0.0
      %3365 = vmatpush1.msra.mxu0 %v2586
      %3366 = vmatprep.subr.mxu0 0.0
      %3367 = vmatpush1.msra.mxu0 %v2585
      %3368 = vmatprep.subr.mxu0 0.0
      %3369 = vmatpush1.msra.mxu0 %v2584
      %3370 = vmatprep.subr.mxu0 0.0
      %3371 = vmatpush1.msra.mxu0 %v2583
      %3372 = vmatprep.subr.mxu0 0.0
      %3373 = vmatpush1.msra.mxu0 %v2582
      %3374 = vmatprep.subr.mxu0 0.0
      %3375 = vmatpush1.msra.mxu0 %v2581
      %3376 = vmatprep.subr.mxu0 0.0
      %3377 = vmatpush1.msra.mxu0 %v2580
      %3378 = vmatprep.subr.mxu0 0.0
      %3379 = vmatpush1.msra.mxu0 %v2579
      %3380 = vmatprep.subr.mxu0 0.0
      %3381 = vmatpush1.msra.mxu0 %v2578
      %3382 = vmatprep.subr.mxu0 0.0
      %3383 = vmatpush1.msra.mxu0 %v2577
      %3384 = vmatprep.subr.mxu0 0.0
      %3385 = vmatpush1.msra.mxu0 %v2576
      %3386 = vmatprep.subr.mxu0 0.0
      %3387 = vmatpush2.msra.mxu0 %v2607
      %3388 = vmatprep.subr.mxu0 0.0
      %3389 = vmatpush2.msra.mxu0 %v2606
      %3390 = vmatprep.subr.mxu0 0.0
      %3391 = vmatpush2.msra.mxu0 %v2605
      %3392 = vmatprep.subr.mxu0 0.0
      %3393 = vmatpush2.msra.mxu0 %v2604
      %3394 = vmatprep.subr.mxu0 0.0
      %3395 = vmatpush2.msra.mxu0 %v2603
      %3396 = vmatprep.subr.mxu0 0.0
      %3397 = vmatpush2.msra.mxu0 %v2602
      %3398 = vmatprep.subr.mxu0 0.0
      %3399 = vmatpush2.msra.mxu0 %v2601
      %3400 = vmatprep.subr.mxu0 0.0
      %3401 = vmatpush2.msra.mxu0 %v2600
      %3402 = vmatprep.subr.mxu0 0.0
      %3403 = vmatpush2.msra.mxu0 %v2599
      %3404 = vmatprep.subr.mxu0 0.0
      %3405 = vmatpush2.msra.mxu0 %v2598
      %3406 = vmatprep.subr.mxu0 0.0
      %3407 = vmatpush2.msra.mxu0 %v2597
      %3408 = vmatprep.subr.mxu0 0.0
      %3409 = vmatpush2.msra.mxu0 %v2596
      %3410 = vmatprep.subr.mxu0 0.0
      %3411 = vmatpush2.msra.mxu0 %v2595
      %3412 = vmatprep.subr.mxu0 0.0
      %3413 = vmatpush2.msra.mxu0 %v2594
      %3414 = vmatprep.subr.mxu0 0.0
      %3415 = vmatpush2.msra.mxu0 %v2593
      %3416 = vmatprep.subr.mxu0 0.0
      %3417 = vmatpush2.msra.mxu0 %v2592
      %3418 = vmatprep.mubr.f32.mxu0 %v2103
      %3419 = vmatmul.mubr.f32.gmra.mxu0 %v2102
      %v3420 = vpop.f32.mrf.mxu0
      %v3421 = vadd.f32 %v3196, %v3420
      %v3422 = vpop.f32.mrf.mxu0
      %3423 = vmatprep.mubr.f32.mxu0 %v2115
      %3424 = vmatmul.mubr.f32.gmra.mxu0 %v2114
      %v3425 = vpop.f32.mrf.mxu0
      %v3426 = vadd.f32 %v3201, %v3425
      %v3427 = vpop.f32.mrf.mxu0
      %3428 = vmatprep.mubr.f32.mxu0 %v2127
      %3429 = vmatmul.mubr.f32.gmra.mxu0 %v2126
      %v3430 = vpop.f32.mrf.mxu0
      %v3431 = vadd.f32 %v3206, %v3430
      %v3432 = vpop.f32.mrf.mxu0
      %3433 = vmatprep.mubr.f32.mxu0 %v2139
      %3434 = vmatmul.mubr.f32.gmra.mxu0 %v2138
      %v3435 = vpop.f32.mrf.mxu0
      %v3436 = vadd.f32 %v3211, %v3435
      %v3437 = vpop.f32.mrf.mxu0
      %3438 = vmatprep.mubr.f32.mxu0 %v2151
      %3439 = vmatmul.mubr.f32.gmra.mxu0 %v2150
      %v3440 = vpop.f32.mrf.mxu0
      %v3441 = vadd.f32 %v3216, %v3440
      %v3442 = vpop.f32.mrf.mxu0
      %3443 = vmatprep.mubr.f32.mxu0 %v2163
      %3444 = vmatmul.mubr.f32.gmra.mxu0 %v2162
      %v3445 = vpop.f32.mrf.mxu0
      %v3446 = vadd.f32 %v3221, %v3445
      %v3447 = vpop.f32.mrf.mxu0
      %3448 = vmatprep.mubr.f32.mxu0 %v2175
      %3449 = vmatmul.mubr.f32.gmra.mxu0 %v2174
      %v3450 = vpop.f32.mrf.mxu0
      %v3451 = vadd.f32 %v3226, %v3450
      %v3452 = vpop.f32.mrf.mxu0
      %3453 = vmatprep.mubr.f32.mxu0 %v2187
      %3454 = vmatmul.mubr.f32.gmra.mxu0 %v2186
      %v3455 = vpop.f32.mrf.mxu0
      %v3456 = vadd.f32 %v3231, %v3455
      %v3457 = vpop.f32.mrf.mxu0
      %3458 = vmatprep.mubr.f32.mxu0 %v2199
      %3459 = vmatmul.mubr.f32.gmra.mxu0 %v2198
      %v3460 = vpop.f32.mrf.mxu0
      %v3461 = vadd.f32 %v3236, %v3460
      %v3462 = vpop.f32.mrf.mxu0
      %3463 = vmatprep.mubr.f32.mxu0 %v2211
      %3464 = vmatmul.mubr.f32.gmra.mxu0 %v2210
      %v3465 = vpop.f32.mrf.mxu0
      %v3466 = vadd.f32 %v3241, %v3465
      %v3467 = vpop.f32.mrf.mxu0
      %3468 = vmatprep.mubr.f32.mxu0 %v2223
      %3469 = vmatmul.mubr.f32.gmra.mxu0 %v2222
      %v3470 = vpop.f32.mrf.mxu0
      %v3471 = vadd.f32 %v3246, %v3470
      %v3472 = vpop.f32.mrf.mxu0
      %3473 = vmatprep.mubr.f32.mxu0 %v2235
      %3474 = vmatmul.mubr.f32.gmra.mxu0 %v2234
      %v3475 = vpop.f32.mrf.mxu0
      %v3476 = vadd.f32 %v3251, %v3475
      %v3477 = vpop.f32.mrf.mxu0
      %3478 = vmatprep.mubr.f32.mxu0 %v2247
      %3479 = vmatmul.mubr.f32.gmra.mxu0 %v2246
      %v3480 = vpop.f32.mrf.mxu0
      %v3481 = vadd.f32 %v3256, %v3480
      %v3482 = vpop.f32.mrf.mxu0
      %3483 = vmatprep.mubr.f32.mxu0 %v2259
      %3484 = vmatmul.mubr.f32.gmra.mxu0 %v2258
      %v3485 = vpop.f32.mrf.mxu0
      %v3486 = vadd.f32 %v3261, %v3485
      %v3487 = vpop.f32.mrf.mxu0
      %3488 = vmatprep.mubr.f32.mxu0 %v2271
      %3489 = vmatmul.mubr.f32.gmra.mxu0 %v2270
      %v3490 = vpop.f32.mrf.mxu0
      %v3491 = vadd.f32 %v3266, %v3490
      %v3492 = vpop.f32.mrf.mxu0
      %3493 = vmatprep.mubr.f32.mxu0 %v2283
      %3494 = vmatmul.mubr.f32.gmra.mxu0 %v2282
      %v3495 = vpop.f32.mrf.mxu0
      %v3496 = vadd.f32 %v3271, %v3495
      %v3497 = vpop.f32.mrf.mxu0
      %3498 = vmatprep.mubr.f32.mxu0 %v2295
      %3499 = vmatmul.mubr.f32.gmra.mxu0 %v2294
      %v3500 = vpop.f32.mrf.mxu0
      %v3501 = vadd.f32 %v3276, %v3500
      %v3502 = vpop.f32.mrf.mxu0
      %3503 = vmatprep.mubr.f32.mxu0 %v2307
      %3504 = vmatmul.mubr.f32.gmra.mxu0 %v2306
      %v3505 = vpop.f32.mrf.mxu0
      %v3506 = vadd.f32 %v3281, %v3505
      %v3507 = vpop.f32.mrf.mxu0
      %3508 = vmatprep.mubr.f32.mxu0 %v2319
      %3509 = vmatmul.mubr.f32.gmra.mxu0 %v2318
      %v3510 = vpop.f32.mrf.mxu0
      %v3511 = vadd.f32 %v3286, %v3510
      %v3512 = vpop.f32.mrf.mxu0
      %3513 = vmatprep.mubr.f32.mxu0 %v2331
      %3514 = vmatmul.mubr.f32.gmra.mxu0 %v2330
      %v3515 = vpop.f32.mrf.mxu0
      %v3516 = vadd.f32 %v3291, %v3515
      %v3517 = vpop.f32.mrf.mxu0
      %3518 = vmatprep.mubr.f32.mxu0 %v2343
      %3519 = vmatmul.mubr.f32.gmra.mxu0 %v2342
      %v3520 = vpop.f32.mrf.mxu0
      %v3521 = vadd.f32 %v3296, %v3520
      %v3522 = vpop.f32.mrf.mxu0
      %3523 = vmatprep.mubr.f32.mxu0 %v2355
      %3524 = vmatmul.mubr.f32.gmra.mxu0 %v2354
      %v3525 = vpop.f32.mrf.mxu0
      %v3526 = vadd.f32 %v3301, %v3525
      %v3527 = vpop.f32.mrf.mxu0
      %3528 = vmatprep.mubr.f32.mxu0 %v2367
      %3529 = vmatmul.mubr.f32.gmra.mxu0 %v2366
      %v3530 = vpop.f32.mrf.mxu0
      %v3531 = vadd.f32 %v3306, %v3530
      %v3532 = vpop.f32.mrf.mxu0
      %3533 = vmatprep.mubr.f32.mxu0 %v2379
      %3534 = vmatmul.mubr.f32.gmra.mxu0 %v2378
      %v3535 = vpop.f32.mrf.mxu0
      %v3536 = vadd.f32 %v3311, %v3535
      %v3537 = vpop.f32.mrf.mxu0
      %3538 = vmatprep.mubr.f32.mxu0 %v2391
      %3539 = vmatmul.mubr.f32.gmra.mxu0 %v2390
      %v3540 = vpop.f32.mrf.mxu0
      %v3541 = vadd.f32 %v3316, %v3540
      %v3542 = vpop.f32.mrf.mxu0
      %3543 = vmatprep.mubr.f32.mxu0 %v2403
      %3544 = vmatmul.mubr.f32.gmra.mxu0 %v2402
      %v3545 = vpop.f32.mrf.mxu0
      %v3546 = vadd.f32 %v3321, %v3545
      %v3547 = vpop.f32.mrf.mxu0
      %3548 = vmatprep.mubr.f32.mxu0 %v2415
      %3549 = vmatmul.mubr.f32.gmra.mxu0 %v2414
      %v3550 = vpop.f32.mrf.mxu0
      %v3551 = vadd.f32 %v3326, %v3550
      %v3552 = vpop.f32.mrf.mxu0
      %3553 = vmatprep.mubr.f32.mxu0 %v2427
      %3554 = vmatmul.mubr.f32.gmra.mxu0 %v2426
      %v3555 = vpop.f32.mrf.mxu0
      %v3556 = vadd.f32 %v3331, %v3555
      %v3557 = vpop.f32.mrf.mxu0
      %3558 = vmatprep.mubr.f32.mxu0 %v2439
      %3559 = vmatmul.mubr.f32.gmra.mxu0 %v2438
      %v3560 = vpop.f32.mrf.mxu0
      %v3561 = vadd.f32 %v3336, %v3560
      %v3562 = vpop.f32.mrf.mxu0
      %3563 = vmatprep.mubr.f32.mxu0 %v2451
      %3564 = vmatmul.mubr.f32.gmra.mxu0 %v2450
      %v3565 = vpop.f32.mrf.mxu0
      %v3566 = vadd.f32 %v3341, %v3565
      %v3567 = vpop.f32.mrf.mxu0
      %3568 = vmatprep.mubr.f32.mxu0 %v2463
      %3569 = vmatmul.mubr.f32.gmra.mxu0 %v2462
      %v3570 = vpop.f32.mrf.mxu0
      %v3571 = vadd.f32 %v3346, %v3570
      %v3572 = vpop.f32.mrf.mxu0
      %3573 = vmatprep.mubr.f32.mxu0 %v2475
      %3574 = vmatmul.mubr.f32.gmra.mxu0 %v2474
      %v3575 = vpop.f32.mrf.mxu0
      %v3576 = vadd.f32 %v3351, %v3575
      %v3577 = vpop.f32.mrf.mxu0
      %3578 = vdwg.mxu0
      %3579 = vmatprep.subr.mxu0 0.0
      %3580 = vmatpush1.msra.mxu0 %v2623
      %3581 = vmatprep.subr.mxu0 0.0
      %3582 = vmatpush1.msra.mxu0 %v2622
      %3583 = vmatprep.subr.mxu0 0.0
      %3584 = vmatpush1.msra.mxu0 %v2621
      %3585 = vmatprep.subr.mxu0 0.0
      %3586 = vmatpush1.msra.mxu0 %v2620
      %3587 = vmatprep.subr.mxu0 0.0
      %3588 = vmatpush1.msra.mxu0 %v2619
      %3589 = vmatprep.subr.mxu0 0.0
      %3590 = vmatpush1.msra.mxu0 %v2618
      %3591 = vmatprep.subr.mxu0 0.0
      %3592 = vmatpush1.msra.mxu0 %v2617
      %3593 = vmatprep.subr.mxu0 0.0
      %3594 = vmatpush1.msra.mxu0 %v2616
      %3595 = vmatprep.subr.mxu0 0.0
      %3596 = vmatpush1.msra.mxu0 %v2615
      %3597 = vmatprep.subr.mxu0 0.0
      %3598 = vmatpush1.msra.mxu0 %v2614
      %3599 = vmatprep.subr.mxu0 0.0
      %3600 = vmatpush1.msra.mxu0 %v2613
      %3601 = vmatprep.subr.mxu0 0.0
      %3602 = vmatpush1.msra.mxu0 %v2612
      %3603 = vmatprep.subr.mxu0 0.0
      %3604 = vmatpush1.msra.mxu0 %v2611
      %3605 = vmatprep.subr.mxu0 0.0
      %3606 = vmatpush1.msra.mxu0 %v2610
      %3607 = vmatprep.subr.mxu0 0.0
      %3608 = vmatpush1.msra.mxu0 %v2609
      %3609 = vmatprep.subr.mxu0 0.0
      %3610 = vmatpush1.msra.mxu0 %v2608
      %3611 = vmatprep.subr.mxu0 0.0
      %3612 = vmatpush2.msra.mxu0 %v2639
      %3613 = vmatprep.subr.mxu0 0.0
      %3614 = vmatpush2.msra.mxu0 %v2638
      %3615 = vmatprep.subr.mxu0 0.0
      %3616 = vmatpush2.msra.mxu0 %v2637
      %3617 = vmatprep.subr.mxu0 0.0
      %3618 = vmatpush2.msra.mxu0 %v2636
      %3619 = vmatprep.subr.mxu0 0.0
      %3620 = vmatpush2.msra.mxu0 %v2635
      %3621 = vmatprep.subr.mxu0 0.0
      %3622 = vmatpush2.msra.mxu0 %v2634
      %3623 = vmatprep.subr.mxu0 0.0
      %3624 = vmatpush2.msra.mxu0 %v2633
      %3625 = vmatprep.subr.mxu0 0.0
      %3626 = vmatpush2.msra.mxu0 %v2632
      %3627 = vmatprep.subr.mxu0 0.0
      %3628 = vmatpush2.msra.mxu0 %v2631
      %3629 = vmatprep.subr.mxu0 0.0
      %3630 = vmatpush2.msra.mxu0 %v2630
      %3631 = vmatprep.subr.mxu0 0.0
      %3632 = vmatpush2.msra.mxu0 %v2629
      %3633 = vmatprep.subr.mxu0 0.0
      %3634 = vmatpush2.msra.mxu0 %v2628
      %3635 = vmatprep.subr.mxu0 0.0
      %3636 = vmatpush2.msra.mxu0 %v2627
      %3637 = vmatprep.subr.mxu0 0.0
      %3638 = vmatpush2.msra.mxu0 %v2626
      %3639 = vmatprep.subr.mxu0 0.0
      %3640 = vmatpush2.msra.mxu0 %v2625
      %3641 = vmatprep.subr.mxu0 0.0
      %3642 = vmatpush2.msra.mxu0 %v2624
      %3643 = vmatprep.mubr.f32.mxu0 %v2105
      %3644 = vmatmul.mubr.f32.gmra.mxu0 %v2104
      %v3645 = vpop.f32.mrf.mxu0
      %v3646 = vadd.f32 %v3421, %v3645
      %v3647 = vpop.f32.mrf.mxu0
      %3648 = vmatprep.mubr.f32.mxu0 %v2117
      %3649 = vmatmul.mubr.f32.gmra.mxu0 %v2116
      %v3650 = vpop.f32.mrf.mxu0
      %v3651 = vadd.f32 %v3426, %v3650
      %v3652 = vpop.f32.mrf.mxu0
      %3653 = vmatprep.mubr.f32.mxu0 %v2129
      %3654 = vmatmul.mubr.f32.gmra.mxu0 %v2128
      %v3655 = vpop.f32.mrf.mxu0
      %v3656 = vadd.f32 %v3431, %v3655
      %v3657 = vpop.f32.mrf.mxu0
      %3658 = vmatprep.mubr.f32.mxu0 %v2141
      %3659 = vmatmul.mubr.f32.gmra.mxu0 %v2140
      %v3660 = vpop.f32.mrf.mxu0
      %v3661 = vadd.f32 %v3436, %v3660
      %v3662 = vpop.f32.mrf.mxu0
      %3663 = vmatprep.mubr.f32.mxu0 %v2153
      %3664 = vmatmul.mubr.f32.gmra.mxu0 %v2152
      %v3665 = vpop.f32.mrf.mxu0
      %v3666 = vadd.f32 %v3441, %v3665
      %v3667 = vpop.f32.mrf.mxu0
      %3668 = vmatprep.mubr.f32.mxu0 %v2165
      %3669 = vmatmul.mubr.f32.gmra.mxu0 %v2164
      %v3670 = vpop.f32.mrf.mxu0
      %v3671 = vadd.f32 %v3446, %v3670
      %v3672 = vpop.f32.mrf.mxu0
      %3673 = vmatprep.mubr.f32.mxu0 %v2177
      %3674 = vmatmul.mubr.f32.gmra.mxu0 %v2176
      %v3675 = vpop.f32.mrf.mxu0
      %v3676 = vadd.f32 %v3451, %v3675
      %v3677 = vpop.f32.mrf.mxu0
      %3678 = vmatprep.mubr.f32.mxu0 %v2189
      %3679 = vmatmul.mubr.f32.gmra.mxu0 %v2188
      %v3680 = vpop.f32.mrf.mxu0
      %v3681 = vadd.f32 %v3456, %v3680
      %v3682 = vpop.f32.mrf.mxu0
      %3683 = vmatprep.mubr.f32.mxu0 %v2201
      %3684 = vmatmul.mubr.f32.gmra.mxu0 %v2200
      %v3685 = vpop.f32.mrf.mxu0
      %v3686 = vadd.f32 %v3461, %v3685
      %v3687 = vpop.f32.mrf.mxu0
      %3688 = vmatprep.mubr.f32.mxu0 %v2213
      %3689 = vmatmul.mubr.f32.gmra.mxu0 %v2212
      %v3690 = vpop.f32.mrf.mxu0
      %v3691 = vadd.f32 %v3466, %v3690
      %v3692 = vpop.f32.mrf.mxu0
      %3693 = vmatprep.mubr.f32.mxu0 %v2225
      %3694 = vmatmul.mubr.f32.gmra.mxu0 %v2224
      %v3695 = vpop.f32.mrf.mxu0
      %v3696 = vadd.f32 %v3471, %v3695
      %v3697 = vpop.f32.mrf.mxu0
      %3698 = vmatprep.mubr.f32.mxu0 %v2237
      %3699 = vmatmul.mubr.f32.gmra.mxu0 %v2236
      %v3700 = vpop.f32.mrf.mxu0
      %v3701 = vadd.f32 %v3476, %v3700
      %v3702 = vpop.f32.mrf.mxu0
      %3703 = vmatprep.mubr.f32.mxu0 %v2249
      %3704 = vmatmul.mubr.f32.gmra.mxu0 %v2248
      %v3705 = vpop.f32.mrf.mxu0
      %v3706 = vadd.f32 %v3481, %v3705
      %v3707 = vpop.f32.mrf.mxu0
      %3708 = vmatprep.mubr.f32.mxu0 %v2261
      %3709 = vmatmul.mubr.f32.gmra.mxu0 %v2260
      %v3710 = vpop.f32.mrf.mxu0
      %v3711 = vadd.f32 %v3486, %v3710
      %v3712 = vpop.f32.mrf.mxu0
      %3713 = vmatprep.mubr.f32.mxu0 %v2273
      %3714 = vmatmul.mubr.f32.gmra.mxu0 %v2272
      %v3715 = vpop.f32.mrf.mxu0
      %v3716 = vadd.f32 %v3491, %v3715
      %v3717 = vpop.f32.mrf.mxu0
      %3718 = vmatprep.mubr.f32.mxu0 %v2285
      %3719 = vmatmul.mubr.f32.gmra.mxu0 %v2284
      %v3720 = vpop.f32.mrf.mxu0
      %v3721 = vadd.f32 %v3496, %v3720
      %v3722 = vpop.f32.mrf.mxu0
      %3723 = vmatprep.mubr.f32.mxu0 %v2297
      %3724 = vmatmul.mubr.f32.gmra.mxu0 %v2296
      %v3725 = vpop.f32.mrf.mxu0
      %v3726 = vadd.f32 %v3501, %v3725
      %v3727 = vpop.f32.mrf.mxu0
      %3728 = vmatprep.mubr.f32.mxu0 %v2309
      %3729 = vmatmul.mubr.f32.gmra.mxu0 %v2308
      %v3730 = vpop.f32.mrf.mxu0
      %v3731 = vadd.f32 %v3506, %v3730
      %v3732 = vpop.f32.mrf.mxu0
      %3733 = vmatprep.mubr.f32.mxu0 %v2321
      %3734 = vmatmul.mubr.f32.gmra.mxu0 %v2320
      %v3735 = vpop.f32.mrf.mxu0
      %v3736 = vadd.f32 %v3511, %v3735
      %v3737 = vpop.f32.mrf.mxu0
      %3738 = vmatprep.mubr.f32.mxu0 %v2333
      %3739 = vmatmul.mubr.f32.gmra.mxu0 %v2332
      %v3740 = vpop.f32.mrf.mxu0
      %v3741 = vadd.f32 %v3516, %v3740
      %v3742 = vpop.f32.mrf.mxu0
      %3743 = vmatprep.mubr.f32.mxu0 %v2345
      %3744 = vmatmul.mubr.f32.gmra.mxu0 %v2344
      %v3745 = vpop.f32.mrf.mxu0
      %v3746 = vadd.f32 %v3521, %v3745
      %v3747 = vpop.f32.mrf.mxu0
      %3748 = vmatprep.mubr.f32.mxu0 %v2357
      %3749 = vmatmul.mubr.f32.gmra.mxu0 %v2356
      %v3750 = vpop.f32.mrf.mxu0
      %v3751 = vadd.f32 %v3526, %v3750
      %v3752 = vpop.f32.mrf.mxu0
      %3753 = vmatprep.mubr.f32.mxu0 %v2369
      %3754 = vmatmul.mubr.f32.gmra.mxu0 %v2368
      %v3755 = vpop.f32.mrf.mxu0
      %v3756 = vadd.f32 %v3531, %v3755
      %v3757 = vpop.f32.mrf.mxu0
      %3758 = vmatprep.mubr.f32.mxu0 %v2381
      %3759 = vmatmul.mubr.f32.gmra.mxu0 %v2380
      %v3760 = vpop.f32.mrf.mxu0
      %v3761 = vadd.f32 %v3536, %v3760
      %v3762 = vpop.f32.mrf.mxu0
      %3763 = vmatprep.mubr.f32.mxu0 %v2393
      %3764 = vmatmul.mubr.f32.gmra.mxu0 %v2392
      %v3765 = vpop.f32.mrf.mxu0
      %v3766 = vadd.f32 %v3541, %v3765
      %v3767 = vpop.f32.mrf.mxu0
      %3768 = vmatprep.mubr.f32.mxu0 %v2405
      %3769 = vmatmul.mubr.f32.gmra.mxu0 %v2404
      %v3770 = vpop.f32.mrf.mxu0
      %v3771 = vadd.f32 %v3546, %v3770
      %v3772 = vpop.f32.mrf.mxu0
      %3773 = vmatprep.mubr.f32.mxu0 %v2417
      %3774 = vmatmul.mubr.f32.gmra.mxu0 %v2416
      %v3775 = vpop.f32.mrf.mxu0
      %v3776 = vadd.f32 %v3551, %v3775
      %v3777 = vpop.f32.mrf.mxu0
      %3778 = vmatprep.mubr.f32.mxu0 %v2429
      %3779 = vmatmul.mubr.f32.gmra.mxu0 %v2428
      %v3780 = vpop.f32.mrf.mxu0
      %v3781 = vadd.f32 %v3556, %v3780
      %v3782 = vpop.f32.mrf.mxu0
      %3783 = vmatprep.mubr.f32.mxu0 %v2441
      %3784 = vmatmul.mubr.f32.gmra.mxu0 %v2440
      %v3785 = vpop.f32.mrf.mxu0
      %v3786 = vadd.f32 %v3561, %v3785
      %v3787 = vpop.f32.mrf.mxu0
      %3788 = vmatprep.mubr.f32.mxu0 %v2453
      %3789 = vmatmul.mubr.f32.gmra.mxu0 %v2452
      %v3790 = vpop.f32.mrf.mxu0
      %v3791 = vadd.f32 %v3566, %v3790
      %v3792 = vpop.f32.mrf.mxu0
      %3793 = vmatprep.mubr.f32.mxu0 %v2465
      %3794 = vmatmul.mubr.f32.gmra.mxu0 %v2464
      %v3795 = vpop.f32.mrf.mxu0
      %v3796 = vadd.f32 %v3571, %v3795
      %v3797 = vpop.f32.mrf.mxu0
      %3798 = vmatprep.mubr.f32.mxu0 %v2477
      %3799 = vmatmul.mubr.f32.gmra.mxu0 %v2476
      %v3800 = vpop.f32.mrf.mxu0
      %v3801 = vadd.f32 %v3576, %v3800
      %v3802 = vpop.f32.mrf.mxu0
      %3803 = vdwg.mxu0
      %3804 = vmatprep.subr.mxu0 0.0
      %3805 = vmatpush1.msra.mxu0 %v2655
      %3806 = vmatprep.subr.mxu0 0.0
      %3807 = vmatpush1.msra.mxu0 %v2654
      %3808 = vmatprep.subr.mxu0 0.0
      %3809 = vmatpush1.msra.mxu0 %v2653
      %3810 = vmatprep.subr.mxu0 0.0
      %3811 = vmatpush1.msra.mxu0 %v2652
      %3812 = vmatprep.subr.mxu0 0.0
      %3813 = vmatpush1.msra.mxu0 %v2651
      %3814 = vmatprep.subr.mxu0 0.0
      %3815 = vmatpush1.msra.mxu0 %v2650
      %3816 = vmatprep.subr.mxu0 0.0
      %3817 = vmatpush1.msra.mxu0 %v2649
      %3818 = vmatprep.subr.mxu0 0.0
      %3819 = vmatpush1.msra.mxu0 %v2648
      %3820 = vmatprep.subr.mxu0 0.0
      %3821 = vmatpush1.msra.mxu0 %v2647
      %3822 = vmatprep.subr.mxu0 0.0
      %3823 = vmatpush1.msra.mxu0 %v2646
      %3824 = vmatprep.subr.mxu0 0.0
      %3825 = vmatpush1.msra.mxu0 %v2645
      %3826 = vmatprep.subr.mxu0 0.0
      %3827 = vmatpush1.msra.mxu0 %v2644
      %3828 = vmatprep.subr.mxu0 0.0
      %3829 = vmatpush1.msra.mxu0 %v2643
      %3830 = vmatprep.subr.mxu0 0.0
      %3831 = vmatpush1.msra.mxu0 %v2642
      %3832 = vmatprep.subr.mxu0 0.0
      %3833 = vmatpush1.msra.mxu0 %v2641
      %3834 = vmatprep.subr.mxu0 0.0
      %3835 = vmatpush1.msra.mxu0 %v2640
      %3836 = vmatprep.subr.mxu0 0.0
      %3837 = vmatpush2.msra.mxu0 %v2671
      %3838 = vmatprep.subr.mxu0 0.0
      %3839 = vmatpush2.msra.mxu0 %v2670
      %3840 = vmatprep.subr.mxu0 0.0
      %3841 = vmatpush2.msra.mxu0 %v2669
      %3842 = vmatprep.subr.mxu0 0.0
      %3843 = vmatpush2.msra.mxu0 %v2668
      %3844 = vmatprep.subr.mxu0 0.0
      %3845 = vmatpush2.msra.mxu0 %v2667
      %3846 = vmatprep.subr.mxu0 0.0
      %3847 = vmatpush2.msra.mxu0 %v2666
      %3848 = vmatprep.subr.mxu0 0.0
      %3849 = vmatpush2.msra.mxu0 %v2665
      %3850 = vmatprep.subr.mxu0 0.0
      %3851 = vmatpush2.msra.mxu0 %v2664
      %3852 = vmatprep.subr.mxu0 0.0
      %3853 = vmatpush2.msra.mxu0 %v2663
      %3854 = vmatprep.subr.mxu0 0.0
      %3855 = vmatpush2.msra.mxu0 %v2662
      %3856 = vmatprep.subr.mxu0 0.0
      %3857 = vmatpush2.msra.mxu0 %v2661
      %3858 = vmatprep.subr.mxu0 0.0
      %3859 = vmatpush2.msra.mxu0 %v2660
      %3860 = vmatprep.subr.mxu0 0.0
      %3861 = vmatpush2.msra.mxu0 %v2659
      %3862 = vmatprep.subr.mxu0 0.0
      %3863 = vmatpush2.msra.mxu0 %v2658
      %3864 = vmatprep.subr.mxu0 0.0
      %3865 = vmatpush2.msra.mxu0 %v2657
      %3866 = vmatprep.subr.mxu0 0.0
      %3867 = vmatpush2.msra.mxu0 %v2656
      %3868 = vmatprep.mubr.f32.mxu0 %v2107
      %3869 = vmatmul.mubr.f32.gmra.mxu0 %v2106
      %v3870 = vpop.f32.mrf.mxu0
      %v3871 = vadd.f32 %v3646, %v3870
      %v3872 = vpop.f32.mrf.mxu0
      %3873 = vmatprep.mubr.f32.mxu0 %v2119
      %3874 = vmatmul.mubr.f32.gmra.mxu0 %v2118
      %v3875 = vpop.f32.mrf.mxu0
      %v3876 = vadd.f32 %v3651, %v3875
      %v3877 = vpop.f32.mrf.mxu0
      %3878 = vmatprep.mubr.f32.mxu0 %v2131
      %3879 = vmatmul.mubr.f32.gmra.mxu0 %v2130
      %v3880 = vpop.f32.mrf.mxu0
      %v3881 = vadd.f32 %v3656, %v3880
      %v3882 = vpop.f32.mrf.mxu0
      %3883 = vmatprep.mubr.f32.mxu0 %v2143
      %3884 = vmatmul.mubr.f32.gmra.mxu0 %v2142
      %v3885 = vpop.f32.mrf.mxu0
      %v3886 = vadd.f32 %v3661, %v3885
      %v3887 = vpop.f32.mrf.mxu0
      %3888 = vmatprep.mubr.f32.mxu0 %v2155
      %3889 = vmatmul.mubr.f32.gmra.mxu0 %v2154
      %v3890 = vpop.f32.mrf.mxu0
      %v3891 = vadd.f32 %v3666, %v3890
      %v3892 = vpop.f32.mrf.mxu0
      %3893 = vmatprep.mubr.f32.mxu0 %v2167
      %3894 = vmatmul.mubr.f32.gmra.mxu0 %v2166
      %v3895 = vpop.f32.mrf.mxu0
      %v3896 = vadd.f32 %v3671, %v3895
      %v3897 = vpop.f32.mrf.mxu0
      %3898 = vmatprep.mubr.f32.mxu0 %v2179
      %3899 = vmatmul.mubr.f32.gmra.mxu0 %v2178
      %v3900 = vpop.f32.mrf.mxu0
      %v3901 = vadd.f32 %v3676, %v3900
      %v3902 = vpop.f32.mrf.mxu0
      %3903 = vmatprep.mubr.f32.mxu0 %v2191
      %3904 = vmatmul.mubr.f32.gmra.mxu0 %v2190
      %v3905 = vpop.f32.mrf.mxu0
      %v3906 = vadd.f32 %v3681, %v3905
      %v3907 = vpop.f32.mrf.mxu0
      %3908 = vmatprep.mubr.f32.mxu0 %v2203
      %3909 = vmatmul.mubr.f32.gmra.mxu0 %v2202
      %v3910 = vpop.f32.mrf.mxu0
      %v3911 = vadd.f32 %v3686, %v3910
      %v3912 = vpop.f32.mrf.mxu0
      %3913 = vmatprep.mubr.f32.mxu0 %v2215
      %3914 = vmatmul.mubr.f32.gmra.mxu0 %v2214
      %v3915 = vpop.f32.mrf.mxu0
      %v3916 = vadd.f32 %v3691, %v3915
      %v3917 = vpop.f32.mrf.mxu0
      %3918 = vmatprep.mubr.f32.mxu0 %v2227
      %3919 = vmatmul.mubr.f32.gmra.mxu0 %v2226
      %v3920 = vpop.f32.mrf.mxu0
      %v3921 = vadd.f32 %v3696, %v3920
      %v3922 = vpop.f32.mrf.mxu0
      %3923 = vmatprep.mubr.f32.mxu0 %v2239
      %3924 = vmatmul.mubr.f32.gmra.mxu0 %v2238
      %v3925 = vpop.f32.mrf.mxu0
      %v3926 = vadd.f32 %v3701, %v3925
      %v3927 = vpop.f32.mrf.mxu0
      %3928 = vmatprep.mubr.f32.mxu0 %v2251
      %3929 = vmatmul.mubr.f32.gmra.mxu0 %v2250
      %v3930 = vpop.f32.mrf.mxu0
      %v3931 = vadd.f32 %v3706, %v3930
      %v3932 = vpop.f32.mrf.mxu0
      %3933 = vmatprep.mubr.f32.mxu0 %v2263
      %3934 = vmatmul.mubr.f32.gmra.mxu0 %v2262
      %v3935 = vpop.f32.mrf.mxu0
      %v3936 = vadd.f32 %v3711, %v3935
      %v3937 = vpop.f32.mrf.mxu0
      %3938 = vmatprep.mubr.f32.mxu0 %v2275
      %3939 = vmatmul.mubr.f32.gmra.mxu0 %v2274
      %v3940 = vpop.f32.mrf.mxu0
      %v3941 = vadd.f32 %v3716, %v3940
      %v3942 = vpop.f32.mrf.mxu0
      %3943 = vmatprep.mubr.f32.mxu0 %v2287
      %3944 = vmatmul.mubr.f32.gmra.mxu0 %v2286
      %v3945 = vpop.f32.mrf.mxu0
      %v3946 = vadd.f32 %v3721, %v3945
      %v3947 = vpop.f32.mrf.mxu0
      %3948 = vmatprep.mubr.f32.mxu0 %v2299
      %3949 = vmatmul.mubr.f32.gmra.mxu0 %v2298
      %v3950 = vpop.f32.mrf.mxu0
      %v3951 = vadd.f32 %v3726, %v3950
      %v3952 = vpop.f32.mrf.mxu0
      %3953 = vmatprep.mubr.f32.mxu0 %v2311
      %3954 = vmatmul.mubr.f32.gmra.mxu0 %v2310
      %v3955 = vpop.f32.mrf.mxu0
      %v3956 = vadd.f32 %v3731, %v3955
      %v3957 = vpop.f32.mrf.mxu0
      %3958 = vmatprep.mubr.f32.mxu0 %v2323
      %3959 = vmatmul.mubr.f32.gmra.mxu0 %v2322
      %v3960 = vpop.f32.mrf.mxu0
      %v3961 = vadd.f32 %v3736, %v3960
      %v3962 = vpop.f32.mrf.mxu0
      %3963 = vmatprep.mubr.f32.mxu0 %v2335
      %3964 = vmatmul.mubr.f32.gmra.mxu0 %v2334
      %v3965 = vpop.f32.mrf.mxu0
      %v3966 = vadd.f32 %v3741, %v3965
      %v3967 = vpop.f32.mrf.mxu0
      %3968 = vmatprep.mubr.f32.mxu0 %v2347
      %3969 = vmatmul.mubr.f32.gmra.mxu0 %v2346
      %v3970 = vpop.f32.mrf.mxu0
      %v3971 = vadd.f32 %v3746, %v3970
      %v3972 = vpop.f32.mrf.mxu0
      %3973 = vmatprep.mubr.f32.mxu0 %v2359
      %3974 = vmatmul.mubr.f32.gmra.mxu0 %v2358
      %v3975 = vpop.f32.mrf.mxu0
      %v3976 = vadd.f32 %v3751, %v3975
      %v3977 = vpop.f32.mrf.mxu0
      %3978 = vmatprep.mubr.f32.mxu0 %v2371
      %3979 = vmatmul.mubr.f32.gmra.mxu0 %v2370
      %v3980 = vpop.f32.mrf.mxu0
      %v3981 = vadd.f32 %v3756, %v3980
      %v3982 = vpop.f32.mrf.mxu0
      %3983 = vmatprep.mubr.f32.mxu0 %v2383
      %3984 = vmatmul.mubr.f32.gmra.mxu0 %v2382
      %v3985 = vpop.f32.mrf.mxu0
      %v3986 = vadd.f32 %v3761, %v3985
      %v3987 = vpop.f32.mrf.mxu0
      %3988 = vmatprep.mubr.f32.mxu0 %v2395
      %3989 = vmatmul.mubr.f32.gmra.mxu0 %v2394
      %v3990 = vpop.f32.mrf.mxu0
      %v3991 = vadd.f32 %v3766, %v3990
      %v3992 = vpop.f32.mrf.mxu0
      %3993 = vmatprep.mubr.f32.mxu0 %v2407
      %3994 = vmatmul.mubr.f32.gmra.mxu0 %v2406
      %v3995 = vpop.f32.mrf.mxu0
      %v3996 = vadd.f32 %v3771, %v3995
      %v3997 = vpop.f32.mrf.mxu0
      %3998 = vmatprep.mubr.f32.mxu0 %v2419
      %3999 = vmatmul.mubr.f32.gmra.mxu0 %v2418
      %v4000 = vpop.f32.mrf.mxu0
      %v4001 = vadd.f32 %v3776, %v4000
      %v4002 = vpop.f32.mrf.mxu0
      %4003 = vmatprep.mubr.f32.mxu0 %v2431
      %4004 = vmatmul.mubr.f32.gmra.mxu0 %v2430
      %v4005 = vpop.f32.mrf.mxu0
      %v4006 = vadd.f32 %v3781, %v4005
      %v4007 = vpop.f32.mrf.mxu0
      %4008 = vmatprep.mubr.f32.mxu0 %v2443
      %4009 = vmatmul.mubr.f32.gmra.mxu0 %v2442
      %v4010 = vpop.f32.mrf.mxu0
      %v4011 = vadd.f32 %v3786, %v4010
      %v4012 = vpop.f32.mrf.mxu0
      %4013 = vmatprep.mubr.f32.mxu0 %v2455
      %4014 = vmatmul.mubr.f32.gmra.mxu0 %v2454
      %v4015 = vpop.f32.mrf.mxu0
      %v4016 = vadd.f32 %v3791, %v4015
      %v4017 = vpop.f32.mrf.mxu0
      %4018 = vmatprep.mubr.f32.mxu0 %v2467
      %4019 = vmatmul.mubr.f32.gmra.mxu0 %v2466
      %v4020 = vpop.f32.mrf.mxu0
      %v4021 = vadd.f32 %v3796, %v4020
      %v4022 = vpop.f32.mrf.mxu0
      %4023 = vmatprep.mubr.f32.mxu0 %v2479
      %4024 = vmatmul.mubr.f32.gmra.mxu0 %v2478
      %v4025 = vpop.f32.mrf.mxu0
      %v4026 = vadd.f32 %v3801, %v4025
      %v4027 = vpop.f32.mrf.mxu0
      %4028 = vdwg.mxu0
      %4029 = vst [vmem:[%s262] sm:$0xff] %v3871
      %4030 = vst [vmem:[%s262 + $0x8] sm:$0xff] %v3876
      %4031 = vst [vmem:[%s262 + $0x10] sm:$0xff] %v3881
      %4032 = vst [vmem:[%s262 + $0x18] sm:$0xff] %v3886
      %4033 = vst [vmem:[%s262 + $0x20] sm:$0xff] %v3891
      %4034 = vst [vmem:[%s262 + $0x28] sm:$0xff] %v3896
      %4035 = vst [vmem:[%s262 + $0x30] sm:$0xff] %v3901
      %4036 = vst [vmem:[%s262 + $0x38] sm:$0xff] %v3906
      %4037 = vst [vmem:[%s262 + $0x40] sm:$0xff] %v3911
      %4038 = vst [vmem:[%s262 + $0x48] sm:$0xff] %v3916
      %4039 = vst [vmem:[%s262 + $0x50] sm:$0xff] %v3921
      %4040 = vst [vmem:[%s262 + $0x58] sm:$0xff] %v3926
      %4041 = vst [vmem:[%s262 + $0x60] sm:$0xff] %v3931
      %4042 = vst [vmem:[%s262 + $0x68] sm:$0xff] %v3936
      %4043 = vst [vmem:[%s262 + $0x70] sm:$0xff] %v3941
      %4044 = vst [vmem:[%s262 + $0x78] sm:$0xff] %v3946
      %4045 = vst [vmem:[%s262 + $0x80] sm:$0xff] %v3951
      %4046 = vst [vmem:[%s262 + $0x88] sm:$0xff] %v3956
      %4047 = vst [vmem:[%s262 + $0x90] sm:$0xff] %v3961
      %4048 = vst [vmem:[%s262 + $0x98] sm:$0xff] %v3966
      %4049 = vst [vmem:[%s262 + $0xa0] sm:$0xff] %v3971
      %4050 = vst [vmem:[%s262 + $0xa8] sm:$0xff] %v3976
      %4051 = vst [vmem:[%s262 + $0xb0] sm:$0xff] %v3981
      %4052 = vst [vmem:[%s262 + $0xb8] sm:$0xff] %v3986
      %4053 = vst [vmem:[%s262 + $0xc0] sm:$0xff] %v3991
      %4054 = vst [vmem:[%s262 + $0xc8] sm:$0xff] %v3996
      %4055 = vst [vmem:[%s262 + $0xd0] sm:$0xff] %v4001
      %4056 = vst [vmem:[%s262 + $0xd8] sm:$0xff] %v4006
      %4057 = vst [vmem:[%s262 + $0xe0] sm:$0xff] %v4011
      %4058 = vst [vmem:[%s262 + $0xe8] sm:$0xff] %v4016
      %4059 = vst [vmem:[%s262 + $0xf0] sm:$0xff] %v4021
      %4060 = vst [vmem:[%s262 + $0xf8] sm:$0xff] %v4026
      %s4061 = smul.u32 32, %s21
      %p4062 = scmp.lt.s32.totalorder %s20, 1
      %s4063 = scalar_select %p4062, %s20, 1
      %p4064 = scmp.lt.s32.totalorder %s4061, 31
      %s4065 = scalar_select %p4064, %s4061, 31
      %s4066 = smul.addr %s4063, 32
      %s4067 = sadd.s32 %s4065, %s4066
      %s4068 = smul.addr %s4067, 8
      %s4069 = scalar_lea.vmem %s5, %s4068
      // Predicated region
      $region41: #{_center_head_impl.1} parent=39 // pred_check
        %p4070 = pneg %p160
      $region42: #{_center_head_impl.1} parent=39 // pred_check_branch
        %4072 = sbr.rel (%p4070) target = $region44
      $region43: #{_center_head_impl.1} parent=39 // pred_region
        %s4073 = smul.u32 32, %s21
      $region44: #{_center_head_impl.1} parent=39 // pred_fallthru
        _
    $region40: #{_center_head_impl.1} parent=5 // pred_fallthru
      _
    %p4074 = scmp.le.s32.totalorder 2, %s11
    // Predicated region
    $region45: #{_center_head_impl.1} parent=5 // pred_check
      %p4075 = pneg %p4074
    $region46: #{_center_head_impl.1} parent=5 // pred_check_branch
      %4077 = sbr.rel (%p4075) target = $region48
    $region47: #{_center_head_impl.1} parent=5 // pred_region
      %s4078 = ssub.s32 %s11, 2
      // Predicated region
      $region49: #{_center_head_impl.1} parent=47 // pred_check
        %p4079 = pneg %p166
      $region50: #{_center_head_impl.1} parent=47 // pred_check_branch
        %4081 = sbr.rel (%p4079) target = $region52
      $region51: #{_center_head_impl.1} parent=47 // pred_region
        %s4082 = smul.u32 32, %s23
        %p4083 = scmp.lt.s32.totalorder %s22, 1
        %s4084 = scalar_select %p4083, %s22, 1
        %p4085 = scmp.lt.s32.totalorder %s4082, 31
        %s4086 = scalar_select %p4085, %s4082, 31
        %s4087 = smul.addr %s4084, 32
        %s4088 = sadd.s32 %s4086, %s4087
        %s4089 = smul.addr %s4088, 8
        %s4090 = scalar_lea.vmem %s5, %s4089
      $region52: #{_center_head_impl.1} parent=47 // pred_fallthru
        _
    $region48: #{_center_head_impl.1} parent=5 // pred_fallthru
      _
  $region6: #{_center_head_impl.1} parent=0 // loop_footer
    %s15 = sadd.s32 1, %s11
  $region7: #{_center_head_impl.1} parent=0 // loop_footer_branch
    %10 = sbr.rel target = $region3
  $region8: #{_center_head_impl.1} parent=0 // loop_exit
    _

</llo_original>
